<compile_context>
chip_gen: v7x
topology: tpu7x:2x2x1
jax: 0.10.0
libtpu: 0.0.40
codegen_flags: <defaults>
</compile_context>

<pallas_src>
import functools
import numpy as np

import jax
import jax.numpy as jnp
from jax.experimental import pallas as pl
from jax.experimental.pallas import tpu as pltpu

# ----------------------------- model hyper-params (small, synthetic) -------------------
VOCAB = 40
H = 32                 # encoder/decoder hidden
HEADS = 2
DH = H // HEADS
FFN_FILTER = 64
FFN_KERNEL = 3
VP_FILTER = 32         # variance-predictor filter size
VP_KERNEL = 3
N_MEL = 16             # n_mel_channels
N_PITCH_BINS = 16
N_SPEAKER = 4
MAX_SRC_LEN = 8
MAX_MEL_LEN = 32
MAX_DUR = 8.0
ENC_LAYERS = 2
DEC_LAYERS = 1

_F32 = jnp.float32
_BF16 = jnp.bfloat16


# =============================== in-kernel helpers ======================================
def _layernorm(x, g, b, eps=1e-5):
    mu = jnp.mean(x, axis=-1, keepdims=True)
    xc = x - mu
    var = jnp.mean(xc * xc, axis=-1, keepdims=True)
    return xc * jax.lax.rsqrt(var + eps) * g + b


def _pos_in_seq(n_rows, seq_len):
    """(n_rows, 1) int32 position of each row within its (contiguous) sequence."""
    row = jax.lax.broadcasted_iota(jnp.int32, (n_rows, 1), 0)
    if seq_len & (seq_len - 1) == 0:          # power of two -> cheap bitwise and
        return jnp.bitwise_and(row, seq_len - 1)
    return jax.lax.rem(row, seq_len)


def _conv_slab(x, pos, seq_len, ksize):
    """Build a (rows, ksize*C) slab of neighbour taps for a 'same' 1-D conv along rows.

    Shifts go through the XLU (pltpu.roll); taps that cross a sequence boundary are
    zeroed with a cheap VPU select -- no (N, N) shift matrices, no matmuls.
    """
    rows = x.shape[0]
    pad = (ksize - 1) // 2
    parts = []
    for k in range(ksize):
        d = k - pad
        if d == 0:
            parts.append(x)
        else:
            shifted = pltpu.roll(x, shift=(-d) % rows, axis=0)   # out[t] = x[t + d] (circular)
            valid = jnp.logical_and(pos + d >= 0, pos + d < seq_len)
            parts.append(shifted * valid.astype(x.dtype))
    return jnp.concatenate(parts, axis=1)


def _mha(x, amask, wqkv, bqkv, wo, bo, heads):
    """Multi-head self-attention on one (T, H) block.  Weights already bf16."""
    rows, h = x.shape
    dh = h // heads
    scale = 1.0 / float(np.sqrt(dh))
    qkv = jnp.dot(x.astype(_BF16), wqkv, preferred_element_type=_F32) + bqkv   # (T, 3H) f32
    outs = []
    for hd in range(heads):
        q = qkv[:, hd * dh:(hd + 1) * dh].astype(_BF16)
        k = qkv[:, h + hd * dh:h + (hd + 1) * dh].astype(_BF16)
        v = qkv[:, 2 * h + hd * dh:2 * h + (hd + 1) * dh].astype(_BF16)
        s = jax.lax.dot_general(q, k, (((1,), (1,)), ((), ())),
                                preferred_element_type=_F32) * scale + amask
        s = s - jnp.max(s, axis=-1, keepdims=True)
        p = jnp.exp(s)
        p = p * pl.reciprocal(jnp.sum(p, axis=-1, keepdims=True), approx=True)
        outs.append(jnp.dot(p.astype(_BF16), v, preferred_element_type=_F32))
    ctx = jnp.concatenate(outs, axis=1)                                        # (T, H)
    return jnp.dot(ctx.astype(_BF16), wo, preferred_element_type=_F32) + bo


def _fft_block(x, mrow, amask, pos, seq_len, heads, ksize,
               wqkv, bqkv, wo, bo, ln1g, ln1b, wc1, bc1, wc2, bc2, ln2g, ln2b):
    """One FFT block (self-attn + conv-FFN) on a single (T, H) batch-element block."""
    attn = _mha(x, amask, wqkv, bqkv, wo, bo, heads)
    x1 = _layernorm(attn + x, ln1g, ln1b) * mrow

    slab1 = _conv_slab(x1, pos, seq_len, ksize).astype(_BF16)                  # (T, K*H)
    h1 = jnp.maximum(jnp.dot(slab1, wc1, preferred_element_type=_F32) + bc1, 0.0)

    slab2 = _conv_slab(h1, pos, seq_len, ksize).astype(_BF16)                  # (T, K*F)
    h2 = jnp.dot(slab2, wc2, preferred_element_type=_F32) + bc2

    return _layernorm(h2 + x1, ln2g, ln2b) * mrow


# =============================== fused FFT-stack kernels ================================
def _fft_stack_kernel(x_ref, mrow_ref, mcol_ref,
                      wqkv_ref, bqkv_ref, wo_ref, bo_ref, ln1g_ref, ln1b_ref,
                      wc1_ref, bc1_ref, wc2_ref, bc2_ref, ln2g_ref, ln2b_ref,
                      o_ref, state_ref, *, heads, ksize, seq_len):
    """grid = (G, B, L); layer axis is the carried ('arbitrary') axis; outputs hidden."""
    l = pl.program_id(2)

    @pl.when(l == 0)
    def _():
        state_ref[...] = x_ref[0, 0]

    x = state_ref[...]                                  # (T, H)
    mrow = mrow_ref[0, 0]                               # (T, 1)
    amask = (mcol_ref[0, 0] - 1.0) * 1e9                # (1, T): 0 valid / -1e9 padded key
    pos = _pos_in_seq(seq_len, seq_len)

    x2 = _fft_block(x, mrow, amask, pos, seq_len, heads, ksize,
                    wqkv_ref[0, 0], bqkv_ref[0, 0], wo_ref[0, 0], bo_ref[0, 0],
                    ln1g_ref[0, 0], ln1b_ref[0, 0],
                    wc1_ref[0, 0], bc1_ref[0, 0], wc2_ref[0, 0], bc2_ref[0, 0],
                    ln2g_ref[0, 0], ln2b_ref[0, 0])
    state_ref[...] = x2

    @pl.when(l == pl.num_programs(2) - 1)
    def _():
        o_ref[0, 0] = x2


def _fft_stack_mel_kernel(x_ref, mrow_ref, mcol_ref,
                          wqkv_ref, bqkv_ref, wo_ref, bo_ref, ln1g_ref, ln1b_ref,
                          wc1_ref, bc1_ref, wc2_ref, bc2_ref, ln2g_ref, ln2b_ref,
                          wmel_ref, bmel_ref,
                          mel_ref, state_ref, *, heads, ksize, seq_len):
    """Decoder variant: same FFT stack + mel-projection epilogue on the last layer."""
    l = pl.program_id(2)

    @pl.when(l == 0)
    def _():
        state_ref[...] = x_ref[0, 0]

    x = state_ref[...]
    mrow = mrow_ref[0, 0]
    amask = (mcol_ref[0, 0] - 1.0) * 1e9
    pos = _pos_in_seq(seq_len, seq_len)

    x2 = _fft_block(x, mrow, amask, pos, seq_len, heads, ksize,
                    wqkv_ref[0, 0], bqkv_ref[0, 0], wo_ref[0, 0], bo_ref[0, 0],
                    ln1g_ref[0, 0], ln1b_ref[0, 0],
                    wc1_ref[0, 0], bc1_ref[0, 0], wc2_ref[0, 0], bc2_ref[0, 0],
                    ln2g_ref[0, 0], ln2b_ref[0, 0])
    state_ref[...] = x2

    @pl.when(l == pl.num_programs(2) - 1)
    def _():
        mel_ref[0, 0] = jnp.dot(x2.astype(_BF16), wmel_ref[0],
                                preferred_element_type=_F32) + bmel_ref[0]


def fused_fft_stack(x, pad_mask, stacked, mel_weights=None):
    """Run G independent stacks of L FFT blocks in one pallas_call.

    x:        (G, B, T, H) f32
    pad_mask: (G, B, T) bool, True = padded
    stacked:  dict of weights with leading (G, L) dims (matmul weights in bf16)
    mel_weights: optional (w (G, H, M) bf16, b (G, 1, M) f32) epilogue projection
    Returns (G, B, T, H) hidden, or (G, B, T, M) mel if mel_weights is given.
    """
    G, B, T, Hh = x.shape
    L = stacked['wqkv'].shape[1]
    K = FFN_KERNEL
    F = stacked['w_c1'].shape[-1]

    keep = (~pad_mask).astype(_F32)
    mrow = keep.reshape(G, B, T, 1)
    mcol = keep.reshape(G, B, 1, T)

    def dmap(g, b, l):            # per (g, batch) data blocks
        return (g, b, 0, 0)

    def wmap(g, b, l):            # per (g, layer) weight blocks
        return (g, l, 0, 0)

    in_specs = [
        pl.BlockSpec((1, 1, T, Hh), dmap),                 # x
        pl.BlockSpec((1, 1, T, 1), dmap),                  # mrow (valid rows)
        pl.BlockSpec((1, 1, 1, T), dmap),                  # mcol (valid keys)
        pl.BlockSpec((1, 1, Hh, 3 * Hh), wmap),            # wqkv (bf16)
        pl.BlockSpec((1, 1, 1, 3 * Hh), wmap),             # bqkv
        pl.BlockSpec((1, 1, Hh, Hh), wmap),                # wo (bf16)
        pl.BlockSpec((1, 1, 1, Hh), wmap),                 # bo
        pl.BlockSpec((1, 1, 1, Hh), wmap),                 # ln1_g
        pl.BlockSpec((1, 1, 1, Hh), wmap),                 # ln1_b
        pl.BlockSpec((1, 1, K * Hh, F), wmap),             # w_c1 (bf16)
        pl.BlockSpec((1, 1, 1, F), wmap),                  # b_c1
        pl.BlockSpec((1, 1, K * F, Hh), wmap),             # w_c2 (bf16)
        pl.BlockSpec((1, 1, 1, Hh), wmap),                 # b_c2
        pl.BlockSpec((1, 1, 1, Hh), wmap),                 # ln2_g
        pl.BlockSpec((1, 1, 1, Hh), wmap),                 # ln2_b
    ]
    args = [x, mrow, mcol,
            stacked['wqkv'], stacked['bqkv'], stacked['wo'], stacked['bo'],
            stacked['ln1_g'], stacked['ln1_b'],
            stacked['w_c1'], stacked['b_c1'], stacked['w_c2'], stacked['b_c2'],
            stacked['ln2_g'], stacked['ln2_b']]

    if mel_weights is None:
        kernel = functools.partial(_fft_stack_kernel, heads=HEADS, ksize=K, seq_len=T)
        out_shape = jax.ShapeDtypeStruct((G, B, T, Hh), _F32)
        out_spec = pl.BlockSpec((1, 1, T, Hh), dmap)
    else:
        wmel, bmel = mel_weights
        M = wmel.shape[-1]
        in_specs += [pl.BlockSpec((1, Hh, M), lambda g, b, l: (g, 0, 0)),
                     pl.BlockSpec((1, 1, M), lambda g, b, l: (g, 0, 0))]
        args += [wmel, bmel]
        kernel = functools.partial(_fft_stack_mel_kernel, heads=HEADS, ksize=K, seq_len=T)
        out_shape = jax.ShapeDtypeStruct((G, B, T, M), _F32)
        out_spec = pl.BlockSpec((1, 1, T, M), dmap)

    return pl.pallas_call(
        kernel,
        out_shape=out_shape,
        grid=(G, B, L),
        in_specs=in_specs,
        out_specs=out_spec,
        scratch_shapes=[pltpu.VMEM((T, Hh), _F32)],        # carried hidden state
        compiler_params=pltpu.CompilerParams(
            dimension_semantics=("parallel", "parallel", "arbitrary")),
    )(*args)


# =============================== fused variance-predictor kernel ========================
def _vp_kernel(x_ref, mrow_ref,
               wc1_ref, bc1_ref, ln1g_ref, ln1b_ref,
               wc2_ref, bc2_ref, ln2g_ref, ln2b_ref,
               wout_ref, bout_ref, o_ref, *, ksize, seq_len):
    x = x_ref[...]                     # (N, H) f32
    mrow = mrow_ref[...]               # (N, 1)
    n = x.shape[0]
    pos = _pos_in_seq(n, seq_len)

    slab1 = _conv_slab(x, pos, seq_len, ksize).astype(_BF16)
    h1 = jnp.maximum(jnp.dot(slab1, wc1_ref[0], preferred_element_type=_F32)
                     + bc1_ref[0], 0.0)
    h1 = _layernorm(h1, ln1g_ref[0], ln1b_ref[0])

    slab2 = _conv_slab(h1, pos, seq_len, ksize).astype(_BF16)
    h2 = jnp.maximum(jnp.dot(slab2, wc2_ref[0], preferred_element_type=_F32)
                     + bc2_ref[0], 0.0)
    h2 = _layernorm(h2, ln2g_ref[0], ln2b_ref[0])

    out = jnp.dot(h2.astype(_BF16), wout_ref[0], preferred_element_type=_F32) + bout_ref[0]
    o_ref[0] = out * mrow


def fused_variance_predictors(x, pad_mask, stacked):
    """Both variance predictors (pitch, duration) in one pallas_call (grid=(2,) parallel).

    x: (B, T, H); pad_mask: (B, T) True=pad; stacked: weights with leading axis 2.
    Returns (2, B, T): [pitch_prediction, log_duration_prediction].
    """
    B, T, Hh = x.shape
    N = B * T
    K = VP_KERNEL
    F = stacked['w_c1'].shape[-1]
    G = stacked['w_c1'].shape[0]

    xf = x.reshape(N, Hh)
    mrow = (~pad_mask).astype(_F32).reshape(N, 1)

    kernel = functools.partial(_vp_kernel, ksize=K, seq_len=T)
    out = pl.pallas_call(
        kernel,
        out_shape=jax.ShapeDtypeStruct((G, N, 1), _F32),
        grid=(G,),
        in_specs=[
            pl.BlockSpec((N, Hh), lambda g: (0, 0)),                # shared input
            pl.BlockSpec((N, 1), lambda g: (0, 0)),                 # shared mask
            pl.BlockSpec((1, K * Hh, F), lambda g: (g, 0, 0)),      # w_c1 (bf16)
            pl.BlockSpec((1, 1, F), lambda g: (g, 0, 0)),           # b_c1
            pl.BlockSpec((1, 1, F), lambda g: (g, 0, 0)),           # ln1_g
            pl.BlockSpec((1, 1, F), lambda g: (g, 0, 0)),           # ln1_b
            pl.BlockSpec((1, K * F, F), lambda g: (g, 0, 0)),       # w_c2 (bf16)
            pl.BlockSpec((1, 1, F), lambda g: (g, 0, 0)),           # b_c2
            pl.BlockSpec((1, 1, F), lambda g: (g, 0, 0)),           # ln2_g
            pl.BlockSpec((1, 1, F), lambda g: (g, 0, 0)),           # ln2_b
            pl.BlockSpec((1, F, 1), lambda g: (g, 0, 0)),           # w_out (bf16)
            pl.BlockSpec((1, 1, 1), lambda g: (g, 0, 0)),           # b_out
        ],
        out_specs=pl.BlockSpec((1, N, 1), lambda g: (g, 0, 0)),
        compiler_params=pltpu.CompilerParams(dimension_semantics=("parallel",)),
    )(xf, mrow,
      stacked['w_c1'], stacked['b_c1'], stacked['ln1_g'], stacked['ln1_b'],
      stacked['w_c2'], stacked['b_c2'], stacked['ln2_g'], stacked['ln2_b'],
      stacked['w_out'], stacked['b_out'])
    return out.reshape(G, B, T)


# =============================== JAX glue ===============================================
def get_mask_from_lengths(lengths, max_len):
    ids = jnp.arange(max_len, dtype=jnp.int32)[None, :]
    return ids >= lengths[:, None]        # True = padded (PyTorch convention)


def sinusoid_pos_enc(max_len, d):
    pos = np.arange(max_len)[:, None]
    i = np.arange(d)[None, :]
    angle = pos / np.power(10000.0, 2 * (i // 2) / d)
    pe = np.zeros((max_len, d), dtype=np.float32)
    pe[:, 0::2] = np.sin(angle[:, 0::2])
    pe[:, 1::2] = np.cos(angle[:, 1::2])
    return jnp.asarray(pe)


def length_regulate(x, durations, max_mel_len):
    """Expand token features by integer durations into a fixed-length mel frame grid."""
    B, T, _ = x.shape
    cum = jnp.cumsum(durations, axis=1)                                   # (B, T)
    mel_lens = jnp.minimum(cum[:, -1], max_mel_len)                       # (B,)
    frame_idx = jnp.arange(max_mel_len, dtype=jnp.int32)[None, :]         # (1, M)
    src_idx = jnp.sum(frame_idx[:, :, None] >= cum[:, None, :], axis=-1)  # (B, M)
    src_idx = jnp.clip(src_idx, 0, T - 1)
    expanded = jax.vmap(lambda xi, idx: xi[idx])(x, src_idx)              # (B, M, H)
    mel_masks = frame_idx >= mel_lens[:, None]                            # (B, M) True=pad
    expanded = expanded * (~mel_masks)[:, :, None]
    return expanded, mel_lens, mel_masks


# =============================== parameters =============================================
def _lin_w(key, fan_in, fan_out, scale=0.02, dtype=_BF16):
    """Matmul weight, pre-cast to bf16 (MXU operand); biases stay f32."""
    return (jax.random.normal(key, (fan_in, fan_out), _F32) * scale).astype(dtype)


def init_fft_layer(key):
    ks = jax.random.split(key, 4)
    p = {}
    p['wqkv'] = _lin_w(ks[0], H, 3 * H)                 # fused Q|K|V projection
    p['bqkv'] = jnp.zeros((1, 3 * H), _F32)
    p['wo'] = _lin_w(ks[1], H, H)
    p['bo'] = jnp.zeros((1, H), _F32)
    p['w_c1'] = _lin_w(ks[2], FFN_KERNEL * H, FFN_FILTER)
    p['b_c1'] = jnp.zeros((1, FFN_FILTER), _F32)
    p['w_c2'] = _lin_w(ks[3], FFN_KERNEL * FFN_FILTER, H)
    p['b_c2'] = jnp.zeros((1, H), _F32)
    p['ln1_g'] = jnp.ones((1, H), _F32); p['ln1_b'] = jnp.zeros((1, H), _F32)
    p['ln2_g'] = jnp.ones((1, H), _F32); p['ln2_b'] = jnp.zeros((1, H), _F32)
    return p


def init_vp(key, out_bias=0.0):
    ks = jax.random.split(key, 3)
    p = {}
    p['w_c1'] = _lin_w(ks[0], VP_KERNEL * H, VP_FILTER)
    p['b_c1'] = jnp.zeros((1, VP_FILTER), _F32)
    p['ln1_g'] = jnp.ones((1, VP_FILTER), _F32); p['ln1_b'] = jnp.zeros((1, VP_FILTER), _F32)
    p['w_c2'] = _lin_w(ks[1], VP_KERNEL * VP_FILTER, VP_FILTER)
    p['b_c2'] = jnp.zeros((1, VP_FILTER), _F32)
    p['ln2_g'] = jnp.ones((1, VP_FILTER), _F32); p['ln2_b'] = jnp.zeros((1, VP_FILTER), _F32)
    p['w_out'] = _lin_w(ks[2], VP_FILTER, 1)
    p['b_out'] = jnp.full((1, 1), out_bias, _F32)
    return p


def _stack(trees):
    """Stack identically-structured param dicts along a new leading axis."""
    return jax.tree_util.tree_map(lambda *xs: jnp.stack(xs, axis=0), *trees)


def init_params(key):
    ks = jax.random.split(key, 12)
    params = {}
    params['word_emb'] = jax.random.normal(ks[0], (VOCAB, H), _F32) * 0.1
    params['speaker_emb'] = jax.random.normal(ks[1], (N_SPEAKER, H), _F32) * 0.1
    params['pitch_embedding'] = jax.random.normal(ks[2], (N_PITCH_BINS, H), _F32) * 0.1
    params['pitch_bins'] = jnp.linspace(-1.0, 1.0, N_PITCH_BINS - 1)
    params['pos_enc_src'] = sinusoid_pos_enc(MAX_SRC_LEN, H)
    params['pos_enc_mel'] = sinusoid_pos_enc(MAX_MEL_LEN, H)

    enc = _stack([init_fft_layer(jax.random.fold_in(ks[3], i)) for i in range(ENC_LAYERS)])
    params['encoder_stack'] = jax.tree_util.tree_map(lambda a: a[None], enc)   # (1, L, ...)

    fil = _stack([init_fft_layer(jax.random.fold_in(ks[4], i)) for i in range(DEC_LAYERS)])
    src = _stack([init_fft_layer(jax.random.fold_in(ks[5], i)) for i in range(DEC_LAYERS)])
    params['decoder_stack'] = jax.tree_util.tree_map(
        lambda a, b: jnp.stack([a, b], axis=0), fil, src)                      # (2, L, ...)

    # pitch + duration predictors run together as one grid=(2,) "parallel" call
    params['vp_stack'] = _stack([init_vp(ks[6], out_bias=0.0),
                                 init_vp(ks[7], out_bias=1.0)])

    # mel projections for filter / source paths, folded into the decoder epilogue
    params['mel_w'] = jnp.stack([_lin_w(ks[8], H, N_MEL), _lin_w(ks[9], H, N_MEL)], axis=0)
    params['mel_b'] = jnp.zeros((2, 1, N_MEL), _F32)
    # TODO(synk): SourceGenerator / FilterGenerator are constructed in __init__ of the PyTorch
    #             module but never invoked in forward(); their parameters are omitted here.
    return params


# =============================== FastSpeech2 forward (gen=True path) ====================
@functools.partial(jax.jit, static_argnums=(4,))
def fastspeech2_forward(params, speakers, texts, src_lens, max_src_len,
                        p_control=1.0, d_control=1.0):
    B = texts.shape[0]
    src_masks = get_mask_from_lengths(src_lens, max_src_len)              # (B, T) True=pad

    # ---- Encoder: all layers in one pallas_call (grid = (1, B, L)) ----
    x = jnp.take(params['word_emb'], texts, axis=0)                       # (B, T, H)
    x = x + params['pos_enc_src'][None, :max_src_len, :]
    x = x * (~src_masks)[:, :, None]
    x = fused_fft_stack(x[None], src_masks[None], params['encoder_stack'])[0]

    # ---- speaker embedding ----
    g = jnp.take(params['speaker_emb'], speakers, axis=0)                 # (B, H)
    x = x + g[:, None, :]

    # ---- Variance adaptor (inference / gen path): both predictors in one launch ----
    vp_out = fused_variance_predictors(x, src_masks, params['vp_stack'])  # (2, B, T)
    p_predictions = vp_out[0]
    log_d_predictions = vp_out[1]
    d_rounded = jnp.clip(jnp.round((jnp.exp(log_d_predictions) - 1.0) * d_control),
                         0.0, MAX_DUR)
    d_rounded = jnp.where(src_masks, 0.0, d_rounded).astype(jnp.int32)

    pitch = p_predictions * p_control
    bucket = jnp.clip(jnp.searchsorted(params['pitch_bins'], pitch), 0, N_PITCH_BINS - 1)
    pitch_emb = jnp.take(params['pitch_embedding'], bucket, axis=0)       # (B, T, H)

    acoustics_src = x + pitch_emb
    linguistics_src = x

    acoustics, mel_lens, mel_masks = length_regulate(acoustics_src, d_rounded, MAX_MEL_LEN)
    linguistics, _, _ = length_regulate(linguistics_src, d_rounded, MAX_MEL_LEN)

    # TODO(synk): alignment-learning aligner (attn_h / attn_s / attn_logprob) requires
    #             ground-truth mels; not run in gen mode.
    attn_h = attn_s = attn_logprob = None

    # ---- Decoder (source-filter) + mel projections: ONE pallas_call, grid = (2, B, L) ----
    pe = params['pos_enc_mel'][None, :MAX_MEL_LEN, :]
    keep = (~mel_masks)[:, :, None]
    y = jnp.stack([(acoustics + pe) * keep, (linguistics + pe) * keep], axis=0)  # (2,B,M,H)
    mel_pad_stack = jnp.broadcast_to(mel_masks[None], (2,) + mel_masks.shape)

    mel_out = fused_fft_stack(y, mel_pad_stack, params['decoder_stack'],
                              mel_weights=(params['mel_w'], params['mel_b']))    # (2,B,M,mel)
    filters_0 = mel_out[0]
    sources_0 = mel_out[1]
    specs = filters_0 + sources_0

    return (specs, p_predictions, log_d_predictions, d_rounded, src_masks, mel_masks,
            src_lens, mel_lens, attn_h, attn_s, attn_logprob, filters_0, sources_0)


# =============================== main ===================================================
if __name__ == "__main__":
    root = jax.random.PRNGKey(0)
    k_params, k_text = jax.random.split(root)
    params = init_params(k_params)

    B = 2
    texts = jax.random.randint(k_text, (B, MAX_SRC_LEN), 0, VOCAB, dtype=jnp.int32)
    speakers = jnp.array([0, 1], jnp.int32)
    src_lens = jnp.array([MAX_SRC_LEN, MAX_SRC_LEN - 2], jnp.int32)

    outs = fastspeech2_forward(params, speakers, texts, src_lens, MAX_SRC_LEN)
    outs = jax.block_until_ready(outs)

    specs = np.asarray(outs[0])
    assert specs.shape == (B, MAX_MEL_LEN, N_MEL)
    assert np.all(np.isfinite(specs))
    assert np.all(np.isfinite(np.asarray(outs[1])))
    assert np.all(np.isfinite(np.asarray(outs[2])))
    print("KERNEL_OK")
</pallas_src>

<mosaic_0001>
module attributes {stable_mosaic.version = 11 : i64} {
  func.func @_fft_stack_kernel(%arg0: i32, %arg1: i32, %arg2: i32, %arg3: memref<1x1x8x32xf32, #tpu.memory_space<vmem>>, %arg4: memref<1x1x8x1xf32, #tpu.memory_space<vmem>>, %arg5: memref<1x1x1x8xf32, #tpu.memory_space<vmem>>, %arg6: memref<1x1x32x96xbf16, #tpu.memory_space<vmem>>, %arg7: memref<1x1x1x96xf32, #tpu.memory_space<vmem>>, %arg8: memref<1x1x32x32xbf16, #tpu.memory_space<vmem>>, %arg9: memref<1x1x1x32xf32, #tpu.memory_space<vmem>>, %arg10: memref<1x1x1x32xf32, #tpu.memory_space<vmem>>, %arg11: memref<1x1x1x32xf32, #tpu.memory_space<vmem>>, %arg12: memref<1x1x96x64xbf16, #tpu.memory_space<vmem>>, %arg13: memref<1x1x1x64xf32, #tpu.memory_space<vmem>>, %arg14: memref<1x1x192x32xbf16, #tpu.memory_space<vmem>>, %arg15: memref<1x1x1x32xf32, #tpu.memory_space<vmem>>, %arg16: memref<1x1x1x32xf32, #tpu.memory_space<vmem>>, %arg17: memref<1x1x1x32xf32, #tpu.memory_space<vmem>>, %arg18: memref<1x1x8x32xf32, #tpu.memory_space<vmem>>, %arg19: memref<8x32xf32, #tpu.memory_space<vmem>>) attributes {dimension_semantics = [#tpu.dimension_semantics<parallel>, #tpu.dimension_semantics<parallel>, #tpu.dimension_semantics<arbitrary>], iteration_bounds = array<i64: 1, 2, 2>, scalar_prefetch = 0 : i64, scratch_operands = 1 : i64, tpu.core_type = #tpu.core_type<tc>, window_params = [{transform_indices = @transform_0, window_bounds = array<i64: 1, 1, 8, 32>}, {transform_indices = @transform_1, window_bounds = array<i64: 1, 1, 8, 1>}, {transform_indices = @transform_2, window_bounds = array<i64: 1, 1, 1, 8>}, {transform_indices = @transform_3, window_bounds = array<i64: 1, 1, 32, 96>}, {transform_indices = @transform_4, window_bounds = array<i64: 1, 1, 1, 96>}, {transform_indices = @transform_5, window_bounds = array<i64: 1, 1, 32, 32>}, {transform_indices = @transform_6, window_bounds = array<i64: 1, 1, 1, 32>}, {transform_indices = @transform_7, window_bounds = array<i64: 1, 1, 1, 32>}, {transform_indices = @transform_8, window_bounds = array<i64: 1, 1, 1, 32>}, {transform_indices = @transform_9, window_bounds = array<i64: 1, 1, 96, 64>}, {transform_indices = @transform_10, window_bounds = array<i64: 1, 1, 1, 64>}, {transform_indices = @transform_11, window_bounds = array<i64: 1, 1, 192, 32>}, {transform_indices = @transform_12, window_bounds = array<i64: 1, 1, 1, 32>}, {transform_indices = @transform_13, window_bounds = array<i64: 1, 1, 1, 32>}, {transform_indices = @transform_14, window_bounds = array<i64: 1, 1, 1, 32>}, {transform_indices = @transform_15, window_bounds = array<i64: 1, 1, 8, 32>}]} {
    %c0_i32 = arith.constant 0 : i32
    %0 = arith.cmpi eq, %arg2, %c0_i32 : i32
    %1 = arith.extui %0 : i1 to i32
    %c0_i32_0 = arith.constant 0 : i32
    %2 = arith.cmpi ne, %1, %c0_i32_0 : i32
    scf.if %2 {
      %c0_105 = arith.constant 0 : index
      %c0_106 = arith.constant 0 : index
      %c0_107 = arith.constant 0 : index
      %c0_108 = arith.constant 0 : index
      %212 = vector.load %arg3[%c0_105, %c0_106, %c0_107, %c0_108] : memref<1x1x8x32xf32, #tpu.memory_space<vmem>>, vector<1x1x8x32xf32>
      %213 = vector.shape_cast %212 : vector<1x1x8x32xf32> to vector<8x32xf32>
      %c0_109 = arith.constant 0 : index
      %c0_110 = arith.constant 0 : index
      %214 = vector.load %arg19[%c0_109, %c0_110] : memref<8x32xf32, #tpu.memory_space<vmem>>, vector<8x32xf32>
      tpu.vector_store %arg19[%c0_109, %c0_110], %213 {strides = array<i32>} : memref<8x32xf32, #tpu.memory_space<vmem>>, vector<8x32xf32>,
    } else {
    }
    %c0 = arith.constant 0 : index
    %c0_1 = arith.constant 0 : index
    %3 = vector.load %arg19[%c0, %c0_1] : memref<8x32xf32, #tpu.memory_space<vmem>>, vector<8x32xf32>
    %c0_2 = arith.constant 0 : index
    %c0_3 = arith.constant 0 : index
    %c0_4 = arith.constant 0 : index
    %c0_5 = arith.constant 0 : index
    %4 = vector.load %arg4[%c0_2, %c0_3, %c0_4, %c0_5] : memref<1x1x8x1xf32, #tpu.memory_space<vmem>>, vector<1x1x8x1xf32>
    %5 = vector.shape_cast %4 : vector<1x1x8x1xf32> to vector<8x1xf32>
    %c0_6 = arith.constant 0 : index
    %c0_7 = arith.constant 0 : index
    %c0_8 = arith.constant 0 : index
    %c0_9 = arith.constant 0 : index
    %6 = vector.load %arg5[%c0_6, %c0_7, %c0_8, %c0_9] : memref<1x1x1x8xf32, #tpu.memory_space<vmem>>, vector<1x1x1x8xf32>
    %7 = vector.shape_cast %6 : vector<1x1x1x8xf32> to vector<1x8xf32>
    %cst = arith.constant 1.000000e+00 : f32
    %8 = vector.broadcast %cst : f32 to vector<1x8xf32>
    %9 = arith.subf %7, %8 : vector<1x8xf32>
    %cst_10 = arith.constant 1.000000e+09 : f32
    %10 = vector.broadcast %cst_10 : f32 to vector<1x8xf32>
    %11 = arith.mulf %9, %10 : vector<1x8xf32>
    %12 = tpu.iota {dimensions = array<i32: 0>} : vector<8x1xi32>
    %c7_i32 = arith.constant 7 : i32
    %13 = vector.broadcast %c7_i32 : i32 to vector<8x1xi32>
    %14 = arith.andi %12, %13 : vector<8x1xi32>
    %c0_11 = arith.constant 0 : index
    %c0_12 = arith.constant 0 : index
    %c0_13 = arith.constant 0 : index
    %c0_14 = arith.constant 0 : index
    %15 = vector.load %arg6[%c0_11, %c0_12, %c0_13, %c0_14] : memref<1x1x32x96xbf16, #tpu.memory_space<vmem>>, vector<1x1x32x96xbf16>
    %16 = vector.shape_cast %15 : vector<1x1x32x96xbf16> to vector<32x96xbf16>
    %c0_15 = arith.constant 0 : index
    %c0_16 = arith.constant 0 : index
    %c0_17 = arith.constant 0 : index
    %c0_18 = arith.constant 0 : index
    %17 = vector.load %arg7[%c0_15, %c0_16, %c0_17, %c0_18] : memref<1x1x1x96xf32, #tpu.memory_space<vmem>>, vector<1x1x1x96xf32>
    %18 = vector.shape_cast %17 : vector<1x1x1x96xf32> to vector<1x96xf32>
    %c0_19 = arith.constant 0 : index
    %c0_20 = arith.constant 0 : index
    %c0_21 = arith.constant 0 : index
    %c0_22 = arith.constant 0 : index
    %19 = vector.load %arg8[%c0_19, %c0_20, %c0_21, %c0_22] : memref<1x1x32x32xbf16, #tpu.memory_space<vmem>>, vector<1x1x32x32xbf16>
    %20 = vector.shape_cast %19 : vector<1x1x32x32xbf16> to vector<32x32xbf16>
    %c0_23 = arith.constant 0 : index
    %c0_24 = arith.constant 0 : index
    %c0_25 = arith.constant 0 : index
    %c0_26 = arith.constant 0 : index
    %21 = vector.load %arg9[%c0_23, %c0_24, %c0_25, %c0_26] : memref<1x1x1x32xf32, #tpu.memory_space<vmem>>, vector<1x1x1x32xf32>
    %22 = vector.shape_cast %21 : vector<1x1x1x32xf32> to vector<1x32xf32>
    %c0_27 = arith.constant 0 : index
    %c0_28 = arith.constant 0 : index
    %c0_29 = arith.constant 0 : index
    %c0_30 = arith.constant 0 : index
    %23 = vector.load %arg10[%c0_27, %c0_28, %c0_29, %c0_30] : memref<1x1x1x32xf32, #tpu.memory_space<vmem>>, vector<1x1x1x32xf32>
    %24 = vector.shape_cast %23 : vector<1x1x1x32xf32> to vector<1x32xf32>
    %c0_31 = arith.constant 0 : index
    %c0_32 = arith.constant 0 : index
    %c0_33 = arith.constant 0 : index
    %c0_34 = arith.constant 0 : index
    %25 = vector.load %arg11[%c0_31, %c0_32, %c0_33, %c0_34] : memref<1x1x1x32xf32, #tpu.memory_space<vmem>>, vector<1x1x1x32xf32>
    %26 = vector.shape_cast %25 : vector<1x1x1x32xf32> to vector<1x32xf32>
    %c0_35 = arith.constant 0 : index
    %c0_36 = arith.constant 0 : index
    %c0_37 = arith.constant 0 : index
    %c0_38 = arith.constant 0 : index
    %27 = vector.load %arg12[%c0_35, %c0_36, %c0_37, %c0_38] : memref<1x1x96x64xbf16, #tpu.memory_space<vmem>>, vector<1x1x96x64xbf16>
    %28 = vector.shape_cast %27 : vector<1x1x96x64xbf16> to vector<96x64xbf16>
    %c0_39 = arith.constant 0 : index
    %c0_40 = arith.constant 0 : index
    %c0_41 = arith.constant 0 : index
    %c0_42 = arith.constant 0 : index
    %29 = vector.load %arg13[%c0_39, %c0_40, %c0_41, %c0_42] : memref<1x1x1x64xf32, #tpu.memory_space<vmem>>, vector<1x1x1x64xf32>
    %30 = vector.shape_cast %29 : vector<1x1x1x64xf32> to vector<1x64xf32>
    %c0_43 = arith.constant 0 : index
    %c0_44 = arith.constant 0 : index
    %c0_45 = arith.constant 0 : index
    %c0_46 = arith.constant 0 : index
    %31 = vector.load %arg14[%c0_43, %c0_44, %c0_45, %c0_46] : memref<1x1x192x32xbf16, #tpu.memory_space<vmem>>, vector<1x1x192x32xbf16>
    %32 = vector.shape_cast %31 : vector<1x1x192x32xbf16> to vector<192x32xbf16>
    %c0_47 = arith.constant 0 : index
    %c0_48 = arith.constant 0 : index
    %c0_49 = arith.constant 0 : index
    %c0_50 = arith.constant 0 : index
    %33 = vector.load %arg15[%c0_47, %c0_48, %c0_49, %c0_50] : memref<1x1x1x32xf32, #tpu.memory_space<vmem>>, vector<1x1x1x32xf32>
    %34 = vector.shape_cast %33 : vector<1x1x1x32xf32> to vector<1x32xf32>
    %c0_51 = arith.constant 0 : index
    %c0_52 = arith.constant 0 : index
    %c0_53 = arith.constant 0 : index
    %c0_54 = arith.constant 0 : index
    %35 = vector.load %arg16[%c0_51, %c0_52, %c0_53, %c0_54] : memref<1x1x1x32xf32, #tpu.memory_space<vmem>>, vector<1x1x1x32xf32>
    %36 = vector.shape_cast %35 : vector<1x1x1x32xf32> to vector<1x32xf32>
    %c0_55 = arith.constant 0 : index
    %c0_56 = arith.constant 0 : index
    %c0_57 = arith.constant 0 : index
    %c0_58 = arith.constant 0 : index
    %37 = vector.load %arg17[%c0_55, %c0_56, %c0_57, %c0_58] : memref<1x1x1x32xf32, #tpu.memory_space<vmem>>, vector<1x1x1x32xf32>
    %38 = vector.shape_cast %37 : vector<1x1x1x32xf32> to vector<1x32xf32>
    %39 = arith.truncf %3 : vector<8x32xf32> to vector<8x32xbf16>
    %cst_59 = arith.constant dense<0.000000e+00> : vector<8x96xf32>
    %40 = tpu.matmul %39, %16, %cst_59 {dimension_numbers = #tpu.dot_dimension_numbers<[1], [0], [0], [1], [0, 0, 1, 1], [], []>} : vector<8x32xbf16>, vector<32x96xbf16>, vector<8x96xf32> -> vector<8x96xf32>
    %41 = vector.broadcast %18 : vector<1x96xf32> to vector<8x96xf32>
    %42 = arith.addf %40, %41 : vector<8x96xf32>
    %43 = vector.extract_strided_slice %42 {offsets = [0, 0], sizes = [8, 16], strides = [1, 1]} : vector<8x96xf32> to vector<8x16xf32>
    %44 = arith.truncf %43 : vector<8x16xf32> to vector<8x16xbf16>
    %45 = vector.extract_strided_slice %42 {offsets = [0, 32], sizes = [8, 16], strides = [1, 1]} : vector<8x96xf32> to vector<8x16xf32>
    %46 = arith.truncf %45 : vector<8x16xf32> to vector<8x16xbf16>
    %47 = vector.extract_strided_slice %42 {offsets = [0, 64], sizes = [8, 16], strides = [1, 1]} : vector<8x96xf32> to vector<8x16xf32>
    %48 = arith.truncf %47 : vector<8x16xf32> to vector<8x16xbf16>
    %cst_60 = arith.constant dense<0.000000e+00> : vector<8x8xf32>
    %49 = tpu.matmul %44, %46, %cst_60 {dimension_numbers = #tpu.dot_dimension_numbers<[1], [1], [0], [0], [0, 0, 1, 0], [], []>} : vector<8x16xbf16>, vector<8x16xbf16>, vector<8x8xf32> -> vector<8x8xf32>
    %cst_61 = arith.constant 2.500000e-01 : f32
    %50 = vector.broadcast %cst_61 : f32 to vector<8x8xf32>
    %51 = arith.mulf %49, %50 : vector<8x8xf32>
    %52 = vector.broadcast %11 : vector<1x8xf32> to vector<8x8xf32>
    %53 = arith.addf %51, %52 : vector<8x8xf32>
    %cst_62 = arith.constant dense<0xFF800000> : vector<8xf32>
    %54 = vector.multi_reduction <maximumf>, %53, %cst_62 [1] : vector<8x8xf32> to vector<8xf32>
    %55 = vector.shape_cast %54 : vector<8xf32> to vector<8x1xf32>
    %56 = vector.broadcast %55 : vector<8x1xf32> to vector<8x8xf32>
    %57 = arith.subf %53, %56 : vector<8x8xf32>
    %58 = math.exp %57 : vector<8x8xf32>
    %cst_63 = arith.constant dense<0.000000e+00> : vector<8xf32>
    %59 = vector.multi_reduction <add>, %58, %cst_63 [1] : vector<8x8xf32> to vector<8xf32>
    %60 = vector.shape_cast %59 : vector<8xf32> to vector<8x1xf32>
    %61 = tpu.reciprocal %60 {approx = true} : vector<8x1xf32> -> vector<8x1xf32>
    %62 = vector.broadcast %61 : vector<8x1xf32> to vector<8x8xf32>
    %63 = arith.mulf %58, %62 : vector<8x8xf32>
    %64 = arith.truncf %63 : vector<8x8xf32> to vector<8x8xbf16>
    %cst_64 = arith.constant dense<0.000000e+00> : vector<8x16xf32>
    %65 = tpu.matmul %64, %48, %cst_64 {dimension_numbers = #tpu.dot_dimension_numbers<[1], [0], [0], [1], [0, 0, 1, 1], [], []>} : vector<8x8xbf16>, vector<8x16xbf16>, vector<8x16xf32> -> vector<8x16xf32>
    %66 = vector.extract_strided_slice %42 {offsets = [0, 16], sizes = [8, 16], strides = [1, 1]} : vector<8x96xf32> to vector<8x16xf32>
    %67 = arith.truncf %66 : vector<8x16xf32> to vector<8x16xbf16>
    %68 = vector.extract_strided_slice %42 {offsets = [0, 48], sizes = [8, 16], strides = [1, 1]} : vector<8x96xf32> to vector<8x16xf32>
    %69 = arith.truncf %68 : vector<8x16xf32> to vector<8x16xbf16>
    %70 = vector.extract_strided_slice %42 {offsets = [0, 80], sizes = [8, 16], strides = [1, 1]} : vector<8x96xf32> to vector<8x16xf32>
    %71 = arith.truncf %70 : vector<8x16xf32> to vector<8x16xbf16>
    %cst_65 = arith.constant dense<0.000000e+00> : vector<8x8xf32>
    %72 = tpu.matmul %67, %69, %cst_65 {dimension_numbers = #tpu.dot_dimension_numbers<[1], [1], [0], [0], [0, 0, 1, 0], [], []>} : vector<8x16xbf16>, vector<8x16xbf16>, vector<8x8xf32> -> vector<8x8xf32>
    %cst_66 = arith.constant 2.500000e-01 : f32
    %73 = vector.broadcast %cst_66 : f32 to vector<8x8xf32>
    %74 = arith.mulf %72, %73 : vector<8x8xf32>
    %75 = vector.broadcast %11 : vector<1x8xf32> to vector<8x8xf32>
    %76 = arith.addf %74, %75 : vector<8x8xf32>
    %cst_67 = arith.constant dense<0xFF800000> : vector<8xf32>
    %77 = vector.multi_reduction <maximumf>, %76, %cst_67 [1] : vector<8x8xf32> to vector<8xf32>
    %78 = vector.shape_cast %77 : vector<8xf32> to vector<8x1xf32>
    %79 = vector.broadcast %78 : vector<8x1xf32> to vector<8x8xf32>
    %80 = arith.subf %76, %79 : vector<8x8xf32>
    %81 = math.exp %80 : vector<8x8xf32>
    %cst_68 = arith.constant dense<0.000000e+00> : vector<8xf32>
    %82 = vector.multi_reduction <add>, %81, %cst_68 [1] : vector<8x8xf32> to vector<8xf32>
    %83 = vector.shape_cast %82 : vector<8xf32> to vector<8x1xf32>
    %84 = tpu.reciprocal %83 {approx = true} : vector<8x1xf32> -> vector<8x1xf32>
    %85 = vector.broadcast %84 : vector<8x1xf32> to vector<8x8xf32>
    %86 = arith.mulf %81, %85 : vector<8x8xf32>
    %87 = arith.truncf %86 : vector<8x8xf32> to vector<8x8xbf16>
    %cst_69 = arith.constant dense<0.000000e+00> : vector<8x16xf32>
    %88 = tpu.matmul %87, %71, %cst_69 {dimension_numbers = #tpu.dot_dimension_numbers<[1], [0], [0], [1], [0, 0, 1, 1], [], []>} : vector<8x8xbf16>, vector<8x16xbf16>, vector<8x16xf32> -> vector<8x16xf32>
    %89 = tpu.concatenate %65, %88 in 1 : vector<8x16xf32>, vector<8x16xf32> -> vector<8x32xf32>
    %90 = arith.truncf %89 : vector<8x32xf32> to vector<8x32xbf16>
    %cst_70 = arith.constant dense<0.000000e+00> : vector<8x32xf32>
    %91 = tpu.matmul %90, %20, %cst_70 {dimension_numbers = #tpu.dot_dimension_numbers<[1], [0], [0], [1], [0, 0, 1, 1], [], []>} : vector<8x32xbf16>, vector<32x32xbf16>, vector<8x32xf32> -> vector<8x32xf32>
    %92 = vector.broadcast %22 : vector<1x32xf32> to vector<8x32xf32>
    %93 = arith.addf %91, %92 : vector<8x32xf32>
    %94 = arith.addf %93, %3 : vector<8x32xf32>
    %cst_71 = arith.constant dense<0.000000e+00> : vector<8xf32>
    %95 = vector.multi_reduction <add>, %94, %cst_71 [1] : vector<8x32xf32> to vector<8xf32>
    %96 = vector.shape_cast %95 : vector<8xf32> to vector<8x1xf32>
    %cst_72 = arith.constant 3.200000e+01 : f32
    %97 = vector.broadcast %cst_72 : f32 to vector<8x1xf32>
    %98 = arith.divf %96, %97 : vector<8x1xf32>
    %99 = vector.broadcast %98 : vector<8x1xf32> to vector<8x32xf32>
    %100 = arith.subf %94, %99 : vector<8x32xf32>
    %101 = arith.mulf %100, %100 : vector<8x32xf32>
    %cst_73 = arith.constant dense<0.000000e+00> : vector<8xf32>
    %102 = vector.multi_reduction <add>, %101, %cst_73 [1] : vector<8x32xf32> to vector<8xf32>
    %103 = vector.shape_cast %102 : vector<8xf32> to vector<8x1xf32>
    %cst_74 = arith.constant 3.200000e+01 : f32
    %104 = vector.broadcast %cst_74 : f32 to vector<8x1xf32>
    %105 = arith.divf %103, %104 : vector<8x1xf32>
    %cst_75 = arith.constant 9.99999974E-6 : f32
    %106 = vector.broadcast %cst_75 : f32 to vector<8x1xf32>
    %107 = arith.addf %105, %106 : vector<8x1xf32>
    %108 = math.rsqrt %107 : vector<8x1xf32>
    %109 = vector.broadcast %108 : vector<8x1xf32> to vector<8x32xf32>
    %110 = arith.mulf %100, %109 : vector<8x32xf32>
    %111 = vector.broadcast %24 : vector<1x32xf32> to vector<8x32xf32>
    %112 = arith.mulf %110, %111 : vector<8x32xf32>
    %113 = vector.broadcast %26 : vector<1x32xf32> to vector<8x32xf32>
    %114 = arith.addf %112, %113 : vector<8x32xf32>
    %115 = vector.broadcast %5 : vector<8x1xf32> to vector<8x32xf32>
    %116 = arith.mulf %114, %115 : vector<8x32xf32>
    %c1_i32 = arith.constant 1 : i32
    %117 = tpu.dynamic_rotate %116 by %c1_i32 dim 0 : vector<8x32xf32>, i32 -> vector<8x32xf32>
    %c-1_i32 = arith.constant -1 : i32
    %118 = vector.broadcast %c-1_i32 : i32 to vector<8x1xi32>
    %119 = arith.addi %14, %118 : vector<8x1xi32>
    %c0_i32_76 = arith.constant 0 : i32
    %120 = vector.broadcast %c0_i32_76 : i32 to vector<8x1xi32>
    %121 = arith.cmpi sge, %119, %120 : vector<8x1xi32>
    %c-1_i32_77 = arith.constant -1 : i32
    %122 = vector.broadcast %c-1_i32_77 : i32 to vector<8x1xi32>
    %123 = arith.addi %14, %122 : vector<8x1xi32>
    %c8_i32 = arith.constant 8 : i32
    %124 = vector.broadcast %c8_i32 : i32 to vector<8x1xi32>
    %125 = arith.cmpi slt, %123, %124 : vector<8x1xi32>
    %126 = arith.andi %121, %125 : vector<8x1xi1>
    %127 = arith.extui %126 : vector<8x1xi1> to vector<8x1xi32>
    %128 = arith.sitofp %127 : vector<8x1xi32> to vector<8x1xf32>
    %129 = vector.broadcast %128 : vector<8x1xf32> to vector<8x32xf32>
    %130 = arith.mulf %117, %129 : vector<8x32xf32>
    %c7_i32_78 = arith.constant 7 : i32
    %131 = tpu.dynamic_rotate %116 by %c7_i32_78 dim 0 : vector<8x32xf32>, i32 -> vector<8x32xf32>
    %c1_i32_79 = arith.constant 1 : i32
    %132 = vector.broadcast %c1_i32_79 : i32 to vector<8x1xi32>
    %133 = arith.addi %14, %132 : vector<8x1xi32>
    %c0_i32_80 = arith.constant 0 : i32
    %134 = vector.broadcast %c0_i32_80 : i32 to vector<8x1xi32>
    %135 = arith.cmpi sge, %133, %134 : vector<8x1xi32>
    %c1_i32_81 = arith.constant 1 : i32
    %136 = vector.broadcast %c1_i32_81 : i32 to vector<8x1xi32>
    %137 = arith.addi %14, %136 : vector<8x1xi32>
    %c8_i32_82 = arith.constant 8 : i32
    %138 = vector.broadcast %c8_i32_82 : i32 to vector<8x1xi32>
    %139 = arith.cmpi slt, %137, %138 : vector<8x1xi32>
    %140 = arith.andi %135, %139 : vector<8x1xi1>
    %141 = arith.extui %140 : vector<8x1xi1> to vector<8x1xi32>
    %142 = arith.sitofp %141 : vector<8x1xi32> to vector<8x1xf32>
    %143 = vector.broadcast %142 : vector<8x1xf32> to vector<8x32xf32>
    %144 = arith.mulf %131, %143 : vector<8x32xf32>
    %145 = tpu.concatenate %130, %116, %144 in 1 : vector<8x32xf32>, vector<8x32xf32>, vector<8x32xf32> -> vector<8x96xf32>
    %146 = arith.truncf %145 : vector<8x96xf32> to vector<8x96xbf16>
    %cst_83 = arith.constant dense<0.000000e+00> : vector<8x64xf32>
    %147 = tpu.matmul %146, %28, %cst_83 {dimension_numbers = #tpu.dot_dimension_numbers<[1], [0], [0], [1], [0, 0, 1, 1], [], []>} : vector<8x96xbf16>, vector<96x64xbf16>, vector<8x64xf32> -> vector<8x64xf32>
    %148 = vector.broadcast %30 : vector<1x64xf32> to vector<8x64xf32>
    %149 = arith.addf %147, %148 : vector<8x64xf32>
    %cst_84 = arith.constant 0.000000e+00 : f32
    %150 = vector.broadcast %cst_84 : f32 to vector<8x64xf32>
    %151 = arith.maximumf %149, %150 : vector<8x64xf32>
    %c1_i32_85 = arith.constant 1 : i32
    %152 = tpu.dynamic_rotate %151 by %c1_i32_85 dim 0 : vector<8x64xf32>, i32 -> vector<8x64xf32>
    %c-1_i32_86 = arith.constant -1 : i32
    %153 = vector.broadcast %c-1_i32_86 : i32 to vector<8x1xi32>
    %154 = arith.addi %14, %153 : vector<8x1xi32>
    %c0_i32_87 = arith.constant 0 : i32
    %155 = vector.broadcast %c0_i32_87 : i32 to vector<8x1xi32>
    %156 = arith.cmpi sge, %154, %155 : vector<8x1xi32>
    %c-1_i32_88 = arith.constant -1 : i32
    %157 = vector.broadcast %c-1_i32_88 : i32 to vector<8x1xi32>
    %158 = arith.addi %14, %157 : vector<8x1xi32>
    %c8_i32_89 = arith.constant 8 : i32
    %159 = vector.broadcast %c8_i32_89 : i32 to vector<8x1xi32>
    %160 = arith.cmpi slt, %158, %159 : vector<8x1xi32>
    %161 = arith.andi %156, %160 : vector<8x1xi1>
    %162 = arith.extui %161 : vector<8x1xi1> to vector<8x1xi32>
    %163 = arith.sitofp %162 : vector<8x1xi32> to vector<8x1xf32>
    %164 = vector.broadcast %163 : vector<8x1xf32> to vector<8x64xf32>
    %165 = arith.mulf %152, %164 : vector<8x64xf32>
    %c7_i32_90 = arith.constant 7 : i32
    %166 = tpu.dynamic_rotate %151 by %c7_i32_90 dim 0 : vector<8x64xf32>, i32 -> vector<8x64xf32>
    %c1_i32_91 = arith.constant 1 : i32
    %167 = vector.broadcast %c1_i32_91 : i32 to vector<8x1xi32>
    %168 = arith.addi %14, %167 : vector<8x1xi32>
    %c0_i32_92 = arith.constant 0 : i32
    %169 = vector.broadcast %c0_i32_92 : i32 to vector<8x1xi32>
    %170 = arith.cmpi sge, %168, %169 : vector<8x1xi32>
    %c1_i32_93 = arith.constant 1 : i32
    %171 = vector.broadcast %c1_i32_93 : i32 to vector<8x1xi32>
    %172 = arith.addi %14, %171 : vector<8x1xi32>
    %c8_i32_94 = arith.constant 8 : i32
    %173 = vector.broadcast %c8_i32_94 : i32 to vector<8x1xi32>
    %174 = arith.cmpi slt, %172, %173 : vector<8x1xi32>
    %175 = arith.andi %170, %174 : vector<8x1xi1>
    %176 = arith.extui %175 : vector<8x1xi1> to vector<8x1xi32>
    %177 = arith.sitofp %176 : vector<8x1xi32> to vector<8x1xf32>
    %178 = vector.broadcast %177 : vector<8x1xf32> to vector<8x64xf32>
    %179 = arith.mulf %166, %178 : vector<8x64xf32>
    %180 = tpu.concatenate %165, %151, %179 in 1 : vector<8x64xf32>, vector<8x64xf32>, vector<8x64xf32> -> vector<8x192xf32>
    %181 = arith.truncf %180 : vector<8x192xf32> to vector<8x192xbf16>
    %cst_95 = arith.constant dense<0.000000e+00> : vector<8x32xf32>
    %182 = tpu.matmul %181, %32, %cst_95 {dimension_numbers = #tpu.dot_dimension_numbers<[1], [0], [0], [1], [0, 0, 1, 1], [], []>} : vector<8x192xbf16>, vector<192x32xbf16>, vector<8x32xf32> -> vector<8x32xf32>
    %183 = vector.broadcast %34 : vector<1x32xf32> to vector<8x32xf32>
    %184 = arith.addf %182, %183 : vector<8x32xf32>
    %185 = arith.addf %184, %116 : vector<8x32xf32>
    %cst_96 = arith.constant dense<0.000000e+00> : vector<8xf32>
    %186 = vector.multi_reduction <add>, %185, %cst_96 [1] : vector<8x32xf32> to vector<8xf32>
    %187 = vector.shape_cast %186 : vector<8xf32> to vector<8x1xf32>
    %cst_97 = arith.constant 3.200000e+01 : f32
    %188 = vector.broadcast %cst_97 : f32 to vector<8x1xf32>
    %189 = arith.divf %187, %188 : vector<8x1xf32>
    %190 = vector.broadcast %189 : vector<8x1xf32> to vector<8x32xf32>
    %191 = arith.subf %185, %190 : vector<8x32xf32>
    %192 = arith.mulf %191, %191 : vector<8x32xf32>
    %cst_98 = arith.constant dense<0.000000e+00> : vector<8xf32>
    %193 = vector.multi_reduction <add>, %192, %cst_98 [1] : vector<8x32xf32> to vector<8xf32>
    %194 = vector.shape_cast %193 : vector<8xf32> to vector<8x1xf32>
    %cst_99 = arith.constant 3.200000e+01 : f32
    %195 = vector.broadcast %cst_99 : f32 to vector<8x1xf32>
    %196 = arith.divf %194, %195 : vector<8x1xf32>
    %cst_100 = arith.constant 9.99999974E-6 : f32
    %197 = vector.broadcast %cst_100 : f32 to vector<8x1xf32>
    %198 = arith.addf %196, %197 : vector<8x1xf32>
    %199 = math.rsqrt %198 : vector<8x1xf32>
    %200 = vector.broadcast %199 : vector<8x1xf32> to vector<8x32xf32>
    %201 = arith.mulf %191, %200 : vector<8x32xf32>
    %202 = vector.broadcast %36 : vector<1x32xf32> to vector<8x32xf32>
    %203 = arith.mulf %201, %202 : vector<8x32xf32>
    %204 = vector.broadcast %38 : vector<1x32xf32> to vector<8x32xf32>
    %205 = arith.addf %203, %204 : vector<8x32xf32>
    %206 = vector.broadcast %5 : vector<8x1xf32> to vector<8x32xf32>
    %207 = arith.mulf %205, %206 : vector<8x32xf32>
    %c0_101 = arith.constant 0 : index
    %c0_102 = arith.constant 0 : index
    %208 = vector.load %arg19[%c0_101, %c0_102] : memref<8x32xf32, #tpu.memory_space<vmem>>, vector<8x32xf32>
    tpu.vector_store %arg19[%c0_101, %c0_102], %207 {strides = array<i32>} : memref<8x32xf32, #tpu.memory_space<vmem>>, vector<8x32xf32>,
    %c1_i32_103 = arith.constant 1 : i32
    %209 = arith.cmpi eq, %arg2, %c1_i32_103 : i32
    %210 = arith.extui %209 : i1 to i32
    %c0_i32_104 = arith.constant 0 : i32
    %211 = arith.cmpi ne, %210, %c0_i32_104 : i32
    scf.if %211 {
      %c0_105 = arith.constant 0 : index
      %c0_106 = arith.constant 0 : index
      %c0_107 = arith.constant 0 : index
      %c0_108 = arith.constant 0 : index
      %212 = vector.load %arg18[%c0_105, %c0_106, %c0_107, %c0_108] : memref<1x1x8x32xf32, #tpu.memory_space<vmem>>, vector<1x1x8x32xf32>
      %213 = vector.shape_cast %212 : vector<1x1x8x32xf32> to vector<8x32xf32>
      %214 = vector.shape_cast %207 : vector<8x32xf32> to vector<1x1x8x32xf32>
      tpu.vector_store %arg18[%c0_105, %c0_106, %c0_107, %c0_108], %214 {strides = array<i32>} : memref<1x1x8x32xf32, #tpu.memory_space<vmem>>, vector<1x1x8x32xf32>,
    } else {
    }
    return
  }
  func.func @transform_0(%arg0: i32, %arg1: i32, %arg2: i32) -> (i32, i32, i32, i32) {
    %c0_i32 = arith.constant 0 : i32
    %c0_i32_0 = arith.constant 0 : i32
    %c0_i32_1 = arith.constant 0 : i32
    return %arg0, %arg1, %c0_i32, %c0_i32_0 : i32, i32, i32, i32
  }
  func.func @transform_1(%arg0: i32, %arg1: i32, %arg2: i32) -> (i32, i32, i32, i32) {
    %c0_i32 = arith.constant 0 : i32
    %c0_i32_0 = arith.constant 0 : i32
    %c0_i32_1 = arith.constant 0 : i32
    return %arg0, %arg1, %c0_i32, %c0_i32_0 : i32, i32, i32, i32
  }
  func.func @transform_2(%arg0: i32, %arg1: i32, %arg2: i32) -> (i32, i32, i32, i32) {
    %c0_i32 = arith.constant 0 : i32
    %c0_i32_0 = arith.constant 0 : i32
    %c0_i32_1 = arith.constant 0 : i32
    return %arg0, %arg1, %c0_i32, %c0_i32_0 : i32, i32, i32, i32
  }
  func.func @transform_3(%arg0: i32, %arg1: i32, %arg2: i32) -> (i32, i32, i32, i32) {
    %c0_i32 = arith.constant 0 : i32
    %c0_i32_0 = arith.constant 0 : i32
    %c0_i32_1 = arith.constant 0 : i32
    return %arg0, %arg2, %c0_i32, %c0_i32_0 : i32, i32, i32, i32
  }
  func.func @transform_4(%arg0: i32, %arg1: i32, %arg2: i32) -> (i32, i32, i32, i32) {
    %c0_i32 = arith.constant 0 : i32
    %c0_i32_0 = arith.constant 0 : i32
    %c0_i32_1 = arith.constant 0 : i32
    return %arg0, %arg2, %c0_i32, %c0_i32_0 : i32, i32, i32, i32
  }
  func.func @transform_5(%arg0: i32, %arg1: i32, %arg2: i32) -> (i32, i32, i32, i32) {
    %c0_i32 = arith.constant 0 : i32
    %c0_i32_0 = arith.constant 0 : i32
    %c0_i32_1 = arith.constant 0 : i32
    return %arg0, %arg2, %c0_i32, %c0_i32_0 : i32, i32, i32, i32
  }
  func.func @transform_6(%arg0: i32, %arg1: i32, %arg2: i32) -> (i32, i32, i32, i32) {
    %c0_i32 = arith.constant 0 : i32
    %c0_i32_0 = arith.constant 0 : i32
    %c0_i32_1 = arith.constant 0 : i32
    return %arg0, %arg2, %c0_i32, %c0_i32_0 : i32, i32, i32, i32
  }
  func.func @transform_7(%arg0: i32, %arg1: i32, %arg2: i32) -> (i32, i32, i32, i32) {
    %c0_i32 = arith.constant 0 : i32
    %c0_i32_0 = arith.constant 0 : i32
    %c0_i32_1 = arith.constant 0 : i32
    return %arg0, %arg2, %c0_i32, %c0_i32_0 : i32, i32, i32, i32
  }
  func.func @transform_8(%arg0: i32, %arg1: i32, %arg2: i32) -> (i32, i32, i32, i32) {
    %c0_i32 = arith.constant 0 : i32
    %c0_i32_0 = arith.constant 0 : i32
    %c0_i32_1 = arith.constant 0 : i32
    return %arg0, %arg2, %c0_i32, %c0_i32_0 : i32, i32, i32, i32
  }
  func.func @transform_9(%arg0: i32, %arg1: i32, %arg2: i32) -> (i32, i32, i32, i32) {
    %c0_i32 = arith.constant 0 : i32
    %c0_i32_0 = arith.constant 0 : i32
    %c0_i32_1 = arith.constant 0 : i32
    return %arg0, %arg2, %c0_i32, %c0_i32_0 : i32, i32, i32, i32
  }
  func.func @transform_10(%arg0: i32, %arg1: i32, %arg2: i32) -> (i32, i32, i32, i32) {
    %c0_i32 = arith.constant 0 : i32
    %c0_i32_0 = arith.constant 0 : i32
    %c0_i32_1 = arith.constant 0 : i32
    return %arg0, %arg2, %c0_i32, %c0_i32_0 : i32, i32, i32, i32
  }
  func.func @transform_11(%arg0: i32, %arg1: i32, %arg2: i32) -> (i32, i32, i32, i32) {
    %c0_i32 = arith.constant 0 : i32
    %c0_i32_0 = arith.constant 0 : i32
    %c0_i32_1 = arith.constant 0 : i32
    return %arg0, %arg2, %c0_i32, %c0_i32_0 : i32, i32, i32, i32
  }
  func.func @transform_12(%arg0: i32, %arg1: i32, %arg2: i32) -> (i32, i32, i32, i32) {
    %c0_i32 = arith.constant 0 : i32
    %c0_i32_0 = arith.constant 0 : i32
    %c0_i32_1 = arith.constant 0 : i32
    return %arg0, %arg2, %c0_i32, %c0_i32_0 : i32, i32, i32, i32
  }
  func.func @transform_13(%arg0: i32, %arg1: i32, %arg2: i32) -> (i32, i32, i32, i32) {
    %c0_i32 = arith.constant 0 : i32
    %c0_i32_0 = arith.constant 0 : i32
    %c0_i32_1 = arith.constant 0 : i32
    return %arg0, %arg2, %c0_i32, %c0_i32_0 : i32, i32, i32, i32
  }
  func.func @transform_14(%arg0: i32, %arg1: i32, %arg2: i32) -> (i32, i32, i32, i32) {
    %c0_i32 = arith.constant 0 : i32
    %c0_i32_0 = arith.constant 0 : i32
    %c0_i32_1 = arith.constant 0 : i32
    return %arg0, %arg2, %c0_i32, %c0_i32_0 : i32, i32, i32, i32
  }
  func.func @transform_15(%arg0: i32, %arg1: i32, %arg2: i32) -> (i32, i32, i32, i32) {
    %c0_i32 = arith.constant 0 : i32
    %c0_i32_0 = arith.constant 0 : i32
    %c0_i32_1 = arith.constant 0 : i32
    return %arg0, %arg1, %c0_i32, %c0_i32_0 : i32, i32, i32, i32
  }
}

module attributes {stable_mosaic.version = 11 : i64} {
  func.func @_vp_kernel(%arg0: i32, %arg1: memref<16x32xf32, #tpu.memory_space<vmem>>, %arg2: memref<16x1xf32, #tpu.memory_space<vmem>>, %arg3: memref<1x96x32xbf16, #tpu.memory_space<vmem>>, %arg4: memref<1x1x32xf32, #tpu.memory_space<vmem>>, %arg5: memref<1x1x32xf32, #tpu.memory_space<vmem>>, %arg6: memref<1x1x32xf32, #tpu.memory_space<vmem>>, %arg7: memref<1x96x32xbf16, #tpu.memory_space<vmem>>, %arg8: memref<1x1x32xf32, #tpu.memory_space<vmem>>, %arg9: memref<1x1x32xf32, #tpu.memory_space<vmem>>, %arg10: memref<1x1x32xf32, #tpu.memory_space<vmem>>, %arg11: memref<1x32x1xbf16, #tpu.memory_space<vmem>>, %arg12: memref<1x1x1xf32, #tpu.memory_space<vmem>>, %arg13: memref<1x16x1xf32, #tpu.memory_space<vmem>>) attributes {dimension_semantics = [#tpu.dimension_semantics<parallel>], iteration_bounds = array<i64: 2>, scalar_prefetch = 0 : i64, scratch_operands = 0 : i64, tpu.core_type = #tpu.core_type<tc>, window_params = [{pipeline_mode = #tpu.pipeline_mode<synchronous>, transform_indices = @transform_0, window_bounds = array<i64: 16, 32>}, {pipeline_mode = #tpu.pipeline_mode<synchronous>, transform_indices = @transform_1, window_bounds = array<i64: 16, 1>}, {transform_indices = @transform_2, window_bounds = array<i64: 1, 96, 32>}, {transform_indices = @transform_3, window_bounds = array<i64: 1, 1, 32>}, {transform_indices = @transform_4, window_bounds = array<i64: 1, 1, 32>}, {transform_indices = @transform_5, window_bounds = array<i64: 1, 1, 32>}, {transform_indices = @transform_6, window_bounds = array<i64: 1, 96, 32>}, {transform_indices = @transform_7, window_bounds = array<i64: 1, 1, 32>}, {transform_indices = @transform_8, window_bounds = array<i64: 1, 1, 32>}, {transform_indices = @transform_9, window_bounds = array<i64: 1, 1, 32>}, {transform_indices = @transform_10, window_bounds = array<i64: 1, 32, 1>}, {transform_indices = @transform_11, window_bounds = array<i64: 1, 1, 1>}, {transform_indices = @transform_12, window_bounds = array<i64: 1, 16, 1>}]} {
    %c0 = arith.constant 0 : index
    %c0_0 = arith.constant 0 : index
    %0 = vector.load %arg1[%c0, %c0_0] : memref<16x32xf32, #tpu.memory_space<vmem>>, vector<16x32xf32>
    %c0_1 = arith.constant 0 : index
    %c0_2 = arith.constant 0 : index
    %1 = vector.load %arg2[%c0_1, %c0_2] : memref<16x1xf32, #tpu.memory_space<vmem>>, vector<16x1xf32>
    %2 = tpu.iota {dimensions = array<i32: 0>} : vector<16x1xi32>
    %c7_i32 = arith.constant 7 : i32
    %3 = vector.broadcast %c7_i32 : i32 to vector<16x1xi32>
    %4 = arith.andi %2, %3 : vector<16x1xi32>
    %c1_i32 = arith.constant 1 : i32
    %5 = tpu.dynamic_rotate %0 by %c1_i32 dim 0 : vector<16x32xf32>, i32 -> vector<16x32xf32>
    %c-1_i32 = arith.constant -1 : i32
    %6 = vector.broadcast %c-1_i32 : i32 to vector<16x1xi32>
    %7 = arith.addi %4, %6 : vector<16x1xi32>
    %c0_i32 = arith.constant 0 : i32
    %8 = vector.broadcast %c0_i32 : i32 to vector<16x1xi32>
    %9 = arith.cmpi sge, %7, %8 : vector<16x1xi32>
    %c-1_i32_3 = arith.constant -1 : i32
    %10 = vector.broadcast %c-1_i32_3 : i32 to vector<16x1xi32>
    %11 = arith.addi %4, %10 : vector<16x1xi32>
    %c8_i32 = arith.constant 8 : i32
    %12 = vector.broadcast %c8_i32 : i32 to vector<16x1xi32>
    %13 = arith.cmpi slt, %11, %12 : vector<16x1xi32>
    %14 = arith.andi %9, %13 : vector<16x1xi1>
    %15 = arith.extui %14 : vector<16x1xi1> to vector<16x1xi32>
    %16 = arith.sitofp %15 : vector<16x1xi32> to vector<16x1xf32>
    %17 = vector.broadcast %16 : vector<16x1xf32> to vector<16x32xf32>
    %18 = arith.mulf %5, %17 : vector<16x32xf32>
    %c15_i32 = arith.constant 15 : i32
    %19 = tpu.dynamic_rotate %0 by %c15_i32 dim 0 : vector<16x32xf32>, i32 -> vector<16x32xf32>
    %c1_i32_4 = arith.constant 1 : i32
    %20 = vector.broadcast %c1_i32_4 : i32 to vector<16x1xi32>
    %21 = arith.addi %4, %20 : vector<16x1xi32>
    %c0_i32_5 = arith.constant 0 : i32
    %22 = vector.broadcast %c0_i32_5 : i32 to vector<16x1xi32>
    %23 = arith.cmpi sge, %21, %22 : vector<16x1xi32>
    %c1_i32_6 = arith.constant 1 : i32
    %24 = vector.broadcast %c1_i32_6 : i32 to vector<16x1xi32>
    %25 = arith.addi %4, %24 : vector<16x1xi32>
    %c8_i32_7 = arith.constant 8 : i32
    %26 = vector.broadcast %c8_i32_7 : i32 to vector<16x1xi32>
    %27 = arith.cmpi slt, %25, %26 : vector<16x1xi32>
    %28 = arith.andi %23, %27 : vector<16x1xi1>
    %29 = arith.extui %28 : vector<16x1xi1> to vector<16x1xi32>
    %30 = arith.sitofp %29 : vector<16x1xi32> to vector<16x1xf32>
    %31 = vector.broadcast %30 : vector<16x1xf32> to vector<16x32xf32>
    %32 = arith.mulf %19, %31 : vector<16x32xf32>
    %33 = tpu.concatenate %18, %0, %32 in 1 : vector<16x32xf32>, vector<16x32xf32>, vector<16x32xf32> -> vector<16x96xf32>
    %34 = arith.truncf %33 : vector<16x96xf32> to vector<16x96xbf16>
    %c0_8 = arith.constant 0 : index
    %c0_9 = arith.constant 0 : index
    %c0_10 = arith.constant 0 : index
    %35 = vector.load %arg3[%c0_8, %c0_9, %c0_10] : memref<1x96x32xbf16, #tpu.memory_space<vmem>>, vector<1x96x32xbf16>
    %36 = vector.shape_cast %35 : vector<1x96x32xbf16> to vector<96x32xbf16>
    %cst = arith.constant dense<0.000000e+00> : vector<16x32xf32>
    %37 = tpu.matmul %34, %36, %cst {dimension_numbers = #tpu.dot_dimension_numbers<[1], [0], [0], [1], [0, 0, 1, 1], [], []>} : vector<16x96xbf16>, vector<96x32xbf16>, vector<16x32xf32> -> vector<16x32xf32>
    %c0_11 = arith.constant 0 : index
    %c0_12 = arith.constant 0 : index
    %c0_13 = arith.constant 0 : index
    %38 = vector.load %arg4[%c0_11, %c0_12, %c0_13] : memref<1x1x32xf32, #tpu.memory_space<vmem>>, vector<1x1x32xf32>
    %39 = vector.shape_cast %38 : vector<1x1x32xf32> to vector<1x32xf32>
    %40 = vector.broadcast %39 : vector<1x32xf32> to vector<16x32xf32>
    %41 = arith.addf %37, %40 : vector<16x32xf32>
    %cst_14 = arith.constant 0.000000e+00 : f32
    %42 = vector.broadcast %cst_14 : f32 to vector<16x32xf32>
    %43 = arith.maximumf %41, %42 : vector<16x32xf32>
    %c0_15 = arith.constant 0 : index
    %c0_16 = arith.constant 0 : index
    %c0_17 = arith.constant 0 : index
    %44 = vector.load %arg5[%c0_15, %c0_16, %c0_17] : memref<1x1x32xf32, #tpu.memory_space<vmem>>, vector<1x1x32xf32>
    %45 = vector.shape_cast %44 : vector<1x1x32xf32> to vector<1x32xf32>
    %c0_18 = arith.constant 0 : index
    %c0_19 = arith.constant 0 : index
    %c0_20 = arith.constant 0 : index
    %46 = vector.load %arg6[%c0_18, %c0_19, %c0_20] : memref<1x1x32xf32, #tpu.memory_space<vmem>>, vector<1x1x32xf32>
    %47 = vector.shape_cast %46 : vector<1x1x32xf32> to vector<1x32xf32>
    %cst_21 = arith.constant dense<0.000000e+00> : vector<16xf32>
    %48 = vector.multi_reduction <add>, %43, %cst_21 [1] : vector<16x32xf32> to vector<16xf32>
    %49 = vector.shape_cast %48 : vector<16xf32> to vector<16x1xf32>
    %cst_22 = arith.constant 3.200000e+01 : f32
    %50 = vector.broadcast %cst_22 : f32 to vector<16x1xf32>
    %51 = arith.divf %49, %50 : vector<16x1xf32>
    %52 = vector.broadcast %51 : vector<16x1xf32> to vector<16x32xf32>
    %53 = arith.subf %43, %52 : vector<16x32xf32>
    %54 = arith.mulf %53, %53 : vector<16x32xf32>
    %cst_23 = arith.constant dense<0.000000e+00> : vector<16xf32>
    %55 = vector.multi_reduction <add>, %54, %cst_23 [1] : vector<16x32xf32> to vector<16xf32>
    %56 = vector.shape_cast %55 : vector<16xf32> to vector<16x1xf32>
    %cst_24 = arith.constant 3.200000e+01 : f32
    %57 = vector.broadcast %cst_24 : f32 to vector<16x1xf32>
    %58 = arith.divf %56, %57 : vector<16x1xf32>
    %cst_25 = arith.constant 9.99999974E-6 : f32
    %59 = vector.broadcast %cst_25 : f32 to vector<16x1xf32>
    %60 = arith.addf %58, %59 : vector<16x1xf32>
    %61 = math.rsqrt %60 : vector<16x1xf32>
    %62 = vector.broadcast %61 : vector<16x1xf32> to vector<16x32xf32>
    %63 = arith.mulf %53, %62 : vector<16x32xf32>
    %64 = vector.broadcast %45 : vector<1x32xf32> to vector<16x32xf32>
    %65 = arith.mulf %63, %64 : vector<16x32xf32>
    %66 = vector.broadcast %47 : vector<1x32xf32> to vector<16x32xf32>
    %67 = arith.addf %65, %66 : vector<16x32xf32>
    %c1_i32_26 = arith.constant 1 : i32
    %68 = tpu.dynamic_rotate %67 by %c1_i32_26 dim 0 : vector<16x32xf32>, i32 -> vector<16x32xf32>
    %c-1_i32_27 = arith.constant -1 : i32
    %69 = vector.broadcast %c-1_i32_27 : i32 to vector<16x1xi32>
    %70 = arith.addi %4, %69 : vector<16x1xi32>
    %c0_i32_28 = arith.constant 0 : i32
    %71 = vector.broadcast %c0_i32_28 : i32 to vector<16x1xi32>
    %72 = arith.cmpi sge, %70, %71 : vector<16x1xi32>
    %c-1_i32_29 = arith.constant -1 : i32
    %73 = vector.broadcast %c-1_i32_29 : i32 to vector<16x1xi32>
    %74 = arith.addi %4, %73 : vector<16x1xi32>
    %c8_i32_30 = arith.constant 8 : i32
    %75 = vector.broadcast %c8_i32_30 : i32 to vector<16x1xi32>
    %76 = arith.cmpi slt, %74, %75 : vector<16x1xi32>
    %77 = arith.andi %72, %76 : vector<16x1xi1>
    %78 = arith.extui %77 : vector<16x1xi1> to vector<16x1xi32>
    %79 = arith.sitofp %78 : vector<16x1xi32> to vector<16x1xf32>
    %80 = vector.broadcast %79 : vector<16x1xf32> to vector<16x32xf32>
    %81 = arith.mulf %68, %80 : vector<16x32xf32>
    %c15_i32_31 = arith.constant 15 : i32
    %82 = tpu.dynamic_rotate %67 by %c15_i32_31 dim 0 : vector<16x32xf32>, i32 -> vector<16x32xf32>
    %c1_i32_32 = arith.constant 1 : i32
    %83 = vector.broadcast %c1_i32_32 : i32 to vector<16x1xi32>
    %84 = arith.addi %4, %83 : vector<16x1xi32>
    %c0_i32_33 = arith.constant 0 : i32
    %85 = vector.broadcast %c0_i32_33 : i32 to vector<16x1xi32>
    %86 = arith.cmpi sge, %84, %85 : vector<16x1xi32>
    %c1_i32_34 = arith.constant 1 : i32
    %87 = vector.broadcast %c1_i32_34 : i32 to vector<16x1xi32>
    %88 = arith.addi %4, %87 : vector<16x1xi32>
    %c8_i32_35 = arith.constant 8 : i32
    %89 = vector.broadcast %c8_i32_35 : i32 to vector<16x1xi32>
    %90 = arith.cmpi slt, %88, %89 : vector<16x1xi32>
    %91 = arith.andi %86, %90 : vector<16x1xi1>
    %92 = arith.extui %91 : vector<16x1xi1> to vector<16x1xi32>
    %93 = arith.sitofp %92 : vector<16x1xi32> to vector<16x1xf32>
    %94 = vector.broadcast %93 : vector<16x1xf32> to vector<16x32xf32>
    %95 = arith.mulf %82, %94 : vector<16x32xf32>
    %96 = tpu.concatenate %81, %67, %95 in 1 : vector<16x32xf32>, vector<16x32xf32>, vector<16x32xf32> -> vector<16x96xf32>
    %97 = arith.truncf %96 : vector<16x96xf32> to vector<16x96xbf16>
    %c0_36 = arith.constant 0 : index
    %c0_37 = arith.constant 0 : index
    %c0_38 = arith.constant 0 : index
    %98 = vector.load %arg7[%c0_36, %c0_37, %c0_38] : memref<1x96x32xbf16, #tpu.memory_space<vmem>>, vector<1x96x32xbf16>
    %99 = vector.shape_cast %98 : vector<1x96x32xbf16> to vector<96x32xbf16>
    %cst_39 = arith.constant dense<0.000000e+00> : vector<16x32xf32>
    %100 = tpu.matmul %97, %99, %cst_39 {dimension_numbers = #tpu.dot_dimension_numbers<[1], [0], [0], [1], [0, 0, 1, 1], [], []>} : vector<16x96xbf16>, vector<96x32xbf16>, vector<16x32xf32> -> vector<16x32xf32>
    %c0_40 = arith.constant 0 : index
    %c0_41 = arith.constant 0 : index
    %c0_42 = arith.constant 0 : index
    %101 = vector.load %arg8[%c0_40, %c0_41, %c0_42] : memref<1x1x32xf32, #tpu.memory_space<vmem>>, vector<1x1x32xf32>
    %102 = vector.shape_cast %101 : vector<1x1x32xf32> to vector<1x32xf32>
    %103 = vector.broadcast %102 : vector<1x32xf32> to vector<16x32xf32>
    %104 = arith.addf %100, %103 : vector<16x32xf32>
    %cst_43 = arith.constant 0.000000e+00 : f32
    %105 = vector.broadcast %cst_43 : f32 to vector<16x32xf32>
    %106 = arith.maximumf %104, %105 : vector<16x32xf32>
    %c0_44 = arith.constant 0 : index
    %c0_45 = arith.constant 0 : index
    %c0_46 = arith.constant 0 : index
    %107 = vector.load %arg9[%c0_44, %c0_45, %c0_46] : memref<1x1x32xf32, #tpu.memory_space<vmem>>, vector<1x1x32xf32>
    %108 = vector.shape_cast %107 : vector<1x1x32xf32> to vector<1x32xf32>
    %c0_47 = arith.constant 0 : index
    %c0_48 = arith.constant 0 : index
    %c0_49 = arith.constant 0 : index
    %109 = vector.load %arg10[%c0_47, %c0_48, %c0_49] : memref<1x1x32xf32, #tpu.memory_space<vmem>>, vector<1x1x32xf32>
    %110 = vector.shape_cast %109 : vector<1x1x32xf32> to vector<1x32xf32>
    %cst_50 = arith.constant dense<0.000000e+00> : vector<16xf32>
    %111 = vector.multi_reduction <add>, %106, %cst_50 [1] : vector<16x32xf32> to vector<16xf32>
    %112 = vector.shape_cast %111 : vector<16xf32> to vector<16x1xf32>
    %cst_51 = arith.constant 3.200000e+01 : f32
    %113 = vector.broadcast %cst_51 : f32 to vector<16x1xf32>
    %114 = arith.divf %112, %113 : vector<16x1xf32>
    %115 = vector.broadcast %114 : vector<16x1xf32> to vector<16x32xf32>
    %116 = arith.subf %106, %115 : vector<16x32xf32>
    %117 = arith.mulf %116, %116 : vector<16x32xf32>
    %cst_52 = arith.constant dense<0.000000e+00> : vector<16xf32>
    %118 = vector.multi_reduction <add>, %117, %cst_52 [1] : vector<16x32xf32> to vector<16xf32>
    %119 = vector.shape_cast %118 : vector<16xf32> to vector<16x1xf32>
    %cst_53 = arith.constant 3.200000e+01 : f32
    %120 = vector.broadcast %cst_53 : f32 to vector<16x1xf32>
    %121 = arith.divf %119, %120 : vector<16x1xf32>
    %cst_54 = arith.constant 9.99999974E-6 : f32
    %122 = vector.broadcast %cst_54 : f32 to vector<16x1xf32>
    %123 = arith.addf %121, %122 : vector<16x1xf32>
    %124 = math.rsqrt %123 : vector<16x1xf32>
    %125 = vector.broadcast %124 : vector<16x1xf32> to vector<16x32xf32>
    %126 = arith.mulf %116, %125 : vector<16x32xf32>
    %127 = vector.broadcast %108 : vector<1x32xf32> to vector<16x32xf32>
    %128 = arith.mulf %126, %127 : vector<16x32xf32>
    %129 = vector.broadcast %110 : vector<1x32xf32> to vector<16x32xf32>
    %130 = arith.addf %128, %129 : vector<16x32xf32>
    %131 = arith.truncf %130 : vector<16x32xf32> to vector<16x32xbf16>
    %c0_55 = arith.constant 0 : index
    %c0_56 = arith.constant 0 : index
    %c0_57 = arith.constant 0 : index
    %132 = vector.load %arg11[%c0_55, %c0_56, %c0_57] : memref<1x32x1xbf16, #tpu.memory_space<vmem>>, vector<1x32x1xbf16>
    %133 = vector.shape_cast %132 : vector<1x32x1xbf16> to vector<32x1xbf16>
    %cst_58 = arith.constant dense<0.000000e+00> : vector<16x1xf32>
    %134 = tpu.matmul %131, %133, %cst_58 {dimension_numbers = #tpu.dot_dimension_numbers<[1], [0], [0], [1], [0, 0, 1, 1], [], []>} : vector<16x32xbf16>, vector<32x1xbf16>, vector<16x1xf32> -> vector<16x1xf32>
    %c0_59 = arith.constant 0 : index
    %c0_60 = arith.constant 0 : index
    %c0_61 = arith.constant 0 : index
    %135 = vector.load %arg12[%c0_59, %c0_60, %c0_61] : memref<1x1x1xf32, #tpu.memory_space<vmem>>, vector<1x1x1xf32>
    %136 = vector.shape_cast %135 : vector<1x1x1xf32> to vector<1x1xf32>
    %137 = vector.broadcast %136 : vector<1x1xf32> to vector<16x1xf32>
    %138 = arith.addf %134, %137 : vector<16x1xf32>
    %139 = arith.mulf %138, %1 : vector<16x1xf32>
    %c0_62 = arith.constant 0 : index
    %c0_63 = arith.constant 0 : index
    %c0_64 = arith.constant 0 : index
    %140 = vector.load %arg13[%c0_62, %c0_63, %c0_64] : memref<1x16x1xf32, #tpu.memory_space<vmem>>, vector<1x16x1xf32>
    %141 = vector.shape_cast %140 : vector<1x16x1xf32> to vector<16x1xf32>
    %142 = vector.shape_cast %139 : vector<16x1xf32> to vector<1x16x1xf32>
    tpu.vector_store %arg13[%c0_62, %c0_63, %c0_64], %142 {strides = array<i32>} : memref<1x16x1xf32, #tpu.memory_space<vmem>>, vector<1x16x1xf32>,
    return
  }
  func.func @transform_0(%arg0: i32) -> (i32, i32) {
    %c0_i32 = arith.constant 0 : i32
    %c0_i32_0 = arith.constant 0 : i32
    %c0_i32_1 = arith.constant 0 : i32
    return %c0_i32, %c0_i32_0 : i32, i32
  }
  func.func @transform_1(%arg0: i32) -> (i32, i32) {
    %c0_i32 = arith.constant 0 : i32
    %c0_i32_0 = arith.constant 0 : i32
    %c0_i32_1 = arith.constant 0 : i32
    return %c0_i32, %c0_i32_0 : i32, i32
  }
  func.func @transform_2(%arg0: i32) -> (i32, i32, i32) {
    %c0_i32 = arith.constant 0 : i32
    %c0_i32_0 = arith.constant 0 : i32
    %c0_i32_1 = arith.constant 0 : i32
    return %arg0, %c0_i32, %c0_i32_0 : i32, i32, i32
  }
  func.func @transform_3(%arg0: i32) -> (i32, i32, i32) {
    %c0_i32 = arith.constant 0 : i32
    %c0_i32_0 = arith.constant 0 : i32
    %c0_i32_1 = arith.constant 0 : i32
    return %arg0, %c0_i32, %c0_i32_0 : i32, i32, i32
  }
  func.func @transform_4(%arg0: i32) -> (i32, i32, i32) {
    %c0_i32 = arith.constant 0 : i32
    %c0_i32_0 = arith.constant 0 : i32
    %c0_i32_1 = arith.constant 0 : i32
    return %arg0, %c0_i32, %c0_i32_0 : i32, i32, i32
  }
  func.func @transform_5(%arg0: i32) -> (i32, i32, i32) {
    %c0_i32 = arith.constant 0 : i32
    %c0_i32_0 = arith.constant 0 : i32
    %c0_i32_1 = arith.constant 0 : i32
    return %arg0, %c0_i32, %c0_i32_0 : i32, i32, i32
  }
  func.func @transform_6(%arg0: i32) -> (i32, i32, i32) {
    %c0_i32 = arith.constant 0 : i32
    %c0_i32_0 = arith.constant 0 : i32
    %c0_i32_1 = arith.constant 0 : i32
    return %arg0, %c0_i32, %c0_i32_0 : i32, i32, i32
  }
  func.func @transform_7(%arg0: i32) -> (i32, i32, i32) {
    %c0_i32 = arith.constant 0 : i32
    %c0_i32_0 = arith.constant 0 : i32
    %c0_i32_1 = arith.constant 0 : i32
    return %arg0, %c0_i32, %c0_i32_0 : i32, i32, i32
  }
  func.func @transform_8(%arg0: i32) -> (i32, i32, i32) {
    %c0_i32 = arith.constant 0 : i32
    %c0_i32_0 = arith.constant 0 : i32
    %c0_i32_1 = arith.constant 0 : i32
    return %arg0, %c0_i32, %c0_i32_0 : i32, i32, i32
  }
  func.func @transform_9(%arg0: i32) -> (i32, i32, i32) {
    %c0_i32 = arith.constant 0 : i32
    %c0_i32_0 = arith.constant 0 : i32
    %c0_i32_1 = arith.constant 0 : i32
    return %arg0, %c0_i32, %c0_i32_0 : i32, i32, i32
  }
  func.func @transform_10(%arg0: i32) -> (i32, i32, i32) {
    %c0_i32 = arith.constant 0 : i32
    %c0_i32_0 = arith.constant 0 : i32
    %c0_i32_1 = arith.constant 0 : i32
    return %arg0, %c0_i32, %c0_i32_0 : i32, i32, i32
  }
  func.func @transform_11(%arg0: i32) -> (i32, i32, i32) {
    %c0_i32 = arith.constant 0 : i32
    %c0_i32_0 = arith.constant 0 : i32
    %c0_i32_1 = arith.constant 0 : i32
    return %arg0, %c0_i32, %c0_i32_0 : i32, i32, i32
  }
  func.func @transform_12(%arg0: i32) -> (i32, i32, i32) {
    %c0_i32 = arith.constant 0 : i32
    %c0_i32_0 = arith.constant 0 : i32
    %c0_i32_1 = arith.constant 0 : i32
    return %arg0, %c0_i32, %c0_i32_0 : i32, i32, i32
  }
}

module attributes {stable_mosaic.version = 11 : i64} {
  func.func @_fft_stack_mel_kernel(%arg0: i32, %arg1: i32, %arg2: i32, %arg3: memref<1x1x32x32xf32, #tpu.memory_space<vmem>>, %arg4: memref<1x1x32x1xf32, #tpu.memory_space<vmem>>, %arg5: memref<1x1x1x32xf32, #tpu.memory_space<vmem>>, %arg6: memref<1x1x32x96xbf16, #tpu.memory_space<vmem>>, %arg7: memref<1x1x1x96xf32, #tpu.memory_space<vmem>>, %arg8: memref<1x1x32x32xbf16, #tpu.memory_space<vmem>>, %arg9: memref<1x1x1x32xf32, #tpu.memory_space<vmem>>, %arg10: memref<1x1x1x32xf32, #tpu.memory_space<vmem>>, %arg11: memref<1x1x1x32xf32, #tpu.memory_space<vmem>>, %arg12: memref<1x1x96x64xbf16, #tpu.memory_space<vmem>>, %arg13: memref<1x1x1x64xf32, #tpu.memory_space<vmem>>, %arg14: memref<1x1x192x32xbf16, #tpu.memory_space<vmem>>, %arg15: memref<1x1x1x32xf32, #tpu.memory_space<vmem>>, %arg16: memref<1x1x1x32xf32, #tpu.memory_space<vmem>>, %arg17: memref<1x1x1x32xf32, #tpu.memory_space<vmem>>, %arg18: memref<1x32x16xbf16, #tpu.memory_space<vmem>>, %arg19: memref<1x1x16xf32, #tpu.memory_space<vmem>>, %arg20: memref<1x1x32x16xf32, #tpu.memory_space<vmem>>, %arg21: memref<32x32xf32, #tpu.memory_space<vmem>>) attributes {dimension_semantics = [#tpu.dimension_semantics<parallel>, #tpu.dimension_semantics<parallel>, #tpu.dimension_semantics<arbitrary>], iteration_bounds = array<i64: 2, 2, 1>, scalar_prefetch = 0 : i64, scratch_operands = 1 : i64, tpu.core_type = #tpu.core_type<tc>, window_params = [{transform_indices = @transform_0, window_bounds = array<i64: 1, 1, 32, 32>}, {transform_indices = @transform_1, window_bounds = array<i64: 1, 1, 32, 1>}, {transform_indices = @transform_2, window_bounds = array<i64: 1, 1, 1, 32>}, {transform_indices = @transform_3, window_bounds = array<i64: 1, 1, 32, 96>}, {transform_indices = @transform_4, window_bounds = array<i64: 1, 1, 1, 96>}, {transform_indices = @transform_5, window_bounds = array<i64: 1, 1, 32, 32>}, {transform_indices = @transform_6, window_bounds = array<i64: 1, 1, 1, 32>}, {transform_indices = @transform_7, window_bounds = array<i64: 1, 1, 1, 32>}, {transform_indices = @transform_8, window_bounds = array<i64: 1, 1, 1, 32>}, {transform_indices = @transform_9, window_bounds = array<i64: 1, 1, 96, 64>}, {transform_indices = @transform_10, window_bounds = array<i64: 1, 1, 1, 64>}, {transform_indices = @transform_11, window_bounds = array<i64: 1, 1, 192, 32>}, {transform_indices = @transform_12, window_bounds = array<i64: 1, 1, 1, 32>}, {transform_indices = @transform_13, window_bounds = array<i64: 1, 1, 1, 32>}, {transform_indices = @transform_14, window_bounds = array<i64: 1, 1, 1, 32>}, {transform_indices = @transform_15, window_bounds = array<i64: 1, 32, 16>}, {transform_indices = @transform_16, window_bounds = array<i64: 1, 1, 16>}, {transform_indices = @transform_17, window_bounds = array<i64: 1, 1, 32, 16>}]} {
    %c0_i32 = arith.constant 0 : i32
    %0 = arith.cmpi eq, %arg2, %c0_i32 : i32
    %1 = arith.extui %0 : i1 to i32
    %c0_i32_0 = arith.constant 0 : i32
    %2 = arith.cmpi ne, %1, %c0_i32_0 : i32
    scf.if %2 {
      %c0_105 = arith.constant 0 : index
      %c0_106 = arith.constant 0 : index
      %c0_107 = arith.constant 0 : index
      %c0_108 = arith.constant 0 : index
      %212 = vector.load %arg3[%c0_105, %c0_106, %c0_107, %c0_108] : memref<1x1x32x32xf32, #tpu.memory_space<vmem>>, vector<1x1x32x32xf32>
      %213 = vector.shape_cast %212 : vector<1x1x32x32xf32> to vector<32x32xf32>
      %c0_109 = arith.constant 0 : index
      %c0_110 = arith.constant 0 : index
      %214 = vector.load %arg21[%c0_109, %c0_110] : memref<32x32xf32, #tpu.memory_space<vmem>>, vector<32x32xf32>
      tpu.vector_store %arg21[%c0_109, %c0_110], %213 {strides = array<i32>} : memref<32x32xf32, #tpu.memory_space<vmem>>, vector<32x32xf32>,
    } else {
    }
    %c0 = arith.constant 0 : index
    %c0_1 = arith.constant 0 : index
    %3 = vector.load %arg21[%c0, %c0_1] : memref<32x32xf32, #tpu.memory_space<vmem>>, vector<32x32xf32>
    %c0_2 = arith.constant 0 : index
    %c0_3 = arith.constant 0 : index
    %c0_4 = arith.constant 0 : index
    %c0_5 = arith.constant 0 : index
    %4 = vector.load %arg4[%c0_2, %c0_3, %c0_4, %c0_5] : memref<1x1x32x1xf32, #tpu.memory_space<vmem>>, vector<1x1x32x1xf32>
    %5 = vector.shape_cast %4 : vector<1x1x32x1xf32> to vector<32x1xf32>
    %c0_6 = arith.constant 0 : index
    %c0_7 = arith.constant 0 : index
    %c0_8 = arith.constant 0 : index
    %c0_9 = arith.constant 0 : index
    %6 = vector.load %arg5[%c0_6, %c0_7, %c0_8, %c0_9] : memref<1x1x1x32xf32, #tpu.memory_space<vmem>>, vector<1x1x1x32xf32>
    %7 = vector.shape_cast %6 : vector<1x1x1x32xf32> to vector<1x32xf32>
    %cst = arith.constant 1.000000e+00 : f32
    %8 = vector.broadcast %cst : f32 to vector<1x32xf32>
    %9 = arith.subf %7, %8 : vector<1x32xf32>
    %cst_10 = arith.constant 1.000000e+09 : f32
    %10 = vector.broadcast %cst_10 : f32 to vector<1x32xf32>
    %11 = arith.mulf %9, %10 : vector<1x32xf32>
    %12 = tpu.iota {dimensions = array<i32: 0>} : vector<32x1xi32>
    %c31_i32 = arith.constant 31 : i32
    %13 = vector.broadcast %c31_i32 : i32 to vector<32x1xi32>
    %14 = arith.andi %12, %13 : vector<32x1xi32>
    %c0_11 = arith.constant 0 : index
    %c0_12 = arith.constant 0 : index
    %c0_13 = arith.constant 0 : index
    %c0_14 = arith.constant 0 : index
    %15 = vector.load %arg6[%c0_11, %c0_12, %c0_13, %c0_14] : memref<1x1x32x96xbf16, #tpu.memory_space<vmem>>, vector<1x1x32x96xbf16>
    %16 = vector.shape_cast %15 : vector<1x1x32x96xbf16> to vector<32x96xbf16>
    %c0_15 = arith.constant 0 : index
    %c0_16 = arith.constant 0 : index
    %c0_17 = arith.constant 0 : index
    %c0_18 = arith.constant 0 : index
    %17 = vector.load %arg7[%c0_15, %c0_16, %c0_17, %c0_18] : memref<1x1x1x96xf32, #tpu.memory_space<vmem>>, vector<1x1x1x96xf32>
    %18 = vector.shape_cast %17 : vector<1x1x1x96xf32> to vector<1x96xf32>
    %c0_19 = arith.constant 0 : index
    %c0_20 = arith.constant 0 : index
    %c0_21 = arith.constant 0 : index
    %c0_22 = arith.constant 0 : index
    %19 = vector.load %arg8[%c0_19, %c0_20, %c0_21, %c0_22] : memref<1x1x32x32xbf16, #tpu.memory_space<vmem>>, vector<1x1x32x32xbf16>
    %20 = vector.shape_cast %19 : vector<1x1x32x32xbf16> to vector<32x32xbf16>
    %c0_23 = arith.constant 0 : index
    %c0_24 = arith.constant 0 : index
    %c0_25 = arith.constant 0 : index
    %c0_26 = arith.constant 0 : index
    %21 = vector.load %arg9[%c0_23, %c0_24, %c0_25, %c0_26] : memref<1x1x1x32xf32, #tpu.memory_space<vmem>>, vector<1x1x1x32xf32>
    %22 = vector.shape_cast %21 : vector<1x1x1x32xf32> to vector<1x32xf32>
    %c0_27 = arith.constant 0 : index
    %c0_28 = arith.constant 0 : index
    %c0_29 = arith.constant 0 : index
    %c0_30 = arith.constant 0 : index
    %23 = vector.load %arg10[%c0_27, %c0_28, %c0_29, %c0_30] : memref<1x1x1x32xf32, #tpu.memory_space<vmem>>, vector<1x1x1x32xf32>
    %24 = vector.shape_cast %23 : vector<1x1x1x32xf32> to vector<1x32xf32>
    %c0_31 = arith.constant 0 : index
    %c0_32 = arith.constant 0 : index
    %c0_33 = arith.constant 0 : index
    %c0_34 = arith.constant 0 : index
    %25 = vector.load %arg11[%c0_31, %c0_32, %c0_33, %c0_34] : memref<1x1x1x32xf32, #tpu.memory_space<vmem>>, vector<1x1x1x32xf32>
    %26 = vector.shape_cast %25 : vector<1x1x1x32xf32> to vector<1x32xf32>
    %c0_35 = arith.constant 0 : index
    %c0_36 = arith.constant 0 : index
    %c0_37 = arith.constant 0 : index
    %c0_38 = arith.constant 0 : index
    %27 = vector.load %arg12[%c0_35, %c0_36, %c0_37, %c0_38] : memref<1x1x96x64xbf16, #tpu.memory_space<vmem>>, vector<1x1x96x64xbf16>
    %28 = vector.shape_cast %27 : vector<1x1x96x64xbf16> to vector<96x64xbf16>
    %c0_39 = arith.constant 0 : index
    %c0_40 = arith.constant 0 : index
    %c0_41 = arith.constant 0 : index
    %c0_42 = arith.constant 0 : index
    %29 = vector.load %arg13[%c0_39, %c0_40, %c0_41, %c0_42] : memref<1x1x1x64xf32, #tpu.memory_space<vmem>>, vector<1x1x1x64xf32>
    %30 = vector.shape_cast %29 : vector<1x1x1x64xf32> to vector<1x64xf32>
    %c0_43 = arith.constant 0 : index
    %c0_44 = arith.constant 0 : index
    %c0_45 = arith.constant 0 : index
    %c0_46 = arith.constant 0 : index
    %31 = vector.load %arg14[%c0_43, %c0_44, %c0_45, %c0_46] : memref<1x1x192x32xbf16, #tpu.memory_space<vmem>>, vector<1x1x192x32xbf16>
    %32 = vector.shape_cast %31 : vector<1x1x192x32xbf16> to vector<192x32xbf16>
    %c0_47 = arith.constant 0 : index
    %c0_48 = arith.constant 0 : index
    %c0_49 = arith.constant 0 : index
    %c0_50 = arith.constant 0 : index
    %33 = vector.load %arg15[%c0_47, %c0_48, %c0_49, %c0_50] : memref<1x1x1x32xf32, #tpu.memory_space<vmem>>, vector<1x1x1x32xf32>
    %34 = vector.shape_cast %33 : vector<1x1x1x32xf32> to vector<1x32xf32>
    %c0_51 = arith.constant 0 : index
    %c0_52 = arith.constant 0 : index
    %c0_53 = arith.constant 0 : index
    %c0_54 = arith.constant 0 : index
    %35 = vector.load %arg16[%c0_51, %c0_52, %c0_53, %c0_54] : memref<1x1x1x32xf32, #tpu.memory_space<vmem>>, vector<1x1x1x32xf32>
    %36 = vector.shape_cast %35 : vector<1x1x1x32xf32> to vector<1x32xf32>
    %c0_55 = arith.constant 0 : index
    %c0_56 = arith.constant 0 : index
    %c0_57 = arith.constant 0 : index
    %c0_58 = arith.constant 0 : index
    %37 = vector.load %arg17[%c0_55, %c0_56, %c0_57, %c0_58] : memref<1x1x1x32xf32, #tpu.memory_space<vmem>>, vector<1x1x1x32xf32>
    %38 = vector.shape_cast %37 : vector<1x1x1x32xf32> to vector<1x32xf32>
    %39 = arith.truncf %3 : vector<32x32xf32> to vector<32x32xbf16>
    %cst_59 = arith.constant dense<0.000000e+00> : vector<32x96xf32>
    %40 = tpu.matmul %39, %16, %cst_59 {dimension_numbers = #tpu.dot_dimension_numbers<[1], [0], [0], [1], [0, 0, 1, 1], [], []>} : vector<32x32xbf16>, vector<32x96xbf16>, vector<32x96xf32> -> vector<32x96xf32>
    %41 = vector.broadcast %18 : vector<1x96xf32> to vector<32x96xf32>
    %42 = arith.addf %40, %41 : vector<32x96xf32>
    %43 = vector.extract_strided_slice %42 {offsets = [0, 0], sizes = [32, 16], strides = [1, 1]} : vector<32x96xf32> to vector<32x16xf32>
    %44 = arith.truncf %43 : vector<32x16xf32> to vector<32x16xbf16>
    %45 = vector.extract_strided_slice %42 {offsets = [0, 32], sizes = [32, 16], strides = [1, 1]} : vector<32x96xf32> to vector<32x16xf32>
    %46 = arith.truncf %45 : vector<32x16xf32> to vector<32x16xbf16>
    %47 = vector.extract_strided_slice %42 {offsets = [0, 64], sizes = [32, 16], strides = [1, 1]} : vector<32x96xf32> to vector<32x16xf32>
    %48 = arith.truncf %47 : vector<32x16xf32> to vector<32x16xbf16>
    %cst_60 = arith.constant dense<0.000000e+00> : vector<32x32xf32>
    %49 = tpu.matmul %44, %46, %cst_60 {dimension_numbers = #tpu.dot_dimension_numbers<[1], [1], [0], [0], [0, 0, 1, 0], [], []>} : vector<32x16xbf16>, vector<32x16xbf16>, vector<32x32xf32> -> vector<32x32xf32>
    %cst_61 = arith.constant 2.500000e-01 : f32
    %50 = vector.broadcast %cst_61 : f32 to vector<32x32xf32>
    %51 = arith.mulf %49, %50 : vector<32x32xf32>
    %52 = vector.broadcast %11 : vector<1x32xf32> to vector<32x32xf32>
    %53 = arith.addf %51, %52 : vector<32x32xf32>
    %cst_62 = arith.constant dense<0xFF800000> : vector<32xf32>
    %54 = vector.multi_reduction <maximumf>, %53, %cst_62 [1] : vector<32x32xf32> to vector<32xf32>
    %55 = vector.shape_cast %54 : vector<32xf32> to vector<32x1xf32>
    %56 = vector.broadcast %55 : vector<32x1xf32> to vector<32x32xf32>
    %57 = arith.subf %53, %56 : vector<32x32xf32>
    %58 = math.exp %57 : vector<32x32xf32>
    %cst_63 = arith.constant dense<0.000000e+00> : vector<32xf32>
    %59 = vector.multi_reduction <add>, %58, %cst_63 [1] : vector<32x32xf32> to vector<32xf32>
    %60 = vector.shape_cast %59 : vector<32xf32> to vector<32x1xf32>
    %61 = tpu.reciprocal %60 {approx = true} : vector<32x1xf32> -> vector<32x1xf32>
    %62 = vector.broadcast %61 : vector<32x1xf32> to vector<32x32xf32>
    %63 = arith.mulf %58, %62 : vector<32x32xf32>
    %64 = arith.truncf %63 : vector<32x32xf32> to vector<32x32xbf16>
    %cst_64 = arith.constant dense<0.000000e+00> : vector<32x16xf32>
    %65 = tpu.matmul %64, %48, %cst_64 {dimension_numbers = #tpu.dot_dimension_numbers<[1], [0], [0], [1], [0, 0, 1, 1], [], []>} : vector<32x32xbf16>, vector<32x16xbf16>, vector<32x16xf32> -> vector<32x16xf32>
    %66 = vector.extract_strided_slice %42 {offsets = [0, 16], sizes = [32, 16], strides = [1, 1]} : vector<32x96xf32> to vector<32x16xf32>
    %67 = arith.truncf %66 : vector<32x16xf32> to vector<32x16xbf16>
    %68 = vector.extract_strided_slice %42 {offsets = [0, 48], sizes = [32, 16], strides = [1, 1]} : vector<32x96xf32> to vector<32x16xf32>
    %69 = arith.truncf %68 : vector<32x16xf32> to vector<32x16xbf16>
    %70 = vector.extract_strided_slice %42 {offsets = [0, 80], sizes = [32, 16], strides = [1, 1]} : vector<32x96xf32> to vector<32x16xf32>
    %71 = arith.truncf %70 : vector<32x16xf32> to vector<32x16xbf16>
    %cst_65 = arith.constant dense<0.000000e+00> : vector<32x32xf32>
    %72 = tpu.matmul %67, %69, %cst_65 {dimension_numbers = #tpu.dot_dimension_numbers<[1], [1], [0], [0], [0, 0, 1, 0], [], []>} : vector<32x16xbf16>, vector<32x16xbf16>, vector<32x32xf32> -> vector<32x32xf32>
    %cst_66 = arith.constant 2.500000e-01 : f32
    %73 = vector.broadcast %cst_66 : f32 to vector<32x32xf32>
    %74 = arith.mulf %72, %73 : vector<32x32xf32>
    %75 = vector.broadcast %11 : vector<1x32xf32> to vector<32x32xf32>
    %76 = arith.addf %74, %75 : vector<32x32xf32>
    %cst_67 = arith.constant dense<0xFF800000> : vector<32xf32>
    %77 = vector.multi_reduction <maximumf>, %76, %cst_67 [1] : vector<32x32xf32> to vector<32xf32>
    %78 = vector.shape_cast %77 : vector<32xf32> to vector<32x1xf32>
    %79 = vector.broadcast %78 : vector<32x1xf32> to vector<32x32xf32>
    %80 = arith.subf %76, %79 : vector<32x32xf32>
    %81 = math.exp %80 : vector<32x32xf32>
    %cst_68 = arith.constant dense<0.000000e+00> : vector<32xf32>
    %82 = vector.multi_reduction <add>, %81, %cst_68 [1] : vector<32x32xf32> to vector<32xf32>
    %83 = vector.shape_cast %82 : vector<32xf32> to vector<32x1xf32>
    %84 = tpu.reciprocal %83 {approx = true} : vector<32x1xf32> -> vector<32x1xf32>
    %85 = vector.broadcast %84 : vector<32x1xf32> to vector<32x32xf32>
    %86 = arith.mulf %81, %85 : vector<32x32xf32>
    %87 = arith.truncf %86 : vector<32x32xf32> to vector<32x32xbf16>
    %cst_69 = arith.constant dense<0.000000e+00> : vector<32x16xf32>
    %88 = tpu.matmul %87, %71, %cst_69 {dimension_numbers = #tpu.dot_dimension_numbers<[1], [0], [0], [1], [0, 0, 1, 1], [], []>} : vector<32x32xbf16>, vector<32x16xbf16>, vector<32x16xf32> -> vector<32x16xf32>
    %89 = tpu.concatenate %65, %88 in 1 : vector<32x16xf32>, vector<32x16xf32> -> vector<32x32xf32>
    %90 = arith.truncf %89 : vector<32x32xf32> to vector<32x32xbf16>
    %cst_70 = arith.constant dense<0.000000e+00> : vector<32x32xf32>
    %91 = tpu.matmul %90, %20, %cst_70 {dimension_numbers = #tpu.dot_dimension_numbers<[1], [0], [0], [1], [0, 0, 1, 1], [], []>} : vector<32x32xbf16>, vector<32x32xbf16>, vector<32x32xf32> -> vector<32x32xf32>
    %92 = vector.broadcast %22 : vector<1x32xf32> to vector<32x32xf32>
    %93 = arith.addf %91, %92 : vector<32x32xf32>
    %94 = arith.addf %93, %3 : vector<32x32xf32>
    %cst_71 = arith.constant dense<0.000000e+00> : vector<32xf32>
    %95 = vector.multi_reduction <add>, %94, %cst_71 [1] : vector<32x32xf32> to vector<32xf32>
    %96 = vector.shape_cast %95 : vector<32xf32> to vector<32x1xf32>
    %cst_72 = arith.constant 3.200000e+01 : f32
    %97 = vector.broadcast %cst_72 : f32 to vector<32x1xf32>
    %98 = arith.divf %96, %97 : vector<32x1xf32>
    %99 = vector.broadcast %98 : vector<32x1xf32> to vector<32x32xf32>
    %100 = arith.subf %94, %99 : vector<32x32xf32>
    %101 = arith.mulf %100, %100 : vector<32x32xf32>
    %cst_73 = arith.constant dense<0.000000e+00> : vector<32xf32>
    %102 = vector.multi_reduction <add>, %101, %cst_73 [1] : vector<32x32xf32> to vector<32xf32>
    %103 = vector.shape_cast %102 : vector<32xf32> to vector<32x1xf32>
    %cst_74 = arith.constant 3.200000e+01 : f32
    %104 = vector.broadcast %cst_74 : f32 to vector<32x1xf32>
    %105 = arith.divf %103, %104 : vector<32x1xf32>
    %cst_75 = arith.constant 9.99999974E-6 : f32
    %106 = vector.broadcast %cst_75 : f32 to vector<32x1xf32>
    %107 = arith.addf %105, %106 : vector<32x1xf32>
    %108 = math.rsqrt %107 : vector<32x1xf32>
    %109 = vector.broadcast %108 : vector<32x1xf32> to vector<32x32xf32>
    %110 = arith.mulf %100, %109 : vector<32x32xf32>
    %111 = vector.broadcast %24 : vector<1x32xf32> to vector<32x32xf32>
    %112 = arith.mulf %110, %111 : vector<32x32xf32>
    %113 = vector.broadcast %26 : vector<1x32xf32> to vector<32x32xf32>
    %114 = arith.addf %112, %113 : vector<32x32xf32>
    %115 = vector.broadcast %5 : vector<32x1xf32> to vector<32x32xf32>
    %116 = arith.mulf %114, %115 : vector<32x32xf32>
    %c1_i32 = arith.constant 1 : i32
    %117 = tpu.dynamic_rotate %116 by %c1_i32 dim 0 : vector<32x32xf32>, i32 -> vector<32x32xf32>
    %c-1_i32 = arith.constant -1 : i32
    %118 = vector.broadcast %c-1_i32 : i32 to vector<32x1xi32>
    %119 = arith.addi %14, %118 : vector<32x1xi32>
    %c0_i32_76 = arith.constant 0 : i32
    %120 = vector.broadcast %c0_i32_76 : i32 to vector<32x1xi32>
    %121 = arith.cmpi sge, %119, %120 : vector<32x1xi32>
    %c-1_i32_77 = arith.constant -1 : i32
    %122 = vector.broadcast %c-1_i32_77 : i32 to vector<32x1xi32>
    %123 = arith.addi %14, %122 : vector<32x1xi32>
    %c32_i32 = arith.constant 32 : i32
    %124 = vector.broadcast %c32_i32 : i32 to vector<32x1xi32>
    %125 = arith.cmpi slt, %123, %124 : vector<32x1xi32>
    %126 = arith.andi %121, %125 : vector<32x1xi1>
    %127 = arith.extui %126 : vector<32x1xi1> to vector<32x1xi32>
    %128 = arith.sitofp %127 : vector<32x1xi32> to vector<32x1xf32>
    %129 = vector.broadcast %128 : vector<32x1xf32> to vector<32x32xf32>
    %130 = arith.mulf %117, %129 : vector<32x32xf32>
    %c31_i32_78 = arith.constant 31 : i32
    %131 = tpu.dynamic_rotate %116 by %c31_i32_78 dim 0 : vector<32x32xf32>, i32 -> vector<32x32xf32>
    %c1_i32_79 = arith.constant 1 : i32
    %132 = vector.broadcast %c1_i32_79 : i32 to vector<32x1xi32>
    %133 = arith.addi %14, %132 : vector<32x1xi32>
    %c0_i32_80 = arith.constant 0 : i32
    %134 = vector.broadcast %c0_i32_80 : i32 to vector<32x1xi32>
    %135 = arith.cmpi sge, %133, %134 : vector<32x1xi32>
    %c1_i32_81 = arith.constant 1 : i32
    %136 = vector.broadcast %c1_i32_81 : i32 to vector<32x1xi32>
    %137 = arith.addi %14, %136 : vector<32x1xi32>
    %c32_i32_82 = arith.constant 32 : i32
    %138 = vector.broadcast %c32_i32_82 : i32 to vector<32x1xi32>
    %139 = arith.cmpi slt, %137, %138 : vector<32x1xi32>
    %140 = arith.andi %135, %139 : vector<32x1xi1>
    %141 = arith.extui %140 : vector<32x1xi1> to vector<32x1xi32>
    %142 = arith.sitofp %141 : vector<32x1xi32> to vector<32x1xf32>
    %143 = vector.broadcast %142 : vector<32x1xf32> to vector<32x32xf32>
    %144 = arith.mulf %131, %143 : vector<32x32xf32>
    %145 = tpu.concatenate %130, %116, %144 in 1 : vector<32x32xf32>, vector<32x32xf32>, vector<32x32xf32> -> vector<32x96xf32>
    %146 = arith.truncf %145 : vector<32x96xf32> to vector<32x96xbf16>
    %cst_83 = arith.constant dense<0.000000e+00> : vector<32x64xf32>
    %147 = tpu.matmul %146, %28, %cst_83 {dimension_numbers = #tpu.dot_dimension_numbers<[1], [0], [0], [1], [0, 0, 1, 1], [], []>} : vector<32x96xbf16>, vector<96x64xbf16>, vector<32x64xf32> -> vector<32x64xf32>
    %148 = vector.broadcast %30 : vector<1x64xf32> to vector<32x64xf32>
    %149 = arith.addf %147, %148 : vector<32x64xf32>
    %cst_84 = arith.constant 0.000000e+00 : f32
    %150 = vector.broadcast %cst_84 : f32 to vector<32x64xf32>
    %151 = arith.maximumf %149, %150 : vector<32x64xf32>
    %c1_i32_85 = arith.constant 1 : i32
    %152 = tpu.dynamic_rotate %151 by %c1_i32_85 dim 0 : vector<32x64xf32>, i32 -> vector<32x64xf32>
    %c-1_i32_86 = arith.constant -1 : i32
    %153 = vector.broadcast %c-1_i32_86 : i32 to vector<32x1xi32>
    %154 = arith.addi %14, %153 : vector<32x1xi32>
    %c0_i32_87 = arith.constant 0 : i32
    %155 = vector.broadcast %c0_i32_87 : i32 to vector<32x1xi32>
    %156 = arith.cmpi sge, %154, %155 : vector<32x1xi32>
    %c-1_i32_88 = arith.constant -1 : i32
    %157 = vector.broadcast %c-1_i32_88 : i32 to vector<32x1xi32>
    %158 = arith.addi %14, %157 : vector<32x1xi32>
    %c32_i32_89 = arith.constant 32 : i32
    %159 = vector.broadcast %c32_i32_89 : i32 to vector<32x1xi32>
    %160 = arith.cmpi slt, %158, %159 : vector<32x1xi32>
    %161 = arith.andi %156, %160 : vector<32x1xi1>
    %162 = arith.extui %161 : vector<32x1xi1> to vector<32x1xi32>
    %163 = arith.sitofp %162 : vector<32x1xi32> to vector<32x1xf32>
    %164 = vector.broadcast %163 : vector<32x1xf32> to vector<32x64xf32>
    %165 = arith.mulf %152, %164 : vector<32x64xf32>
    %c31_i32_90 = arith.constant 31 : i32
    %166 = tpu.dynamic_rotate %151 by %c31_i32_90 dim 0 : vector<32x64xf32>, i32 -> vector<32x64xf32>
    %c1_i32_91 = arith.constant 1 : i32
    %167 = vector.broadcast %c1_i32_91 : i32 to vector<32x1xi32>
    %168 = arith.addi %14, %167 : vector<32x1xi32>
    %c0_i32_92 = arith.constant 0 : i32
    %169 = vector.broadcast %c0_i32_92 : i32 to vector<32x1xi32>
    %170 = arith.cmpi sge, %168, %169 : vector<32x1xi32>
    %c1_i32_93 = arith.constant 1 : i32
    %171 = vector.broadcast %c1_i32_93 : i32 to vector<32x1xi32>
    %172 = arith.addi %14, %171 : vector<32x1xi32>
    %c32_i32_94 = arith.constant 32 : i32
    %173 = vector.broadcast %c32_i32_94 : i32 to vector<32x1xi32>
    %174 = arith.cmpi slt, %172, %173 : vector<32x1xi32>
    %175 = arith.andi %170, %174 : vector<32x1xi1>
    %176 = arith.extui %175 : vector<32x1xi1> to vector<32x1xi32>
    %177 = arith.sitofp %176 : vector<32x1xi32> to vector<32x1xf32>
    %178 = vector.broadcast %177 : vector<32x1xf32> to vector<32x64xf32>
    %179 = arith.mulf %166, %178 : vector<32x64xf32>
    %180 = tpu.concatenate %165, %151, %179 in 1 : vector<32x64xf32>, vector<32x64xf32>, vector<32x64xf32> -> vector<32x192xf32>
    %181 = arith.truncf %180 : vector<32x192xf32> to vector<32x192xbf16>
    %cst_95 = arith.constant dense<0.000000e+00> : vector<32x32xf32>
    %182 = tpu.matmul %181, %32, %cst_95 {dimension_numbers = #tpu.dot_dimension_numbers<[1], [0], [0], [1], [0, 0, 1, 1], [], []>} : vector<32x192xbf16>, vector<192x32xbf16>, vector<32x32xf32> -> vector<32x32xf32>
    %183 = vector.broadcast %34 : vector<1x32xf32> to vector<32x32xf32>
    %184 = arith.addf %182, %183 : vector<32x32xf32>
    %185 = arith.addf %184, %116 : vector<32x32xf32>
    %cst_96 = arith.constant dense<0.000000e+00> : vector<32xf32>
    %186 = vector.multi_reduction <add>, %185, %cst_96 [1] : vector<32x32xf32> to vector<32xf32>
    %187 = vector.shape_cast %186 : vector<32xf32> to vector<32x1xf32>
    %cst_97 = arith.constant 3.200000e+01 : f32
    %188 = vector.broadcast %cst_97 : f32 to vector<32x1xf32>
    %189 = arith.divf %187, %188 : vector<32x1xf32>
    %190 = vector.broadcast %189 : vector<32x1xf32> to vector<32x32xf32>
    %191 = arith.subf %185, %190 : vector<32x32xf32>
    %192 = arith.mulf %191, %191 : vector<32x32xf32>
    %cst_98 = arith.constant dense<0.000000e+00> : vector<32xf32>
    %193 = vector.multi_reduction <add>, %192, %cst_98 [1] : vector<32x32xf32> to vector<32xf32>
    %194 = vector.shape_cast %193 : vector<32xf32> to vector<32x1xf32>
    %cst_99 = arith.constant 3.200000e+01 : f32
    %195 = vector.broadcast %cst_99 : f32 to vector<32x1xf32>
    %196 = arith.divf %194, %195 : vector<32x1xf32>
    %cst_100 = arith.constant 9.99999974E-6 : f32
    %197 = vector.broadcast %cst_100 : f32 to vector<32x1xf32>
    %198 = arith.addf %196, %197 : vector<32x1xf32>
    %199 = math.rsqrt %198 : vector<32x1xf32>
    %200 = vector.broadcast %199 : vector<32x1xf32> to vector<32x32xf32>
    %201 = arith.mulf %191, %200 : vector<32x32xf32>
    %202 = vector.broadcast %36 : vector<1x32xf32> to vector<32x32xf32>
    %203 = arith.mulf %201, %202 : vector<32x32xf32>
    %204 = vector.broadcast %38 : vector<1x32xf32> to vector<32x32xf32>
    %205 = arith.addf %203, %204 : vector<32x32xf32>
    %206 = vector.broadcast %5 : vector<32x1xf32> to vector<32x32xf32>
    %207 = arith.mulf %205, %206 : vector<32x32xf32>
    %c0_101 = arith.constant 0 : index
    %c0_102 = arith.constant 0 : index
    %208 = vector.load %arg21[%c0_101, %c0_102] : memref<32x32xf32, #tpu.memory_space<vmem>>, vector<32x32xf32>
    tpu.vector_store %arg21[%c0_101, %c0_102], %207 {strides = array<i32>} : memref<32x32xf32, #tpu.memory_space<vmem>>, vector<32x32xf32>,
    %c0_i32_103 = arith.constant 0 : i32
    %209 = arith.cmpi eq, %arg2, %c0_i32_103 : i32
    %210 = arith.extui %209 : i1 to i32
    %c0_i32_104 = arith.constant 0 : i32
    %211 = arith.cmpi ne, %210, %c0_i32_104 : i32
    scf.if %211 {
      %212 = arith.truncf %207 : vector<32x32xf32> to vector<32x32xbf16>
      %c0_105 = arith.constant 0 : index
      %c0_106 = arith.constant 0 : index
      %c0_107 = arith.constant 0 : index
      %213 = vector.load %arg18[%c0_105, %c0_106, %c0_107] : memref<1x32x16xbf16, #tpu.memory_space<vmem>>, vector<1x32x16xbf16>
      %214 = vector.shape_cast %213 : vector<1x32x16xbf16> to vector<32x16xbf16>
      %cst_108 = arith.constant dense<0.000000e+00> : vector<32x16xf32>
      %215 = tpu.matmul %212, %214, %cst_108 {dimension_numbers = #tpu.dot_dimension_numbers<[1], [0], [0], [1], [0, 0, 1, 1], [], []>} : vector<32x32xbf16>, vector<32x16xbf16>, vector<32x16xf32> -> vector<32x16xf32>
      %c0_109 = arith.constant 0 : index
      %c0_110 = arith.constant 0 : index
      %c0_111 = arith.constant 0 : index
      %216 = vector.load %arg19[%c0_109, %c0_110, %c0_111] : memref<1x1x16xf32, #tpu.memory_space<vmem>>, vector<1x1x16xf32>
      %217 = vector.shape_cast %216 : vector<1x1x16xf32> to vector<1x16xf32>
      %218 = vector.broadcast %217 : vector<1x16xf32> to vector<32x16xf32>
      %219 = arith.addf %215, %218 : vector<32x16xf32>
      %c0_112 = arith.constant 0 : index
      %c0_113 = arith.constant 0 : index
      %c0_114 = arith.constant 0 : index
      %c0_115 = arith.constant 0 : index
      %220 = vector.load %arg20[%c0_112, %c0_113, %c0_114, %c0_115] : memref<1x1x32x16xf32, #tpu.memory_space<vmem>>, vector<1x1x32x16xf32>
      %221 = vector.shape_cast %220 : vector<1x1x32x16xf32> to vector<32x16xf32>
      %222 = vector.shape_cast %219 : vector<32x16xf32> to vector<1x1x32x16xf32>
      tpu.vector_store %arg20[%c0_112, %c0_113, %c0_114, %c0_115], %222 {strides = array<i32>} : memref<1x1x32x16xf32, #tpu.memory_space<vmem>>, vector<1x1x32x16xf32>,
    } else {
    }
    return
  }
  func.func @transform_0(%arg0: i32, %arg1: i32, %arg2: i32) -> (i32, i32, i32, i32) {
    %c0_i32 = arith.constant 0 : i32
    %c0_i32_0 = arith.constant 0 : i32
    %c0_i32_1 = arith.constant 0 : i32
    return %arg0, %arg1, %c0_i32, %c0_i32_0 : i32, i32, i32, i32
  }
  func.func @transform_1(%arg0: i32, %arg1: i32, %arg2: i32) -> (i32, i32, i32, i32) {
    %c0_i32 = arith.constant 0 : i32
    %c0_i32_0 = arith.constant 0 : i32
    %c0_i32_1 = arith.constant 0 : i32
    return %arg0, %arg1, %c0_i32, %c0_i32_0 : i32, i32, i32, i32
  }
  func.func @transform_2(%arg0: i32, %arg1: i32, %arg2: i32) -> (i32, i32, i32, i32) {
    %c0_i32 = arith.constant 0 : i32
    %c0_i32_0 = arith.constant 0 : i32
    %c0_i32_1 = arith.constant 0 : i32
    return %arg0, %arg1, %c0_i32, %c0_i32_0 : i32, i32, i32, i32
  }
  func.func @transform_3(%arg0: i32, %arg1: i32, %arg2: i32) -> (i32, i32, i32, i32) {
    %c0_i32 = arith.constant 0 : i32
    %c0_i32_0 = arith.constant 0 : i32
    %c0_i32_1 = arith.constant 0 : i32
    return %arg0, %arg2, %c0_i32, %c0_i32_0 : i32, i32, i32, i32
  }
  func.func @transform_4(%arg0: i32, %arg1: i32, %arg2: i32) -> (i32, i32, i32, i32) {
    %c0_i32 = arith.constant 0 : i32
    %c0_i32_0 = arith.constant 0 : i32
    %c0_i32_1 = arith.constant 0 : i32
    return %arg0, %arg2, %c0_i32, %c0_i32_0 : i32, i32, i32, i32
  }
  func.func @transform_5(%arg0: i32, %arg1: i32, %arg2: i32) -> (i32, i32, i32, i32) {
    %c0_i32 = arith.constant 0 : i32
    %c0_i32_0 = arith.constant 0 : i32
    %c0_i32_1 = arith.constant 0 : i32
    return %arg0, %arg2, %c0_i32, %c0_i32_0 : i32, i32, i32, i32
  }
  func.func @transform_6(%arg0: i32, %arg1: i32, %arg2: i32) -> (i32, i32, i32, i32) {
    %c0_i32 = arith.constant 0 : i32
    %c0_i32_0 = arith.constant 0 : i32
    %c0_i32_1 = arith.constant 0 : i32
    return %arg0, %arg2, %c0_i32, %c0_i32_0 : i32, i32, i32, i32
  }
  func.func @transform_7(%arg0: i32, %arg1: i32, %arg2: i32) -> (i32, i32, i32, i32) {
    %c0_i32 = arith.constant 0 : i32
    %c0_i32_0 = arith.constant 0 : i32
    %c0_i32_1 = arith.constant 0 : i32
    return %arg0, %arg2, %c0_i32, %c0_i32_0 : i32, i32, i32, i32
  }
  func.func @transform_8(%arg0: i32, %arg1: i32, %arg2: i32) -> (i32, i32, i32, i32) {
    %c0_i32 = arith.constant 0 : i32
    %c0_i32_0 = arith.constant 0 : i32
    %c0_i32_1 = arith.constant 0 : i32
    return %arg0, %arg2, %c0_i32, %c0_i32_0 : i32, i32, i32, i32
  }
  func.func @transform_9(%arg0: i32, %arg1: i32, %arg2: i32) -> (i32, i32, i32, i32) {
    %c0_i32 = arith.constant 0 : i32
    %c0_i32_0 = arith.constant 0 : i32
    %c0_i32_1 = arith.constant 0 : i32
    return %arg0, %arg2, %c0_i32, %c0_i32_0 : i32, i32, i32, i32
  }
  func.func @transform_10(%arg0: i32, %arg1: i32, %arg2: i32) -> (i32, i32, i32, i32) {
    %c0_i32 = arith.constant 0 : i32
    %c0_i32_0 = arith.constant 0 : i32
    %c0_i32_1 = arith.constant 0 : i32
    return %arg0, %arg2, %c0_i32, %c0_i32_0 : i32, i32, i32, i32
  }
  func.func @transform_11(%arg0: i32, %arg1: i32, %arg2: i32) -> (i32, i32, i32, i32) {
    %c0_i32 = arith.constant 0 : i32
    %c0_i32_0 = arith.constant 0 : i32
    %c0_i32_1 = arith.constant 0 : i32
    return %arg0, %arg2, %c0_i32, %c0_i32_0 : i32, i32, i32, i32
  }
  func.func @transform_12(%arg0: i32, %arg1: i32, %arg2: i32) -> (i32, i32, i32, i32) {
    %c0_i32 = arith.constant 0 : i32
    %c0_i32_0 = arith.constant 0 : i32
    %c0_i32_1 = arith.constant 0 : i32
    return %arg0, %arg2, %c0_i32, %c0_i32_0 : i32, i32, i32, i32
  }
  func.func @transform_13(%arg0: i32, %arg1: i32, %arg2: i32) -> (i32, i32, i32, i32) {
    %c0_i32 = arith.constant 0 : i32
    %c0_i32_0 = arith.constant 0 : i32
    %c0_i32_1 = arith.constant 0 : i32
    return %arg0, %arg2, %c0_i32, %c0_i32_0 : i32, i32, i32, i32
  }
  func.func @transform_14(%arg0: i32, %arg1: i32, %arg2: i32) -> (i32, i32, i32, i32) {
    %c0_i32 = arith.constant 0 : i32
    %c0_i32_0 = arith.constant 0 : i32
    %c0_i32_1 = arith.constant 0 : i32
    return %arg0, %arg2, %c0_i32, %c0_i32_0 : i32, i32, i32, i32
  }
  func.func @transform_15(%arg0: i32, %arg1: i32, %arg2: i32) -> (i32, i32, i32) {
    %c0_i32 = arith.constant 0 : i32
    %c0_i32_0 = arith.constant 0 : i32
    %c0_i32_1 = arith.constant 0 : i32
    return %arg0, %c0_i32, %c0_i32_0 : i32, i32, i32
  }
  func.func @transform_16(%arg0: i32, %arg1: i32, %arg2: i32) -> (i32, i32, i32) {
    %c0_i32 = arith.constant 0 : i32
    %c0_i32_0 = arith.constant 0 : i32
    %c0_i32_1 = arith.constant 0 : i32
    return %arg0, %c0_i32, %c0_i32_0 : i32, i32, i32
  }
  func.func @transform_17(%arg0: i32, %arg1: i32, %arg2: i32) -> (i32, i32, i32, i32) {
    %c0_i32 = arith.constant 0 : i32
    %c0_i32_0 = arith.constant 0 : i32
    %c0_i32_1 = arith.constant 0 : i32
    return %arg0, %arg1, %c0_i32, %c0_i32_0 : i32, i32, i32, i32
  }
}

</mosaic_0001>

<llo_original>
// kernel: squeeze.10
$region0: #{squeeze.10}
  %s0 = inlined_call_operand.vmem [shape: f32[16], index: 0, kind: input, shape index: {}]
  %s1 = inlined_call_operand.vmem [shape: f32[2,8], index: 1, kind: output, shape index: {}]
  $region1: #{squeeze.10} parent=0
    #allocation0 [shape = 'u8[4096]{0}', space=vmem, size = 0x1000, scoped, tag = 'scoped mem for output reshape']
    #allocation1 [shape = 'u8[4096]{0}', space=vmem, size = 0x1000, scoped, tag = 'scoped mem for input reshape']
    %s3 = sshllo.u32 0, 1
    %v4 = vld [vmem:[%s0] sm:%s3]
    %5 = vst [vmem:[#allocation1] sm:%s3] %v4
    %v6 = vld [vmem:[#allocation1] sm:$0x1]
    %vm7 = vcmask 64512
    %8 = vst.msk [vmem:[#allocation0] sm:$0x1] %vm7, %v6
    %v9 = vld [vmem:[#allocation1] sm:$0x1]
    %10 = vrot.lane.b32.xlu0 %v9, 120
    %v11 = vpop.permute.xlu0 %10
    %vm12 = vcmask 64512
    %s13 = scalar_lea.vmem [#allocation0], 1
    %14 = vst.msk [vmem:[%s13] sm:$0x1] %vm12, %v11
    %s16 = sshllo.u32 0, 2
    %v18 = vld [vmem:[#allocation0] sm:%s16]
    %s19 = sshllo.u32 0, 2
    %20 = vst [vmem:[%s1] sm:%s19] %v18

// kernel: ne.4
$region0: #{ne.4}
  #allocation0 [shape = 's32[1]{0}', space=sflag, size = 0x4, scoped, tag = 'scoped memory for ne.4']
  %s0 = inlined_call_operand.vmem [shape: f32[2,8], index: 0, kind: input, shape index: {}, may-alias: {0,1}]
  %s1 = inlined_call_operand.vmem [shape: f32[2,8], index: 1, kind: input, shape index: {}, may-alias: {0,1}]
  %s2 = inlined_call_operand.vmem [shape: pred[2,8], index: 2, kind: output, shape index: {}]
  %v3 = vld [vmem:[%s0] sm:$0x3]
  %v4 = vld [vmem:[%s1] sm:$0x3]
  %5 = xla_tuple %v3, %v4
  %6 = xla_tuple %5
  %vm7 = vcmp.ne.f32.partialorder %v3, %v4
  %v8 = vsel %vm7, 1, 0
  %9 = xla_tuple %v8
  %v10 = vpack.c.b16 0, %v8
  %v11 = vpack.c.b8 0, %v10
  %13 = vst [vmem:[%s2] sm:$0x1] %v11

// kernel: custom-call.4
$region0: #{custom-call.4}
  %s0 = inlined_call_operand.vmem [shape: u32[2,8], index: 0, kind: output, shape index: {}]

// kernel: fastspeech2_forward.4
$region0: #{fastspeech2_forward.4}
  #allocation0 [shape = 'u32[]', space=smem, size = 0x4, offset = 0x4, fixed_abs, tag = 'smem constant byte address 0x4 - core index']
  #allocation1 [shape = 'u32[144,128]{1,0:T(1,128)}', space=vmem, size = 0x12000, scoped, tag = 'internal scratch']
  %s0 = inlined_call_operand.vmem [shape: f32[16,32], index: 0, kind: input, shape index: {}]
  %s1 = inlined_call_operand.vmem [shape: f32[16,1], index: 1, kind: input, shape index: {}]
  %s2 = inlined_call_operand.vmem [shape: bf16[2,96,32], index: 2, kind: input, shape index: {}]
  %s3 = inlined_call_operand.vmem [shape: f32[2,1,32], index: 3, kind: input, shape index: {}]
  %s4 = inlined_call_operand.vmem [shape: f32[2,1,32], index: 4, kind: input, shape index: {}]
  %s5 = inlined_call_operand.vmem [shape: f32[2,1,32], index: 5, kind: input, shape index: {}]
  %s6 = inlined_call_operand.vmem [shape: bf16[2,96,32], index: 6, kind: input, shape index: {}]
  %s7 = inlined_call_operand.vmem [shape: f32[2,1,32], index: 7, kind: input, shape index: {}]
  %s8 = inlined_call_operand.vmem [shape: f32[2,1,32], index: 8, kind: input, shape index: {}]
  %s9 = inlined_call_operand.vmem [shape: f32[2,1,32], index: 9, kind: input, shape index: {}]
  %s10 = inlined_call_operand.vmem [shape: bf16[2,32,1], index: 10, kind: input, shape index: {}]
  %s11 = inlined_call_operand.vmem [shape: f32[2,1,1], index: 11, kind: input, shape index: {}]
  %s12 = inlined_call_operand.vmem [shape: f32[2,16,1], index: 12, kind: output, shape index: {}]
  %s13 = sld [smem:[#allocation0]]
  $region81: #{fastspeech2_forward.4} parent=0
    _
  %s15 = ssub.s32 1, %s13
  %s16 = scalar_select 0, %s15, %s13
  loop: start=0, step=1, limit=4
  $region2: #{fastspeech2_forward.4} parent=0 // loop_pre_header
    _
  $region3: #{fastspeech2_forward.4} parent=0 // loop_header
    %s18 = sphi 0, %s22
    %p19 = scmp.ge.s32.totalorder %s18, 4
    %s26 = sphi 0, %s26
    %s28 = sphi 0, %s26
    %s29 = sphi 0, %s28
    %s43 = sphi 0, %s29
    %s47 = sphi 0, %s47
    %s49 = sphi 0, %s47
    %s50 = sphi 0, %s49
    %s64 = sphi 0, %s50
    %s70 = sphi 0, %s72
    %s73 = sphi 0, %s70
    %s74 = sphi 0, %s73
    %s90 = sphi 0, %s74
    %s96 = sphi 0, %s98
    %s99 = sphi 0, %s96
    %s100 = sphi 0, %s99
    %s116 = sphi 0, %s100
    %s122 = sphi 0, %s124
    %s125 = sphi 0, %s122
    %s126 = sphi 0, %s125
    %s142 = sphi 0, %s126
    %s148 = sphi 0, %s150
    %s151 = sphi 0, %s148
    %s152 = sphi 0, %s151
    %s168 = sphi 0, %s152
    %s174 = sphi 0, %s176
    %s177 = sphi 0, %s174
    %s178 = sphi 0, %s177
    %s194 = sphi 0, %s178
    %s200 = sphi 0, %s202
    %s203 = sphi 0, %s200
    %s204 = sphi 0, %s203
    %s220 = sphi 0, %s204
    %s226 = sphi 0, %s228
    %s229 = sphi 0, %s226
    %s230 = sphi 0, %s229
    %s246 = sphi 0, %s230
    %s252 = sphi 0, %s254
    %s255 = sphi 0, %s252
    %s256 = sphi 0, %s255
    %s272 = sphi 0, %s256
    %s278 = sphi 0, %s280
    %s281 = sphi 0, %s278
    %s282 = sphi 0, %s281
    %s298 = sphi 0, %s282
    %s304 = sphi 0, %s306
    %s307 = sphi 0, %s304
    %s308 = sphi 0, %s307
    %s324 = sphi 0, %s308
    %s330 = sphi 0, %s332
    %s333 = sphi 0, %s330
    %s334 = sphi 0, %s333
    %s350 = sphi 0, %s334
  $region4: #{fastspeech2_forward.4} parent=0 // loop_header_branch
    %21 = sbr.rel (%p19) target = $region8
  $region5: #{fastspeech2_forward.4} parent=0 // loop_body
    %s23 = ssub.s32 %s18, 1
    %s24 = ssub.s32 %s18, 2
    %s25 = sadd.s32 %s18, 1
    %s27 = sadd.s32 %s26, 1
    %p30 = scmp.eq.s32.totalorder %s18, 1
    %p31 = scmp.ne.s32.totalorder %s26, %s28
    %p32 = scmp.eq.s32.totalorder %s18, 0
    %p33 = por %p31, %p32
    %p34 = scmp.ne.s32.totalorder %s26, %s28
    %p35 = scmp.eq.s32.totalorder %s23, 1
    %p36 = por %p34, %p35
    %p37 = scmp.ne.s32.totalorder %s28, %s29
    %p38 = scmp.eq.s32.totalorder %s23, 0
    %p39 = por %p37, %p38
    %p40 = scmp.ne.s32.totalorder %s28, %s29
    %p41 = scmp.eq.s32.totalorder %s24, 1
    %p42 = por %p40, %p41
    %p44 = scmp.ne.s32.totalorder %s29, %s43
    %p45 = scmp.eq.s32.totalorder %s24, 0
    %p46 = por %p44, %p45
    %s48 = sadd.s32 %s47, 1
    %p51 = scmp.eq.s32.totalorder %s18, 1
    %p52 = scmp.ne.s32.totalorder %s47, %s49
    %p53 = scmp.eq.s32.totalorder %s18, 0
    %p54 = por %p52, %p53
    %p55 = scmp.ne.s32.totalorder %s47, %s49
    %p56 = scmp.eq.s32.totalorder %s23, 1
    %p57 = por %p55, %p56
    %p58 = scmp.ne.s32.totalorder %s49, %s50
    %p59 = scmp.eq.s32.totalorder %s23, 0
    %p60 = por %p58, %p59
    %p61 = scmp.ne.s32.totalorder %s49, %s50
    %p62 = scmp.eq.s32.totalorder %s24, 1
    %p63 = por %p61, %p62
    %p65 = scmp.ne.s32.totalorder %s50, %s64
    %p66 = scmp.eq.s32.totalorder %s24, 0
    %p67 = por %p65, %p66
    %s68 = ssub.s32 %s18, %s25
    %p69 = scmp.eq.s32.totalorder %s68, 0
    %s71 = sadd.s32 %s70, 1
    %s72 = scalar_select %p69, %s70, %s71
    %p75 = pneg %p69
    %p76 = scmp.eq.s32.totalorder %s18, 1
    %p77 = por %p75, %p76
    %p78 = scmp.ne.s32.totalorder %s70, %s73
    %p79 = scmp.eq.s32.totalorder %s18, 0
    %p80 = por %p78, %p79
    %p81 = scmp.ne.s32.totalorder %s70, %s73
    %p82 = scmp.eq.s32.totalorder %s23, 1
    %p83 = por %p81, %p82
    %p84 = scmp.ne.s32.totalorder %s73, %s74
    %p85 = scmp.eq.s32.totalorder %s23, 0
    %p86 = por %p84, %p85
    %p87 = scmp.ne.s32.totalorder %s73, %s74
    %p88 = scmp.eq.s32.totalorder %s24, 1
    %p89 = por %p87, %p88
    %p91 = scmp.ne.s32.totalorder %s74, %s90
    %p92 = scmp.eq.s32.totalorder %s24, 0
    %p93 = por %p91, %p92
    %s94 = ssub.s32 %s18, %s25
    %p95 = scmp.eq.s32.totalorder %s94, 0
    %s97 = sadd.s32 %s96, 1
    %s98 = scalar_select %p95, %s96, %s97
    %p101 = pneg %p95
    %p102 = scmp.eq.s32.totalorder %s18, 1
    %p103 = por %p101, %p102
    %p104 = scmp.ne.s32.totalorder %s96, %s99
    %p105 = scmp.eq.s32.totalorder %s18, 0
    %p106 = por %p104, %p105
    %p107 = scmp.ne.s32.totalorder %s96, %s99
    %p108 = scmp.eq.s32.totalorder %s23, 1
    %p109 = por %p107, %p108
    %p110 = scmp.ne.s32.totalorder %s99, %s100
    %p111 = scmp.eq.s32.totalorder %s23, 0
    %p112 = por %p110, %p111
    %p113 = scmp.ne.s32.totalorder %s99, %s100
    %p114 = scmp.eq.s32.totalorder %s24, 1
    %p115 = por %p113, %p114
    %p117 = scmp.ne.s32.totalorder %s100, %s116
    %p118 = scmp.eq.s32.totalorder %s24, 0
    %p119 = por %p117, %p118
    %s120 = ssub.s32 %s18, %s25
    %p121 = scmp.eq.s32.totalorder %s120, 0
    %s123 = sadd.s32 %s122, 1
    %s124 = scalar_select %p121, %s122, %s123
    %p127 = pneg %p121
    %p128 = scmp.eq.s32.totalorder %s18, 1
    %p129 = por %p127, %p128
    %p130 = scmp.ne.s32.totalorder %s122, %s125
    %p131 = scmp.eq.s32.totalorder %s18, 0
    %p132 = por %p130, %p131
    %p133 = scmp.ne.s32.totalorder %s122, %s125
    %p134 = scmp.eq.s32.totalorder %s23, 1
    %p135 = por %p133, %p134
    %p136 = scmp.ne.s32.totalorder %s125, %s126
    %p137 = scmp.eq.s32.totalorder %s23, 0
    %p138 = por %p136, %p137
    %p139 = scmp.ne.s32.totalorder %s125, %s126
    %p140 = scmp.eq.s32.totalorder %s24, 1
    %p141 = por %p139, %p140
    %p143 = scmp.ne.s32.totalorder %s126, %s142
    %p144 = scmp.eq.s32.totalorder %s24, 0
    %p145 = por %p143, %p144
    %s146 = ssub.s32 %s18, %s25
    %p147 = scmp.eq.s32.totalorder %s146, 0
    %s149 = sadd.s32 %s148, 1
    %s150 = scalar_select %p147, %s148, %s149
    %p153 = pneg %p147
    %p154 = scmp.eq.s32.totalorder %s18, 1
    %p155 = por %p153, %p154
    %p156 = scmp.ne.s32.totalorder %s148, %s151
    %p157 = scmp.eq.s32.totalorder %s18, 0
    %p158 = por %p156, %p157
    %p159 = scmp.ne.s32.totalorder %s148, %s151
    %p160 = scmp.eq.s32.totalorder %s23, 1
    %p161 = por %p159, %p160
    %p162 = scmp.ne.s32.totalorder %s151, %s152
    %p163 = scmp.eq.s32.totalorder %s23, 0
    %p164 = por %p162, %p163
    %p165 = scmp.ne.s32.totalorder %s151, %s152
    %p166 = scmp.eq.s32.totalorder %s24, 1
    %p167 = por %p165, %p166
    %p169 = scmp.ne.s32.totalorder %s152, %s168
    %p170 = scmp.eq.s32.totalorder %s24, 0
    %p171 = por %p169, %p170
    %s172 = ssub.s32 %s18, %s25
    %p173 = scmp.eq.s32.totalorder %s172, 0
    %s175 = sadd.s32 %s174, 1
    %s176 = scalar_select %p173, %s174, %s175
    %p179 = pneg %p173
    %p180 = scmp.eq.s32.totalorder %s18, 1
    %p181 = por %p179, %p180
    %p182 = scmp.ne.s32.totalorder %s174, %s177
    %p183 = scmp.eq.s32.totalorder %s18, 0
    %p184 = por %p182, %p183
    %p185 = scmp.ne.s32.totalorder %s174, %s177
    %p186 = scmp.eq.s32.totalorder %s23, 1
    %p187 = por %p185, %p186
    %p188 = scmp.ne.s32.totalorder %s177, %s178
    %p189 = scmp.eq.s32.totalorder %s23, 0
    %p190 = por %p188, %p189
    %p191 = scmp.ne.s32.totalorder %s177, %s178
    %p192 = scmp.eq.s32.totalorder %s24, 1
    %p193 = por %p191, %p192
    %p195 = scmp.ne.s32.totalorder %s178, %s194
    %p196 = scmp.eq.s32.totalorder %s24, 0
    %p197 = por %p195, %p196
    %s198 = ssub.s32 %s18, %s25
    %p199 = scmp.eq.s32.totalorder %s198, 0
    %s201 = sadd.s32 %s200, 1
    %s202 = scalar_select %p199, %s200, %s201
    %p205 = pneg %p199
    %p206 = scmp.eq.s32.totalorder %s18, 1
    %p207 = por %p205, %p206
    %p208 = scmp.ne.s32.totalorder %s200, %s203
    %p209 = scmp.eq.s32.totalorder %s18, 0
    %p210 = por %p208, %p209
    %p211 = scmp.ne.s32.totalorder %s200, %s203
    %p212 = scmp.eq.s32.totalorder %s23, 1
    %p213 = por %p211, %p212
    %p214 = scmp.ne.s32.totalorder %s203, %s204
    %p215 = scmp.eq.s32.totalorder %s23, 0
    %p216 = por %p214, %p215
    %p217 = scmp.ne.s32.totalorder %s203, %s204
    %p218 = scmp.eq.s32.totalorder %s24, 1
    %p219 = por %p217, %p218
    %p221 = scmp.ne.s32.totalorder %s204, %s220
    %p222 = scmp.eq.s32.totalorder %s24, 0
    %p223 = por %p221, %p222
    %s224 = ssub.s32 %s18, %s25
    %p225 = scmp.eq.s32.totalorder %s224, 0
    %s227 = sadd.s32 %s226, 1
    %s228 = scalar_select %p225, %s226, %s227
    %p231 = pneg %p225
    %p232 = scmp.eq.s32.totalorder %s18, 1
    %p233 = por %p231, %p232
    %p234 = scmp.ne.s32.totalorder %s226, %s229
    %p235 = scmp.eq.s32.totalorder %s18, 0
    %p236 = por %p234, %p235
    %p237 = scmp.ne.s32.totalorder %s226, %s229
    %p238 = scmp.eq.s32.totalorder %s23, 1
    %p239 = por %p237, %p238
    %p240 = scmp.ne.s32.totalorder %s229, %s230
    %p241 = scmp.eq.s32.totalorder %s23, 0
    %p242 = por %p240, %p241
    %p243 = scmp.ne.s32.totalorder %s229, %s230
    %p244 = scmp.eq.s32.totalorder %s24, 1
    %p245 = por %p243, %p244
    %p247 = scmp.ne.s32.totalorder %s230, %s246
    %p248 = scmp.eq.s32.totalorder %s24, 0
    %p249 = por %p247, %p248
    %s250 = ssub.s32 %s18, %s25
    %p251 = scmp.eq.s32.totalorder %s250, 0
    %s253 = sadd.s32 %s252, 1
    %s254 = scalar_select %p251, %s252, %s253
    %p257 = pneg %p251
    %p258 = scmp.eq.s32.totalorder %s18, 1
    %p259 = por %p257, %p258
    %p260 = scmp.ne.s32.totalorder %s252, %s255
    %p261 = scmp.eq.s32.totalorder %s18, 0
    %p262 = por %p260, %p261
    %p263 = scmp.ne.s32.totalorder %s252, %s255
    %p264 = scmp.eq.s32.totalorder %s23, 1
    %p265 = por %p263, %p264
    %p266 = scmp.ne.s32.totalorder %s255, %s256
    %p267 = scmp.eq.s32.totalorder %s23, 0
    %p268 = por %p266, %p267
    %p269 = scmp.ne.s32.totalorder %s255, %s256
    %p270 = scmp.eq.s32.totalorder %s24, 1
    %p271 = por %p269, %p270
    %p273 = scmp.ne.s32.totalorder %s256, %s272
    %p274 = scmp.eq.s32.totalorder %s24, 0
    %p275 = por %p273, %p274
    %s276 = ssub.s32 %s18, %s25
    %p277 = scmp.eq.s32.totalorder %s276, 0
    %s279 = sadd.s32 %s278, 1
    %s280 = scalar_select %p277, %s278, %s279
    %p283 = pneg %p277
    %p284 = scmp.eq.s32.totalorder %s18, 1
    %p285 = por %p283, %p284
    %p286 = scmp.ne.s32.totalorder %s278, %s281
    %p287 = scmp.eq.s32.totalorder %s18, 0
    %p288 = por %p286, %p287
    %p289 = scmp.ne.s32.totalorder %s278, %s281
    %p290 = scmp.eq.s32.totalorder %s23, 1
    %p291 = por %p289, %p290
    %p292 = scmp.ne.s32.totalorder %s281, %s282
    %p293 = scmp.eq.s32.totalorder %s23, 0
    %p294 = por %p292, %p293
    %p295 = scmp.ne.s32.totalorder %s281, %s282
    %p296 = scmp.eq.s32.totalorder %s24, 1
    %p297 = por %p295, %p296
    %p299 = scmp.ne.s32.totalorder %s282, %s298
    %p300 = scmp.eq.s32.totalorder %s24, 0
    %p301 = por %p299, %p300
    %s302 = ssub.s32 %s18, %s25
    %p303 = scmp.eq.s32.totalorder %s302, 0
    %s305 = sadd.s32 %s304, 1
    %s306 = scalar_select %p303, %s304, %s305
    %p309 = pneg %p303
    %p310 = scmp.eq.s32.totalorder %s18, 1
    %p311 = por %p309, %p310
    %p312 = scmp.ne.s32.totalorder %s304, %s307
    %p313 = scmp.eq.s32.totalorder %s18, 0
    %p314 = por %p312, %p313
    %p315 = scmp.ne.s32.totalorder %s304, %s307
    %p316 = scmp.eq.s32.totalorder %s23, 1
    %p317 = por %p315, %p316
    %p318 = scmp.ne.s32.totalorder %s307, %s308
    %p319 = scmp.eq.s32.totalorder %s23, 0
    %p320 = por %p318, %p319
    %p321 = scmp.ne.s32.totalorder %s307, %s308
    %p322 = scmp.eq.s32.totalorder %s24, 1
    %p323 = por %p321, %p322
    %p325 = scmp.ne.s32.totalorder %s308, %s324
    %p326 = scmp.eq.s32.totalorder %s24, 0
    %p327 = por %p325, %p326
    %s328 = ssub.s32 %s18, %s25
    %p329 = scmp.eq.s32.totalorder %s328, 0
    %s331 = sadd.s32 %s330, 1
    %s332 = scalar_select %p329, %s330, %s331
    %p335 = pneg %p329
    %p336 = scmp.eq.s32.totalorder %s18, 1
    %p337 = por %p335, %p336
    %p338 = scmp.ne.s32.totalorder %s330, %s333
    %p339 = scmp.eq.s32.totalorder %s18, 0
    %p340 = por %p338, %p339
    %p341 = scmp.ne.s32.totalorder %s330, %s333
    %p342 = scmp.eq.s32.totalorder %s23, 1
    %p343 = por %p341, %p342
    %p344 = scmp.ne.s32.totalorder %s333, %s334
    %p345 = scmp.eq.s32.totalorder %s23, 0
    %p346 = por %p344, %p345
    %p347 = scmp.ne.s32.totalorder %s333, %s334
    %p348 = scmp.eq.s32.totalorder %s24, 1
    %p349 = por %p347, %p348
    %p351 = scmp.ne.s32.totalorder %s334, %s350
    %p352 = scmp.eq.s32.totalorder %s24, 0
    %p353 = por %p351, %p352
    %p354 = scmp.le.s32.totalorder 1, %s18
    %p355 = scmp.lt.s32.totalorder %s18, 3
    %p356 = pnand %p354, %p355
    %p357 = pneg %p356
    // Predicated region
    $region9: #{fastspeech2_forward.4} parent=5 // pred_check
      _
    $region10: #{fastspeech2_forward.4} parent=5 // pred_check_branch
      %359 = sbr.rel (%p356) target = $region12
    $region11: #{fastspeech2_forward.4} parent=5 // pred_region
      %s360 = ssub.s32 %s18, 1
      // Predicated region
      $region13: #{fastspeech2_forward.4} parent=11 // pred_check
        %p361 = pneg %p39
      $region14: #{fastspeech2_forward.4} parent=11 // pred_check_branch
        %363 = sbr.rel (%p361) target = $region16
      $region15: #{fastspeech2_forward.4} parent=11 // pred_region
        _
      $region16: #{fastspeech2_forward.4} parent=11 // pred_fallthru
        _
      // Predicated region
      $region17: #{fastspeech2_forward.4} parent=11 // pred_check
        %p364 = pneg %p60
      $region18: #{fastspeech2_forward.4} parent=11 // pred_check_branch
        %366 = sbr.rel (%p364) target = $region20
      $region19: #{fastspeech2_forward.4} parent=11 // pred_region
        _
      $region20: #{fastspeech2_forward.4} parent=11 // pred_fallthru
        _
    $region12: #{fastspeech2_forward.4} parent=5 // pred_fallthru
      _
    %p367 = scmp.lt.s32.totalorder %s18, 2
    // Predicated region
    $region21: #{fastspeech2_forward.4} parent=5 // pred_check
      %p368 = pneg %p367
    $region22: #{fastspeech2_forward.4} parent=5 // pred_check_branch
      %370 = sbr.rel (%p368) target = $region24
    $region23: #{fastspeech2_forward.4} parent=5 // pred_region
      // Predicated region
      $region25: #{fastspeech2_forward.4} parent=23 // pred_check
        %p371 = pneg %p80
      $region26: #{fastspeech2_forward.4} parent=23 // pred_check_branch
        %373 = sbr.rel (%p371) target = $region28
      $region27: #{fastspeech2_forward.4} parent=23 // pred_region
        %p374 = scmp.lt.s32.totalorder %s18, 1
        %s375 = scalar_select %p374, %s18, 1
        %s376 = smul.addr %s375, 12
        %s377 = smul.addr %s376, 4
        %s378 = scalar_lea.vmem %s2, %s377
      $region28: #{fastspeech2_forward.4} parent=23 // pred_fallthru
        _
      // Predicated region
      $region29: #{fastspeech2_forward.4} parent=23 // pred_check
        %p379 = pneg %p106
      $region30: #{fastspeech2_forward.4} parent=23 // pred_check_branch
        %381 = sbr.rel (%p379) target = $region32
      $region31: #{fastspeech2_forward.4} parent=23 // pred_region
        %p382 = scmp.lt.s32.totalorder %s18, 1
        %s383 = scalar_select %p382, %s18, 1
        %s384 = scalar_lea.vmem %s3, %s383
      $region32: #{fastspeech2_forward.4} parent=23 // pred_fallthru
        _
      // Predicated region
      $region33: #{fastspeech2_forward.4} parent=23 // pred_check
        %p385 = pneg %p132
      $region34: #{fastspeech2_forward.4} parent=23 // pred_check_branch
        %387 = sbr.rel (%p385) target = $region36
      $region35: #{fastspeech2_forward.4} parent=23 // pred_region
        %p388 = scmp.lt.s32.totalorder %s18, 1
        %s389 = scalar_select %p388, %s18, 1
        %s390 = scalar_lea.vmem %s4, %s389
      $region36: #{fastspeech2_forward.4} parent=23 // pred_fallthru
        _
      // Predicated region
      $region37: #{fastspeech2_forward.4} parent=23 // pred_check
        %p391 = pneg %p158
      $region38: #{fastspeech2_forward.4} parent=23 // pred_check_branch
        %393 = sbr.rel (%p391) target = $region40
      $region39: #{fastspeech2_forward.4} parent=23 // pred_region
        %p394 = scmp.lt.s32.totalorder %s18, 1
        %s395 = scalar_select %p394, %s18, 1
        %s396 = scalar_lea.vmem %s5, %s395
      $region40: #{fastspeech2_forward.4} parent=23 // pred_fallthru
        _
      // Predicated region
      $region41: #{fastspeech2_forward.4} parent=23 // pred_check
        %p397 = pneg %p184
      $region42: #{fastspeech2_forward.4} parent=23 // pred_check_branch
        %399 = sbr.rel (%p397) target = $region44
      $region43: #{fastspeech2_forward.4} parent=23 // pred_region
        %p400 = scmp.lt.s32.totalorder %s18, 1
        %s401 = scalar_select %p400, %s18, 1
        %s402 = smul.addr %s401, 12
        %s403 = smul.addr %s402, 4
        %s404 = scalar_lea.vmem %s6, %s403
      $region44: #{fastspeech2_forward.4} parent=23 // pred_fallthru
        _
      // Predicated region
      $region45: #{fastspeech2_forward.4} parent=23 // pred_check
        %p405 = pneg %p210
      $region46: #{fastspeech2_forward.4} parent=23 // pred_check_branch
        %407 = sbr.rel (%p405) target = $region48
      $region47: #{fastspeech2_forward.4} parent=23 // pred_region
        %p408 = scmp.lt.s32.totalorder %s18, 1
        %s409 = scalar_select %p408, %s18, 1
        %s410 = scalar_lea.vmem %s7, %s409
      $region48: #{fastspeech2_forward.4} parent=23 // pred_fallthru
        _
      // Predicated region
      $region49: #{fastspeech2_forward.4} parent=23 // pred_check
        %p411 = pneg %p236
      $region50: #{fastspeech2_forward.4} parent=23 // pred_check_branch
        %413 = sbr.rel (%p411) target = $region52
      $region51: #{fastspeech2_forward.4} parent=23 // pred_region
        %p414 = scmp.lt.s32.totalorder %s18, 1
        %s415 = scalar_select %p414, %s18, 1
        %s416 = scalar_lea.vmem %s8, %s415
      $region52: #{fastspeech2_forward.4} parent=23 // pred_fallthru
        _
      // Predicated region
      $region53: #{fastspeech2_forward.4} parent=23 // pred_check
        %p417 = pneg %p262
      $region54: #{fastspeech2_forward.4} parent=23 // pred_check_branch
        %419 = sbr.rel (%p417) target = $region56
      $region55: #{fastspeech2_forward.4} parent=23 // pred_region
        %p420 = scmp.lt.s32.totalorder %s18, 1
        %s421 = scalar_select %p420, %s18, 1
        %s422 = scalar_lea.vmem %s9, %s421
      $region56: #{fastspeech2_forward.4} parent=23 // pred_fallthru
        _
      // Predicated region
      $region57: #{fastspeech2_forward.4} parent=23 // pred_check
        %p423 = pneg %p288
      $region58: #{fastspeech2_forward.4} parent=23 // pred_check_branch
        %425 = sbr.rel (%p423) target = $region60
      $region59: #{fastspeech2_forward.4} parent=23 // pred_region
        %p426 = scmp.lt.s32.totalorder %s18, 1
        %s427 = scalar_select %p426, %s18, 1
        %s428 = smul.addr %s427, 4
        %s429 = smul.addr %s428, 4
        %s430 = scalar_lea.vmem %s10, %s429
      $region60: #{fastspeech2_forward.4} parent=23 // pred_fallthru
        _
      // Predicated region
      $region61: #{fastspeech2_forward.4} parent=23 // pred_check
        %p431 = pneg %p314
      $region62: #{fastspeech2_forward.4} parent=23 // pred_check_branch
        %433 = sbr.rel (%p431) target = $region64
      $region63: #{fastspeech2_forward.4} parent=23 // pred_region
        %p434 = scmp.lt.s32.totalorder %s18, 1
        %s435 = scalar_select %p434, %s18, 1
        %s436 = scalar_lea.vmem %s11, %s435
      $region64: #{fastspeech2_forward.4} parent=23 // pred_fallthru
        _
    $region24: #{fastspeech2_forward.4} parent=5 // pred_fallthru
      _
    %p437 = scmp.le.s32.totalorder 1, %s18
    %p438 = scmp.lt.s32.totalorder %s18, 3
    %p439 = pnand %p437, %p438
    %p440 = pneg %p439
    // Predicated region
    $region65: #{fastspeech2_forward.4} parent=5 // pred_check
      _
    $region66: #{fastspeech2_forward.4} parent=5 // pred_check_branch
      %442 = sbr.rel (%p439) target = $region68
    $region67: #{fastspeech2_forward.4} parent=5 // pred_region
      %s443 = ssub.s32 %s18, 1
      %p444 = pneg %p39
      %p445 = pneg %p36
      %p446 = pneg %p60
      %p447 = pneg %p57
      %p448 = scmp.lt.s32.totalorder %s23, 1
      %s449 = scalar_select %p448, %s23, 1
      %s450 = smul.addr %s449, 12
      %s451 = smul.addr %s450, 4
      %s452 = scalar_lea.vmem %s2, %s451
      %p453 = pneg %p86
      %p454 = pneg %p83
      %p455 = scmp.lt.s32.totalorder %s23, 1
      %s456 = scalar_select %p455, %s23, 1
      %s457 = scalar_lea.vmem %s3, %s456
      %p458 = pneg %p112
      %p459 = pneg %p109
      %p460 = scmp.lt.s32.totalorder %s23, 1
      %s461 = scalar_select %p460, %s23, 1
      %s462 = scalar_lea.vmem %s4, %s461
      %p463 = pneg %p138
      %p464 = pneg %p135
      %p465 = scmp.lt.s32.totalorder %s23, 1
      %s466 = scalar_select %p465, %s23, 1
      %s467 = scalar_lea.vmem %s5, %s466
      %p468 = pneg %p164
      %p469 = pneg %p161
      %p470 = scmp.lt.s32.totalorder %s23, 1
      %s471 = scalar_select %p470, %s23, 1
      %s472 = smul.addr %s471, 12
      %s473 = smul.addr %s472, 4
      %s474 = scalar_lea.vmem %s6, %s473
      %p475 = pneg %p190
      %p476 = pneg %p187
      %p477 = scmp.lt.s32.totalorder %s23, 1
      %s478 = scalar_select %p477, %s23, 1
      %s479 = scalar_lea.vmem %s7, %s478
      %p480 = pneg %p216
      %p481 = pneg %p213
      %p482 = scmp.lt.s32.totalorder %s23, 1
      %s483 = scalar_select %p482, %s23, 1
      %s484 = scalar_lea.vmem %s8, %s483
      %p485 = pneg %p242
      %p486 = pneg %p239
      %p487 = scmp.lt.s32.totalorder %s23, 1
      %s488 = scalar_select %p487, %s23, 1
      %s489 = scalar_lea.vmem %s9, %s488
      %p490 = pneg %p268
      %p491 = pneg %p265
      %p492 = scmp.lt.s32.totalorder %s23, 1
      %s493 = scalar_select %p492, %s23, 1
      %s494 = smul.addr %s493, 4
      %s495 = smul.addr %s494, 4
      %s496 = scalar_lea.vmem %s10, %s495
      %p497 = pneg %p294
      %p498 = pneg %p291
      %p499 = scmp.lt.s32.totalorder %s23, 1
      %s500 = scalar_select %p499, %s23, 1
      %s501 = scalar_lea.vmem %s11, %s500
      %p502 = pneg %p320
      %p503 = pneg %p317
      %p504 = pneg %p346
      %p505 = pneg %p343
      %p506 = scmp.lt.s32.totalorder %s23, 1
      %s507 = scalar_select %p506, %s23, 1
      %s508 = smul.addr %s507, 2
      %s509 = smul.addr %s508, 8
      %s510 = scalar_lea.vmem %s12, %s509
      %p511 = scmp.lt.s32.totalorder %s23, 1
      %s512 = scalar_select %p511, %s23, 1
      %s513 = smul.addr %s512, 12
      %s514 = smul.addr %s513, 4
      %s515 = scalar_lea.vmem %s2, %s514
      %p516 = scmp.lt.s32.totalorder %s23, 1
      %s517 = scalar_select %p516, %s23, 1
      %s518 = scalar_lea.vmem %s3, %s517
      %p519 = scmp.lt.s32.totalorder %s23, 1
      %s520 = scalar_select %p519, %s23, 1
      %s521 = scalar_lea.vmem %s4, %s520
      %p522 = scmp.lt.s32.totalorder %s23, 1
      %s523 = scalar_select %p522, %s23, 1
      %s524 = scalar_lea.vmem %s5, %s523
      %p525 = scmp.lt.s32.totalorder %s23, 1
      %s526 = scalar_select %p525, %s23, 1
      %s527 = smul.addr %s526, 12
      %s528 = smul.addr %s527, 4
      %s529 = scalar_lea.vmem %s6, %s528
      %p530 = scmp.lt.s32.totalorder %s23, 1
      %s531 = scalar_select %p530, %s23, 1
      %s532 = scalar_lea.vmem %s7, %s531
      %p533 = scmp.lt.s32.totalorder %s23, 1
      %s534 = scalar_select %p533, %s23, 1
      %s535 = scalar_lea.vmem %s8, %s534
      %p536 = scmp.lt.s32.totalorder %s23, 1
      %s537 = scalar_select %p536, %s23, 1
      %s538 = scalar_lea.vmem %s9, %s537
      %p539 = scmp.lt.s32.totalorder %s23, 1
      %s540 = scalar_select %p539, %s23, 1
      %s541 = smul.addr %s540, 4
      %s542 = smul.addr %s541, 4
      %s543 = scalar_lea.vmem %s10, %s542
      %p544 = scmp.lt.s32.totalorder %s23, 1
      %s545 = scalar_select %p544, %s23, 1
      %s546 = scalar_lea.vmem %s11, %s545
      %p547 = scmp.lt.s32.totalorder %s23, 1
      %s548 = scalar_select %p547, %s23, 1
      %s549 = smul.addr %s548, 2
      %s550 = smul.addr %s549, 8
      %s551 = scalar_lea.vmem %s12, %s550
      %v553 = vld [vmem:[%s0] sm:$0xff]
      %v554 = vld [vmem:[%s0 + $0x8] sm:$0xff]
      %v555 = vld [vmem:[%s1] sm:$0xff]
      %v556 = vld [vmem:[%s1 + $0x8] sm:$0xff]
      %v557 = vlaneseq
      %v558 = vshrl.u32 %v557, 7
      %v559 = vadd.s32 %v558, 8
      %v560 = vand.u32 %v558, 7
      %v561 = vand.u32 %v559, 7
      %v562 = vrot.slane %v553, 7
      %v563 = vrot.slane %v554, 7
      %vm564 = vcmp.lt.s32.totalorder %v558, 1
      %v565 = vsel %vm564, %v562, %v563
      %v566 = vsel %vm564, %v563, %v562
      %v567 = vadd.s32 %v560, 4294967295
      %v568 = vadd.s32 %v561, 4294967295
      %vm569 = vcmp.ge.s32.totalorder %v567, 0
      %vm570 = vcmp.ge.s32.totalorder %v568, 0
      %vm571 = vcmp.lt.s32.totalorder %v567, 8
      %vm572 = vcmp.lt.s32.totalorder %v568, 8
      %vm573 = vmand %vm569, %vm571
      %vm574 = vmand %vm570, %vm572
      %v575 = vsel %vm573, 1, 0
      %v576 = vsel %vm574, 1, 0
      %v577 = vcvt.s32.f32 %v575
      %v578 = vcvt.s32.f32 %v576
      %v579 = vmul.f32 %v566, %v577
      %v580 = vmul.f32 %v565, %v578
      %v581 = vrot.slane %v553, 1
      %v582 = vrot.slane %v554, 1
      %vm583 = vcmp.lt.s32.totalorder %v558, 7
      %v584 = vsel %vm583, %v581, %v582
      %v585 = vsel %vm583, %v582, %v581
      %v586 = vadd.s32 %v560, 1
      %v587 = vadd.s32 %v561, 1
      %vm588 = vcmp.ge.s32.totalorder %v586, 0
      %vm589 = vcmp.ge.s32.totalorder %v587, 0
      %vm590 = vcmp.lt.s32.totalorder %v586, 8
      %vm591 = vcmp.lt.s32.totalorder %v587, 8
      %vm592 = vmand %vm588, %vm590
      %vm593 = vmand %vm589, %vm591
      %v594 = vsel %vm592, 1, 0
      %v595 = vsel %vm593, 1, 0
      %v596 = vcvt.s32.f32 %v594
      %v597 = vcvt.s32.f32 %v595
      %v598 = vmul.f32 %v584, %v596
      %v599 = vmul.f32 %v585, %v597
      %602 = vrot.lane.b32.xlu0 %v553, 32
      %v603 = vpop.permute.xlu0 %602
      %604 = vrot.lane.b32.xlu0 %v554, 32
      %v605 = vpop.permute.xlu0 %604
      %610 = vrot.lane.b32.xlu0 %v598, 64
      %v611 = vpop.permute.xlu0 %610
      %612 = vrot.lane.b32.xlu0 %v599, 64
      %v613 = vpop.permute.xlu0 %612
      %vm616 = vcmask 261120
      %v617 = vsel %vm616, %v579, %v603
      %v618 = vsel %vm616, %v580, %v605
      %vm619 = vcmask 523264
      %v620 = vsel %vm619, %v617, %v611
      %v621 = vsel %vm619, %v618, %v613
      %v622 = vpack.c.bf16 %v621, %v620
      %v623 = vld [vmem:[%s515] sm:$0xf]
      %v624 = vld [vmem:[%s515 + $0x4] sm:$0xf]
      %v625 = vld [vmem:[%s515 + $0x8] sm:$0xf]
      %v626 = vld [vmem:[%s515 + $0xc] sm:$0xf]
      %v627 = vld [vmem:[%s515 + $0x10] sm:$0xf]
      %v628 = vld [vmem:[%s515 + $0x14] sm:$0xf]
      %v629 = vld [vmem:[%s515 + $0x18] sm:$0xf]
      %v630 = vld [vmem:[%s515 + $0x1c] sm:$0xf]
      %v631 = vld [vmem:[%s515 + $0x20] sm:$0xf]
      %v632 = vld [vmem:[%s515 + $0x24] sm:$0xf]
      %v633 = vld [vmem:[%s515 + $0x28] sm:$0xf]
      %v634 = vld [vmem:[%s515 + $0x2c] sm:$0xf]
      %v635 = vld [vmem:[%s518] sm:$0x1]
      %v637 = vlaneseq
      %v638 = vshrl.u32 %v637, 7
      %v639 = vsub.s32 0, %v638
      %v640 = vrot.slane %v635, %v639
      %v654 = vunpack.c.l.b16 %v623
      %v655 = vunpack.c.l.b16 %v624
      %v656 = vunpack.c.l.b16 %v625
      %v657 = vunpack.c.l.b16 %v626
      %v658 = vunpack.c.l.b16 %v627
      %v659 = vunpack.c.l.b16 %v628
      %v660 = vunpack.c.l.b16 %v629
      %v661 = vunpack.c.l.b16 %v630
      %v662 = vunpack.c.l.b16 %v631
      %v663 = vunpack.c.l.b16 %v632
      %v664 = vunpack.c.l.b16 %v633
      %v665 = vunpack.c.l.b16 %v634
      %v666 = vpack.c.b16 %v655, %v654
      %v667 = vpack.c.b16 %v657, %v656
      %v668 = vpack.c.b16 %v659, %v658
      %v669 = vpack.c.b16 %v661, %v660
      %v670 = vpack.c.b16 %v663, %v662
      %v671 = vpack.c.b16 %v665, %v664
      %vm678 = vcmask 785408
      %v680 = vsel %vm678, %v622, 0
      %682 = vmatprep.subr.bf16.mxu0 0
      %683 = vmatpush1.bf16.msra.mxu0 %v666
      %684 = vmatprep.subr.bf16.mxu0 0
      %685 = vmatpush1.bf16.msra.mxu0 %v667
      %686 = vmatprep.subr.bf16.mxu0 0
      %687 = vmatpush1.bf16.msra.mxu0 %v668
      %688 = vmatprep.subr.bf16.mxu0 0
      %689 = vmatpush1.bf16.msra.mxu0 %v669
      %690 = vmatprep.subr.bf16.mxu0 0
      %691 = vmatpush1.bf16.msra.mxu0 %v670
      %692 = vmatprep.subr.bf16.mxu0 0
      %693 = vmatpush1.bf16.msra.mxu0 %v671
      %694 = vmatprep.subr.bf16.mxu0 0
      %695 = vmatpush1.bf16.msra.mxu0 0
      %696 = vmatprep.subr.bf16.mxu0 0
      %697 = vmatpush1.bf16.msra.mxu0 0
      %698 = vmatprep.subr.bf16.mxu0 0
      %699 = vmatpush1.bf16.msra.mxu0 0
      %700 = vmatprep.subr.bf16.mxu0 0
      %701 = vmatpush1.bf16.msra.mxu0 0
      %702 = vmatprep.subr.bf16.mxu0 0
      %703 = vmatpush1.bf16.msra.mxu0 0
      %704 = vmatprep.subr.bf16.mxu0 0
      %705 = vmatpush1.bf16.msra.mxu0 0
      %706 = vmatprep.subr.bf16.mxu0 0
      %707 = vmatpush1.bf16.msra.mxu0 0
      %708 = vmatprep.subr.bf16.mxu0 0
      %709 = vmatpush1.bf16.msra.mxu0 0
      %710 = vmatprep.subr.bf16.mxu0 0
      %711 = vmatpush1.bf16.msra.mxu0 0
      %712 = vmatprep.subr.bf16.mxu0 0
      %713 = vmatpush1.bf16.msra.mxu0 0
      %714 = vmatprep.mubr.bf16.mxu0 0
      %715 = vmatmul.mubr.bf16.gmra.mrb[0].mxu0 %v680
      %v716 = vpop.f32.mrb[0].mxu0
      %v717 = vadd.f32 %v640, %v716
      %v718 = vpop.f32.mrb[0].mxu0
      %v719 = vpop.f32.mrb[0].mxu0
      %v720 = vadd.f32 %v640, %v719
      %v721 = vpop.f32.mrb[0].mxu0
      %722 = vdwg.mxu0
      %v723 = vmax.f32 %v717, 0.0
      %v724 = vmax.f32 %v720, 0.0
      %v725 = vld [vmem:[%s521] sm:$0x1]
      %v726 = vld [vmem:[%s524] sm:$0x1]
      %v727 = vsel %vm616, %v723, 0.0
      %728 = vadd.xlane.f32.xlu0 %v727
      %v729 = vpop.xlane.xlu0 %728
      %v730 = vsel %vm616, %v724, 0.0
      %731 = vadd.xlane.f32.xlu0 %v730
      %v732 = vpop.xlane.xlu0 %731
      %v733 = vrcp.pop 32.0
      %v734 = vmul.f32 %v729, %v733
      %v735 = vmul.f32 %v732, %v733
      %v736 = vsub.f32 %v723, %v734
      %v737 = vsub.f32 %v724, %v735
      %v738 = vmul.f32 %v736, %v736
      %v739 = vmul.f32 %v737, %v737
      %v740 = vsel %vm616, %v738, 0.0
      %741 = vadd.xlane.f32.xlu0 %v740
      %v742 = vpop.xlane.xlu0 %741
      %v743 = vsel %vm616, %v739, 0.0
      %744 = vadd.xlane.f32.xlu0 %v743
      %v745 = vpop.xlane.xlu0 %744
      %v746 = vmul.f32 %v742, %v733
      %v747 = vmul.f32 %v745, %v733
      %v748 = vadd.f32 %v746, 1e-05
      %v749 = vadd.f32 %v747, 1e-05
      %v750 = vrsqrt.pop %v748
      %v751 = vrsqrt.pop %v749
      %v752 = vmul.f32 %v736, %v750
      %v753 = vmul.f32 %v737, %v751
      %v755 = vlaneseq
      %v756 = vshrl.u32 %v755, 7
      %v757 = vsub.s32 0, %v756
      %v758 = vrot.slane %v725, %v757
      %v760 = vmul.f32 %v752, %v758
      %v761 = vmul.f32 %v753, %v758
      %v763 = vlaneseq
      %v764 = vshrl.u32 %v763, 7
      %v765 = vsub.s32 0, %v764
      %v766 = vrot.slane %v726, %v765
      %v768 = vadd.f32 %v760, %v766
      %v769 = vadd.f32 %v761, %v766
      %v770 = vrot.slane %v768, 7
      %v771 = vrot.slane %v769, 7
      %v772 = vsel %vm564, %v770, %v771
      %v773 = vsel %vm564, %v771, %v770
      %v774 = vmul.f32 %v773, %v577
      %v775 = vmul.f32 %v772, %v578
      %v776 = vrot.slane %v768, 1
      %v777 = vrot.slane %v769, 1
      %v778 = vsel %vm583, %v776, %v777
      %v779 = vsel %vm583, %v777, %v776
      %v780 = vmul.f32 %v778, %v596
      %v781 = vmul.f32 %v779, %v597
      %784 = vrot.lane.b32.xlu0 %v768, 32
      %v785 = vpop.permute.xlu0 %784
      %786 = vrot.lane.b32.xlu0 %v769, 32
      %v787 = vpop.permute.xlu0 %786
      %792 = vrot.lane.b32.xlu0 %v780, 64
      %v793 = vpop.permute.xlu0 %792
      %794 = vrot.lane.b32.xlu0 %v781, 64
      %v795 = vpop.permute.xlu0 %794
      %v798 = vsel %vm616, %v774, %v785
      %v799 = vsel %vm616, %v775, %v787
      %v800 = vsel %vm619, %v798, %v793
      %v801 = vsel %vm619, %v799, %v795
      %v802 = vpack.c.bf16 %v801, %v800
      %v803 = vld [vmem:[%s529] sm:$0xf]
      %v804 = vld [vmem:[%s529 + $0x4] sm:$0xf]
      %v805 = vld [vmem:[%s529 + $0x8] sm:$0xf]
      %v806 = vld [vmem:[%s529 + $0xc] sm:$0xf]
      %v807 = vld [vmem:[%s529 + $0x10] sm:$0xf]
      %v808 = vld [vmem:[%s529 + $0x14] sm:$0xf]
      %v809 = vld [vmem:[%s529 + $0x18] sm:$0xf]
      %v810 = vld [vmem:[%s529 + $0x1c] sm:$0xf]
      %v811 = vld [vmem:[%s529 + $0x20] sm:$0xf]
      %v812 = vld [vmem:[%s529 + $0x24] sm:$0xf]
      %v813 = vld [vmem:[%s529 + $0x28] sm:$0xf]
      %v814 = vld [vmem:[%s529 + $0x2c] sm:$0xf]
      %v815 = vld [vmem:[%s532] sm:$0x1]
      %v817 = vlaneseq
      %v818 = vshrl.u32 %v817, 7
      %v819 = vsub.s32 0, %v818
      %v820 = vrot.slane %v815, %v819
      %v834 = vunpack.c.l.b16 %v803
      %v835 = vunpack.c.l.b16 %v804
      %v836 = vunpack.c.l.b16 %v805
      %v837 = vunpack.c.l.b16 %v806
      %v838 = vunpack.c.l.b16 %v807
      %v839 = vunpack.c.l.b16 %v808
      %v840 = vunpack.c.l.b16 %v809
      %v841 = vunpack.c.l.b16 %v810
      %v842 = vunpack.c.l.b16 %v811
      %v843 = vunpack.c.l.b16 %v812
      %v844 = vunpack.c.l.b16 %v813
      %v845 = vunpack.c.l.b16 %v814
      %v846 = vpack.c.b16 %v835, %v834
      %v847 = vpack.c.b16 %v837, %v836
      %v848 = vpack.c.b16 %v839, %v838
      %v849 = vpack.c.b16 %v841, %v840
      %v850 = vpack.c.b16 %v843, %v842
      %v851 = vpack.c.b16 %v845, %v844
      %v859 = vsel %vm678, %v802, 0
      %861 = vmatprep.subr.bf16.mxu0 0
      %862 = vmatpush1.bf16.msra.mxu0 %v846
      %863 = vmatprep.subr.bf16.mxu0 0
      %864 = vmatpush1.bf16.msra.mxu0 %v847
      %865 = vmatprep.subr.bf16.mxu0 0
      %866 = vmatpush1.bf16.msra.mxu0 %v848
      %867 = vmatprep.subr.bf16.mxu0 0
      %868 = vmatpush1.bf16.msra.mxu0 %v849
      %869 = vmatprep.subr.bf16.mxu0 0
      %870 = vmatpush1.bf16.msra.mxu0 %v850
      %871 = vmatprep.subr.bf16.mxu0 0
      %872 = vmatpush1.bf16.msra.mxu0 %v851
      %873 = vmatprep.subr.bf16.mxu0 0
      %874 = vmatpush1.bf16.msra.mxu0 0
      %875 = vmatprep.subr.bf16.mxu0 0
      %876 = vmatpush1.bf16.msra.mxu0 0
      %877 = vmatprep.subr.bf16.mxu0 0
      %878 = vmatpush1.bf16.msra.mxu0 0
      %879 = vmatprep.subr.bf16.mxu0 0
      %880 = vmatpush1.bf16.msra.mxu0 0
      %881 = vmatprep.subr.bf16.mxu0 0
      %882 = vmatpush1.bf16.msra.mxu0 0
      %883 = vmatprep.subr.bf16.mxu0 0
      %884 = vmatpush1.bf16.msra.mxu0 0
      %885 = vmatprep.subr.bf16.mxu0 0
      %886 = vmatpush1.bf16.msra.mxu0 0
      %887 = vmatprep.subr.bf16.mxu0 0
      %888 = vmatpush1.bf16.msra.mxu0 0
      %889 = vmatprep.subr.bf16.mxu0 0
      %890 = vmatpush1.bf16.msra.mxu0 0
      %891 = vmatprep.subr.bf16.mxu0 0
      %892 = vmatpush1.bf16.msra.mxu0 0
      %893 = vmatprep.mubr.bf16.mxu0 0
      %894 = vmatmul.mubr.bf16.gmra.mrb[0].mxu0 %v859
      %v895 = vpop.f32.mrb[0].mxu0
      %v896 = vadd.f32 %v820, %v895
      %v897 = vpop.f32.mrb[0].mxu0
      %v898 = vpop.f32.mrb[0].mxu0
      %v899 = vadd.f32 %v820, %v898
      %v900 = vpop.f32.mrb[0].mxu0
      %901 = vdwg.mxu0
      %v902 = vmax.f32 %v896, 0.0
      %v903 = vmax.f32 %v899, 0.0
      %v904 = vld [vmem:[%s535] sm:$0x1]
      %v905 = vld [vmem:[%s538] sm:$0x1]
      %v906 = vsel %vm616, %v902, 0.0
      %907 = vadd.xlane.f32.xlu0 %v906
      %v908 = vpop.xlane.xlu0 %907
      %v909 = vsel %vm616, %v903, 0.0
      %910 = vadd.xlane.f32.xlu0 %v909
      %v911 = vpop.xlane.xlu0 %910
      %v912 = vmul.f32 %v908, %v733
      %v913 = vmul.f32 %v911, %v733
      %v914 = vsub.f32 %v902, %v912
      %v915 = vsub.f32 %v903, %v913
      %v916 = vmul.f32 %v914, %v914
      %v917 = vmul.f32 %v915, %v915
      %v918 = vsel %vm616, %v916, 0.0
      %919 = vadd.xlane.f32.xlu0 %v918
      %v920 = vpop.xlane.xlu0 %919
      %v921 = vsel %vm616, %v917, 0.0
      %922 = vadd.xlane.f32.xlu0 %v921
      %v923 = vpop.xlane.xlu0 %922
      %v924 = vmul.f32 %v920, %v733
      %v925 = vmul.f32 %v923, %v733
      %v926 = vadd.f32 %v924, 1e-05
      %v927 = vadd.f32 %v925, 1e-05
      %v928 = vrsqrt.pop %v926
      %v929 = vrsqrt.pop %v927
      %v930 = vmul.f32 %v914, %v928
      %v931 = vmul.f32 %v915, %v929
      %v933 = vlaneseq
      %v934 = vshrl.u32 %v933, 7
      %v935 = vsub.s32 0, %v934
      %v936 = vrot.slane %v904, %v935
      %v938 = vmul.f32 %v930, %v936
      %v939 = vmul.f32 %v931, %v936
      %v941 = vlaneseq
      %v942 = vshrl.u32 %v941, 7
      %v943 = vsub.s32 0, %v942
      %v944 = vrot.slane %v905, %v943
      %v946 = vadd.f32 %v938, %v944
      %v947 = vadd.f32 %v939, %v944
      %v948 = vpack.c.bf16 %v947, %v946
      %v949 = vld [vmem:[%s543] sm:$0xf]
      %v950 = vld [vmem:[%s543 + $0x4] sm:$0xf]
      %v951 = vld [vmem:[%s543 + $0x8] sm:$0xf]
      %v952 = vld [vmem:[%s543 + $0xc] sm:$0xf]
      %v953 = vld [vmem:[%s546] sm:$0x1]
      %v955 = vlaneseq
      %v956 = vshrl.u32 %v955, 7
      %v957 = vsub.s32 0, %v956
      %v958 = vrot.slane %v953, %v957
      %v964 = vunpack.c.l.b16 %v949
      %v965 = vunpack.c.l.b16 %v950
      %v966 = vunpack.c.l.b16 %v951
      %v967 = vunpack.c.l.b16 %v952
      %v968 = vpack.c.b16 %v965, %v964
      %v969 = vpack.c.b16 %v967, %v966
      %v973 = vsel %vm616, %v948, 0
      %975 = vmatprep.subr.bf16.mxu0 0
      %976 = vmatpush1.bf16.msra.mxu0 %v968
      %977 = vmatprep.subr.bf16.mxu0 0
      %978 = vmatpush1.bf16.msra.mxu0 %v969
      %979 = vmatprep.subr.bf16.mxu0 0
      %980 = vmatpush1.bf16.msra.mxu0 0
      %981 = vmatprep.subr.bf16.mxu0 0
      %982 = vmatpush1.bf16.msra.mxu0 0
      %983 = vmatprep.subr.bf16.mxu0 0
      %984 = vmatpush1.bf16.msra.mxu0 0
      %985 = vmatprep.subr.bf16.mxu0 0
      %986 = vmatpush1.bf16.msra.mxu0 0
      %987 = vmatprep.subr.bf16.mxu0 0
      %988 = vmatpush1.bf16.msra.mxu0 0
      %989 = vmatprep.subr.bf16.mxu0 0
      %990 = vmatpush1.bf16.msra.mxu0 0
      %991 = vmatprep.subr.bf16.mxu0 0
      %992 = vmatpush1.bf16.msra.mxu0 0
      %993 = vmatprep.subr.bf16.mxu0 0
      %994 = vmatpush1.bf16.msra.mxu0 0
      %995 = vmatprep.subr.bf16.mxu0 0
      %996 = vmatpush1.bf16.msra.mxu0 0
      %997 = vmatprep.subr.bf16.mxu0 0
      %998 = vmatpush1.bf16.msra.mxu0 0
      %999 = vmatprep.subr.bf16.mxu0 0
      %1000 = vmatpush1.bf16.msra.mxu0 0
      %1001 = vmatprep.subr.bf16.mxu0 0
      %1002 = vmatpush1.bf16.msra.mxu0 0
      %1003 = vmatprep.subr.bf16.mxu0 0
      %1004 = vmatpush1.bf16.msra.mxu0 0
      %1005 = vmatprep.subr.bf16.mxu0 0
      %1006 = vmatpush1.bf16.msra.mxu0 0
      %1007 = vmatprep.mubr.bf16.mxu0 0
      %1008 = vmatmul.mubr.bf16.gmra.mrb[0].mxu0 %v973
      %v1009 = vpop.f32.mrb[0].mxu0
      %v1010 = vadd.f32 %v958, %v1009
      %v1011 = vpop.f32.mrb[0].mxu0
      %v1012 = vpop.f32.mrb[0].mxu0
      %v1013 = vadd.f32 %v958, %v1012
      %v1014 = vpop.f32.mrb[0].mxu0
      %1015 = vdwg.mxu0
      %v1016 = vmul.f32 %v1010, %v555
      %v1017 = vmul.f32 %v1013, %v556
      %vm1018 = vcmask 7168
      %1019 = vst.msk [vmem:[%s551] sm:$0xff] %vm1018, %v1016
      %1020 = vst.msk [vmem:[%s551 + $0x8] sm:$0xff] %vm1018, %v1017
      %p1021 = scmp.lt.s32.totalorder %s23, 1
      %s1022 = scalar_select %p1021, %s23, 1
      %s1023 = smul.addr %s1022, 2
      %s1024 = smul.addr %s1023, 8
      %s1025 = scalar_lea.vmem %s12, %s1024
      // Predicated region
      $region69: #{fastspeech2_forward.4} parent=67 // pred_check
        %p1026 = pneg %p343
      $region70: #{fastspeech2_forward.4} parent=67 // pred_check_branch
        %1028 = sbr.rel (%p1026) target = $region72
      $region71: #{fastspeech2_forward.4} parent=67 // pred_region
        _
      $region72: #{fastspeech2_forward.4} parent=67 // pred_fallthru
        _
    $region68: #{fastspeech2_forward.4} parent=5 // pred_fallthru
      _
    %p1029 = scmp.le.s32.totalorder 2, %s18
    // Predicated region
    $region73: #{fastspeech2_forward.4} parent=5 // pred_check
      %p1030 = pneg %p1029
    $region74: #{fastspeech2_forward.4} parent=5 // pred_check_branch
      %1032 = sbr.rel (%p1030) target = $region76
    $region75: #{fastspeech2_forward.4} parent=5 // pred_region
      %s1033 = ssub.s32 %s18, 2
      // Predicated region
      $region77: #{fastspeech2_forward.4} parent=75 // pred_check
        %p1034 = pneg %p349
      $region78: #{fastspeech2_forward.4} parent=75 // pred_check_branch
        %1036 = sbr.rel (%p1034) target = $region80
      $region79: #{fastspeech2_forward.4} parent=75 // pred_region
        %p1037 = scmp.lt.s32.totalorder %s24, 1
        %s1038 = scalar_select %p1037, %s24, 1
        %s1039 = smul.addr %s1038, 2
        %s1040 = smul.addr %s1039, 8
        %s1041 = scalar_lea.vmem %s12, %s1040
      $region80: #{fastspeech2_forward.4} parent=75 // pred_fallthru
        _
    $region76: #{fastspeech2_forward.4} parent=5 // pred_fallthru
      _
  $region6: #{fastspeech2_forward.4} parent=0 // loop_footer
    %s22 = sadd.s32 1, %s18
  $region7: #{fastspeech2_forward.4} parent=0 // loop_footer_branch
    %17 = sbr.rel target = $region3
  $region8: #{fastspeech2_forward.4} parent=0 // loop_exit
    _

// kernel: fastspeech2_forward.3
$region0: #{fastspeech2_forward.3}
  #allocation0 [shape = 'u32[]', space=smem, size = 0x4, offset = 0x4, fixed_abs, tag = 'smem constant byte address 0x4 - core index']
  #allocation1 [shape = 'u32[144,128]{1,0:T(1,128)}', space=vmem, size = 0x12000, scoped, tag = 'internal scratch']
  #allocation2 [shape = 'f32[8,32]{1,0:T(8,128)}', space=vmem, size = 0x1000, scoped, tag = 'scratch operand']
  %s0 = inlined_call_operand.vmem [shape: f32[1,2,8,32], index: 0, kind: input, shape index: {}]
  %s1 = inlined_call_operand.vmem [shape: f32[1,2,8,1], index: 1, kind: input, shape index: {}]
  %s2 = inlined_call_operand.vmem [shape: f32[1,2,1,8], index: 2, kind: input, shape index: {}]
  %s3 = inlined_call_operand.vmem [shape: bf16[1,2,32,96], index: 3, kind: input, shape index: {}]
  %s4 = inlined_call_operand.vmem [shape: f32[1,2,1,96], index: 4, kind: input, shape index: {}]
  %s5 = inlined_call_operand.vmem [shape: bf16[1,2,32,32], index: 5, kind: input, shape index: {}]
  %s6 = inlined_call_operand.vmem [shape: f32[1,2,1,32], index: 6, kind: input, shape index: {}]
  %s7 = inlined_call_operand.vmem [shape: f32[1,2,1,32], index: 7, kind: input, shape index: {}]
  %s8 = inlined_call_operand.vmem [shape: f32[1,2,1,32], index: 8, kind: input, shape index: {}]
  %s9 = inlined_call_operand.vmem [shape: bf16[1,2,96,64], index: 9, kind: input, shape index: {}]
  %s10 = inlined_call_operand.vmem [shape: f32[1,2,1,64], index: 10, kind: input, shape index: {}]
  %s11 = inlined_call_operand.vmem [shape: bf16[1,2,192,32], index: 11, kind: input, shape index: {}]
  %s12 = inlined_call_operand.vmem [shape: f32[1,2,1,32], index: 12, kind: input, shape index: {}]
  %s13 = inlined_call_operand.vmem [shape: f32[1,2,1,32], index: 13, kind: input, shape index: {}]
  %s14 = inlined_call_operand.vmem [shape: f32[1,2,1,32], index: 14, kind: input, shape index: {}]
  %s15 = inlined_call_operand.vmem [shape: f32[1,2,8,32], index: 15, kind: output, shape index: {}]
  %s16 = sld [smem:[#allocation0]]
  $region101: #{fastspeech2_forward.3} parent=0
    _
  %s18 = ssub.s32 1, %s16
  %s19 = scalar_select 0, %s18, %s16
  loop: start=0, step=1, limit=6
  $region2: #{fastspeech2_forward.3} parent=0 // loop_pre_header
    _
  $region3: #{fastspeech2_forward.3} parent=0 // loop_header
    %s21 = sphi 0, %s25
    %p22 = scmp.ge.s32.totalorder %s21, 6
    %s28 = sphi 0, %s47
    %s29 = sphi 0, %s43
    %s30 = sphi 0, %s39
    %s31 = sphi 0, %s28
    %s32 = sphi 0, %s29
    %s33 = sphi 0, %s30
    %s34 = sphi 0, %s31
    %s35 = sphi 0, %s32
    %s36 = sphi 0, %s33
    %s52 = sphi 0, %s54
    %s55 = sphi 0, %s52
    %s56 = sphi 0, %s55
    %s72 = sphi 0, %s56
    %s80 = sphi 0, %s82
    %s83 = sphi 0, %s80
    %s84 = sphi 0, %s83
    %s100 = sphi 0, %s84
    %s108 = sphi 0, %s110
    %s111 = sphi 0, %s108
    %s112 = sphi 0, %s111
    %s128 = sphi 0, %s112
    %s136 = sphi 0, %s138
    %s139 = sphi 0, %s136
    %s140 = sphi 0, %s139
    %s156 = sphi 0, %s140
    %s164 = sphi 0, %s166
    %s167 = sphi 0, %s164
    %s168 = sphi 0, %s167
    %s184 = sphi 0, %s168
    %s192 = sphi 0, %s194
    %s195 = sphi 0, %s192
    %s196 = sphi 0, %s195
    %s212 = sphi 0, %s196
    %s220 = sphi 0, %s222
    %s223 = sphi 0, %s220
    %s224 = sphi 0, %s223
    %s240 = sphi 0, %s224
    %s248 = sphi 0, %s250
    %s251 = sphi 0, %s248
    %s252 = sphi 0, %s251
    %s268 = sphi 0, %s252
    %s276 = sphi 0, %s278
    %s279 = sphi 0, %s276
    %s280 = sphi 0, %s279
    %s296 = sphi 0, %s280
    %s304 = sphi 0, %s306
    %s307 = sphi 0, %s304
    %s308 = sphi 0, %s307
    %s324 = sphi 0, %s308
    %s332 = sphi 0, %s334
    %s335 = sphi 0, %s332
    %s336 = sphi 0, %s335
    %s352 = sphi 0, %s336
    %s360 = sphi 0, %s362
    %s363 = sphi 0, %s360
    %s364 = sphi 0, %s363
    %s380 = sphi 0, %s364
    %s388 = sphi 0, %s390
    %s391 = sphi 0, %s388
    %s392 = sphi 0, %s391
    %s408 = sphi 0, %s392
    %s416 = sphi 0, %s418
    %s419 = sphi 0, %s416
    %s420 = sphi 0, %s419
    %s436 = sphi 0, %s420
    %s444 = sphi 0, %s446
    %s447 = sphi 0, %s444
    %s448 = sphi 0, %s447
    %s464 = sphi 0, %s448
    %s472 = sphi 0, %s474
    %s475 = sphi 0, %s472
    %s476 = sphi 0, %s475
    %s492 = sphi 0, %s476
  $region4: #{fastspeech2_forward.3} parent=0 // loop_header_branch
    %24 = sbr.rel (%p22) target = $region8
  $region5: #{fastspeech2_forward.3} parent=0 // loop_body
    %s26 = ssub.s32 %s21, 1
    %s27 = ssub.s32 %s21, 2
    %s37 = sadd.s32 1, %s30
    %p38 = scmp.ge.s32.totalorder %s37, 2
    %s39 = scalar_select %p38, 0, %s37
    %s40 = sadd.s32 1, %s29
    %s41 = scalar_select %p38, %s40, %s29
    %p42 = scmp.ge.s32.totalorder %s41, 2
    %s43 = scalar_select %p42, 0, %s41
    %s44 = sadd.s32 1, %s28
    %s45 = scalar_select %p42, %s44, %s28
    %p46 = scmp.ge.s32.totalorder %s45, 1
    %s47 = scalar_select %p46, 0, %s45
    %s48 = ssub.s32 %s28, %s47
    %s49 = ssub.s32 %s29, %s43
    %s50 = sor.u32 %s48, %s49
    %p51 = scmp.eq.s32.totalorder %s50, 0
    %s53 = sadd.s32 %s52, 1
    %s54 = scalar_select %p51, %s52, %s53
    %p57 = pneg %p51
    %p58 = scmp.eq.s32.totalorder %s21, 3
    %p59 = por %p57, %p58
    %p60 = scmp.ne.s32.totalorder %s52, %s55
    %p61 = scmp.eq.s32.totalorder %s21, 0
    %p62 = por %p60, %p61
    %p63 = scmp.ne.s32.totalorder %s52, %s55
    %p64 = scmp.eq.s32.totalorder %s26, 3
    %p65 = por %p63, %p64
    %p66 = scmp.ne.s32.totalorder %s55, %s56
    %p67 = scmp.eq.s32.totalorder %s26, 0
    %p68 = por %p66, %p67
    %p69 = scmp.ne.s32.totalorder %s55, %s56
    %p70 = scmp.eq.s32.totalorder %s27, 3
    %p71 = por %p69, %p70
    %p73 = scmp.ne.s32.totalorder %s56, %s72
    %p74 = scmp.eq.s32.totalorder %s27, 0
    %p75 = por %p73, %p74
    %s76 = ssub.s32 %s28, %s47
    %s77 = ssub.s32 %s29, %s43
    %s78 = sor.u32 %s76, %s77
    %p79 = scmp.eq.s32.totalorder %s78, 0
    %s81 = sadd.s32 %s80, 1
    %s82 = scalar_select %p79, %s80, %s81
    %p85 = pneg %p79
    %p86 = scmp.eq.s32.totalorder %s21, 3
    %p87 = por %p85, %p86
    %p88 = scmp.ne.s32.totalorder %s80, %s83
    %p89 = scmp.eq.s32.totalorder %s21, 0
    %p90 = por %p88, %p89
    %p91 = scmp.ne.s32.totalorder %s80, %s83
    %p92 = scmp.eq.s32.totalorder %s26, 3
    %p93 = por %p91, %p92
    %p94 = scmp.ne.s32.totalorder %s83, %s84
    %p95 = scmp.eq.s32.totalorder %s26, 0
    %p96 = por %p94, %p95
    %p97 = scmp.ne.s32.totalorder %s83, %s84
    %p98 = scmp.eq.s32.totalorder %s27, 3
    %p99 = por %p97, %p98
    %p101 = scmp.ne.s32.totalorder %s84, %s100
    %p102 = scmp.eq.s32.totalorder %s27, 0
    %p103 = por %p101, %p102
    %s104 = ssub.s32 %s28, %s47
    %s105 = ssub.s32 %s29, %s43
    %s106 = sor.u32 %s104, %s105
    %p107 = scmp.eq.s32.totalorder %s106, 0
    %s109 = sadd.s32 %s108, 1
    %s110 = scalar_select %p107, %s108, %s109
    %p113 = pneg %p107
    %p114 = scmp.eq.s32.totalorder %s21, 3
    %p115 = por %p113, %p114
    %p116 = scmp.ne.s32.totalorder %s108, %s111
    %p117 = scmp.eq.s32.totalorder %s21, 0
    %p118 = por %p116, %p117
    %p119 = scmp.ne.s32.totalorder %s108, %s111
    %p120 = scmp.eq.s32.totalorder %s26, 3
    %p121 = por %p119, %p120
    %p122 = scmp.ne.s32.totalorder %s111, %s112
    %p123 = scmp.eq.s32.totalorder %s26, 0
    %p124 = por %p122, %p123
    %p125 = scmp.ne.s32.totalorder %s111, %s112
    %p126 = scmp.eq.s32.totalorder %s27, 3
    %p127 = por %p125, %p126
    %p129 = scmp.ne.s32.totalorder %s112, %s128
    %p130 = scmp.eq.s32.totalorder %s27, 0
    %p131 = por %p129, %p130
    %s132 = ssub.s32 %s28, %s47
    %s133 = ssub.s32 %s30, %s39
    %s134 = sor.u32 %s132, %s133
    %p135 = scmp.eq.s32.totalorder %s134, 0
    %s137 = sadd.s32 %s136, 1
    %s138 = scalar_select %p135, %s136, %s137
    %p141 = pneg %p135
    %p142 = scmp.eq.s32.totalorder %s21, 3
    %p143 = por %p141, %p142
    %p144 = scmp.ne.s32.totalorder %s136, %s139
    %p145 = scmp.eq.s32.totalorder %s21, 0
    %p146 = por %p144, %p145
    %p147 = scmp.ne.s32.totalorder %s136, %s139
    %p148 = scmp.eq.s32.totalorder %s26, 3
    %p149 = por %p147, %p148
    %p150 = scmp.ne.s32.totalorder %s139, %s140
    %p151 = scmp.eq.s32.totalorder %s26, 0
    %p152 = por %p150, %p151
    %p153 = scmp.ne.s32.totalorder %s139, %s140
    %p154 = scmp.eq.s32.totalorder %s27, 3
    %p155 = por %p153, %p154
    %p157 = scmp.ne.s32.totalorder %s140, %s156
    %p158 = scmp.eq.s32.totalorder %s27, 0
    %p159 = por %p157, %p158
    %s160 = ssub.s32 %s28, %s47
    %s161 = ssub.s32 %s30, %s39
    %s162 = sor.u32 %s160, %s161
    %p163 = scmp.eq.s32.totalorder %s162, 0
    %s165 = sadd.s32 %s164, 1
    %s166 = scalar_select %p163, %s164, %s165
    %p169 = pneg %p163
    %p170 = scmp.eq.s32.totalorder %s21, 3
    %p171 = por %p169, %p170
    %p172 = scmp.ne.s32.totalorder %s164, %s167
    %p173 = scmp.eq.s32.totalorder %s21, 0
    %p174 = por %p172, %p173
    %p175 = scmp.ne.s32.totalorder %s164, %s167
    %p176 = scmp.eq.s32.totalorder %s26, 3
    %p177 = por %p175, %p176
    %p178 = scmp.ne.s32.totalorder %s167, %s168
    %p179 = scmp.eq.s32.totalorder %s26, 0
    %p180 = por %p178, %p179
    %p181 = scmp.ne.s32.totalorder %s167, %s168
    %p182 = scmp.eq.s32.totalorder %s27, 3
    %p183 = por %p181, %p182
    %p185 = scmp.ne.s32.totalorder %s168, %s184
    %p186 = scmp.eq.s32.totalorder %s27, 0
    %p187 = por %p185, %p186
    %s188 = ssub.s32 %s28, %s47
    %s189 = ssub.s32 %s30, %s39
    %s190 = sor.u32 %s188, %s189
    %p191 = scmp.eq.s32.totalorder %s190, 0
    %s193 = sadd.s32 %s192, 1
    %s194 = scalar_select %p191, %s192, %s193
    %p197 = pneg %p191
    %p198 = scmp.eq.s32.totalorder %s21, 3
    %p199 = por %p197, %p198
    %p200 = scmp.ne.s32.totalorder %s192, %s195
    %p201 = scmp.eq.s32.totalorder %s21, 0
    %p202 = por %p200, %p201
    %p203 = scmp.ne.s32.totalorder %s192, %s195
    %p204 = scmp.eq.s32.totalorder %s26, 3
    %p205 = por %p203, %p204
    %p206 = scmp.ne.s32.totalorder %s195, %s196
    %p207 = scmp.eq.s32.totalorder %s26, 0
    %p208 = por %p206, %p207
    %p209 = scmp.ne.s32.totalorder %s195, %s196
    %p210 = scmp.eq.s32.totalorder %s27, 3
    %p211 = por %p209, %p210
    %p213 = scmp.ne.s32.totalorder %s196, %s212
    %p214 = scmp.eq.s32.totalorder %s27, 0
    %p215 = por %p213, %p214
    %s216 = ssub.s32 %s28, %s47
    %s217 = ssub.s32 %s30, %s39
    %s218 = sor.u32 %s216, %s217
    %p219 = scmp.eq.s32.totalorder %s218, 0
    %s221 = sadd.s32 %s220, 1
    %s222 = scalar_select %p219, %s220, %s221
    %p225 = pneg %p219
    %p226 = scmp.eq.s32.totalorder %s21, 3
    %p227 = por %p225, %p226
    %p228 = scmp.ne.s32.totalorder %s220, %s223
    %p229 = scmp.eq.s32.totalorder %s21, 0
    %p230 = por %p228, %p229
    %p231 = scmp.ne.s32.totalorder %s220, %s223
    %p232 = scmp.eq.s32.totalorder %s26, 3
    %p233 = por %p231, %p232
    %p234 = scmp.ne.s32.totalorder %s223, %s224
    %p235 = scmp.eq.s32.totalorder %s26, 0
    %p236 = por %p234, %p235
    %p237 = scmp.ne.s32.totalorder %s223, %s224
    %p238 = scmp.eq.s32.totalorder %s27, 3
    %p239 = por %p237, %p238
    %p241 = scmp.ne.s32.totalorder %s224, %s240
    %p242 = scmp.eq.s32.totalorder %s27, 0
    %p243 = por %p241, %p242
    %s244 = ssub.s32 %s28, %s47
    %s245 = ssub.s32 %s30, %s39
    %s246 = sor.u32 %s244, %s245
    %p247 = scmp.eq.s32.totalorder %s246, 0
    %s249 = sadd.s32 %s248, 1
    %s250 = scalar_select %p247, %s248, %s249
    %p253 = pneg %p247
    %p254 = scmp.eq.s32.totalorder %s21, 3
    %p255 = por %p253, %p254
    %p256 = scmp.ne.s32.totalorder %s248, %s251
    %p257 = scmp.eq.s32.totalorder %s21, 0
    %p258 = por %p256, %p257
    %p259 = scmp.ne.s32.totalorder %s248, %s251
    %p260 = scmp.eq.s32.totalorder %s26, 3
    %p261 = por %p259, %p260
    %p262 = scmp.ne.s32.totalorder %s251, %s252
    %p263 = scmp.eq.s32.totalorder %s26, 0
    %p264 = por %p262, %p263
    %p265 = scmp.ne.s32.totalorder %s251, %s252
    %p266 = scmp.eq.s32.totalorder %s27, 3
    %p267 = por %p265, %p266
    %p269 = scmp.ne.s32.totalorder %s252, %s268
    %p270 = scmp.eq.s32.totalorder %s27, 0
    %p271 = por %p269, %p270
    %s272 = ssub.s32 %s28, %s47
    %s273 = ssub.s32 %s30, %s39
    %s274 = sor.u32 %s272, %s273
    %p275 = scmp.eq.s32.totalorder %s274, 0
    %s277 = sadd.s32 %s276, 1
    %s278 = scalar_select %p275, %s276, %s277
    %p281 = pneg %p275
    %p282 = scmp.eq.s32.totalorder %s21, 3
    %p283 = por %p281, %p282
    %p284 = scmp.ne.s32.totalorder %s276, %s279
    %p285 = scmp.eq.s32.totalorder %s21, 0
    %p286 = por %p284, %p285
    %p287 = scmp.ne.s32.totalorder %s276, %s279
    %p288 = scmp.eq.s32.totalorder %s26, 3
    %p289 = por %p287, %p288
    %p290 = scmp.ne.s32.totalorder %s279, %s280
    %p291 = scmp.eq.s32.totalorder %s26, 0
    %p292 = por %p290, %p291
    %p293 = scmp.ne.s32.totalorder %s279, %s280
    %p294 = scmp.eq.s32.totalorder %s27, 3
    %p295 = por %p293, %p294
    %p297 = scmp.ne.s32.totalorder %s280, %s296
    %p298 = scmp.eq.s32.totalorder %s27, 0
    %p299 = por %p297, %p298
    %s300 = ssub.s32 %s28, %s47
    %s301 = ssub.s32 %s30, %s39
    %s302 = sor.u32 %s300, %s301
    %p303 = scmp.eq.s32.totalorder %s302, 0
    %s305 = sadd.s32 %s304, 1
    %s306 = scalar_select %p303, %s304, %s305
    %p309 = pneg %p303
    %p310 = scmp.eq.s32.totalorder %s21, 3
    %p311 = por %p309, %p310
    %p312 = scmp.ne.s32.totalorder %s304, %s307
    %p313 = scmp.eq.s32.totalorder %s21, 0
    %p314 = por %p312, %p313
    %p315 = scmp.ne.s32.totalorder %s304, %s307
    %p316 = scmp.eq.s32.totalorder %s26, 3
    %p317 = por %p315, %p316
    %p318 = scmp.ne.s32.totalorder %s307, %s308
    %p319 = scmp.eq.s32.totalorder %s26, 0
    %p320 = por %p318, %p319
    %p321 = scmp.ne.s32.totalorder %s307, %s308
    %p322 = scmp.eq.s32.totalorder %s27, 3
    %p323 = por %p321, %p322
    %p325 = scmp.ne.s32.totalorder %s308, %s324
    %p326 = scmp.eq.s32.totalorder %s27, 0
    %p327 = por %p325, %p326
    %s328 = ssub.s32 %s28, %s47
    %s329 = ssub.s32 %s30, %s39
    %s330 = sor.u32 %s328, %s329
    %p331 = scmp.eq.s32.totalorder %s330, 0
    %s333 = sadd.s32 %s332, 1
    %s334 = scalar_select %p331, %s332, %s333
    %p337 = pneg %p331
    %p338 = scmp.eq.s32.totalorder %s21, 3
    %p339 = por %p337, %p338
    %p340 = scmp.ne.s32.totalorder %s332, %s335
    %p341 = scmp.eq.s32.totalorder %s21, 0
    %p342 = por %p340, %p341
    %p343 = scmp.ne.s32.totalorder %s332, %s335
    %p344 = scmp.eq.s32.totalorder %s26, 3
    %p345 = por %p343, %p344
    %p346 = scmp.ne.s32.totalorder %s335, %s336
    %p347 = scmp.eq.s32.totalorder %s26, 0
    %p348 = por %p346, %p347
    %p349 = scmp.ne.s32.totalorder %s335, %s336
    %p350 = scmp.eq.s32.totalorder %s27, 3
    %p351 = por %p349, %p350
    %p353 = scmp.ne.s32.totalorder %s336, %s352
    %p354 = scmp.eq.s32.totalorder %s27, 0
    %p355 = por %p353, %p354
    %s356 = ssub.s32 %s28, %s47
    %s357 = ssub.s32 %s30, %s39
    %s358 = sor.u32 %s356, %s357
    %p359 = scmp.eq.s32.totalorder %s358, 0
    %s361 = sadd.s32 %s360, 1
    %s362 = scalar_select %p359, %s360, %s361
    %p365 = pneg %p359
    %p366 = scmp.eq.s32.totalorder %s21, 3
    %p367 = por %p365, %p366
    %p368 = scmp.ne.s32.totalorder %s360, %s363
    %p369 = scmp.eq.s32.totalorder %s21, 0
    %p370 = por %p368, %p369
    %p371 = scmp.ne.s32.totalorder %s360, %s363
    %p372 = scmp.eq.s32.totalorder %s26, 3
    %p373 = por %p371, %p372
    %p374 = scmp.ne.s32.totalorder %s363, %s364
    %p375 = scmp.eq.s32.totalorder %s26, 0
    %p376 = por %p374, %p375
    %p377 = scmp.ne.s32.totalorder %s363, %s364
    %p378 = scmp.eq.s32.totalorder %s27, 3
    %p379 = por %p377, %p378
    %p381 = scmp.ne.s32.totalorder %s364, %s380
    %p382 = scmp.eq.s32.totalorder %s27, 0
    %p383 = por %p381, %p382
    %s384 = ssub.s32 %s28, %s47
    %s385 = ssub.s32 %s30, %s39
    %s386 = sor.u32 %s384, %s385
    %p387 = scmp.eq.s32.totalorder %s386, 0
    %s389 = sadd.s32 %s388, 1
    %s390 = scalar_select %p387, %s388, %s389
    %p393 = pneg %p387
    %p394 = scmp.eq.s32.totalorder %s21, 3
    %p395 = por %p393, %p394
    %p396 = scmp.ne.s32.totalorder %s388, %s391
    %p397 = scmp.eq.s32.totalorder %s21, 0
    %p398 = por %p396, %p397
    %p399 = scmp.ne.s32.totalorder %s388, %s391
    %p400 = scmp.eq.s32.totalorder %s26, 3
    %p401 = por %p399, %p400
    %p402 = scmp.ne.s32.totalorder %s391, %s392
    %p403 = scmp.eq.s32.totalorder %s26, 0
    %p404 = por %p402, %p403
    %p405 = scmp.ne.s32.totalorder %s391, %s392
    %p406 = scmp.eq.s32.totalorder %s27, 3
    %p407 = por %p405, %p406
    %p409 = scmp.ne.s32.totalorder %s392, %s408
    %p410 = scmp.eq.s32.totalorder %s27, 0
    %p411 = por %p409, %p410
    %s412 = ssub.s32 %s28, %s47
    %s413 = ssub.s32 %s30, %s39
    %s414 = sor.u32 %s412, %s413
    %p415 = scmp.eq.s32.totalorder %s414, 0
    %s417 = sadd.s32 %s416, 1
    %s418 = scalar_select %p415, %s416, %s417
    %p421 = pneg %p415
    %p422 = scmp.eq.s32.totalorder %s21, 3
    %p423 = por %p421, %p422
    %p424 = scmp.ne.s32.totalorder %s416, %s419
    %p425 = scmp.eq.s32.totalorder %s21, 0
    %p426 = por %p424, %p425
    %p427 = scmp.ne.s32.totalorder %s416, %s419
    %p428 = scmp.eq.s32.totalorder %s26, 3
    %p429 = por %p427, %p428
    %p430 = scmp.ne.s32.totalorder %s419, %s420
    %p431 = scmp.eq.s32.totalorder %s26, 0
    %p432 = por %p430, %p431
    %p433 = scmp.ne.s32.totalorder %s419, %s420
    %p434 = scmp.eq.s32.totalorder %s27, 3
    %p435 = por %p433, %p434
    %p437 = scmp.ne.s32.totalorder %s420, %s436
    %p438 = scmp.eq.s32.totalorder %s27, 0
    %p439 = por %p437, %p438
    %s440 = ssub.s32 %s28, %s47
    %s441 = ssub.s32 %s30, %s39
    %s442 = sor.u32 %s440, %s441
    %p443 = scmp.eq.s32.totalorder %s442, 0
    %s445 = sadd.s32 %s444, 1
    %s446 = scalar_select %p443, %s444, %s445
    %p449 = pneg %p443
    %p450 = scmp.eq.s32.totalorder %s21, 3
    %p451 = por %p449, %p450
    %p452 = scmp.ne.s32.totalorder %s444, %s447
    %p453 = scmp.eq.s32.totalorder %s21, 0
    %p454 = por %p452, %p453
    %p455 = scmp.ne.s32.totalorder %s444, %s447
    %p456 = scmp.eq.s32.totalorder %s26, 3
    %p457 = por %p455, %p456
    %p458 = scmp.ne.s32.totalorder %s447, %s448
    %p459 = scmp.eq.s32.totalorder %s26, 0
    %p460 = por %p458, %p459
    %p461 = scmp.ne.s32.totalorder %s447, %s448
    %p462 = scmp.eq.s32.totalorder %s27, 3
    %p463 = por %p461, %p462
    %p465 = scmp.ne.s32.totalorder %s448, %s464
    %p466 = scmp.eq.s32.totalorder %s27, 0
    %p467 = por %p465, %p466
    %s468 = ssub.s32 %s28, %s47
    %s469 = ssub.s32 %s29, %s43
    %s470 = sor.u32 %s468, %s469
    %p471 = scmp.eq.s32.totalorder %s470, 0
    %s473 = sadd.s32 %s472, 1
    %s474 = scalar_select %p471, %s472, %s473
    %p477 = pneg %p471
    %p478 = scmp.eq.s32.totalorder %s21, 3
    %p479 = por %p477, %p478
    %p480 = scmp.ne.s32.totalorder %s472, %s475
    %p481 = scmp.eq.s32.totalorder %s21, 0
    %p482 = por %p480, %p481
    %p483 = scmp.ne.s32.totalorder %s472, %s475
    %p484 = scmp.eq.s32.totalorder %s26, 3
    %p485 = por %p483, %p484
    %p486 = scmp.ne.s32.totalorder %s475, %s476
    %p487 = scmp.eq.s32.totalorder %s26, 0
    %p488 = por %p486, %p487
    %p489 = scmp.ne.s32.totalorder %s475, %s476
    %p490 = scmp.eq.s32.totalorder %s27, 3
    %p491 = por %p489, %p490
    %p493 = scmp.ne.s32.totalorder %s476, %s492
    %p494 = scmp.eq.s32.totalorder %s27, 0
    %p495 = por %p493, %p494
    %p496 = scmp.le.s32.totalorder 1, %s21
    %p497 = scmp.lt.s32.totalorder %s21, 5
    %p498 = pnand %p496, %p497
    %p499 = pneg %p498
    // Predicated region
    $region9: #{fastspeech2_forward.3} parent=5 // pred_check
      _
    $region10: #{fastspeech2_forward.3} parent=5 // pred_check_branch
      %501 = sbr.rel (%p498) target = $region12
    $region11: #{fastspeech2_forward.3} parent=5 // pred_region
      %s502 = ssub.s32 %s21, 1
    $region12: #{fastspeech2_forward.3} parent=5 // pred_fallthru
      _
    %p503 = scmp.lt.s32.totalorder %s21, 4
    // Predicated region
    $region13: #{fastspeech2_forward.3} parent=5 // pred_check
      %p504 = pneg %p503
    $region14: #{fastspeech2_forward.3} parent=5 // pred_check_branch
      %506 = sbr.rel (%p504) target = $region16
    $region15: #{fastspeech2_forward.3} parent=5 // pred_region
      // Predicated region
      $region17: #{fastspeech2_forward.3} parent=15 // pred_check
        %p507 = pneg %p62
      $region18: #{fastspeech2_forward.3} parent=15 // pred_check_branch
        %509 = sbr.rel (%p507) target = $region20
      $region19: #{fastspeech2_forward.3} parent=15 // pred_region
        %p510 = scmp.lt.s32.totalorder %s28, 0
        %s511 = scalar_select %p510, %s28, 0
        %p512 = scmp.lt.s32.totalorder %s29, 1
        %s513 = scalar_select %p512, %s29, 1
        %s514 = smul.addr %s511, 2
        %s515 = sadd.s32 %s513, %s514
        %s516 = smul.addr %s515, 8
        %s517 = scalar_lea.vmem %s0, %s516
      $region20: #{fastspeech2_forward.3} parent=15 // pred_fallthru
        _
      // Predicated region
      $region21: #{fastspeech2_forward.3} parent=15 // pred_check
        %p518 = pneg %p90
      $region22: #{fastspeech2_forward.3} parent=15 // pred_check_branch
        %520 = sbr.rel (%p518) target = $region24
      $region23: #{fastspeech2_forward.3} parent=15 // pred_region
        %p521 = scmp.lt.s32.totalorder %s28, 0
        %s522 = scalar_select %p521, %s28, 0
        %p523 = scmp.lt.s32.totalorder %s29, 1
        %s524 = scalar_select %p523, %s29, 1
        %s525 = smul.addr %s522, 2
        %s526 = sadd.s32 %s524, %s525
        %s527 = smul.addr %s526, 8
        %s528 = scalar_lea.vmem %s1, %s527
      $region24: #{fastspeech2_forward.3} parent=15 // pred_fallthru
        _
      // Predicated region
      $region25: #{fastspeech2_forward.3} parent=15 // pred_check
        %p529 = pneg %p118
      $region26: #{fastspeech2_forward.3} parent=15 // pred_check_branch
        %531 = sbr.rel (%p529) target = $region28
      $region27: #{fastspeech2_forward.3} parent=15 // pred_region
        %p532 = scmp.lt.s32.totalorder %s28, 0
        %s533 = scalar_select %p532, %s28, 0
        %p534 = scmp.lt.s32.totalorder %s29, 1
        %s535 = scalar_select %p534, %s29, 1
        %s536 = smul.addr %s533, 2
        %s537 = sadd.s32 %s535, %s536
        %s538 = scalar_lea.vmem %s2, %s537
      $region28: #{fastspeech2_forward.3} parent=15 // pred_fallthru
        _
      // Predicated region
      $region29: #{fastspeech2_forward.3} parent=15 // pred_check
        %p539 = pneg %p146
      $region30: #{fastspeech2_forward.3} parent=15 // pred_check_branch
        %541 = sbr.rel (%p539) target = $region32
      $region31: #{fastspeech2_forward.3} parent=15 // pred_region
        %p542 = scmp.lt.s32.totalorder %s28, 0
        %s543 = scalar_select %p542, %s28, 0
        %p544 = scmp.lt.s32.totalorder %s30, 1
        %s545 = scalar_select %p544, %s30, 1
        %s546 = smul.addr %s545, 4
        %s547 = smul.addr %s543, 8
        %s548 = sadd.s32 %s546, %s547
        %s549 = smul.addr %s548, 4
        %s550 = scalar_lea.vmem %s3, %s549
      $region32: #{fastspeech2_forward.3} parent=15 // pred_fallthru
        _
      // Predicated region
      $region33: #{fastspeech2_forward.3} parent=15 // pred_check
        %p551 = pneg %p174
      $region34: #{fastspeech2_forward.3} parent=15 // pred_check_branch
        %553 = sbr.rel (%p551) target = $region36
      $region35: #{fastspeech2_forward.3} parent=15 // pred_region
        %p554 = scmp.lt.s32.totalorder %s28, 0
        %s555 = scalar_select %p554, %s28, 0
        %p556 = scmp.lt.s32.totalorder %s30, 1
        %s557 = scalar_select %p556, %s30, 1
        %s558 = smul.addr %s555, 2
        %s559 = sadd.s32 %s557, %s558
        %s560 = scalar_lea.vmem %s4, %s559
      $region36: #{fastspeech2_forward.3} parent=15 // pred_fallthru
        _
      // Predicated region
      $region37: #{fastspeech2_forward.3} parent=15 // pred_check
        %p561 = pneg %p202
      $region38: #{fastspeech2_forward.3} parent=15 // pred_check_branch
        %563 = sbr.rel (%p561) target = $region40
      $region39: #{fastspeech2_forward.3} parent=15 // pred_region
        %p564 = scmp.lt.s32.totalorder %s28, 0
        %s565 = scalar_select %p564, %s28, 0
        %p566 = scmp.lt.s32.totalorder %s30, 1
        %s567 = scalar_select %p566, %s30, 1
        %s568 = smul.addr %s567, 4
        %s569 = smul.addr %s565, 8
        %s570 = sadd.s32 %s568, %s569
        %s571 = smul.addr %s570, 4
        %s572 = scalar_lea.vmem %s5, %s571
      $region40: #{fastspeech2_forward.3} parent=15 // pred_fallthru
        _
      // Predicated region
      $region41: #{fastspeech2_forward.3} parent=15 // pred_check
        %p573 = pneg %p230
      $region42: #{fastspeech2_forward.3} parent=15 // pred_check_branch
        %575 = sbr.rel (%p573) target = $region44
      $region43: #{fastspeech2_forward.3} parent=15 // pred_region
        %p576 = scmp.lt.s32.totalorder %s28, 0
        %s577 = scalar_select %p576, %s28, 0
        %p578 = scmp.lt.s32.totalorder %s30, 1
        %s579 = scalar_select %p578, %s30, 1
        %s580 = smul.addr %s577, 2
        %s581 = sadd.s32 %s579, %s580
        %s582 = scalar_lea.vmem %s6, %s581
      $region44: #{fastspeech2_forward.3} parent=15 // pred_fallthru
        _
      // Predicated region
      $region45: #{fastspeech2_forward.3} parent=15 // pred_check
        %p583 = pneg %p258
      $region46: #{fastspeech2_forward.3} parent=15 // pred_check_branch
        %585 = sbr.rel (%p583) target = $region48
      $region47: #{fastspeech2_forward.3} parent=15 // pred_region
        %p586 = scmp.lt.s32.totalorder %s28, 0
        %s587 = scalar_select %p586, %s28, 0
        %p588 = scmp.lt.s32.totalorder %s30, 1
        %s589 = scalar_select %p588, %s30, 1
        %s590 = smul.addr %s587, 2
        %s591 = sadd.s32 %s589, %s590
        %s592 = scalar_lea.vmem %s7, %s591
      $region48: #{fastspeech2_forward.3} parent=15 // pred_fallthru
        _
      // Predicated region
      $region49: #{fastspeech2_forward.3} parent=15 // pred_check
        %p593 = pneg %p286
      $region50: #{fastspeech2_forward.3} parent=15 // pred_check_branch
        %595 = sbr.rel (%p593) target = $region52
      $region51: #{fastspeech2_forward.3} parent=15 // pred_region
        %p596 = scmp.lt.s32.totalorder %s28, 0
        %s597 = scalar_select %p596, %s28, 0
        %p598 = scmp.lt.s32.totalorder %s30, 1
        %s599 = scalar_select %p598, %s30, 1
        %s600 = smul.addr %s597, 2
        %s601 = sadd.s32 %s599, %s600
        %s602 = scalar_lea.vmem %s8, %s601
      $region52: #{fastspeech2_forward.3} parent=15 // pred_fallthru
        _
      // Predicated region
      $region53: #{fastspeech2_forward.3} parent=15 // pred_check
        %p603 = pneg %p314
      $region54: #{fastspeech2_forward.3} parent=15 // pred_check_branch
        %605 = sbr.rel (%p603) target = $region56
      $region55: #{fastspeech2_forward.3} parent=15 // pred_region
        %p606 = scmp.lt.s32.totalorder %s28, 0
        %s607 = scalar_select %p606, %s28, 0
        %p608 = scmp.lt.s32.totalorder %s30, 1
        %s609 = scalar_select %p608, %s30, 1
        %s610 = smul.addr %s609, 12
        %s611 = smul.addr %s607, 24
        %s612 = sadd.s32 %s610, %s611
        %s613 = smul.addr %s612, 4
        %s614 = scalar_lea.vmem %s9, %s613
      $region56: #{fastspeech2_forward.3} parent=15 // pred_fallthru
        _
      // Predicated region
      $region57: #{fastspeech2_forward.3} parent=15 // pred_check
        %p615 = pneg %p342
      $region58: #{fastspeech2_forward.3} parent=15 // pred_check_branch
        %617 = sbr.rel (%p615) target = $region60
      $region59: #{fastspeech2_forward.3} parent=15 // pred_region
        %p618 = scmp.lt.s32.totalorder %s28, 0
        %s619 = scalar_select %p618, %s28, 0
        %p620 = scmp.lt.s32.totalorder %s30, 1
        %s621 = scalar_select %p620, %s30, 1
        %s622 = smul.addr %s619, 2
        %s623 = sadd.s32 %s621, %s622
        %s624 = scalar_lea.vmem %s10, %s623
      $region60: #{fastspeech2_forward.3} parent=15 // pred_fallthru
        _
      // Predicated region
      $region61: #{fastspeech2_forward.3} parent=15 // pred_check
        %p625 = pneg %p370
      $region62: #{fastspeech2_forward.3} parent=15 // pred_check_branch
        %627 = sbr.rel (%p625) target = $region64
      $region63: #{fastspeech2_forward.3} parent=15 // pred_region
        %p628 = scmp.lt.s32.totalorder %s28, 0
        %s629 = scalar_select %p628, %s28, 0
        %p630 = scmp.lt.s32.totalorder %s30, 1
        %s631 = scalar_select %p630, %s30, 1
        %s632 = smul.addr %s631, 24
        %s633 = smul.addr %s629, 48
        %s634 = sadd.s32 %s632, %s633
        %s635 = smul.addr %s634, 4
        %s636 = scalar_lea.vmem %s11, %s635
      $region64: #{fastspeech2_forward.3} parent=15 // pred_fallthru
        _
      // Predicated region
      $region65: #{fastspeech2_forward.3} parent=15 // pred_check
        %p637 = pneg %p398
      $region66: #{fastspeech2_forward.3} parent=15 // pred_check_branch
        %639 = sbr.rel (%p637) target = $region68
      $region67: #{fastspeech2_forward.3} parent=15 // pred_region
        %p640 = scmp.lt.s32.totalorder %s28, 0
        %s641 = scalar_select %p640, %s28, 0
        %p642 = scmp.lt.s32.totalorder %s30, 1
        %s643 = scalar_select %p642, %s30, 1
        %s644 = smul.addr %s641, 2
        %s645 = sadd.s32 %s643, %s644
        %s646 = scalar_lea.vmem %s12, %s645
      $region68: #{fastspeech2_forward.3} parent=15 // pred_fallthru
        _
      // Predicated region
      $region69: #{fastspeech2_forward.3} parent=15 // pred_check
        %p647 = pneg %p426
      $region70: #{fastspeech2_forward.3} parent=15 // pred_check_branch
        %649 = sbr.rel (%p647) target = $region72
      $region71: #{fastspeech2_forward.3} parent=15 // pred_region
        %p650 = scmp.lt.s32.totalorder %s28, 0
        %s651 = scalar_select %p650, %s28, 0
        %p652 = scmp.lt.s32.totalorder %s30, 1
        %s653 = scalar_select %p652, %s30, 1
        %s654 = smul.addr %s651, 2
        %s655 = sadd.s32 %s653, %s654
        %s656 = scalar_lea.vmem %s13, %s655
      $region72: #{fastspeech2_forward.3} parent=15 // pred_fallthru
        _
      // Predicated region
      $region73: #{fastspeech2_forward.3} parent=15 // pred_check
        %p657 = pneg %p454
      $region74: #{fastspeech2_forward.3} parent=15 // pred_check_branch
        %659 = sbr.rel (%p657) target = $region76
      $region75: #{fastspeech2_forward.3} parent=15 // pred_region
        %p660 = scmp.lt.s32.totalorder %s28, 0
        %s661 = scalar_select %p660, %s28, 0
        %p662 = scmp.lt.s32.totalorder %s30, 1
        %s663 = scalar_select %p662, %s30, 1
        %s664 = smul.addr %s661, 2
        %s665 = sadd.s32 %s663, %s664
        %s666 = scalar_lea.vmem %s14, %s665
      $region76: #{fastspeech2_forward.3} parent=15 // pred_fallthru
        _
    $region16: #{fastspeech2_forward.3} parent=5 // pred_fallthru
      _
    %p667 = scmp.le.s32.totalorder 1, %s21
    %p668 = scmp.lt.s32.totalorder %s21, 5
    %p669 = pnand %p667, %p668
    %p670 = pneg %p669
    // Predicated region
    $region77: #{fastspeech2_forward.3} parent=5 // pred_check
      _
    $region78: #{fastspeech2_forward.3} parent=5 // pred_check_branch
      %672 = sbr.rel (%p669) target = $region80
    $region79: #{fastspeech2_forward.3} parent=5 // pred_region
      %s673 = ssub.s32 %s21, 1
      %p674 = scmp.lt.s32.totalorder %s31, 0
      %s675 = scalar_select %p674, %s31, 0
      %p676 = scmp.lt.s32.totalorder %s32, 1
      %s677 = scalar_select %p676, %s32, 1
      %s678 = smul.addr %s675, 2
      %s679 = sadd.s32 %s677, %s678
      %s680 = smul.addr %s679, 8
      %s681 = scalar_lea.vmem %s0, %s680
      %p682 = pneg %p68
      %p683 = pneg %p65
      %p684 = scmp.lt.s32.totalorder %s31, 0
      %s685 = scalar_select %p684, %s31, 0
      %p686 = scmp.lt.s32.totalorder %s32, 1
      %s687 = scalar_select %p686, %s32, 1
      %s688 = smul.addr %s685, 2
      %s689 = sadd.s32 %s687, %s688
      %s690 = smul.addr %s689, 8
      %s691 = scalar_lea.vmem %s1, %s690
      %p692 = pneg %p96
      %p693 = pneg %p93
      %p694 = scmp.lt.s32.totalorder %s31, 0
      %s695 = scalar_select %p694, %s31, 0
      %p696 = scmp.lt.s32.totalorder %s32, 1
      %s697 = scalar_select %p696, %s32, 1
      %s698 = smul.addr %s695, 2
      %s699 = sadd.s32 %s697, %s698
      %s700 = scalar_lea.vmem %s2, %s699
      %p701 = pneg %p124
      %p702 = pneg %p121
      %p703 = scmp.lt.s32.totalorder %s31, 0
      %s704 = scalar_select %p703, %s31, 0
      %p705 = scmp.lt.s32.totalorder %s33, 1
      %s706 = scalar_select %p705, %s33, 1
      %s707 = smul.addr %s706, 4
      %s708 = smul.addr %s704, 8
      %s709 = sadd.s32 %s707, %s708
      %s710 = smul.addr %s709, 4
      %s711 = scalar_lea.vmem %s3, %s710
      %p712 = pneg %p152
      %p713 = pneg %p149
      %p714 = scmp.lt.s32.totalorder %s31, 0
      %s715 = scalar_select %p714, %s31, 0
      %p716 = scmp.lt.s32.totalorder %s33, 1
      %s717 = scalar_select %p716, %s33, 1
      %s718 = smul.addr %s715, 2
      %s719 = sadd.s32 %s717, %s718
      %s720 = scalar_lea.vmem %s4, %s719
      %p721 = pneg %p180
      %p722 = pneg %p177
      %p723 = scmp.lt.s32.totalorder %s31, 0
      %s724 = scalar_select %p723, %s31, 0
      %p725 = scmp.lt.s32.totalorder %s33, 1
      %s726 = scalar_select %p725, %s33, 1
      %s727 = smul.addr %s726, 4
      %s728 = smul.addr %s724, 8
      %s729 = sadd.s32 %s727, %s728
      %s730 = smul.addr %s729, 4
      %s731 = scalar_lea.vmem %s5, %s730
      %p732 = pneg %p208
      %p733 = pneg %p205
      %p734 = scmp.lt.s32.totalorder %s31, 0
      %s735 = scalar_select %p734, %s31, 0
      %p736 = scmp.lt.s32.totalorder %s33, 1
      %s737 = scalar_select %p736, %s33, 1
      %s738 = smul.addr %s735, 2
      %s739 = sadd.s32 %s737, %s738
      %s740 = scalar_lea.vmem %s6, %s739
      %p741 = pneg %p236
      %p742 = pneg %p233
      %p743 = scmp.lt.s32.totalorder %s31, 0
      %s744 = scalar_select %p743, %s31, 0
      %p745 = scmp.lt.s32.totalorder %s33, 1
      %s746 = scalar_select %p745, %s33, 1
      %s747 = smul.addr %s744, 2
      %s748 = sadd.s32 %s746, %s747
      %s749 = scalar_lea.vmem %s7, %s748
      %p750 = pneg %p264
      %p751 = pneg %p261
      %p752 = scmp.lt.s32.totalorder %s31, 0
      %s753 = scalar_select %p752, %s31, 0
      %p754 = scmp.lt.s32.totalorder %s33, 1
      %s755 = scalar_select %p754, %s33, 1
      %s756 = smul.addr %s753, 2
      %s757 = sadd.s32 %s755, %s756
      %s758 = scalar_lea.vmem %s8, %s757
      %p759 = pneg %p292
      %p760 = pneg %p289
      %p761 = scmp.lt.s32.totalorder %s31, 0
      %s762 = scalar_select %p761, %s31, 0
      %p763 = scmp.lt.s32.totalorder %s33, 1
      %s764 = scalar_select %p763, %s33, 1
      %s765 = smul.addr %s764, 12
      %s766 = smul.addr %s762, 24
      %s767 = sadd.s32 %s765, %s766
      %s768 = smul.addr %s767, 4
      %s769 = scalar_lea.vmem %s9, %s768
      %p770 = pneg %p320
      %p771 = pneg %p317
      %p772 = scmp.lt.s32.totalorder %s31, 0
      %s773 = scalar_select %p772, %s31, 0
      %p774 = scmp.lt.s32.totalorder %s33, 1
      %s775 = scalar_select %p774, %s33, 1
      %s776 = smul.addr %s773, 2
      %s777 = sadd.s32 %s775, %s776
      %s778 = scalar_lea.vmem %s10, %s777
      %p779 = pneg %p348
      %p780 = pneg %p345
      %p781 = scmp.lt.s32.totalorder %s31, 0
      %s782 = scalar_select %p781, %s31, 0
      %p783 = scmp.lt.s32.totalorder %s33, 1
      %s784 = scalar_select %p783, %s33, 1
      %s785 = smul.addr %s784, 24
      %s786 = smul.addr %s782, 48
      %s787 = sadd.s32 %s785, %s786
      %s788 = smul.addr %s787, 4
      %s789 = scalar_lea.vmem %s11, %s788
      %p790 = pneg %p376
      %p791 = pneg %p373
      %p792 = scmp.lt.s32.totalorder %s31, 0
      %s793 = scalar_select %p792, %s31, 0
      %p794 = scmp.lt.s32.totalorder %s33, 1
      %s795 = scalar_select %p794, %s33, 1
      %s796 = smul.addr %s793, 2
      %s797 = sadd.s32 %s795, %s796
      %s798 = scalar_lea.vmem %s12, %s797
      %p799 = pneg %p404
      %p800 = pneg %p401
      %p801 = scmp.lt.s32.totalorder %s31, 0
      %s802 = scalar_select %p801, %s31, 0
      %p803 = scmp.lt.s32.totalorder %s33, 1
      %s804 = scalar_select %p803, %s33, 1
      %s805 = smul.addr %s802, 2
      %s806 = sadd.s32 %s804, %s805
      %s807 = scalar_lea.vmem %s13, %s806
      %p808 = pneg %p432
      %p809 = pneg %p429
      %p810 = scmp.lt.s32.totalorder %s31, 0
      %s811 = scalar_select %p810, %s31, 0
      %p812 = scmp.lt.s32.totalorder %s33, 1
      %s813 = scalar_select %p812, %s33, 1
      %s814 = smul.addr %s811, 2
      %s815 = sadd.s32 %s813, %s814
      %s816 = scalar_lea.vmem %s14, %s815
      %p817 = pneg %p460
      %p818 = pneg %p457
      %p819 = pneg %p488
      %p820 = pneg %p485
      %p821 = scmp.lt.s32.totalorder %s31, 0
      %s822 = scalar_select %p821, %s31, 0
      %p823 = scmp.lt.s32.totalorder %s32, 1
      %s824 = scalar_select %p823, %s32, 1
      %s825 = smul.addr %s822, 2
      %s826 = sadd.s32 %s824, %s825
      %s827 = smul.addr %s826, 8
      %s828 = scalar_lea.vmem %s15, %s827
      %p829 = scmp.lt.s32.totalorder %s31, 0
      %s830 = scalar_select %p829, %s31, 0
      %p831 = scmp.lt.s32.totalorder %s32, 1
      %s832 = scalar_select %p831, %s32, 1
      %s833 = smul.addr %s830, 2
      %s834 = sadd.s32 %s832, %s833
      %s835 = smul.addr %s834, 8
      %s836 = scalar_lea.vmem %s0, %s835
      %p837 = scmp.lt.s32.totalorder %s31, 0
      %s838 = scalar_select %p837, %s31, 0
      %p839 = scmp.lt.s32.totalorder %s32, 1
      %s840 = scalar_select %p839, %s32, 1
      %s841 = smul.addr %s838, 2
      %s842 = sadd.s32 %s840, %s841
      %s843 = smul.addr %s842, 8
      %s844 = scalar_lea.vmem %s1, %s843
      %p845 = scmp.lt.s32.totalorder %s31, 0
      %s846 = scalar_select %p845, %s31, 0
      %p847 = scmp.lt.s32.totalorder %s32, 1
      %s848 = scalar_select %p847, %s32, 1
      %s849 = smul.addr %s846, 2
      %s850 = sadd.s32 %s848, %s849
      %s851 = scalar_lea.vmem %s2, %s850
      %p852 = scmp.lt.s32.totalorder %s31, 0
      %s853 = scalar_select %p852, %s31, 0
      %p854 = scmp.lt.s32.totalorder %s33, 1
      %s855 = scalar_select %p854, %s33, 1
      %s856 = smul.addr %s855, 4
      %s857 = smul.addr %s853, 8
      %s858 = sadd.s32 %s856, %s857
      %s859 = smul.addr %s858, 4
      %s860 = scalar_lea.vmem %s3, %s859
      %p861 = scmp.lt.s32.totalorder %s31, 0
      %s862 = scalar_select %p861, %s31, 0
      %p863 = scmp.lt.s32.totalorder %s33, 1
      %s864 = scalar_select %p863, %s33, 1
      %s865 = smul.addr %s862, 2
      %s866 = sadd.s32 %s864, %s865
      %s867 = scalar_lea.vmem %s4, %s866
      %p868 = scmp.lt.s32.totalorder %s31, 0
      %s869 = scalar_select %p868, %s31, 0
      %p870 = scmp.lt.s32.totalorder %s33, 1
      %s871 = scalar_select %p870, %s33, 1
      %s872 = smul.addr %s871, 4
      %s873 = smul.addr %s869, 8
      %s874 = sadd.s32 %s872, %s873
      %s875 = smul.addr %s874, 4
      %s876 = scalar_lea.vmem %s5, %s875
      %p877 = scmp.lt.s32.totalorder %s31, 0
      %s878 = scalar_select %p877, %s31, 0
      %p879 = scmp.lt.s32.totalorder %s33, 1
      %s880 = scalar_select %p879, %s33, 1
      %s881 = smul.addr %s878, 2
      %s882 = sadd.s32 %s880, %s881
      %s883 = scalar_lea.vmem %s6, %s882
      %p884 = scmp.lt.s32.totalorder %s31, 0
      %s885 = scalar_select %p884, %s31, 0
      %p886 = scmp.lt.s32.totalorder %s33, 1
      %s887 = scalar_select %p886, %s33, 1
      %s888 = smul.addr %s885, 2
      %s889 = sadd.s32 %s887, %s888
      %s890 = scalar_lea.vmem %s7, %s889
      %p891 = scmp.lt.s32.totalorder %s31, 0
      %s892 = scalar_select %p891, %s31, 0
      %p893 = scmp.lt.s32.totalorder %s33, 1
      %s894 = scalar_select %p893, %s33, 1
      %s895 = smul.addr %s892, 2
      %s896 = sadd.s32 %s894, %s895
      %s897 = scalar_lea.vmem %s8, %s896
      %p898 = scmp.lt.s32.totalorder %s31, 0
      %s899 = scalar_select %p898, %s31, 0
      %p900 = scmp.lt.s32.totalorder %s33, 1
      %s901 = scalar_select %p900, %s33, 1
      %s902 = smul.addr %s901, 12
      %s903 = smul.addr %s899, 24
      %s904 = sadd.s32 %s902, %s903
      %s905 = smul.addr %s904, 4
      %s906 = scalar_lea.vmem %s9, %s905
      %p907 = scmp.lt.s32.totalorder %s31, 0
      %s908 = scalar_select %p907, %s31, 0
      %p909 = scmp.lt.s32.totalorder %s33, 1
      %s910 = scalar_select %p909, %s33, 1
      %s911 = smul.addr %s908, 2
      %s912 = sadd.s32 %s910, %s911
      %s913 = scalar_lea.vmem %s10, %s912
      %p914 = scmp.lt.s32.totalorder %s31, 0
      %s915 = scalar_select %p914, %s31, 0
      %p916 = scmp.lt.s32.totalorder %s33, 1
      %s917 = scalar_select %p916, %s33, 1
      %s918 = smul.addr %s917, 24
      %s919 = smul.addr %s915, 48
      %s920 = sadd.s32 %s918, %s919
      %s921 = smul.addr %s920, 4
      %s922 = scalar_lea.vmem %s11, %s921
      %p923 = scmp.lt.s32.totalorder %s31, 0
      %s924 = scalar_select %p923, %s31, 0
      %p925 = scmp.lt.s32.totalorder %s33, 1
      %s926 = scalar_select %p925, %s33, 1
      %s927 = smul.addr %s924, 2
      %s928 = sadd.s32 %s926, %s927
      %s929 = scalar_lea.vmem %s12, %s928
      %p930 = scmp.lt.s32.totalorder %s31, 0
      %s931 = scalar_select %p930, %s31, 0
      %p932 = scmp.lt.s32.totalorder %s33, 1
      %s933 = scalar_select %p932, %s33, 1
      %s934 = smul.addr %s931, 2
      %s935 = sadd.s32 %s933, %s934
      %s936 = scalar_lea.vmem %s13, %s935
      %p937 = scmp.lt.s32.totalorder %s31, 0
      %s938 = scalar_select %p937, %s31, 0
      %p939 = scmp.lt.s32.totalorder %s33, 1
      %s940 = scalar_select %p939, %s33, 1
      %s941 = smul.addr %s938, 2
      %s942 = sadd.s32 %s940, %s941
      %s943 = scalar_lea.vmem %s14, %s942
      %p944 = scmp.lt.s32.totalorder %s31, 0
      %s945 = scalar_select %p944, %s31, 0
      %p946 = scmp.lt.s32.totalorder %s32, 1
      %s947 = scalar_select %p946, %s32, 1
      %s948 = smul.addr %s945, 2
      %s949 = sadd.s32 %s947, %s948
      %s950 = smul.addr %s949, 8
      %s951 = scalar_lea.vmem %s15, %s950
      %p953 = scmp.eq.s32.totalorder %s33, 0
      // Predicated region
      $region81: #{fastspeech2_forward.3} parent=79 // pred_check
        %p954 = pneg %p953
      $region82: #{fastspeech2_forward.3} parent=79 // pred_check_branch
        %956 = sbr.rel (%p954) target = $region84
      $region83: #{fastspeech2_forward.3} parent=79 // pred_region
        %v957 = vld [vmem:[%s836] sm:$0xff]
        %vm958 = vcmask 261120
        %959 = vst.msk [vmem:[#allocation2] sm:$0xff] %vm958, %v957
      $region84: #{fastspeech2_forward.3} parent=79 // pred_fallthru
        _
      %v960 = vld [vmem:[#allocation2] sm:$0xff]
      %v961 = vld [vmem:[%s844] sm:$0xff]
      %v962 = vld [vmem:[%s851] sm:$0x1]
      %v963 = vsub.f32 %v962, 1.0
      %v964 = vmul.f32 %v963, 1e+09
      %v965 = vlaneseq
      %v966 = vshrl.u32 %v965, 7
      %v967 = vand.u32 %v966, 7
      %v968 = vld [vmem:[%s860] sm:$0xf]
      %v969 = vld [vmem:[%s860 + $0x4] sm:$0xf]
      %v970 = vld [vmem:[%s860 + $0x8] sm:$0xf]
      %v971 = vld [vmem:[%s860 + $0xc] sm:$0xf]
      %v972 = vld [vmem:[%s867] sm:$0x1]
      %v973 = vld [vmem:[%s876] sm:$0xf]
      %v974 = vld [vmem:[%s876 + $0x4] sm:$0xf]
      %v975 = vld [vmem:[%s876 + $0x8] sm:$0xf]
      %v976 = vld [vmem:[%s876 + $0xc] sm:$0xf]
      %v977 = vld [vmem:[%s883] sm:$0x1]
      %v978 = vld [vmem:[%s890] sm:$0x1]
      %v979 = vld [vmem:[%s897] sm:$0x1]
      %v980 = vld [vmem:[%s906] sm:$0xf]
      %v981 = vld [vmem:[%s906 + $0x4] sm:$0xf]
      %v982 = vld [vmem:[%s906 + $0x8] sm:$0xf]
      %v983 = vld [vmem:[%s906 + $0xc] sm:$0xf]
      %v984 = vld [vmem:[%s906 + $0x10] sm:$0xf]
      %v985 = vld [vmem:[%s906 + $0x14] sm:$0xf]
      %v986 = vld [vmem:[%s906 + $0x18] sm:$0xf]
      %v987 = vld [vmem:[%s906 + $0x1c] sm:$0xf]
      %v988 = vld [vmem:[%s906 + $0x20] sm:$0xf]
      %v989 = vld [vmem:[%s906 + $0x24] sm:$0xf]
      %v990 = vld [vmem:[%s906 + $0x28] sm:$0xf]
      %v991 = vld [vmem:[%s906 + $0x2c] sm:$0xf]
      %v992 = vld [vmem:[%s913] sm:$0x1]
      %v993 = vld [vmem:[%s922] sm:$0xf]
      %v994 = vld [vmem:[%s922 + $0x4] sm:$0xf]
      %v995 = vld [vmem:[%s922 + $0x8] sm:$0xf]
      %v996 = vld [vmem:[%s922 + $0xc] sm:$0xf]
      %v997 = vld [vmem:[%s922 + $0x10] sm:$0xf]
      %v998 = vld [vmem:[%s922 + $0x14] sm:$0xf]
      %v999 = vld [vmem:[%s922 + $0x18] sm:$0xf]
      %v1000 = vld [vmem:[%s922 + $0x1c] sm:$0xf]
      %v1001 = vld [vmem:[%s922 + $0x20] sm:$0xf]
      %v1002 = vld [vmem:[%s922 + $0x24] sm:$0xf]
      %v1003 = vld [vmem:[%s922 + $0x28] sm:$0xf]
      %v1004 = vld [vmem:[%s922 + $0x2c] sm:$0xf]
      %v1005 = vld [vmem:[%s922 + $0x30] sm:$0xf]
      %v1006 = vld [vmem:[%s922 + $0x34] sm:$0xf]
      %v1007 = vld [vmem:[%s922 + $0x38] sm:$0xf]
      %v1008 = vld [vmem:[%s922 + $0x3c] sm:$0xf]
      %v1009 = vld [vmem:[%s922 + $0x40] sm:$0xf]
      %v1010 = vld [vmem:[%s922 + $0x44] sm:$0xf]
      %v1011 = vld [vmem:[%s922 + $0x48] sm:$0xf]
      %v1012 = vld [vmem:[%s922 + $0x4c] sm:$0xf]
      %v1013 = vld [vmem:[%s922 + $0x50] sm:$0xf]
      %v1014 = vld [vmem:[%s922 + $0x54] sm:$0xf]
      %v1015 = vld [vmem:[%s922 + $0x58] sm:$0xf]
      %v1016 = vld [vmem:[%s922 + $0x5c] sm:$0xf]
      %v1017 = vld [vmem:[%s929] sm:$0x1]
      %v1018 = vld [vmem:[%s936] sm:$0x1]
      %v1019 = vld [vmem:[%s943] sm:$0x1]
      %v1020 = vpack.c.bf16 %v960, %v960
      %v1022 = vlaneseq
      %v1023 = vshrl.u32 %v1022, 7
      %v1024 = vsub.s32 0, %v1023
      %v1025 = vrot.slane %v972, %v1024
      %v1031 = vunpack.c.l.b16 %v968
      %v1032 = vunpack.c.l.b16 %v969
      %v1033 = vunpack.c.l.b16 %v970
      %v1034 = vunpack.c.l.b16 %v971
      %v1035 = vpack.c.b16 %v1032, %v1031
      %v1036 = vpack.c.b16 %v1034, %v1033
      %vm1039 = vcmask 261120
      %v1041 = vsel %vm1039, %v1020, 0
      %1043 = vmatprep.subr.bf16.mxu0 0
      %1044 = vmatpush1.bf16.msra.mxu0 %v1035
      %1045 = vmatprep.subr.bf16.mxu0 0
      %1046 = vmatpush1.bf16.msra.mxu0 %v1036
      %1047 = vmatprep.subr.bf16.mxu0 0
      %1048 = vmatpush1.bf16.msra.mxu0 0
      %1049 = vmatprep.subr.bf16.mxu0 0
      %1050 = vmatpush1.bf16.msra.mxu0 0
      %1051 = vmatprep.subr.bf16.mxu0 0
      %1052 = vmatpush1.bf16.msra.mxu0 0
      %1053 = vmatprep.subr.bf16.mxu0 0
      %1054 = vmatpush1.bf16.msra.mxu0 0
      %1055 = vmatprep.subr.bf16.mxu0 0
      %1056 = vmatpush1.bf16.msra.mxu0 0
      %1057 = vmatprep.subr.bf16.mxu0 0
      %1058 = vmatpush1.bf16.msra.mxu0 0
      %1059 = vmatprep.subr.bf16.mxu0 0
      %1060 = vmatpush1.bf16.msra.mxu0 0
      %1061 = vmatprep.subr.bf16.mxu0 0
      %1062 = vmatpush1.bf16.msra.mxu0 0
      %1063 = vmatprep.subr.bf16.mxu0 0
      %1064 = vmatpush1.bf16.msra.mxu0 0
      %1065 = vmatprep.subr.bf16.mxu0 0
      %1066 = vmatpush1.bf16.msra.mxu0 0
      %1067 = vmatprep.subr.bf16.mxu0 0
      %1068 = vmatpush1.bf16.msra.mxu0 0
      %1069 = vmatprep.subr.bf16.mxu0 0
      %1070 = vmatpush1.bf16.msra.mxu0 0
      %1071 = vmatprep.subr.bf16.mxu0 0
      %1072 = vmatpush1.bf16.msra.mxu0 0
      %1073 = vmatprep.subr.bf16.mxu0 0
      %1074 = vmatpush1.bf16.msra.mxu0 0
      %1075 = vmatprep.mubr.bf16.mxu0 0
      %1076 = vmatmul.mubr.bf16.gmra.mrb[0].mxu0 %v1041
      %v1077 = vpop.f32.mrb[0].mxu0
      %v1078 = vadd.f32 %v1025, %v1077
      %v1079 = vpop.f32.mrb[0].mxu0
      %v1080 = vpop.f32.mrb[0].mxu0
      %v1081 = vpop.f32.mrb[0].mxu0
      %1082 = vdwg.mxu0
      %v1083 = vpack.c.bf16 %v1078, %v1078
      %1085 = vrot.lane.b32.xlu0 %v1083, 96
      %v1086 = vpop.permute.xlu0 %1085
      %vm1087 = vcmask 130048
      %v1089 = vsel %vm1087, %v1083, 0
      %v1092 = vsel %vm1087, %v1086, 0
      %1094 = vmatprep.subr.bf16.mxu0 0
      %1095 = vmatpush1.bf16.xpose.msra.mxu0 %v1092
      %1096 = vmatprep.subr.bf16.mxu0 0
      %1097 = vmatpush1.bf16.xpose.msra.mxu0 0
      %1098 = vmatprep.subr.bf16.mxu0 0
      %1099 = vmatpush1.bf16.xpose.msra.mxu0 0
      %1100 = vmatprep.subr.bf16.mxu0 0
      %1101 = vmatpush1.bf16.xpose.msra.mxu0 0
      %1102 = vmatprep.subr.bf16.mxu0 0
      %1103 = vmatpush1.bf16.xpose.msra.mxu0 0
      %1104 = vmatprep.subr.bf16.mxu0 0
      %1105 = vmatpush1.bf16.xpose.msra.mxu0 0
      %1106 = vmatprep.subr.bf16.mxu0 0
      %1107 = vmatpush1.bf16.xpose.msra.mxu0 0
      %1108 = vmatprep.subr.bf16.mxu0 0
      %1109 = vmatpush1.bf16.xpose.msra.mxu0 0
      %1110 = vmatprep.subr.bf16.mxu0 0
      %1111 = vmatpush1.bf16.xpose.msra.mxu0 0
      %1112 = vmatprep.subr.bf16.mxu0 0
      %1113 = vmatpush1.bf16.xpose.msra.mxu0 0
      %1114 = vmatprep.subr.bf16.mxu0 0
      %1115 = vmatpush1.bf16.xpose.msra.mxu0 0
      %1116 = vmatprep.subr.bf16.mxu0 0
      %1117 = vmatpush1.bf16.xpose.msra.mxu0 0
      %1118 = vmatprep.subr.bf16.mxu0 0
      %1119 = vmatpush1.bf16.xpose.msra.mxu0 0
      %1120 = vmatprep.subr.bf16.mxu0 0
      %1121 = vmatpush1.bf16.xpose.msra.mxu0 0
      %1122 = vmatprep.subr.bf16.mxu0 0
      %1123 = vmatpush1.bf16.xpose.msra.mxu0 0
      %1124 = vmatprep.subr.bf16.mxu0 0
      %1125 = vmatpush1.bf16.xpose.msra.mxu0 0
      %1126 = vmatprep.mubr.bf16.mxu0 0
      %1127 = vmatmul.mubr.bf16.gmra.mrb[0].mxu0 %v1089
      %v1128 = vpop.f32.mrb[0].mxu0
      %v1129 = vadd.f32 0.0, %v1128
      %v1130 = vpop.f32.mrb[0].mxu0
      %v1131 = vpop.f32.mrb[0].mxu0
      %v1132 = vpop.f32.mrb[0].mxu0
      %1133 = vdwg.mxu0
      %v1134 = vmul.f32 %v1129, 0.25
      %v1136 = vlaneseq
      %v1137 = vshrl.u32 %v1136, 7
      %v1138 = vsub.s32 0, %v1137
      %v1139 = vrot.slane %v964, %v1138
      %v1141 = vadd.f32 %v1134, %v1139
      %vm1142 = vcmask 64512
      %v1143 = vsel %vm1142, %v1141, -inf
      %1144 = vmax.xlane.f32.xlu0 %v1143
      %v1145 = vpop.xlane.xlu0 %1144
      %v1146 = vsub.f32 %v1141, %v1145
      %v1147 = vmul.f32 %v1146, 1.442695
      %v1148 = vpow.pop %v1147
      %v1149 = vsel %vm1142, %v1148, 0.0
      %1150 = vadd.xlane.f32.xlu0 %v1149
      %v1151 = vpop.xlane.xlu0 %1150
      %v1152 = vrcp.pop %v1151
      %v1153 = vmul.f32 %v1148, %v1152
      %v1154 = vpack.c.bf16 %v1153, %v1153
      %1155 = vrot.lane.b32.xlu0 %v1083, 64
      %v1156 = vpop.permute.xlu0 %1155
      %v1158 = vsel %vm1142, %v1154, 0
      %vm1160 = vcmask 1043456
      %v1162 = vsel %vm1160, %v1156, 0
      %1164 = vmatprep.subr.bf16.mxu0 0
      %1165 = vmatpush1.bf16.msra.mxu0 %v1162
      %1166 = vmatprep.subr.bf16.mxu0 0
      %1167 = vmatpush1.bf16.msra.mxu0 0
      %1168 = vmatprep.subr.bf16.mxu0 0
      %1169 = vmatpush1.bf16.msra.mxu0 0
      %1170 = vmatprep.subr.bf16.mxu0 0
      %1171 = vmatpush1.bf16.msra.mxu0 0
      %1172 = vmatprep.subr.bf16.mxu0 0
      %1173 = vmatpush1.bf16.msra.mxu0 0
      %1174 = vmatprep.subr.bf16.mxu0 0
      %1175 = vmatpush1.bf16.msra.mxu0 0
      %1176 = vmatprep.subr.bf16.mxu0 0
      %1177 = vmatpush1.bf16.msra.mxu0 0
      %1178 = vmatprep.subr.bf16.mxu0 0
      %1179 = vmatpush1.bf16.msra.mxu0 0
      %1180 = vmatprep.subr.bf16.mxu0 0
      %1181 = vmatpush1.bf16.msra.mxu0 0
      %1182 = vmatprep.subr.bf16.mxu0 0
      %1183 = vmatpush1.bf16.msra.mxu0 0
      %1184 = vmatprep.subr.bf16.mxu0 0
      %1185 = vmatpush1.bf16.msra.mxu0 0
      %1186 = vmatprep.subr.bf16.mxu0 0
      %1187 = vmatpush1.bf16.msra.mxu0 0
      %1188 = vmatprep.subr.bf16.mxu0 0
      %1189 = vmatpush1.bf16.msra.mxu0 0
      %1190 = vmatprep.subr.bf16.mxu0 0
      %1191 = vmatpush1.bf16.msra.mxu0 0
      %1192 = vmatprep.subr.bf16.mxu0 0
      %1193 = vmatpush1.bf16.msra.mxu0 0
      %1194 = vmatprep.subr.bf16.mxu0 0
      %1195 = vmatpush1.bf16.msra.mxu0 0
      %1196 = vmatprep.mubr.bf16.mxu0 0
      %1197 = vmatmul.mubr.bf16.gmra.mrb[0].mxu0 %v1158
      %v1198 = vpop.f32.mrb[0].mxu0
      %v1199 = vadd.f32 0.0, %v1198
      %v1200 = vpop.f32.mrb[0].mxu0
      %v1201 = vpop.f32.mrb[0].mxu0
      %v1202 = vpop.f32.mrb[0].mxu0
      %1203 = vdwg.mxu0
      %1204 = vrot.lane.b32.xlu0 %v1083, 112
      %v1205 = vpop.permute.xlu0 %1204
      %1206 = vrot.lane.b32.xlu0 %v1083, 80
      %v1207 = vpop.permute.xlu0 %1206
      %v1209 = vsel %vm1087, %v1205, 0
      %v1212 = vsel %vm1087, %v1207, 0
      %1214 = vmatprep.subr.bf16.mxu0 0
      %1215 = vmatpush1.bf16.xpose.msra.mxu0 %v1212
      %1216 = vmatprep.subr.bf16.mxu0 0
      %1217 = vmatpush1.bf16.xpose.msra.mxu0 0
      %1218 = vmatprep.subr.bf16.mxu0 0
      %1219 = vmatpush1.bf16.xpose.msra.mxu0 0
      %1220 = vmatprep.subr.bf16.mxu0 0
      %1221 = vmatpush1.bf16.xpose.msra.mxu0 0
      %1222 = vmatprep.subr.bf16.mxu0 0
      %1223 = vmatpush1.bf16.xpose.msra.mxu0 0
      %1224 = vmatprep.subr.bf16.mxu0 0
      %1225 = vmatpush1.bf16.xpose.msra.mxu0 0
      %1226 = vmatprep.subr.bf16.mxu0 0
      %1227 = vmatpush1.bf16.xpose.msra.mxu0 0
      %1228 = vmatprep.subr.bf16.mxu0 0
      %1229 = vmatpush1.bf16.xpose.msra.mxu0 0
      %1230 = vmatprep.subr.bf16.mxu0 0
      %1231 = vmatpush1.bf16.xpose.msra.mxu0 0
      %1232 = vmatprep.subr.bf16.mxu0 0
      %1233 = vmatpush1.bf16.xpose.msra.mxu0 0
      %1234 = vmatprep.subr.bf16.mxu0 0
      %1235 = vmatpush1.bf16.xpose.msra.mxu0 0
      %1236 = vmatprep.subr.bf16.mxu0 0
      %1237 = vmatpush1.bf16.xpose.msra.mxu0 0
      %1238 = vmatprep.subr.bf16.mxu0 0
      %1239 = vmatpush1.bf16.xpose.msra.mxu0 0
      %1240 = vmatprep.subr.bf16.mxu0 0
      %1241 = vmatpush1.bf16.xpose.msra.mxu0 0
      %1242 = vmatprep.subr.bf16.mxu0 0
      %1243 = vmatpush1.bf16.xpose.msra.mxu0 0
      %1244 = vmatprep.subr.bf16.mxu0 0
      %1245 = vmatpush1.bf16.xpose.msra.mxu0 0
      %1246 = vmatprep.mubr.bf16.mxu0 0
      %1247 = vmatmul.mubr.bf16.gmra.mrb[0].mxu0 %v1209
      %v1248 = vpop.f32.mrb[0].mxu0
      %v1249 = vadd.f32 0.0, %v1248
      %v1250 = vpop.f32.mrb[0].mxu0
      %v1251 = vpop.f32.mrb[0].mxu0
      %v1252 = vpop.f32.mrb[0].mxu0
      %1253 = vdwg.mxu0
      %v1254 = vmul.f32 %v1249, 0.25
      %v1255 = vadd.f32 %v1254, %v1139
      %v1256 = vsel %vm1142, %v1255, -inf
      %1257 = vmax.xlane.f32.xlu0 %v1256
      %v1258 = vpop.xlane.xlu0 %1257
      %v1259 = vsub.f32 %v1255, %v1258
      %v1260 = vmul.f32 %v1259, 1.442695
      %v1261 = vpow.pop %v1260
      %v1262 = vsel %vm1142, %v1261, 0.0
      %1263 = vadd.xlane.f32.xlu0 %v1262
      %v1264 = vpop.xlane.xlu0 %1263
      %v1265 = vrcp.pop %v1264
      %v1266 = vmul.f32 %v1261, %v1265
      %v1267 = vpack.c.bf16 %v1266, %v1266
      %1268 = vrot.lane.b32.xlu0 %v1083, 48
      %v1269 = vpop.permute.xlu0 %1268
      %v1271 = vsel %vm1142, %v1267, 0
      %v1274 = vsel %vm1160, %v1269, 0
      %1276 = vmatprep.subr.bf16.mxu0 0
      %1277 = vmatpush1.bf16.msra.mxu0 %v1274
      %1278 = vmatprep.subr.bf16.mxu0 0
      %1279 = vmatpush1.bf16.msra.mxu0 0
      %1280 = vmatprep.subr.bf16.mxu0 0
      %1281 = vmatpush1.bf16.msra.mxu0 0
      %1282 = vmatprep.subr.bf16.mxu0 0
      %1283 = vmatpush1.bf16.msra.mxu0 0
      %1284 = vmatprep.subr.bf16.mxu0 0
      %1285 = vmatpush1.bf16.msra.mxu0 0
      %1286 = vmatprep.subr.bf16.mxu0 0
      %1287 = vmatpush1.bf16.msra.mxu0 0
      %1288 = vmatprep.subr.bf16.mxu0 0
      %1289 = vmatpush1.bf16.msra.mxu0 0
      %1290 = vmatprep.subr.bf16.mxu0 0
      %1291 = vmatpush1.bf16.msra.mxu0 0
      %1292 = vmatprep.subr.bf16.mxu0 0
      %1293 = vmatpush1.bf16.msra.mxu0 0
      %1294 = vmatprep.subr.bf16.mxu0 0
      %1295 = vmatpush1.bf16.msra.mxu0 0
      %1296 = vmatprep.subr.bf16.mxu0 0
      %1297 = vmatpush1.bf16.msra.mxu0 0
      %1298 = vmatprep.subr.bf16.mxu0 0
      %1299 = vmatpush1.bf16.msra.mxu0 0
      %1300 = vmatprep.subr.bf16.mxu0 0
      %1301 = vmatpush1.bf16.msra.mxu0 0
      %1302 = vmatprep.subr.bf16.mxu0 0
      %1303 = vmatpush1.bf16.msra.mxu0 0
      %1304 = vmatprep.subr.bf16.mxu0 0
      %1305 = vmatpush1.bf16.msra.mxu0 0
      %1306 = vmatprep.subr.bf16.mxu0 0
      %1307 = vmatpush1.bf16.msra.mxu0 0
      %1308 = vmatprep.mubr.bf16.mxu0 0
      %1309 = vmatmul.mubr.bf16.gmra.mrb[0].mxu0 %v1271
      %v1310 = vpop.f32.mrb[0].mxu0
      %v1311 = vadd.f32 0.0, %v1310
      %v1312 = vpop.f32.mrb[0].mxu0
      %v1313 = vpop.f32.mrb[0].mxu0
      %v1314 = vpop.f32.mrb[0].mxu0
      %1315 = vdwg.mxu0
      %1317 = vrot.lane.b32.xlu0 %v1311, 16
      %v1318 = vpop.permute.xlu0 %1317
      %v1320 = vsel %vm1087, %v1199, %v1318
      %v1321 = vpack.c.bf16 %v1320, %v1320
      %v1323 = vlaneseq
      %v1324 = vshrl.u32 %v1323, 7
      %v1325 = vsub.s32 0, %v1324
      %v1326 = vrot.slane %v977, %v1325
      %v1332 = vunpack.c.l.b16 %v973
      %v1333 = vunpack.c.l.b16 %v974
      %v1334 = vunpack.c.l.b16 %v975
      %v1335 = vunpack.c.l.b16 %v976
      %v1336 = vpack.c.b16 %v1333, %v1332
      %v1337 = vpack.c.b16 %v1335, %v1334
      %v1341 = vsel %vm1039, %v1321, 0
      %1343 = vmatprep.subr.bf16.mxu0 0
      %1344 = vmatpush1.bf16.msra.mxu0 %v1336
      %1345 = vmatprep.subr.bf16.mxu0 0
      %1346 = vmatpush1.bf16.msra.mxu0 %v1337
      %1347 = vmatprep.subr.bf16.mxu0 0
      %1348 = vmatpush1.bf16.msra.mxu0 0
      %1349 = vmatprep.subr.bf16.mxu0 0
      %1350 = vmatpush1.bf16.msra.mxu0 0
      %1351 = vmatprep.subr.bf16.mxu0 0
      %1352 = vmatpush1.bf16.msra.mxu0 0
      %1353 = vmatprep.subr.bf16.mxu0 0
      %1354 = vmatpush1.bf16.msra.mxu0 0
      %1355 = vmatprep.subr.bf16.mxu0 0
      %1356 = vmatpush1.bf16.msra.mxu0 0
      %1357 = vmatprep.subr.bf16.mxu0 0
      %1358 = vmatpush1.bf16.msra.mxu0 0
      %1359 = vmatprep.subr.bf16.mxu0 0
      %1360 = vmatpush1.bf16.msra.mxu0 0
      %1361 = vmatprep.subr.bf16.mxu0 0
      %1362 = vmatpush1.bf16.msra.mxu0 0
      %1363 = vmatprep.subr.bf16.mxu0 0
      %1364 = vmatpush1.bf16.msra.mxu0 0
      %1365 = vmatprep.subr.bf16.mxu0 0
      %1366 = vmatpush1.bf16.msra.mxu0 0
      %1367 = vmatprep.subr.bf16.mxu0 0
      %1368 = vmatpush1.bf16.msra.mxu0 0
      %1369 = vmatprep.subr.bf16.mxu0 0
      %1370 = vmatpush1.bf16.msra.mxu0 0
      %1371 = vmatprep.subr.bf16.mxu0 0
      %1372 = vmatpush1.bf16.msra.mxu0 0
      %1373 = vmatprep.subr.bf16.mxu0 0
      %1374 = vmatpush1.bf16.msra.mxu0 0
      %1375 = vmatprep.mubr.bf16.mxu0 0
      %1376 = vmatmul.mubr.bf16.gmra.mrb[0].mxu0 %v1341
      %v1377 = vpop.f32.mrb[0].mxu0
      %v1378 = vadd.f32 %v1326, %v1377
      %v1379 = vpop.f32.mrb[0].mxu0
      %v1380 = vpop.f32.mrb[0].mxu0
      %v1381 = vpop.f32.mrb[0].mxu0
      %1382 = vdwg.mxu0
      %v1383 = vadd.f32 %v1378, %v960
      %v1384 = vsel %vm1039, %v1383, 0.0
      %1385 = vadd.xlane.f32.xlu0 %v1384
      %v1386 = vpop.xlane.xlu0 %1385
      %v1387 = vrcp.pop 32.0
      %v1388 = vmul.f32 %v1386, %v1387
      %v1389 = vsub.f32 %v1383, %v1388
      %v1390 = vmul.f32 %v1389, %v1389
      %v1391 = vsel %vm1039, %v1390, 0.0
      %1392 = vadd.xlane.f32.xlu0 %v1391
      %v1393 = vpop.xlane.xlu0 %1392
      %v1394 = vmul.f32 %v1393, %v1387
      %v1395 = vadd.f32 %v1394, 1e-05
      %v1396 = vrsqrt.pop %v1395
      %v1397 = vmul.f32 %v1389, %v1396
      %v1399 = vlaneseq
      %v1400 = vshrl.u32 %v1399, 7
      %v1401 = vsub.s32 0, %v1400
      %v1402 = vrot.slane %v978, %v1401
      %v1404 = vmul.f32 %v1397, %v1402
      %v1406 = vlaneseq
      %v1407 = vshrl.u32 %v1406, 7
      %v1408 = vsub.s32 0, %v1407
      %v1409 = vrot.slane %v979, %v1408
      %v1411 = vadd.f32 %v1404, %v1409
      %1413 = vset.pattern.permute.xlu0 0
      %1414 = vperm.xlu0 %1413, %v961
      %v1415 = vpop.permute.xlu0 %1414
      %v1417 = vmul.f32 %v1411, %v1415
      %v1418 = vrot.slane %v1417, 7
      %v1419 = vadd.s32 %v967, 4294967295
      %vm1420 = vcmp.ge.s32.totalorder %v1419, 0
      %vm1421 = vcmp.lt.s32.totalorder %v1419, 8
      %vm1422 = vmand %vm1420, %vm1421
      %v1423 = vsel %vm1422, 1, 0
      %v1424 = vcvt.s32.f32 %v1423
      %v1425 = vmul.f32 %v1418, %v1424
      %v1426 = vrot.slane %v1417, 1
      %v1427 = vadd.s32 %v967, 1
      %vm1428 = vcmp.ge.s32.totalorder %v1427, 0
      %vm1429 = vcmp.lt.s32.totalorder %v1427, 8
      %vm1430 = vmand %vm1428, %vm1429
      %v1431 = vsel %vm1430, 1, 0
      %v1432 = vcvt.s32.f32 %v1431
      %v1433 = vmul.f32 %v1426, %v1432
      %1435 = vrot.lane.b32.xlu0 %v1417, 32
      %v1436 = vpop.permute.xlu0 %1435
      %1439 = vrot.lane.b32.xlu0 %v1433, 64
      %v1440 = vpop.permute.xlu0 %1439
      %v1442 = vsel %vm1039, %v1425, %v1436
      %vm1443 = vcmask 523264
      %v1444 = vsel %vm1443, %v1442, %v1440
      %v1445 = vpack.c.bf16 %v1444, %v1444
      %v1447 = vlaneseq
      %v1448 = vshrl.u32 %v1447, 7
      %v1449 = vsub.s32 0, %v1448
      %v1450 = vrot.slane %v992, %v1449
      %v1464 = vunpack.c.l.b16 %v980
      %v1465 = vunpack.c.l.b16 %v981
      %v1466 = vunpack.c.l.b16 %v982
      %v1467 = vunpack.c.l.b16 %v983
      %v1468 = vunpack.c.l.b16 %v984
      %v1469 = vunpack.c.l.b16 %v985
      %v1470 = vunpack.c.l.b16 %v986
      %v1471 = vunpack.c.l.b16 %v987
      %v1472 = vunpack.c.l.b16 %v988
      %v1473 = vunpack.c.l.b16 %v989
      %v1474 = vunpack.c.l.b16 %v990
      %v1475 = vunpack.c.l.b16 %v991
      %v1476 = vpack.c.b16 %v1465, %v1464
      %v1477 = vpack.c.b16 %v1467, %v1466
      %v1478 = vpack.c.b16 %v1469, %v1468
      %v1479 = vpack.c.b16 %v1471, %v1470
      %v1480 = vpack.c.b16 %v1473, %v1472
      %v1481 = vpack.c.b16 %v1475, %v1474
      %vm1488 = vcmask 785408
      %v1490 = vsel %vm1488, %v1445, 0
      %1492 = vmatprep.subr.bf16.mxu0 0
      %1493 = vmatpush1.bf16.msra.mxu0 %v1476
      %1494 = vmatprep.subr.bf16.mxu0 0
      %1495 = vmatpush1.bf16.msra.mxu0 %v1477
      %1496 = vmatprep.subr.bf16.mxu0 0
      %1497 = vmatpush1.bf16.msra.mxu0 %v1478
      %1498 = vmatprep.subr.bf16.mxu0 0
      %1499 = vmatpush1.bf16.msra.mxu0 %v1479
      %1500 = vmatprep.subr.bf16.mxu0 0
      %1501 = vmatpush1.bf16.msra.mxu0 %v1480
      %1502 = vmatprep.subr.bf16.mxu0 0
      %1503 = vmatpush1.bf16.msra.mxu0 %v1481
      %1504 = vmatprep.subr.bf16.mxu0 0
      %1505 = vmatpush1.bf16.msra.mxu0 0
      %1506 = vmatprep.subr.bf16.mxu0 0
      %1507 = vmatpush1.bf16.msra.mxu0 0
      %1508 = vmatprep.subr.bf16.mxu0 0
      %1509 = vmatpush1.bf16.msra.mxu0 0
      %1510 = vmatprep.subr.bf16.mxu0 0
      %1511 = vmatpush1.bf16.msra.mxu0 0
      %1512 = vmatprep.subr.bf16.mxu0 0
      %1513 = vmatpush1.bf16.msra.mxu0 0
      %1514 = vmatprep.subr.bf16.mxu0 0
      %1515 = vmatpush1.bf16.msra.mxu0 0
      %1516 = vmatprep.subr.bf16.mxu0 0
      %1517 = vmatpush1.bf16.msra.mxu0 0
      %1518 = vmatprep.subr.bf16.mxu0 0
      %1519 = vmatpush1.bf16.msra.mxu0 0
      %1520 = vmatprep.subr.bf16.mxu0 0
      %1521 = vmatpush1.bf16.msra.mxu0 0
      %1522 = vmatprep.subr.bf16.mxu0 0
      %1523 = vmatpush1.bf16.msra.mxu0 0
      %1524 = vmatprep.mubr.bf16.mxu0 0
      %1525 = vmatmul.mubr.bf16.gmra.mrb[0].mxu0 %v1490
      %v1526 = vpop.f32.mrb[0].mxu0
      %v1527 = vadd.f32 %v1450, %v1526
      %v1528 = vpop.f32.mrb[0].mxu0
      %v1529 = vpop.f32.mrb[0].mxu0
      %v1530 = vpop.f32.mrb[0].mxu0
      %1531 = vdwg.mxu0
      %v1532 = vmax.f32 %v1527, 0.0
      %v1533 = vrot.slane %v1532, 7
      %v1534 = vmul.f32 %v1533, %v1424
      %v1535 = vrot.slane %v1532, 1
      %v1536 = vmul.f32 %v1535, %v1432
      %1538 = vrot.lane.b32.xlu0 %v1532, 64
      %v1539 = vpop.permute.xlu0 %1538
      %v1541 = vsel %vm1443, %v1534, %v1539
      %v1542 = vpack.c.bf16 %v1541, %v1541
      %v1543 = vpack.c.bf16 %v1536, %v1536
      %v1545 = vlaneseq
      %v1546 = vshrl.u32 %v1545, 7
      %v1547 = vsub.s32 0, %v1546
      %v1548 = vrot.slane %v1017, %v1547
      %v1574 = vunpack.c.l.b16 %v993
      %v1575 = vunpack.c.l.b16 %v994
      %v1576 = vunpack.c.l.b16 %v995
      %v1577 = vunpack.c.l.b16 %v996
      %v1578 = vunpack.c.l.b16 %v997
      %v1579 = vunpack.c.l.b16 %v998
      %v1580 = vunpack.c.l.b16 %v999
      %v1581 = vunpack.c.l.b16 %v1000
      %v1582 = vunpack.c.l.b16 %v1001
      %v1583 = vunpack.c.l.b16 %v1002
      %v1584 = vunpack.c.l.b16 %v1003
      %v1585 = vunpack.c.l.b16 %v1004
      %v1586 = vunpack.c.l.b16 %v1005
      %v1587 = vunpack.c.l.b16 %v1006
      %v1588 = vunpack.c.l.b16 %v1007
      %v1589 = vunpack.c.l.b16 %v1008
      %v1590 = vunpack.c.l.b16 %v1009
      %v1591 = vunpack.c.l.b16 %v1010
      %v1592 = vunpack.c.l.b16 %v1011
      %v1593 = vunpack.c.l.b16 %v1012
      %v1594 = vunpack.c.l.b16 %v1013
      %v1595 = vunpack.c.l.b16 %v1014
      %v1596 = vunpack.c.l.b16 %v1015
      %v1597 = vunpack.c.l.b16 %v1016
      %v1598 = vpack.c.b16 %v1575, %v1574
      %v1599 = vpack.c.b16 %v1577, %v1576
      %v1600 = vpack.c.b16 %v1579, %v1578
      %v1601 = vpack.c.b16 %v1581, %v1580
      %v1602 = vpack.c.b16 %v1583, %v1582
      %v1603 = vpack.c.b16 %v1585, %v1584
      %v1604 = vpack.c.b16 %v1587, %v1586
      %v1605 = vpack.c.b16 %v1589, %v1588
      %v1606 = vpack.c.b16 %v1591, %v1590
      %v1607 = vpack.c.b16 %v1593, %v1592
      %v1608 = vpack.c.b16 %v1595, %v1594
      %v1609 = vpack.c.b16 %v1597, %v1596
      %v1623 = vsel %vm1443, %v1543, 0
      %1625 = vmatprep.subr.bf16.mxu0 0
      %1626 = vmatpush1.bf16.msra.mxu0 %v1598
      %1627 = vmatprep.subr.bf16.mxu0 0
      %1628 = vmatpush1.bf16.msra.mxu0 %v1599
      %1629 = vmatprep.subr.bf16.mxu0 0
      %1630 = vmatpush1.bf16.msra.mxu0 %v1600
      %1631 = vmatprep.subr.bf16.mxu0 0
      %1632 = vmatpush1.bf16.msra.mxu0 %v1601
      %1633 = vmatprep.subr.bf16.mxu0 0
      %1634 = vmatpush1.bf16.msra.mxu0 %v1602
      %1635 = vmatprep.subr.bf16.mxu0 0
      %1636 = vmatpush1.bf16.msra.mxu0 %v1603
      %1637 = vmatprep.subr.bf16.mxu0 0
      %1638 = vmatpush1.bf16.msra.mxu0 %v1604
      %1639 = vmatprep.subr.bf16.mxu0 0
      %1640 = vmatpush1.bf16.msra.mxu0 %v1605
      %1641 = vmatprep.subr.bf16.mxu0 0
      %1642 = vmatpush1.bf16.msra.mxu0 %v1606
      %1643 = vmatprep.subr.bf16.mxu0 0
      %1644 = vmatpush1.bf16.msra.mxu0 %v1607
      %1645 = vmatprep.subr.bf16.mxu0 0
      %1646 = vmatpush1.bf16.msra.mxu0 %v1608
      %1647 = vmatprep.subr.bf16.mxu0 0
      %1648 = vmatpush1.bf16.msra.mxu0 %v1609
      %1649 = vmatprep.subr.bf16.mxu0 0
      %1650 = vmatpush1.bf16.msra.mxu0 0
      %1651 = vmatprep.subr.bf16.mxu0 0
      %1652 = vmatpush1.bf16.msra.mxu0 0
      %1653 = vmatprep.subr.bf16.mxu0 0
      %1654 = vmatpush1.bf16.msra.mxu0 0
      %1655 = vmatprep.subr.bf16.mxu0 0
      %1656 = vmatpush1.bf16.msra.mxu0 0
      %1657 = vmatprep.mubr.bf16.mxu0 %v1623
      %1658 = vmatmul.mubr.bf16.gmra.mrb[0].mxu0 %v1542
      %v1659 = vpop.f32.mrb[0].mxu0
      %v1660 = vadd.f32 %v1548, %v1659
      %v1661 = vpop.f32.mrb[0].mxu0
      %v1662 = vpop.f32.mrb[0].mxu0
      %v1663 = vpop.f32.mrb[0].mxu0
      %1664 = vdwg.mxu0
      %v1665 = vadd.f32 %v1660, %v1417
      %v1666 = vsel %vm1039, %v1665, 0.0
      %1667 = vadd.xlane.f32.xlu0 %v1666
      %v1668 = vpop.xlane.xlu0 %1667
      %v1669 = vmul.f32 %v1668, %v1387
      %v1670 = vsub.f32 %v1665, %v1669
      %v1671 = vmul.f32 %v1670, %v1670
      %v1672 = vsel %vm1039, %v1671, 0.0
      %1673 = vadd.xlane.f32.xlu0 %v1672
      %v1674 = vpop.xlane.xlu0 %1673
      %v1675 = vmul.f32 %v1674, %v1387
      %v1676 = vadd.f32 %v1675, 1e-05
      %v1677 = vrsqrt.pop %v1676
      %v1678 = vmul.f32 %v1670, %v1677
      %v1680 = vlaneseq
      %v1681 = vshrl.u32 %v1680, 7
      %v1682 = vsub.s32 0, %v1681
      %v1683 = vrot.slane %v1018, %v1682
      %v1685 = vmul.f32 %v1678, %v1683
      %v1687 = vlaneseq
      %v1688 = vshrl.u32 %v1687, 7
      %v1689 = vsub.s32 0, %v1688
      %v1690 = vrot.slane %v1019, %v1689
      %v1692 = vadd.f32 %v1685, %v1690
      %v1693 = vmul.f32 %v1692, %v1415
      %1694 = vst.msk [vmem:[#allocation2] sm:$0xff] %vm1039, %v1693
      %p1695 = scmp.eq.s32.totalorder %s33, 1
      // Predicated region
      $region85: #{fastspeech2_forward.3} parent=79 // pred_check
        %p1696 = pneg %p1695
      $region86: #{fastspeech2_forward.3} parent=79 // pred_check_branch
        %1698 = sbr.rel (%p1696) target = $region88
      $region87: #{fastspeech2_forward.3} parent=79 // pred_region
        %1699 = vst.msk [vmem:[%s951] sm:$0xff] %vm1039, %v1693
      $region88: #{fastspeech2_forward.3} parent=79 // pred_fallthru
        _
      %p1700 = scmp.lt.s32.totalorder %s31, 0
      %s1701 = scalar_select %p1700, %s31, 0
      %p1702 = scmp.lt.s32.totalorder %s32, 1
      %s1703 = scalar_select %p1702, %s32, 1
      %s1704 = smul.addr %s1701, 2
      %s1705 = sadd.s32 %s1703, %s1704
      %s1706 = smul.addr %s1705, 8
      %s1707 = scalar_lea.vmem %s15, %s1706
      // Predicated region
      $region89: #{fastspeech2_forward.3} parent=79 // pred_check
        %p1708 = pneg %p485
      $region90: #{fastspeech2_forward.3} parent=79 // pred_check_branch
        %1710 = sbr.rel (%p1708) target = $region92
      $region91: #{fastspeech2_forward.3} parent=79 // pred_region
        _
      $region92: #{fastspeech2_forward.3} parent=79 // pred_fallthru
        _
    $region80: #{fastspeech2_forward.3} parent=5 // pred_fallthru
      _
    %p1711 = scmp.le.s32.totalorder 2, %s21
    // Predicated region
    $region93: #{fastspeech2_forward.3} parent=5 // pred_check
      %p1712 = pneg %p1711
    $region94: #{fastspeech2_forward.3} parent=5 // pred_check_branch
      %1714 = sbr.rel (%p1712) target = $region96
    $region95: #{fastspeech2_forward.3} parent=5 // pred_region
      %s1715 = ssub.s32 %s21, 2
      // Predicated region
      $region97: #{fastspeech2_forward.3} parent=95 // pred_check
        %p1716 = pneg %p491
      $region98: #{fastspeech2_forward.3} parent=95 // pred_check_branch
        %1718 = sbr.rel (%p1716) target = $region100
      $region99: #{fastspeech2_forward.3} parent=95 // pred_region
        %p1719 = scmp.lt.s32.totalorder %s34, 0
        %s1720 = scalar_select %p1719, %s34, 0
        %p1721 = scmp.lt.s32.totalorder %s35, 1
        %s1722 = scalar_select %p1721, %s35, 1
        %s1723 = smul.addr %s1720, 2
        %s1724 = sadd.s32 %s1722, %s1723
        %s1725 = smul.addr %s1724, 8
        %s1726 = scalar_lea.vmem %s15, %s1725
      $region100: #{fastspeech2_forward.3} parent=95 // pred_fallthru
        _
    $region96: #{fastspeech2_forward.3} parent=5 // pred_fallthru
      _
  $region6: #{fastspeech2_forward.3} parent=0 // loop_footer
    %s25 = sadd.s32 1, %s21
  $region7: #{fastspeech2_forward.3} parent=0 // loop_footer_branch
    %20 = sbr.rel target = $region3
  $region8: #{fastspeech2_forward.3} parent=0 // loop_exit
    _

// kernel: fastspeech2_forward.5
$region0: #{fastspeech2_forward.5}
  #allocation0 [shape = 'u32[]', space=smem, size = 0x4, offset = 0x4, fixed_abs, tag = 'smem constant byte address 0x4 - core index']
  #allocation1 [shape = 'u32[144,128]{1,0:T(1,128)}', space=vmem, size = 0x12000, scoped, tag = 'internal scratch']
  #allocation2 [shape = 'f32[32,32]{1,0:T(8,128)}', space=vmem, size = 0x4000, scoped, tag = 'scratch operand']
  %s0 = inlined_call_operand.vmem [shape: f32[2,2,32,32], index: 0, kind: input, shape index: {}]
  %s1 = inlined_call_operand.vmem [shape: f32[2,2,32,1], index: 1, kind: input, shape index: {}]
  %s2 = inlined_call_operand.vmem [shape: f32[2,2,1,32], index: 2, kind: input, shape index: {}]
  %s3 = inlined_call_operand.vmem [shape: bf16[2,1,32,96], index: 3, kind: input, shape index: {}]
  %s4 = inlined_call_operand.vmem [shape: f32[2,1,1,96], index: 4, kind: input, shape index: {}]
  %s5 = inlined_call_operand.vmem [shape: bf16[2,1,32,32], index: 5, kind: input, shape index: {}]
  %s6 = inlined_call_operand.vmem [shape: f32[2,1,1,32], index: 6, kind: input, shape index: {}]
  %s7 = inlined_call_operand.vmem [shape: f32[2,1,1,32], index: 7, kind: input, shape index: {}]
  %s8 = inlined_call_operand.vmem [shape: f32[2,1,1,32], index: 8, kind: input, shape index: {}]
  %s9 = inlined_call_operand.vmem [shape: bf16[2,1,96,64], index: 9, kind: input, shape index: {}]
  %s10 = inlined_call_operand.vmem [shape: f32[2,1,1,64], index: 10, kind: input, shape index: {}]
  %s11 = inlined_call_operand.vmem [shape: bf16[2,1,192,32], index: 11, kind: input, shape index: {}]
  %s12 = inlined_call_operand.vmem [shape: f32[2,1,1,32], index: 12, kind: input, shape index: {}]
  %s13 = inlined_call_operand.vmem [shape: f32[2,1,1,32], index: 13, kind: input, shape index: {}]
  %s14 = inlined_call_operand.vmem [shape: f32[2,1,1,32], index: 14, kind: input, shape index: {}]
  %s15 = inlined_call_operand.vmem [shape: bf16[2,32,16], index: 15, kind: input, shape index: {}]
  %s16 = inlined_call_operand.vmem [shape: f32[2,1,16], index: 16, kind: input, shape index: {}]
  %s17 = inlined_call_operand.vmem [shape: f32[2,2,32,16], index: 17, kind: output, shape index: {}]
  %s18 = sld [smem:[#allocation0]]
  $region109: #{fastspeech2_forward.5} parent=0
    _
  %s20 = ssub.s32 1, %s18
  %s21 = scalar_select 0, %s20, %s18
  loop: start=0, step=1, limit=6
  $region2: #{fastspeech2_forward.5} parent=0 // loop_pre_header
    _
  $region3: #{fastspeech2_forward.5} parent=0 // loop_header
    %s23 = sphi 0, %s27
    %p24 = scmp.ge.s32.totalorder %s23, 6
    %s30 = sphi 0, %s49
    %s31 = sphi 0, %s45
    %s32 = sphi 0, %s41
    %s33 = sphi 0, %s30
    %s34 = sphi 0, %s31
    %s35 = sphi 0, %s32
    %s36 = sphi 0, %s33
    %s37 = sphi 0, %s34
    %s38 = sphi 0, %s35
    %s54 = sphi 0, %s56
    %s57 = sphi 0, %s54
    %s58 = sphi 0, %s57
    %s74 = sphi 0, %s58
    %s82 = sphi 0, %s84
    %s85 = sphi 0, %s82
    %s86 = sphi 0, %s85
    %s102 = sphi 0, %s86
    %s110 = sphi 0, %s112
    %s113 = sphi 0, %s110
    %s114 = sphi 0, %s113
    %s130 = sphi 0, %s114
    %s138 = sphi 0, %s140
    %s141 = sphi 0, %s138
    %s142 = sphi 0, %s141
    %s158 = sphi 0, %s142
    %s166 = sphi 0, %s168
    %s169 = sphi 0, %s166
    %s170 = sphi 0, %s169
    %s186 = sphi 0, %s170
    %s194 = sphi 0, %s196
    %s197 = sphi 0, %s194
    %s198 = sphi 0, %s197
    %s214 = sphi 0, %s198
    %s222 = sphi 0, %s224
    %s225 = sphi 0, %s222
    %s226 = sphi 0, %s225
    %s242 = sphi 0, %s226
    %s250 = sphi 0, %s252
    %s253 = sphi 0, %s250
    %s254 = sphi 0, %s253
    %s270 = sphi 0, %s254
    %s278 = sphi 0, %s280
    %s281 = sphi 0, %s278
    %s282 = sphi 0, %s281
    %s298 = sphi 0, %s282
    %s306 = sphi 0, %s308
    %s309 = sphi 0, %s306
    %s310 = sphi 0, %s309
    %s326 = sphi 0, %s310
    %s334 = sphi 0, %s336
    %s337 = sphi 0, %s334
    %s338 = sphi 0, %s337
    %s354 = sphi 0, %s338
    %s362 = sphi 0, %s364
    %s365 = sphi 0, %s362
    %s366 = sphi 0, %s365
    %s382 = sphi 0, %s366
    %s390 = sphi 0, %s392
    %s393 = sphi 0, %s390
    %s394 = sphi 0, %s393
    %s410 = sphi 0, %s394
    %s418 = sphi 0, %s420
    %s421 = sphi 0, %s418
    %s422 = sphi 0, %s421
    %s438 = sphi 0, %s422
    %s446 = sphi 0, %s448
    %s449 = sphi 0, %s446
    %s450 = sphi 0, %s449
    %s466 = sphi 0, %s450
    %s472 = sphi 0, %s474
    %s475 = sphi 0, %s472
    %s476 = sphi 0, %s475
    %s492 = sphi 0, %s476
    %s498 = sphi 0, %s500
    %s501 = sphi 0, %s498
    %s502 = sphi 0, %s501
    %s518 = sphi 0, %s502
    %s526 = sphi 0, %s528
    %s529 = sphi 0, %s526
    %s530 = sphi 0, %s529
    %s546 = sphi 0, %s530
  $region4: #{fastspeech2_forward.5} parent=0 // loop_header_branch
    %26 = sbr.rel (%p24) target = $region8
  $region5: #{fastspeech2_forward.5} parent=0 // loop_body
    %s28 = ssub.s32 %s23, 1
    %s29 = ssub.s32 %s23, 2
    %s39 = sadd.s32 1, %s32
    %p40 = scmp.ge.s32.totalorder %s39, 1
    %s41 = scalar_select %p40, 0, %s39
    %s42 = sadd.s32 1, %s31
    %s43 = scalar_select %p40, %s42, %s31
    %p44 = scmp.ge.s32.totalorder %s43, 2
    %s45 = scalar_select %p44, 0, %s43
    %s46 = sadd.s32 1, %s30
    %s47 = scalar_select %p44, %s46, %s30
    %p48 = scmp.ge.s32.totalorder %s47, 2
    %s49 = scalar_select %p48, 0, %s47
    %s50 = ssub.s32 %s30, %s49
    %s51 = ssub.s32 %s31, %s45
    %s52 = sor.u32 %s50, %s51
    %p53 = scmp.eq.s32.totalorder %s52, 0
    %s55 = sadd.s32 %s54, 1
    %s56 = scalar_select %p53, %s54, %s55
    %p59 = pneg %p53
    %p60 = scmp.eq.s32.totalorder %s23, 3
    %p61 = por %p59, %p60
    %p62 = scmp.ne.s32.totalorder %s54, %s57
    %p63 = scmp.eq.s32.totalorder %s23, 0
    %p64 = por %p62, %p63
    %p65 = scmp.ne.s32.totalorder %s54, %s57
    %p66 = scmp.eq.s32.totalorder %s28, 3
    %p67 = por %p65, %p66
    %p68 = scmp.ne.s32.totalorder %s57, %s58
    %p69 = scmp.eq.s32.totalorder %s28, 0
    %p70 = por %p68, %p69
    %p71 = scmp.ne.s32.totalorder %s57, %s58
    %p72 = scmp.eq.s32.totalorder %s29, 3
    %p73 = por %p71, %p72
    %p75 = scmp.ne.s32.totalorder %s58, %s74
    %p76 = scmp.eq.s32.totalorder %s29, 0
    %p77 = por %p75, %p76
    %s78 = ssub.s32 %s30, %s49
    %s79 = ssub.s32 %s31, %s45
    %s80 = sor.u32 %s78, %s79
    %p81 = scmp.eq.s32.totalorder %s80, 0
    %s83 = sadd.s32 %s82, 1
    %s84 = scalar_select %p81, %s82, %s83
    %p87 = pneg %p81
    %p88 = scmp.eq.s32.totalorder %s23, 3
    %p89 = por %p87, %p88
    %p90 = scmp.ne.s32.totalorder %s82, %s85
    %p91 = scmp.eq.s32.totalorder %s23, 0
    %p92 = por %p90, %p91
    %p93 = scmp.ne.s32.totalorder %s82, %s85
    %p94 = scmp.eq.s32.totalorder %s28, 3
    %p95 = por %p93, %p94
    %p96 = scmp.ne.s32.totalorder %s85, %s86
    %p97 = scmp.eq.s32.totalorder %s28, 0
    %p98 = por %p96, %p97
    %p99 = scmp.ne.s32.totalorder %s85, %s86
    %p100 = scmp.eq.s32.totalorder %s29, 3
    %p101 = por %p99, %p100
    %p103 = scmp.ne.s32.totalorder %s86, %s102
    %p104 = scmp.eq.s32.totalorder %s29, 0
    %p105 = por %p103, %p104
    %s106 = ssub.s32 %s30, %s49
    %s107 = ssub.s32 %s31, %s45
    %s108 = sor.u32 %s106, %s107
    %p109 = scmp.eq.s32.totalorder %s108, 0
    %s111 = sadd.s32 %s110, 1
    %s112 = scalar_select %p109, %s110, %s111
    %p115 = pneg %p109
    %p116 = scmp.eq.s32.totalorder %s23, 3
    %p117 = por %p115, %p116
    %p118 = scmp.ne.s32.totalorder %s110, %s113
    %p119 = scmp.eq.s32.totalorder %s23, 0
    %p120 = por %p118, %p119
    %p121 = scmp.ne.s32.totalorder %s110, %s113
    %p122 = scmp.eq.s32.totalorder %s28, 3
    %p123 = por %p121, %p122
    %p124 = scmp.ne.s32.totalorder %s113, %s114
    %p125 = scmp.eq.s32.totalorder %s28, 0
    %p126 = por %p124, %p125
    %p127 = scmp.ne.s32.totalorder %s113, %s114
    %p128 = scmp.eq.s32.totalorder %s29, 3
    %p129 = por %p127, %p128
    %p131 = scmp.ne.s32.totalorder %s114, %s130
    %p132 = scmp.eq.s32.totalorder %s29, 0
    %p133 = por %p131, %p132
    %s134 = ssub.s32 %s30, %s49
    %s135 = ssub.s32 %s32, %s41
    %s136 = sor.u32 %s134, %s135
    %p137 = scmp.eq.s32.totalorder %s136, 0
    %s139 = sadd.s32 %s138, 1
    %s140 = scalar_select %p137, %s138, %s139
    %p143 = pneg %p137
    %p144 = scmp.eq.s32.totalorder %s23, 3
    %p145 = por %p143, %p144
    %p146 = scmp.ne.s32.totalorder %s138, %s141
    %p147 = scmp.eq.s32.totalorder %s23, 0
    %p148 = por %p146, %p147
    %p149 = scmp.ne.s32.totalorder %s138, %s141
    %p150 = scmp.eq.s32.totalorder %s28, 3
    %p151 = por %p149, %p150
    %p152 = scmp.ne.s32.totalorder %s141, %s142
    %p153 = scmp.eq.s32.totalorder %s28, 0
    %p154 = por %p152, %p153
    %p155 = scmp.ne.s32.totalorder %s141, %s142
    %p156 = scmp.eq.s32.totalorder %s29, 3
    %p157 = por %p155, %p156
    %p159 = scmp.ne.s32.totalorder %s142, %s158
    %p160 = scmp.eq.s32.totalorder %s29, 0
    %p161 = por %p159, %p160
    %s162 = ssub.s32 %s30, %s49
    %s163 = ssub.s32 %s32, %s41
    %s164 = sor.u32 %s162, %s163
    %p165 = scmp.eq.s32.totalorder %s164, 0
    %s167 = sadd.s32 %s166, 1
    %s168 = scalar_select %p165, %s166, %s167
    %p171 = pneg %p165
    %p172 = scmp.eq.s32.totalorder %s23, 3
    %p173 = por %p171, %p172
    %p174 = scmp.ne.s32.totalorder %s166, %s169
    %p175 = scmp.eq.s32.totalorder %s23, 0
    %p176 = por %p174, %p175
    %p177 = scmp.ne.s32.totalorder %s166, %s169
    %p178 = scmp.eq.s32.totalorder %s28, 3
    %p179 = por %p177, %p178
    %p180 = scmp.ne.s32.totalorder %s169, %s170
    %p181 = scmp.eq.s32.totalorder %s28, 0
    %p182 = por %p180, %p181
    %p183 = scmp.ne.s32.totalorder %s169, %s170
    %p184 = scmp.eq.s32.totalorder %s29, 3
    %p185 = por %p183, %p184
    %p187 = scmp.ne.s32.totalorder %s170, %s186
    %p188 = scmp.eq.s32.totalorder %s29, 0
    %p189 = por %p187, %p188
    %s190 = ssub.s32 %s30, %s49
    %s191 = ssub.s32 %s32, %s41
    %s192 = sor.u32 %s190, %s191
    %p193 = scmp.eq.s32.totalorder %s192, 0
    %s195 = sadd.s32 %s194, 1
    %s196 = scalar_select %p193, %s194, %s195
    %p199 = pneg %p193
    %p200 = scmp.eq.s32.totalorder %s23, 3
    %p201 = por %p199, %p200
    %p202 = scmp.ne.s32.totalorder %s194, %s197
    %p203 = scmp.eq.s32.totalorder %s23, 0
    %p204 = por %p202, %p203
    %p205 = scmp.ne.s32.totalorder %s194, %s197
    %p206 = scmp.eq.s32.totalorder %s28, 3
    %p207 = por %p205, %p206
    %p208 = scmp.ne.s32.totalorder %s197, %s198
    %p209 = scmp.eq.s32.totalorder %s28, 0
    %p210 = por %p208, %p209
    %p211 = scmp.ne.s32.totalorder %s197, %s198
    %p212 = scmp.eq.s32.totalorder %s29, 3
    %p213 = por %p211, %p212
    %p215 = scmp.ne.s32.totalorder %s198, %s214
    %p216 = scmp.eq.s32.totalorder %s29, 0
    %p217 = por %p215, %p216
    %s218 = ssub.s32 %s30, %s49
    %s219 = ssub.s32 %s32, %s41
    %s220 = sor.u32 %s218, %s219
    %p221 = scmp.eq.s32.totalorder %s220, 0
    %s223 = sadd.s32 %s222, 1
    %s224 = scalar_select %p221, %s222, %s223
    %p227 = pneg %p221
    %p228 = scmp.eq.s32.totalorder %s23, 3
    %p229 = por %p227, %p228
    %p230 = scmp.ne.s32.totalorder %s222, %s225
    %p231 = scmp.eq.s32.totalorder %s23, 0
    %p232 = por %p230, %p231
    %p233 = scmp.ne.s32.totalorder %s222, %s225
    %p234 = scmp.eq.s32.totalorder %s28, 3
    %p235 = por %p233, %p234
    %p236 = scmp.ne.s32.totalorder %s225, %s226
    %p237 = scmp.eq.s32.totalorder %s28, 0
    %p238 = por %p236, %p237
    %p239 = scmp.ne.s32.totalorder %s225, %s226
    %p240 = scmp.eq.s32.totalorder %s29, 3
    %p241 = por %p239, %p240
    %p243 = scmp.ne.s32.totalorder %s226, %s242
    %p244 = scmp.eq.s32.totalorder %s29, 0
    %p245 = por %p243, %p244
    %s246 = ssub.s32 %s30, %s49
    %s247 = ssub.s32 %s32, %s41
    %s248 = sor.u32 %s246, %s247
    %p249 = scmp.eq.s32.totalorder %s248, 0
    %s251 = sadd.s32 %s250, 1
    %s252 = scalar_select %p249, %s250, %s251
    %p255 = pneg %p249
    %p256 = scmp.eq.s32.totalorder %s23, 3
    %p257 = por %p255, %p256
    %p258 = scmp.ne.s32.totalorder %s250, %s253
    %p259 = scmp.eq.s32.totalorder %s23, 0
    %p260 = por %p258, %p259
    %p261 = scmp.ne.s32.totalorder %s250, %s253
    %p262 = scmp.eq.s32.totalorder %s28, 3
    %p263 = por %p261, %p262
    %p264 = scmp.ne.s32.totalorder %s253, %s254
    %p265 = scmp.eq.s32.totalorder %s28, 0
    %p266 = por %p264, %p265
    %p267 = scmp.ne.s32.totalorder %s253, %s254
    %p268 = scmp.eq.s32.totalorder %s29, 3
    %p269 = por %p267, %p268
    %p271 = scmp.ne.s32.totalorder %s254, %s270
    %p272 = scmp.eq.s32.totalorder %s29, 0
    %p273 = por %p271, %p272
    %s274 = ssub.s32 %s30, %s49
    %s275 = ssub.s32 %s32, %s41
    %s276 = sor.u32 %s274, %s275
    %p277 = scmp.eq.s32.totalorder %s276, 0
    %s279 = sadd.s32 %s278, 1
    %s280 = scalar_select %p277, %s278, %s279
    %p283 = pneg %p277
    %p284 = scmp.eq.s32.totalorder %s23, 3
    %p285 = por %p283, %p284
    %p286 = scmp.ne.s32.totalorder %s278, %s281
    %p287 = scmp.eq.s32.totalorder %s23, 0
    %p288 = por %p286, %p287
    %p289 = scmp.ne.s32.totalorder %s278, %s281
    %p290 = scmp.eq.s32.totalorder %s28, 3
    %p291 = por %p289, %p290
    %p292 = scmp.ne.s32.totalorder %s281, %s282
    %p293 = scmp.eq.s32.totalorder %s28, 0
    %p294 = por %p292, %p293
    %p295 = scmp.ne.s32.totalorder %s281, %s282
    %p296 = scmp.eq.s32.totalorder %s29, 3
    %p297 = por %p295, %p296
    %p299 = scmp.ne.s32.totalorder %s282, %s298
    %p300 = scmp.eq.s32.totalorder %s29, 0
    %p301 = por %p299, %p300
    %s302 = ssub.s32 %s30, %s49
    %s303 = ssub.s32 %s32, %s41
    %s304 = sor.u32 %s302, %s303
    %p305 = scmp.eq.s32.totalorder %s304, 0
    %s307 = sadd.s32 %s306, 1
    %s308 = scalar_select %p305, %s306, %s307
    %p311 = pneg %p305
    %p312 = scmp.eq.s32.totalorder %s23, 3
    %p313 = por %p311, %p312
    %p314 = scmp.ne.s32.totalorder %s306, %s309
    %p315 = scmp.eq.s32.totalorder %s23, 0
    %p316 = por %p314, %p315
    %p317 = scmp.ne.s32.totalorder %s306, %s309
    %p318 = scmp.eq.s32.totalorder %s28, 3
    %p319 = por %p317, %p318
    %p320 = scmp.ne.s32.totalorder %s309, %s310
    %p321 = scmp.eq.s32.totalorder %s28, 0
    %p322 = por %p320, %p321
    %p323 = scmp.ne.s32.totalorder %s309, %s310
    %p324 = scmp.eq.s32.totalorder %s29, 3
    %p325 = por %p323, %p324
    %p327 = scmp.ne.s32.totalorder %s310, %s326
    %p328 = scmp.eq.s32.totalorder %s29, 0
    %p329 = por %p327, %p328
    %s330 = ssub.s32 %s30, %s49
    %s331 = ssub.s32 %s32, %s41
    %s332 = sor.u32 %s330, %s331
    %p333 = scmp.eq.s32.totalorder %s332, 0
    %s335 = sadd.s32 %s334, 1
    %s336 = scalar_select %p333, %s334, %s335
    %p339 = pneg %p333
    %p340 = scmp.eq.s32.totalorder %s23, 3
    %p341 = por %p339, %p340
    %p342 = scmp.ne.s32.totalorder %s334, %s337
    %p343 = scmp.eq.s32.totalorder %s23, 0
    %p344 = por %p342, %p343
    %p345 = scmp.ne.s32.totalorder %s334, %s337
    %p346 = scmp.eq.s32.totalorder %s28, 3
    %p347 = por %p345, %p346
    %p348 = scmp.ne.s32.totalorder %s337, %s338
    %p349 = scmp.eq.s32.totalorder %s28, 0
    %p350 = por %p348, %p349
    %p351 = scmp.ne.s32.totalorder %s337, %s338
    %p352 = scmp.eq.s32.totalorder %s29, 3
    %p353 = por %p351, %p352
    %p355 = scmp.ne.s32.totalorder %s338, %s354
    %p356 = scmp.eq.s32.totalorder %s29, 0
    %p357 = por %p355, %p356
    %s358 = ssub.s32 %s30, %s49
    %s359 = ssub.s32 %s32, %s41
    %s360 = sor.u32 %s358, %s359
    %p361 = scmp.eq.s32.totalorder %s360, 0
    %s363 = sadd.s32 %s362, 1
    %s364 = scalar_select %p361, %s362, %s363
    %p367 = pneg %p361
    %p368 = scmp.eq.s32.totalorder %s23, 3
    %p369 = por %p367, %p368
    %p370 = scmp.ne.s32.totalorder %s362, %s365
    %p371 = scmp.eq.s32.totalorder %s23, 0
    %p372 = por %p370, %p371
    %p373 = scmp.ne.s32.totalorder %s362, %s365
    %p374 = scmp.eq.s32.totalorder %s28, 3
    %p375 = por %p373, %p374
    %p376 = scmp.ne.s32.totalorder %s365, %s366
    %p377 = scmp.eq.s32.totalorder %s28, 0
    %p378 = por %p376, %p377
    %p379 = scmp.ne.s32.totalorder %s365, %s366
    %p380 = scmp.eq.s32.totalorder %s29, 3
    %p381 = por %p379, %p380
    %p383 = scmp.ne.s32.totalorder %s366, %s382
    %p384 = scmp.eq.s32.totalorder %s29, 0
    %p385 = por %p383, %p384
    %s386 = ssub.s32 %s30, %s49
    %s387 = ssub.s32 %s32, %s41
    %s388 = sor.u32 %s386, %s387
    %p389 = scmp.eq.s32.totalorder %s388, 0
    %s391 = sadd.s32 %s390, 1
    %s392 = scalar_select %p389, %s390, %s391
    %p395 = pneg %p389
    %p396 = scmp.eq.s32.totalorder %s23, 3
    %p397 = por %p395, %p396
    %p398 = scmp.ne.s32.totalorder %s390, %s393
    %p399 = scmp.eq.s32.totalorder %s23, 0
    %p400 = por %p398, %p399
    %p401 = scmp.ne.s32.totalorder %s390, %s393
    %p402 = scmp.eq.s32.totalorder %s28, 3
    %p403 = por %p401, %p402
    %p404 = scmp.ne.s32.totalorder %s393, %s394
    %p405 = scmp.eq.s32.totalorder %s28, 0
    %p406 = por %p404, %p405
    %p407 = scmp.ne.s32.totalorder %s393, %s394
    %p408 = scmp.eq.s32.totalorder %s29, 3
    %p409 = por %p407, %p408
    %p411 = scmp.ne.s32.totalorder %s394, %s410
    %p412 = scmp.eq.s32.totalorder %s29, 0
    %p413 = por %p411, %p412
    %s414 = ssub.s32 %s30, %s49
    %s415 = ssub.s32 %s32, %s41
    %s416 = sor.u32 %s414, %s415
    %p417 = scmp.eq.s32.totalorder %s416, 0
    %s419 = sadd.s32 %s418, 1
    %s420 = scalar_select %p417, %s418, %s419
    %p423 = pneg %p417
    %p424 = scmp.eq.s32.totalorder %s23, 3
    %p425 = por %p423, %p424
    %p426 = scmp.ne.s32.totalorder %s418, %s421
    %p427 = scmp.eq.s32.totalorder %s23, 0
    %p428 = por %p426, %p427
    %p429 = scmp.ne.s32.totalorder %s418, %s421
    %p430 = scmp.eq.s32.totalorder %s28, 3
    %p431 = por %p429, %p430
    %p432 = scmp.ne.s32.totalorder %s421, %s422
    %p433 = scmp.eq.s32.totalorder %s28, 0
    %p434 = por %p432, %p433
    %p435 = scmp.ne.s32.totalorder %s421, %s422
    %p436 = scmp.eq.s32.totalorder %s29, 3
    %p437 = por %p435, %p436
    %p439 = scmp.ne.s32.totalorder %s422, %s438
    %p440 = scmp.eq.s32.totalorder %s29, 0
    %p441 = por %p439, %p440
    %s442 = ssub.s32 %s30, %s49
    %s443 = ssub.s32 %s32, %s41
    %s444 = sor.u32 %s442, %s443
    %p445 = scmp.eq.s32.totalorder %s444, 0
    %s447 = sadd.s32 %s446, 1
    %s448 = scalar_select %p445, %s446, %s447
    %p451 = pneg %p445
    %p452 = scmp.eq.s32.totalorder %s23, 3
    %p453 = por %p451, %p452
    %p454 = scmp.ne.s32.totalorder %s446, %s449
    %p455 = scmp.eq.s32.totalorder %s23, 0
    %p456 = por %p454, %p455
    %p457 = scmp.ne.s32.totalorder %s446, %s449
    %p458 = scmp.eq.s32.totalorder %s28, 3
    %p459 = por %p457, %p458
    %p460 = scmp.ne.s32.totalorder %s449, %s450
    %p461 = scmp.eq.s32.totalorder %s28, 0
    %p462 = por %p460, %p461
    %p463 = scmp.ne.s32.totalorder %s449, %s450
    %p464 = scmp.eq.s32.totalorder %s29, 3
    %p465 = por %p463, %p464
    %p467 = scmp.ne.s32.totalorder %s450, %s466
    %p468 = scmp.eq.s32.totalorder %s29, 0
    %p469 = por %p467, %p468
    %s470 = ssub.s32 %s30, %s49
    %p471 = scmp.eq.s32.totalorder %s470, 0
    %s473 = sadd.s32 %s472, 1
    %s474 = scalar_select %p471, %s472, %s473
    %p477 = pneg %p471
    %p478 = scmp.eq.s32.totalorder %s23, 3
    %p479 = por %p477, %p478
    %p480 = scmp.ne.s32.totalorder %s472, %s475
    %p481 = scmp.eq.s32.totalorder %s23, 0
    %p482 = por %p480, %p481
    %p483 = scmp.ne.s32.totalorder %s472, %s475
    %p484 = scmp.eq.s32.totalorder %s28, 3
    %p485 = por %p483, %p484
    %p486 = scmp.ne.s32.totalorder %s475, %s476
    %p487 = scmp.eq.s32.totalorder %s28, 0
    %p488 = por %p486, %p487
    %p489 = scmp.ne.s32.totalorder %s475, %s476
    %p490 = scmp.eq.s32.totalorder %s29, 3
    %p491 = por %p489, %p490
    %p493 = scmp.ne.s32.totalorder %s476, %s492
    %p494 = scmp.eq.s32.totalorder %s29, 0
    %p495 = por %p493, %p494
    %s496 = ssub.s32 %s30, %s49
    %p497 = scmp.eq.s32.totalorder %s496, 0
    %s499 = sadd.s32 %s498, 1
    %s500 = scalar_select %p497, %s498, %s499
    %p503 = pneg %p497
    %p504 = scmp.eq.s32.totalorder %s23, 3
    %p505 = por %p503, %p504
    %p506 = scmp.ne.s32.totalorder %s498, %s501
    %p507 = scmp.eq.s32.totalorder %s23, 0
    %p508 = por %p506, %p507
    %p509 = scmp.ne.s32.totalorder %s498, %s501
    %p510 = scmp.eq.s32.totalorder %s28, 3
    %p511 = por %p509, %p510
    %p512 = scmp.ne.s32.totalorder %s501, %s502
    %p513 = scmp.eq.s32.totalorder %s28, 0
    %p514 = por %p512, %p513
    %p515 = scmp.ne.s32.totalorder %s501, %s502
    %p516 = scmp.eq.s32.totalorder %s29, 3
    %p517 = por %p515, %p516
    %p519 = scmp.ne.s32.totalorder %s502, %s518
    %p520 = scmp.eq.s32.totalorder %s29, 0
    %p521 = por %p519, %p520
    %s522 = ssub.s32 %s30, %s49
    %s523 = ssub.s32 %s31, %s45
    %s524 = sor.u32 %s522, %s523
    %p525 = scmp.eq.s32.totalorder %s524, 0
    %s527 = sadd.s32 %s526, 1
    %s528 = scalar_select %p525, %s526, %s527
    %p531 = pneg %p525
    %p532 = scmp.eq.s32.totalorder %s23, 3
    %p533 = por %p531, %p532
    %p534 = scmp.ne.s32.totalorder %s526, %s529
    %p535 = scmp.eq.s32.totalorder %s23, 0
    %p536 = por %p534, %p535
    %p537 = scmp.ne.s32.totalorder %s526, %s529
    %p538 = scmp.eq.s32.totalorder %s28, 3
    %p539 = por %p537, %p538
    %p540 = scmp.ne.s32.totalorder %s529, %s530
    %p541 = scmp.eq.s32.totalorder %s28, 0
    %p542 = por %p540, %p541
    %p543 = scmp.ne.s32.totalorder %s529, %s530
    %p544 = scmp.eq.s32.totalorder %s29, 3
    %p545 = por %p543, %p544
    %p547 = scmp.ne.s32.totalorder %s530, %s546
    %p548 = scmp.eq.s32.totalorder %s29, 0
    %p549 = por %p547, %p548
    %p550 = scmp.le.s32.totalorder 1, %s23
    %p551 = scmp.lt.s32.totalorder %s23, 5
    %p552 = pnand %p550, %p551
    %p553 = pneg %p552
    // Predicated region
    $region9: #{fastspeech2_forward.5} parent=5 // pred_check
      _
    $region10: #{fastspeech2_forward.5} parent=5 // pred_check_branch
      %555 = sbr.rel (%p552) target = $region12
    $region11: #{fastspeech2_forward.5} parent=5 // pred_region
      %s556 = ssub.s32 %s23, 1
    $region12: #{fastspeech2_forward.5} parent=5 // pred_fallthru
      _
    %p557 = scmp.lt.s32.totalorder %s23, 4
    // Predicated region
    $region13: #{fastspeech2_forward.5} parent=5 // pred_check
      %p558 = pneg %p557
    $region14: #{fastspeech2_forward.5} parent=5 // pred_check_branch
      %560 = sbr.rel (%p558) target = $region16
    $region15: #{fastspeech2_forward.5} parent=5 // pred_region
      // Predicated region
      $region17: #{fastspeech2_forward.5} parent=15 // pred_check
        %p561 = pneg %p64
      $region18: #{fastspeech2_forward.5} parent=15 // pred_check_branch
        %563 = sbr.rel (%p561) target = $region20
      $region19: #{fastspeech2_forward.5} parent=15 // pred_region
        %p564 = scmp.lt.s32.totalorder %s30, 1
        %s565 = scalar_select %p564, %s30, 1
        %p566 = scmp.lt.s32.totalorder %s31, 1
        %s567 = scalar_select %p566, %s31, 1
        %s568 = smul.addr %s567, 4
        %s569 = smul.addr %s565, 8
        %s570 = sadd.s32 %s568, %s569
        %s571 = smul.addr %s570, 8
        %s572 = scalar_lea.vmem %s0, %s571
      $region20: #{fastspeech2_forward.5} parent=15 // pred_fallthru
        _
      // Predicated region
      $region21: #{fastspeech2_forward.5} parent=15 // pred_check
        %p573 = pneg %p92
      $region22: #{fastspeech2_forward.5} parent=15 // pred_check_branch
        %575 = sbr.rel (%p573) target = $region24
      $region23: #{fastspeech2_forward.5} parent=15 // pred_region
        %p576 = scmp.lt.s32.totalorder %s30, 1
        %s577 = scalar_select %p576, %s30, 1
        %p578 = scmp.lt.s32.totalorder %s31, 1
        %s579 = scalar_select %p578, %s31, 1
        %s580 = smul.addr %s579, 4
        %s581 = smul.addr %s577, 8
        %s582 = sadd.s32 %s580, %s581
        %s583 = smul.addr %s582, 8
        %s584 = scalar_lea.vmem %s1, %s583
      $region24: #{fastspeech2_forward.5} parent=15 // pred_fallthru
        _
      // Predicated region
      $region25: #{fastspeech2_forward.5} parent=15 // pred_check
        %p585 = pneg %p120
      $region26: #{fastspeech2_forward.5} parent=15 // pred_check_branch
        %587 = sbr.rel (%p585) target = $region28
      $region27: #{fastspeech2_forward.5} parent=15 // pred_region
        %p588 = scmp.lt.s32.totalorder %s30, 1
        %s589 = scalar_select %p588, %s30, 1
        %p590 = scmp.lt.s32.totalorder %s31, 1
        %s591 = scalar_select %p590, %s31, 1
        %s592 = smul.addr %s589, 2
        %s593 = sadd.s32 %s591, %s592
        %s594 = scalar_lea.vmem %s2, %s593
      $region28: #{fastspeech2_forward.5} parent=15 // pred_fallthru
        _
      // Predicated region
      $region29: #{fastspeech2_forward.5} parent=15 // pred_check
        %p595 = pneg %p148
      $region30: #{fastspeech2_forward.5} parent=15 // pred_check_branch
        %597 = sbr.rel (%p595) target = $region32
      $region31: #{fastspeech2_forward.5} parent=15 // pred_region
        %p598 = scmp.lt.s32.totalorder %s30, 1
        %s599 = scalar_select %p598, %s30, 1
        %p600 = scmp.lt.s32.totalorder %s32, 0
        %s601 = scalar_select %p600, %s32, 0
        %s602 = smul.addr %s601, 4
        %s603 = smul.addr %s599, 4
        %s604 = sadd.s32 %s602, %s603
        %s605 = smul.addr %s604, 4
        %s606 = scalar_lea.vmem %s3, %s605
      $region32: #{fastspeech2_forward.5} parent=15 // pred_fallthru
        _
      // Predicated region
      $region33: #{fastspeech2_forward.5} parent=15 // pred_check
        %p607 = pneg %p176
      $region34: #{fastspeech2_forward.5} parent=15 // pred_check_branch
        %609 = sbr.rel (%p607) target = $region36
      $region35: #{fastspeech2_forward.5} parent=15 // pred_region
        %p610 = scmp.lt.s32.totalorder %s30, 1
        %s611 = scalar_select %p610, %s30, 1
        %p612 = scmp.lt.s32.totalorder %s32, 0
        %s613 = scalar_select %p612, %s32, 0
        %s614 = sadd.s32 %s613, %s611
        %s615 = scalar_lea.vmem %s4, %s614
      $region36: #{fastspeech2_forward.5} parent=15 // pred_fallthru
        _
      // Predicated region
      $region37: #{fastspeech2_forward.5} parent=15 // pred_check
        %p616 = pneg %p204
      $region38: #{fastspeech2_forward.5} parent=15 // pred_check_branch
        %618 = sbr.rel (%p616) target = $region40
      $region39: #{fastspeech2_forward.5} parent=15 // pred_region
        %p619 = scmp.lt.s32.totalorder %s30, 1
        %s620 = scalar_select %p619, %s30, 1
        %p621 = scmp.lt.s32.totalorder %s32, 0
        %s622 = scalar_select %p621, %s32, 0
        %s623 = smul.addr %s622, 4
        %s624 = smul.addr %s620, 4
        %s625 = sadd.s32 %s623, %s624
        %s626 = smul.addr %s625, 4
        %s627 = scalar_lea.vmem %s5, %s626
      $region40: #{fastspeech2_forward.5} parent=15 // pred_fallthru
        _
      // Predicated region
      $region41: #{fastspeech2_forward.5} parent=15 // pred_check
        %p628 = pneg %p232
      $region42: #{fastspeech2_forward.5} parent=15 // pred_check_branch
        %630 = sbr.rel (%p628) target = $region44
      $region43: #{fastspeech2_forward.5} parent=15 // pred_region
        %p631 = scmp.lt.s32.totalorder %s30, 1
        %s632 = scalar_select %p631, %s30, 1
        %p633 = scmp.lt.s32.totalorder %s32, 0
        %s634 = scalar_select %p633, %s32, 0
        %s635 = sadd.s32 %s634, %s632
        %s636 = scalar_lea.vmem %s6, %s635
      $region44: #{fastspeech2_forward.5} parent=15 // pred_fallthru
        _
      // Predicated region
      $region45: #{fastspeech2_forward.5} parent=15 // pred_check
        %p637 = pneg %p260
      $region46: #{fastspeech2_forward.5} parent=15 // pred_check_branch
        %639 = sbr.rel (%p637) target = $region48
      $region47: #{fastspeech2_forward.5} parent=15 // pred_region
        %p640 = scmp.lt.s32.totalorder %s30, 1
        %s641 = scalar_select %p640, %s30, 1
        %p642 = scmp.lt.s32.totalorder %s32, 0
        %s643 = scalar_select %p642, %s32, 0
        %s644 = sadd.s32 %s643, %s641
        %s645 = scalar_lea.vmem %s7, %s644
      $region48: #{fastspeech2_forward.5} parent=15 // pred_fallthru
        _
      // Predicated region
      $region49: #{fastspeech2_forward.5} parent=15 // pred_check
        %p646 = pneg %p288
      $region50: #{fastspeech2_forward.5} parent=15 // pred_check_branch
        %648 = sbr.rel (%p646) target = $region52
      $region51: #{fastspeech2_forward.5} parent=15 // pred_region
        %p649 = scmp.lt.s32.totalorder %s30, 1
        %s650 = scalar_select %p649, %s30, 1
        %p651 = scmp.lt.s32.totalorder %s32, 0
        %s652 = scalar_select %p651, %s32, 0
        %s653 = sadd.s32 %s652, %s650
        %s654 = scalar_lea.vmem %s8, %s653
      $region52: #{fastspeech2_forward.5} parent=15 // pred_fallthru
        _
      // Predicated region
      $region53: #{fastspeech2_forward.5} parent=15 // pred_check
        %p655 = pneg %p316
      $region54: #{fastspeech2_forward.5} parent=15 // pred_check_branch
        %657 = sbr.rel (%p655) target = $region56
      $region55: #{fastspeech2_forward.5} parent=15 // pred_region
        %p658 = scmp.lt.s32.totalorder %s30, 1
        %s659 = scalar_select %p658, %s30, 1
        %p660 = scmp.lt.s32.totalorder %s32, 0
        %s661 = scalar_select %p660, %s32, 0
        %s662 = smul.addr %s661, 12
        %s663 = smul.addr %s659, 12
        %s664 = sadd.s32 %s662, %s663
        %s665 = smul.addr %s664, 4
        %s666 = scalar_lea.vmem %s9, %s665
      $region56: #{fastspeech2_forward.5} parent=15 // pred_fallthru
        _
      // Predicated region
      $region57: #{fastspeech2_forward.5} parent=15 // pred_check
        %p667 = pneg %p344
      $region58: #{fastspeech2_forward.5} parent=15 // pred_check_branch
        %669 = sbr.rel (%p667) target = $region60
      $region59: #{fastspeech2_forward.5} parent=15 // pred_region
        %p670 = scmp.lt.s32.totalorder %s30, 1
        %s671 = scalar_select %p670, %s30, 1
        %p672 = scmp.lt.s32.totalorder %s32, 0
        %s673 = scalar_select %p672, %s32, 0
        %s674 = sadd.s32 %s673, %s671
        %s675 = scalar_lea.vmem %s10, %s674
      $region60: #{fastspeech2_forward.5} parent=15 // pred_fallthru
        _
      // Predicated region
      $region61: #{fastspeech2_forward.5} parent=15 // pred_check
        %p676 = pneg %p372
      $region62: #{fastspeech2_forward.5} parent=15 // pred_check_branch
        %678 = sbr.rel (%p676) target = $region64
      $region63: #{fastspeech2_forward.5} parent=15 // pred_region
        %p679 = scmp.lt.s32.totalorder %s30, 1
        %s680 = scalar_select %p679, %s30, 1
        %p681 = scmp.lt.s32.totalorder %s32, 0
        %s682 = scalar_select %p681, %s32, 0
        %s683 = smul.addr %s682, 24
        %s684 = smul.addr %s680, 24
        %s685 = sadd.s32 %s683, %s684
        %s686 = smul.addr %s685, 4
        %s687 = scalar_lea.vmem %s11, %s686
      $region64: #{fastspeech2_forward.5} parent=15 // pred_fallthru
        _
      // Predicated region
      $region65: #{fastspeech2_forward.5} parent=15 // pred_check
        %p688 = pneg %p400
      $region66: #{fastspeech2_forward.5} parent=15 // pred_check_branch
        %690 = sbr.rel (%p688) target = $region68
      $region67: #{fastspeech2_forward.5} parent=15 // pred_region
        %p691 = scmp.lt.s32.totalorder %s30, 1
        %s692 = scalar_select %p691, %s30, 1
        %p693 = scmp.lt.s32.totalorder %s32, 0
        %s694 = scalar_select %p693, %s32, 0
        %s695 = sadd.s32 %s694, %s692
        %s696 = scalar_lea.vmem %s12, %s695
      $region68: #{fastspeech2_forward.5} parent=15 // pred_fallthru
        _
      // Predicated region
      $region69: #{fastspeech2_forward.5} parent=15 // pred_check
        %p697 = pneg %p428
      $region70: #{fastspeech2_forward.5} parent=15 // pred_check_branch
        %699 = sbr.rel (%p697) target = $region72
      $region71: #{fastspeech2_forward.5} parent=15 // pred_region
        %p700 = scmp.lt.s32.totalorder %s30, 1
        %s701 = scalar_select %p700, %s30, 1
        %p702 = scmp.lt.s32.totalorder %s32, 0
        %s703 = scalar_select %p702, %s32, 0
        %s704 = sadd.s32 %s703, %s701
        %s705 = scalar_lea.vmem %s13, %s704
      $region72: #{fastspeech2_forward.5} parent=15 // pred_fallthru
        _
      // Predicated region
      $region73: #{fastspeech2_forward.5} parent=15 // pred_check
        %p706 = pneg %p456
      $region74: #{fastspeech2_forward.5} parent=15 // pred_check_branch
        %708 = sbr.rel (%p706) target = $region76
      $region75: #{fastspeech2_forward.5} parent=15 // pred_region
        %p709 = scmp.lt.s32.totalorder %s30, 1
        %s710 = scalar_select %p709, %s30, 1
        %p711 = scmp.lt.s32.totalorder %s32, 0
        %s712 = scalar_select %p711, %s32, 0
        %s713 = sadd.s32 %s712, %s710
        %s714 = scalar_lea.vmem %s14, %s713
      $region76: #{fastspeech2_forward.5} parent=15 // pred_fallthru
        _
      // Predicated region
      $region77: #{fastspeech2_forward.5} parent=15 // pred_check
        %p715 = pneg %p482
      $region78: #{fastspeech2_forward.5} parent=15 // pred_check_branch
        %717 = sbr.rel (%p715) target = $region80
      $region79: #{fastspeech2_forward.5} parent=15 // pred_region
        %p718 = scmp.lt.s32.totalorder %s30, 1
        %s719 = scalar_select %p718, %s30, 1
        %s720 = smul.addr %s719, 4
        %s721 = smul.addr %s720, 4
        %s722 = scalar_lea.vmem %s15, %s721
      $region80: #{fastspeech2_forward.5} parent=15 // pred_fallthru
        _
      // Predicated region
      $region81: #{fastspeech2_forward.5} parent=15 // pred_check
        %p723 = pneg %p508
      $region82: #{fastspeech2_forward.5} parent=15 // pred_check_branch
        %725 = sbr.rel (%p723) target = $region84
      $region83: #{fastspeech2_forward.5} parent=15 // pred_region
        %p726 = scmp.lt.s32.totalorder %s30, 1
        %s727 = scalar_select %p726, %s30, 1
        %s728 = scalar_lea.vmem %s16, %s727
      $region84: #{fastspeech2_forward.5} parent=15 // pred_fallthru
        _
    $region16: #{fastspeech2_forward.5} parent=5 // pred_fallthru
      _
    %p729 = scmp.le.s32.totalorder 1, %s23
    %p730 = scmp.lt.s32.totalorder %s23, 5
    %p731 = pnand %p729, %p730
    %p732 = pneg %p731
    // Predicated region
    $region85: #{fastspeech2_forward.5} parent=5 // pred_check
      _
    $region86: #{fastspeech2_forward.5} parent=5 // pred_check_branch
      %734 = sbr.rel (%p731) target = $region88
    $region87: #{fastspeech2_forward.5} parent=5 // pred_region
      %s735 = ssub.s32 %s23, 1
      %p736 = scmp.lt.s32.totalorder %s33, 1
      %s737 = scalar_select %p736, %s33, 1
      %p738 = scmp.lt.s32.totalorder %s34, 1
      %s739 = scalar_select %p738, %s34, 1
      %s740 = smul.addr %s739, 4
      %s741 = smul.addr %s737, 8
      %s742 = sadd.s32 %s740, %s741
      %s743 = smul.addr %s742, 8
      %s744 = scalar_lea.vmem %s0, %s743
      %p745 = pneg %p70
      %p746 = pneg %p67
      %p747 = scmp.lt.s32.totalorder %s33, 1
      %s748 = scalar_select %p747, %s33, 1
      %p749 = scmp.lt.s32.totalorder %s34, 1
      %s750 = scalar_select %p749, %s34, 1
      %s751 = smul.addr %s750, 4
      %s752 = smul.addr %s748, 8
      %s753 = sadd.s32 %s751, %s752
      %s754 = smul.addr %s753, 8
      %s755 = scalar_lea.vmem %s1, %s754
      %p756 = pneg %p98
      %p757 = pneg %p95
      %p758 = scmp.lt.s32.totalorder %s33, 1
      %s759 = scalar_select %p758, %s33, 1
      %p760 = scmp.lt.s32.totalorder %s34, 1
      %s761 = scalar_select %p760, %s34, 1
      %s762 = smul.addr %s759, 2
      %s763 = sadd.s32 %s761, %s762
      %s764 = scalar_lea.vmem %s2, %s763
      %p765 = pneg %p126
      %p766 = pneg %p123
      %p767 = scmp.lt.s32.totalorder %s33, 1
      %s768 = scalar_select %p767, %s33, 1
      %p769 = scmp.lt.s32.totalorder %s35, 0
      %s770 = scalar_select %p769, %s35, 0
      %s771 = smul.addr %s770, 4
      %s772 = smul.addr %s768, 4
      %s773 = sadd.s32 %s771, %s772
      %s774 = smul.addr %s773, 4
      %s775 = scalar_lea.vmem %s3, %s774
      %p776 = pneg %p154
      %p777 = pneg %p151
      %p778 = scmp.lt.s32.totalorder %s33, 1
      %s779 = scalar_select %p778, %s33, 1
      %p780 = scmp.lt.s32.totalorder %s35, 0
      %s781 = scalar_select %p780, %s35, 0
      %s782 = sadd.s32 %s781, %s779
      %s783 = scalar_lea.vmem %s4, %s782
      %p784 = pneg %p182
      %p785 = pneg %p179
      %p786 = scmp.lt.s32.totalorder %s33, 1
      %s787 = scalar_select %p786, %s33, 1
      %p788 = scmp.lt.s32.totalorder %s35, 0
      %s789 = scalar_select %p788, %s35, 0
      %s790 = smul.addr %s789, 4
      %s791 = smul.addr %s787, 4
      %s792 = sadd.s32 %s790, %s791
      %s793 = smul.addr %s792, 4
      %s794 = scalar_lea.vmem %s5, %s793
      %p795 = pneg %p210
      %p796 = pneg %p207
      %p797 = scmp.lt.s32.totalorder %s33, 1
      %s798 = scalar_select %p797, %s33, 1
      %p799 = scmp.lt.s32.totalorder %s35, 0
      %s800 = scalar_select %p799, %s35, 0
      %s801 = sadd.s32 %s800, %s798
      %s802 = scalar_lea.vmem %s6, %s801
      %p803 = pneg %p238
      %p804 = pneg %p235
      %p805 = scmp.lt.s32.totalorder %s33, 1
      %s806 = scalar_select %p805, %s33, 1
      %p807 = scmp.lt.s32.totalorder %s35, 0
      %s808 = scalar_select %p807, %s35, 0
      %s809 = sadd.s32 %s808, %s806
      %s810 = scalar_lea.vmem %s7, %s809
      %p811 = pneg %p266
      %p812 = pneg %p263
      %p813 = scmp.lt.s32.totalorder %s33, 1
      %s814 = scalar_select %p813, %s33, 1
      %p815 = scmp.lt.s32.totalorder %s35, 0
      %s816 = scalar_select %p815, %s35, 0
      %s817 = sadd.s32 %s816, %s814
      %s818 = scalar_lea.vmem %s8, %s817
      %p819 = pneg %p294
      %p820 = pneg %p291
      %p821 = scmp.lt.s32.totalorder %s33, 1
      %s822 = scalar_select %p821, %s33, 1
      %p823 = scmp.lt.s32.totalorder %s35, 0
      %s824 = scalar_select %p823, %s35, 0
      %s825 = smul.addr %s824, 12
      %s826 = smul.addr %s822, 12
      %s827 = sadd.s32 %s825, %s826
      %s828 = smul.addr %s827, 4
      %s829 = scalar_lea.vmem %s9, %s828
      %p830 = pneg %p322
      %p831 = pneg %p319
      %p832 = scmp.lt.s32.totalorder %s33, 1
      %s833 = scalar_select %p832, %s33, 1
      %p834 = scmp.lt.s32.totalorder %s35, 0
      %s835 = scalar_select %p834, %s35, 0
      %s836 = sadd.s32 %s835, %s833
      %s837 = scalar_lea.vmem %s10, %s836
      %p838 = pneg %p350
      %p839 = pneg %p347
      %p840 = scmp.lt.s32.totalorder %s33, 1
      %s841 = scalar_select %p840, %s33, 1
      %p842 = scmp.lt.s32.totalorder %s35, 0
      %s843 = scalar_select %p842, %s35, 0
      %s844 = smul.addr %s843, 24
      %s845 = smul.addr %s841, 24
      %s846 = sadd.s32 %s844, %s845
      %s847 = smul.addr %s846, 4
      %s848 = scalar_lea.vmem %s11, %s847
      %p849 = pneg %p378
      %p850 = pneg %p375
      %p851 = scmp.lt.s32.totalorder %s33, 1
      %s852 = scalar_select %p851, %s33, 1
      %p853 = scmp.lt.s32.totalorder %s35, 0
      %s854 = scalar_select %p853, %s35, 0
      %s855 = sadd.s32 %s854, %s852
      %s856 = scalar_lea.vmem %s12, %s855
      %p857 = pneg %p406
      %p858 = pneg %p403
      %p859 = scmp.lt.s32.totalorder %s33, 1
      %s860 = scalar_select %p859, %s33, 1
      %p861 = scmp.lt.s32.totalorder %s35, 0
      %s862 = scalar_select %p861, %s35, 0
      %s863 = sadd.s32 %s862, %s860
      %s864 = scalar_lea.vmem %s13, %s863
      %p865 = pneg %p434
      %p866 = pneg %p431
      %p867 = scmp.lt.s32.totalorder %s33, 1
      %s868 = scalar_select %p867, %s33, 1
      %p869 = scmp.lt.s32.totalorder %s35, 0
      %s870 = scalar_select %p869, %s35, 0
      %s871 = sadd.s32 %s870, %s868
      %s872 = scalar_lea.vmem %s14, %s871
      %p873 = pneg %p462
      %p874 = pneg %p459
      %p875 = scmp.lt.s32.totalorder %s33, 1
      %s876 = scalar_select %p875, %s33, 1
      %s877 = smul.addr %s876, 4
      %s878 = smul.addr %s877, 4
      %s879 = scalar_lea.vmem %s15, %s878
      %p880 = pneg %p488
      %p881 = pneg %p485
      %p882 = scmp.lt.s32.totalorder %s33, 1
      %s883 = scalar_select %p882, %s33, 1
      %s884 = scalar_lea.vmem %s16, %s883
      %p885 = pneg %p514
      %p886 = pneg %p511
      %p887 = pneg %p542
      %p888 = pneg %p539
      %p889 = scmp.lt.s32.totalorder %s33, 1
      %s890 = scalar_select %p889, %s33, 1
      %p891 = scmp.lt.s32.totalorder %s34, 1
      %s892 = scalar_select %p891, %s34, 1
      %s893 = smul.addr %s892, 4
      %s894 = smul.addr %s890, 8
      %s895 = sadd.s32 %s893, %s894
      %s896 = smul.addr %s895, 8
      %s897 = scalar_lea.vmem %s17, %s896
      %p898 = scmp.lt.s32.totalorder %s33, 1
      %s899 = scalar_select %p898, %s33, 1
      %p900 = scmp.lt.s32.totalorder %s34, 1
      %s901 = scalar_select %p900, %s34, 1
      %s902 = smul.addr %s901, 4
      %s903 = smul.addr %s899, 8
      %s904 = sadd.s32 %s902, %s903
      %s905 = smul.addr %s904, 8
      %s906 = scalar_lea.vmem %s0, %s905
      %p907 = scmp.lt.s32.totalorder %s33, 1
      %s908 = scalar_select %p907, %s33, 1
      %p909 = scmp.lt.s32.totalorder %s34, 1
      %s910 = scalar_select %p909, %s34, 1
      %s911 = smul.addr %s910, 4
      %s912 = smul.addr %s908, 8
      %s913 = sadd.s32 %s911, %s912
      %s914 = smul.addr %s913, 8
      %s915 = scalar_lea.vmem %s1, %s914
      %p916 = scmp.lt.s32.totalorder %s33, 1
      %s917 = scalar_select %p916, %s33, 1
      %p918 = scmp.lt.s32.totalorder %s34, 1
      %s919 = scalar_select %p918, %s34, 1
      %s920 = smul.addr %s917, 2
      %s921 = sadd.s32 %s919, %s920
      %s922 = scalar_lea.vmem %s2, %s921
      %p923 = scmp.lt.s32.totalorder %s33, 1
      %s924 = scalar_select %p923, %s33, 1
      %p925 = scmp.lt.s32.totalorder %s35, 0
      %s926 = scalar_select %p925, %s35, 0
      %s927 = smul.addr %s926, 4
      %s928 = smul.addr %s924, 4
      %s929 = sadd.s32 %s927, %s928
      %s930 = smul.addr %s929, 4
      %s931 = scalar_lea.vmem %s3, %s930
      %p932 = scmp.lt.s32.totalorder %s33, 1
      %s933 = scalar_select %p932, %s33, 1
      %p934 = scmp.lt.s32.totalorder %s35, 0
      %s935 = scalar_select %p934, %s35, 0
      %s936 = sadd.s32 %s935, %s933
      %s937 = scalar_lea.vmem %s4, %s936
      %p938 = scmp.lt.s32.totalorder %s33, 1
      %s939 = scalar_select %p938, %s33, 1
      %p940 = scmp.lt.s32.totalorder %s35, 0
      %s941 = scalar_select %p940, %s35, 0
      %s942 = smul.addr %s941, 4
      %s943 = smul.addr %s939, 4
      %s944 = sadd.s32 %s942, %s943
      %s945 = smul.addr %s944, 4
      %s946 = scalar_lea.vmem %s5, %s945
      %p947 = scmp.lt.s32.totalorder %s33, 1
      %s948 = scalar_select %p947, %s33, 1
      %p949 = scmp.lt.s32.totalorder %s35, 0
      %s950 = scalar_select %p949, %s35, 0
      %s951 = sadd.s32 %s950, %s948
      %s952 = scalar_lea.vmem %s6, %s951
      %p953 = scmp.lt.s32.totalorder %s33, 1
      %s954 = scalar_select %p953, %s33, 1
      %p955 = scmp.lt.s32.totalorder %s35, 0
      %s956 = scalar_select %p955, %s35, 0
      %s957 = sadd.s32 %s956, %s954
      %s958 = scalar_lea.vmem %s7, %s957
      %p959 = scmp.lt.s32.totalorder %s33, 1
      %s960 = scalar_select %p959, %s33, 1
      %p961 = scmp.lt.s32.totalorder %s35, 0
      %s962 = scalar_select %p961, %s35, 0
      %s963 = sadd.s32 %s962, %s960
      %s964 = scalar_lea.vmem %s8, %s963
      %p965 = scmp.lt.s32.totalorder %s33, 1
      %s966 = scalar_select %p965, %s33, 1
      %p967 = scmp.lt.s32.totalorder %s35, 0
      %s968 = scalar_select %p967, %s35, 0
      %s969 = smul.addr %s968, 12
      %s970 = smul.addr %s966, 12
      %s971 = sadd.s32 %s969, %s970
      %s972 = smul.addr %s971, 4
      %s973 = scalar_lea.vmem %s9, %s972
      %p974 = scmp.lt.s32.totalorder %s33, 1
      %s975 = scalar_select %p974, %s33, 1
      %p976 = scmp.lt.s32.totalorder %s35, 0
      %s977 = scalar_select %p976, %s35, 0
      %s978 = sadd.s32 %s977, %s975
      %s979 = scalar_lea.vmem %s10, %s978
      %p980 = scmp.lt.s32.totalorder %s33, 1
      %s981 = scalar_select %p980, %s33, 1
      %p982 = scmp.lt.s32.totalorder %s35, 0
      %s983 = scalar_select %p982, %s35, 0
      %s984 = smul.addr %s983, 24
      %s985 = smul.addr %s981, 24
      %s986 = sadd.s32 %s984, %s985
      %s987 = smul.addr %s986, 4
      %s988 = scalar_lea.vmem %s11, %s987
      %p989 = scmp.lt.s32.totalorder %s33, 1
      %s990 = scalar_select %p989, %s33, 1
      %p991 = scmp.lt.s32.totalorder %s35, 0
      %s992 = scalar_select %p991, %s35, 0
      %s993 = sadd.s32 %s992, %s990
      %s994 = scalar_lea.vmem %s12, %s993
      %p995 = scmp.lt.s32.totalorder %s33, 1
      %s996 = scalar_select %p995, %s33, 1
      %p997 = scmp.lt.s32.totalorder %s35, 0
      %s998 = scalar_select %p997, %s35, 0
      %s999 = sadd.s32 %s998, %s996
      %s1000 = scalar_lea.vmem %s13, %s999
      %p1001 = scmp.lt.s32.totalorder %s33, 1
      %s1002 = scalar_select %p1001, %s33, 1
      %p1003 = scmp.lt.s32.totalorder %s35, 0
      %s1004 = scalar_select %p1003, %s35, 0
      %s1005 = sadd.s32 %s1004, %s1002
      %s1006 = scalar_lea.vmem %s14, %s1005
      %p1007 = scmp.lt.s32.totalorder %s33, 1
      %s1008 = scalar_select %p1007, %s33, 1
      %s1009 = smul.addr %s1008, 4
      %s1010 = smul.addr %s1009, 4
      %s1011 = scalar_lea.vmem %s15, %s1010
      %p1012 = scmp.lt.s32.totalorder %s33, 1
      %s1013 = scalar_select %p1012, %s33, 1
      %s1014 = scalar_lea.vmem %s16, %s1013
      %p1015 = scmp.lt.s32.totalorder %s33, 1
      %s1016 = scalar_select %p1015, %s33, 1
      %p1017 = scmp.lt.s32.totalorder %s34, 1
      %s1018 = scalar_select %p1017, %s34, 1
      %s1019 = smul.addr %s1018, 4
      %s1020 = smul.addr %s1016, 8
      %s1021 = sadd.s32 %s1019, %s1020
      %s1022 = smul.addr %s1021, 8
      %s1023 = scalar_lea.vmem %s17, %s1022
      %p1025 = scmp.eq.s32.totalorder %s35, 0
      // Predicated region
      $region89: #{fastspeech2_forward.5} parent=87 // pred_check
        %p1026 = pneg %p1025
      $region90: #{fastspeech2_forward.5} parent=87 // pred_check_branch
        %1028 = sbr.rel (%p1026) target = $region92
      $region91: #{fastspeech2_forward.5} parent=87 // pred_region
        %v1029 = vld [vmem:[%s906] sm:$0xff]
        %v1030 = vld [vmem:[%s906 + $0x8] sm:$0xff]
        %v1031 = vld [vmem:[%s906 + $0x10] sm:$0xff]
        %v1032 = vld [vmem:[%s906 + $0x18] sm:$0xff]
        %vm1033 = vcmask 261120
        %1034 = vst.msk [vmem:[#allocation2] sm:$0xff] %vm1033, %v1029
        %1035 = vst.msk [vmem:[#allocation2 + $0x8] sm:$0xff] %vm1033, %v1030
        %1036 = vst.msk [vmem:[#allocation2 + $0x10] sm:$0xff] %vm1033, %v1031
        %1037 = vst.msk [vmem:[#allocation2 + $0x18] sm:$0xff] %vm1033, %v1032
      $region92: #{fastspeech2_forward.5} parent=87 // pred_fallthru
        _
      %v1038 = vld [vmem:[#allocation2] sm:$0xff]
      %v1039 = vld [vmem:[#allocation2 + $0x8] sm:$0xff]
      %v1040 = vld [vmem:[#allocation2 + $0x10] sm:$0xff]
      %v1041 = vld [vmem:[#allocation2 + $0x18] sm:$0xff]
      %v1042 = vld [vmem:[%s915] sm:$0xff]
      %v1043 = vld [vmem:[%s915 + $0x8] sm:$0xff]
      %v1044 = vld [vmem:[%s915 + $0x10] sm:$0xff]
      %v1045 = vld [vmem:[%s915 + $0x18] sm:$0xff]
      %v1046 = vld [vmem:[%s922] sm:$0x1]
      %v1047 = vsub.f32 %v1046, 1.0
      %v1048 = vmul.f32 %v1047, 1e+09
      %v1049 = vlaneseq
      %v1050 = vshrl.u32 %v1049, 7
      %v1051 = vadd.s32 %v1050, 8
      %v1052 = vadd.s32 %v1050, 16
      %v1053 = vadd.s32 %v1050, 24
      %v1054 = vand.u32 %v1050, 31
      %v1055 = vand.u32 %v1051, 31
      %v1056 = vand.u32 %v1052, 31
      %v1057 = vand.u32 %v1053, 31
      %v1058 = vld [vmem:[%s931] sm:$0xf]
      %v1059 = vld [vmem:[%s931 + $0x4] sm:$0xf]
      %v1060 = vld [vmem:[%s931 + $0x8] sm:$0xf]
      %v1061 = vld [vmem:[%s931 + $0xc] sm:$0xf]
      %v1062 = vld [vmem:[%s937] sm:$0x1]
      %v1063 = vld [vmem:[%s946] sm:$0xf]
      %v1064 = vld [vmem:[%s946 + $0x4] sm:$0xf]
      %v1065 = vld [vmem:[%s946 + $0x8] sm:$0xf]
      %v1066 = vld [vmem:[%s946 + $0xc] sm:$0xf]
      %v1067 = vld [vmem:[%s952] sm:$0x1]
      %v1068 = vld [vmem:[%s958] sm:$0x1]
      %v1069 = vld [vmem:[%s964] sm:$0x1]
      %v1070 = vld [vmem:[%s973] sm:$0xf]
      %v1071 = vld [vmem:[%s973 + $0x4] sm:$0xf]
      %v1072 = vld [vmem:[%s973 + $0x8] sm:$0xf]
      %v1073 = vld [vmem:[%s973 + $0xc] sm:$0xf]
      %v1074 = vld [vmem:[%s973 + $0x10] sm:$0xf]
      %v1075 = vld [vmem:[%s973 + $0x14] sm:$0xf]
      %v1076 = vld [vmem:[%s973 + $0x18] sm:$0xf]
      %v1077 = vld [vmem:[%s973 + $0x1c] sm:$0xf]
      %v1078 = vld [vmem:[%s973 + $0x20] sm:$0xf]
      %v1079 = vld [vmem:[%s973 + $0x24] sm:$0xf]
      %v1080 = vld [vmem:[%s973 + $0x28] sm:$0xf]
      %v1081 = vld [vmem:[%s973 + $0x2c] sm:$0xf]
      %v1082 = vld [vmem:[%s979] sm:$0x1]
      %v1083 = vld [vmem:[%s988] sm:$0xf]
      %v1084 = vld [vmem:[%s988 + $0x4] sm:$0xf]
      %v1085 = vld [vmem:[%s988 + $0x8] sm:$0xf]
      %v1086 = vld [vmem:[%s988 + $0xc] sm:$0xf]
      %v1087 = vld [vmem:[%s988 + $0x10] sm:$0xf]
      %v1088 = vld [vmem:[%s988 + $0x14] sm:$0xf]
      %v1089 = vld [vmem:[%s988 + $0x18] sm:$0xf]
      %v1090 = vld [vmem:[%s988 + $0x1c] sm:$0xf]
      %v1091 = vld [vmem:[%s988 + $0x20] sm:$0xf]
      %v1092 = vld [vmem:[%s988 + $0x24] sm:$0xf]
      %v1093 = vld [vmem:[%s988 + $0x28] sm:$0xf]
      %v1094 = vld [vmem:[%s988 + $0x2c] sm:$0xf]
      %v1095 = vld [vmem:[%s988 + $0x30] sm:$0xf]
      %v1096 = vld [vmem:[%s988 + $0x34] sm:$0xf]
      %v1097 = vld [vmem:[%s988 + $0x38] sm:$0xf]
      %v1098 = vld [vmem:[%s988 + $0x3c] sm:$0xf]
      %v1099 = vld [vmem:[%s988 + $0x40] sm:$0xf]
      %v1100 = vld [vmem:[%s988 + $0x44] sm:$0xf]
      %v1101 = vld [vmem:[%s988 + $0x48] sm:$0xf]
      %v1102 = vld [vmem:[%s988 + $0x4c] sm:$0xf]
      %v1103 = vld [vmem:[%s988 + $0x50] sm:$0xf]
      %v1104 = vld [vmem:[%s988 + $0x54] sm:$0xf]
      %v1105 = vld [vmem:[%s988 + $0x58] sm:$0xf]
      %v1106 = vld [vmem:[%s988 + $0x5c] sm:$0xf]
      %v1107 = vld [vmem:[%s994] sm:$0x1]
      %v1108 = vld [vmem:[%s1000] sm:$0x1]
      %v1109 = vld [vmem:[%s1006] sm:$0x1]
      %v1110 = vpack.c.bf16 %v1039, %v1038
      %v1111 = vpack.c.bf16 %v1041, %v1040
      %v1113 = vlaneseq
      %v1114 = vshrl.u32 %v1113, 7
      %v1115 = vsub.s32 0, %v1114
      %v1116 = vrot.slane %v1062, %v1115
      %v1122 = vunpack.c.l.b16 %v1058
      %v1123 = vunpack.c.l.b16 %v1059
      %v1124 = vunpack.c.l.b16 %v1060
      %v1125 = vunpack.c.l.b16 %v1061
      %v1126 = vpack.c.b16 %v1123, %v1122
      %v1127 = vpack.c.b16 %v1125, %v1124
      %vm1130 = vcmask 261120
      %v1132 = vsel %vm1130, %v1110, 0
      %v1135 = vsel %vm1130, %v1111, 0
      %1137 = vmatprep.subr.bf16.mxu0 0
      %1138 = vmatpush1.bf16.msra.mxu0 %v1126
      %1139 = vmatprep.subr.bf16.mxu0 0
      %1140 = vmatpush1.bf16.msra.mxu0 %v1127
      %1141 = vmatprep.subr.bf16.mxu0 0
      %1142 = vmatpush1.bf16.msra.mxu0 0
      %1143 = vmatprep.subr.bf16.mxu0 0
      %1144 = vmatpush1.bf16.msra.mxu0 0
      %1145 = vmatprep.subr.bf16.mxu0 0
      %1146 = vmatpush1.bf16.msra.mxu0 0
      %1147 = vmatprep.subr.bf16.mxu0 0
      %1148 = vmatpush1.bf16.msra.mxu0 0
      %1149 = vmatprep.subr.bf16.mxu0 0
      %1150 = vmatpush1.bf16.msra.mxu0 0
      %1151 = vmatprep.subr.bf16.mxu0 0
      %1152 = vmatpush1.bf16.msra.mxu0 0
      %1153 = vmatprep.subr.bf16.mxu0 0
      %1154 = vmatpush1.bf16.msra.mxu0 0
      %1155 = vmatprep.subr.bf16.mxu0 0
      %1156 = vmatpush1.bf16.msra.mxu0 0
      %1157 = vmatprep.subr.bf16.mxu0 0
      %1158 = vmatpush1.bf16.msra.mxu0 0
      %1159 = vmatprep.subr.bf16.mxu0 0
      %1160 = vmatpush1.bf16.msra.mxu0 0
      %1161 = vmatprep.subr.bf16.mxu0 0
      %1162 = vmatpush1.bf16.msra.mxu0 0
      %1163 = vmatprep.subr.bf16.mxu0 0
      %1164 = vmatpush1.bf16.msra.mxu0 0
      %1165 = vmatprep.subr.bf16.mxu0 0
      %1166 = vmatpush1.bf16.msra.mxu0 0
      %1167 = vmatprep.subr.bf16.mxu0 0
      %1168 = vmatpush1.bf16.msra.mxu0 0
      %1169 = vmatprep.mubr.bf16.mxu0 0
      %1170 = vmatmul.mubr.bf16.gmra.mrb[0].mxu0 %v1132
      %v1171 = vpop.f32.mrb[0].mxu0
      %v1172 = vadd.f32 %v1116, %v1171
      %v1173 = vpop.f32.mrb[0].mxu0
      %v1174 = vpop.f32.mrb[0].mxu0
      %v1175 = vadd.f32 %v1116, %v1174
      %v1176 = vpop.f32.mrb[0].mxu0
      %1177 = vmatprep.mubr.bf16.mxu0 0
      %1178 = vmatmul.mubr.bf16.gmra.mrb[0].mxu0 %v1135
      %v1179 = vpop.f32.mrb[0].mxu0
      %v1180 = vadd.f32 %v1116, %v1179
      %v1181 = vpop.f32.mrb[0].mxu0
      %v1182 = vpop.f32.mrb[0].mxu0
      %v1183 = vadd.f32 %v1116, %v1182
      %v1184 = vpop.f32.mrb[0].mxu0
      %1185 = vdwg.mxu0
      %v1186 = vpack.c.bf16 %v1175, %v1172
      %v1187 = vpack.c.bf16 %v1183, %v1180
      %1190 = vrot.lane.b32.xlu0 %v1186, 96
      %v1191 = vpop.permute.xlu0 %1190
      %1192 = vrot.lane.b32.xlu0 %v1187, 96
      %v1193 = vpop.permute.xlu0 %1192
      %vm1194 = vcmask 130048
      %v1196 = vsel %vm1194, %v1186, 0
      %v1199 = vsel %vm1194, %v1187, 0
      %v1202 = vsel %vm1194, %v1191, 0
      %v1205 = vsel %vm1194, %v1193, 0
      %1207 = vmatprep.subr.bf16.mxu0 0
      %1208 = vmatpush1.bf16.xpose.msra.mxu0 %v1202
      %1209 = vmatprep.subr.bf16.mxu0 0
      %1210 = vmatpush1.bf16.xpose.msra.mxu0 %v1205
      %1211 = vmatprep.subr.bf16.mxu0 0
      %1212 = vmatpush1.bf16.xpose.msra.mxu0 0
      %1213 = vmatprep.subr.bf16.mxu0 0
      %1214 = vmatpush1.bf16.xpose.msra.mxu0 0
      %1215 = vmatprep.subr.bf16.mxu0 0
      %1216 = vmatpush1.bf16.xpose.msra.mxu0 0
      %1217 = vmatprep.subr.bf16.mxu0 0
      %1218 = vmatpush1.bf16.xpose.msra.mxu0 0
      %1219 = vmatprep.subr.bf16.mxu0 0
      %1220 = vmatpush1.bf16.xpose.msra.mxu0 0
      %1221 = vmatprep.subr.bf16.mxu0 0
      %1222 = vmatpush1.bf16.xpose.msra.mxu0 0
      %1223 = vmatprep.subr.bf16.mxu0 0
      %1224 = vmatpush1.bf16.xpose.msra.mxu0 0
      %1225 = vmatprep.subr.bf16.mxu0 0
      %1226 = vmatpush1.bf16.xpose.msra.mxu0 0
      %1227 = vmatprep.subr.bf16.mxu0 0
      %1228 = vmatpush1.bf16.xpose.msra.mxu0 0
      %1229 = vmatprep.subr.bf16.mxu0 0
      %1230 = vmatpush1.bf16.xpose.msra.mxu0 0
      %1231 = vmatprep.subr.bf16.mxu0 0
      %1232 = vmatpush1.bf16.xpose.msra.mxu0 0
      %1233 = vmatprep.subr.bf16.mxu0 0
      %1234 = vmatpush1.bf16.xpose.msra.mxu0 0
      %1235 = vmatprep.subr.bf16.mxu0 0
      %1236 = vmatpush1.bf16.xpose.msra.mxu0 0
      %1237 = vmatprep.subr.bf16.mxu0 0
      %1238 = vmatpush1.bf16.xpose.msra.mxu0 0
      %1239 = vmatprep.mubr.bf16.mxu0 0
      %1240 = vmatmul.mubr.bf16.gmra.mrb[0].mxu0 %v1196
      %v1241 = vpop.f32.mrb[0].mxu0
      %v1242 = vadd.f32 0.0, %v1241
      %v1243 = vpop.f32.mrb[0].mxu0
      %v1244 = vpop.f32.mrb[0].mxu0
      %v1245 = vadd.f32 0.0, %v1244
      %v1246 = vpop.f32.mrb[0].mxu0
      %1247 = vmatprep.mubr.bf16.mxu0 0
      %1248 = vmatmul.mubr.bf16.gmra.mrb[0].mxu0 %v1199
      %v1249 = vpop.f32.mrb[0].mxu0
      %v1250 = vadd.f32 0.0, %v1249
      %v1251 = vpop.f32.mrb[0].mxu0
      %v1252 = vpop.f32.mrb[0].mxu0
      %v1253 = vadd.f32 0.0, %v1252
      %v1254 = vpop.f32.mrb[0].mxu0
      %1255 = vdwg.mxu0
      %v1256 = vmul.f32 %v1242, 0.25
      %v1257 = vmul.f32 %v1245, 0.25
      %v1258 = vmul.f32 %v1250, 0.25
      %v1259 = vmul.f32 %v1253, 0.25
      %v1261 = vlaneseq
      %v1262 = vshrl.u32 %v1261, 7
      %v1263 = vsub.s32 0, %v1262
      %v1264 = vrot.slane %v1048, %v1263
      %v1266 = vadd.f32 %v1256, %v1264
      %v1267 = vadd.f32 %v1257, %v1264
      %v1268 = vadd.f32 %v1258, %v1264
      %v1269 = vadd.f32 %v1259, %v1264
      %v1270 = vsel %vm1130, %v1266, -inf
      %1271 = vmax.xlane.f32.xlu0 %v1270
      %v1272 = vpop.xlane.xlu0 %1271
      %v1273 = vsel %vm1130, %v1267, -inf
      %1274 = vmax.xlane.f32.xlu0 %v1273
      %v1275 = vpop.xlane.xlu0 %1274
      %v1276 = vsel %vm1130, %v1268, -inf
      %1277 = vmax.xlane.f32.xlu0 %v1276
      %v1278 = vpop.xlane.xlu0 %1277
      %v1279 = vsel %vm1130, %v1269, -inf
      %1280 = vmax.xlane.f32.xlu0 %v1279
      %v1281 = vpop.xlane.xlu0 %1280
      %v1282 = vsub.f32 %v1266, %v1272
      %v1283 = vsub.f32 %v1267, %v1275
      %v1284 = vsub.f32 %v1268, %v1278
      %v1285 = vsub.f32 %v1269, %v1281
      %v1286 = vmul.f32 %v1282, 1.442695
      %v1287 = vpow.pop %v1286
      %v1288 = vmul.f32 %v1283, 1.442695
      %v1289 = vpow.pop %v1288
      %v1290 = vmul.f32 %v1284, 1.442695
      %v1291 = vpow.pop %v1290
      %v1292 = vmul.f32 %v1285, 1.442695
      %v1293 = vpow.pop %v1292
      %v1294 = vsel %vm1130, %v1287, 0.0
      %1295 = vadd.xlane.f32.xlu0 %v1294
      %v1296 = vpop.xlane.xlu0 %1295
      %v1297 = vsel %vm1130, %v1289, 0.0
      %1298 = vadd.xlane.f32.xlu0 %v1297
      %v1299 = vpop.xlane.xlu0 %1298
      %v1300 = vsel %vm1130, %v1291, 0.0
      %1301 = vadd.xlane.f32.xlu0 %v1300
      %v1302 = vpop.xlane.xlu0 %1301
      %v1303 = vsel %vm1130, %v1293, 0.0
      %1304 = vadd.xlane.f32.xlu0 %v1303
      %v1305 = vpop.xlane.xlu0 %1304
      %v1306 = vrcp.pop %v1296
      %v1307 = vrcp.pop %v1299
      %v1308 = vrcp.pop %v1302
      %v1309 = vrcp.pop %v1305
      %v1310 = vmul.f32 %v1287, %v1306
      %v1311 = vmul.f32 %v1289, %v1307
      %v1312 = vmul.f32 %v1291, %v1308
      %v1313 = vmul.f32 %v1293, %v1309
      %v1314 = vpack.c.bf16 %v1311, %v1310
      %v1315 = vpack.c.bf16 %v1313, %v1312
      %1316 = vrot.lane.b32.xlu0 %v1186, 64
      %v1317 = vpop.permute.xlu0 %1316
      %1318 = vrot.lane.b32.xlu0 %v1187, 64
      %v1319 = vpop.permute.xlu0 %1318
      %v1323 = vsel %vm1130, %v1314, 0
      %v1326 = vsel %vm1130, %v1315, 0
      %1328 = vmatprep.subr.bf16.mxu0 0
      %1329 = vmatpush1.bf16.msra.mxu0 %v1317
      %1330 = vmatprep.subr.bf16.mxu0 0
      %1331 = vmatpush1.bf16.msra.mxu0 %v1319
      %1332 = vmatprep.subr.bf16.mxu0 0
      %1333 = vmatpush1.bf16.msra.mxu0 0
      %1334 = vmatprep.subr.bf16.mxu0 0
      %1335 = vmatpush1.bf16.msra.mxu0 0
      %1336 = vmatprep.subr.bf16.mxu0 0
      %1337 = vmatpush1.bf16.msra.mxu0 0
      %1338 = vmatprep.subr.bf16.mxu0 0
      %1339 = vmatpush1.bf16.msra.mxu0 0
      %1340 = vmatprep.subr.bf16.mxu0 0
      %1341 = vmatpush1.bf16.msra.mxu0 0
      %1342 = vmatprep.subr.bf16.mxu0 0
      %1343 = vmatpush1.bf16.msra.mxu0 0
      %1344 = vmatprep.subr.bf16.mxu0 0
      %1345 = vmatpush1.bf16.msra.mxu0 0
      %1346 = vmatprep.subr.bf16.mxu0 0
      %1347 = vmatpush1.bf16.msra.mxu0 0
      %1348 = vmatprep.subr.bf16.mxu0 0
      %1349 = vmatpush1.bf16.msra.mxu0 0
      %1350 = vmatprep.subr.bf16.mxu0 0
      %1351 = vmatpush1.bf16.msra.mxu0 0
      %1352 = vmatprep.subr.bf16.mxu0 0
      %1353 = vmatpush1.bf16.msra.mxu0 0
      %1354 = vmatprep.subr.bf16.mxu0 0
      %1355 = vmatpush1.bf16.msra.mxu0 0
      %1356 = vmatprep.subr.bf16.mxu0 0
      %1357 = vmatpush1.bf16.msra.mxu0 0
      %1358 = vmatprep.subr.bf16.mxu0 0
      %1359 = vmatpush1.bf16.msra.mxu0 0
      %1360 = vmatprep.mubr.bf16.mxu0 0
      %1361 = vmatmul.mubr.bf16.gmra.mrb[0].mxu0 %v1323
      %v1362 = vpop.f32.mrb[0].mxu0
      %v1363 = vadd.f32 0.0, %v1362
      %v1364 = vpop.f32.mrb[0].mxu0
      %v1365 = vpop.f32.mrb[0].mxu0
      %v1366 = vadd.f32 0.0, %v1365
      %v1367 = vpop.f32.mrb[0].mxu0
      %1368 = vmatprep.mubr.bf16.mxu0 0
      %1369 = vmatmul.mubr.bf16.gmra.mrb[0].mxu0 %v1326
      %v1370 = vpop.f32.mrb[0].mxu0
      %v1371 = vadd.f32 0.0, %v1370
      %v1372 = vpop.f32.mrb[0].mxu0
      %v1373 = vpop.f32.mrb[0].mxu0
      %v1374 = vadd.f32 0.0, %v1373
      %v1375 = vpop.f32.mrb[0].mxu0
      %1376 = vdwg.mxu0
      %1377 = vrot.lane.b32.xlu0 %v1186, 112
      %v1378 = vpop.permute.xlu0 %1377
      %1379 = vrot.lane.b32.xlu0 %v1187, 112
      %v1380 = vpop.permute.xlu0 %1379
      %1381 = vrot.lane.b32.xlu0 %v1186, 80
      %v1382 = vpop.permute.xlu0 %1381
      %1383 = vrot.lane.b32.xlu0 %v1187, 80
      %v1384 = vpop.permute.xlu0 %1383
      %v1386 = vsel %vm1194, %v1378, 0
      %v1389 = vsel %vm1194, %v1380, 0
      %v1392 = vsel %vm1194, %v1382, 0
      %v1395 = vsel %vm1194, %v1384, 0
      %1397 = vmatprep.subr.bf16.mxu0 0
      %1398 = vmatpush1.bf16.xpose.msra.mxu0 %v1392
      %1399 = vmatprep.subr.bf16.mxu0 0
      %1400 = vmatpush1.bf16.xpose.msra.mxu0 %v1395
      %1401 = vmatprep.subr.bf16.mxu0 0
      %1402 = vmatpush1.bf16.xpose.msra.mxu0 0
      %1403 = vmatprep.subr.bf16.mxu0 0
      %1404 = vmatpush1.bf16.xpose.msra.mxu0 0
      %1405 = vmatprep.subr.bf16.mxu0 0
      %1406 = vmatpush1.bf16.xpose.msra.mxu0 0
      %1407 = vmatprep.subr.bf16.mxu0 0
      %1408 = vmatpush1.bf16.xpose.msra.mxu0 0
      %1409 = vmatprep.subr.bf16.mxu0 0
      %1410 = vmatpush1.bf16.xpose.msra.mxu0 0
      %1411 = vmatprep.subr.bf16.mxu0 0
      %1412 = vmatpush1.bf16.xpose.msra.mxu0 0
      %1413 = vmatprep.subr.bf16.mxu0 0
      %1414 = vmatpush1.bf16.xpose.msra.mxu0 0
      %1415 = vmatprep.subr.bf16.mxu0 0
      %1416 = vmatpush1.bf16.xpose.msra.mxu0 0
      %1417 = vmatprep.subr.bf16.mxu0 0
      %1418 = vmatpush1.bf16.xpose.msra.mxu0 0
      %1419 = vmatprep.subr.bf16.mxu0 0
      %1420 = vmatpush1.bf16.xpose.msra.mxu0 0
      %1421 = vmatprep.subr.bf16.mxu0 0
      %1422 = vmatpush1.bf16.xpose.msra.mxu0 0
      %1423 = vmatprep.subr.bf16.mxu0 0
      %1424 = vmatpush1.bf16.xpose.msra.mxu0 0
      %1425 = vmatprep.subr.bf16.mxu0 0
      %1426 = vmatpush1.bf16.xpose.msra.mxu0 0
      %1427 = vmatprep.subr.bf16.mxu0 0
      %1428 = vmatpush1.bf16.xpose.msra.mxu0 0
      %1429 = vmatprep.mubr.bf16.mxu0 0
      %1430 = vmatmul.mubr.bf16.gmra.mrb[0].mxu0 %v1386
      %v1431 = vpop.f32.mrb[0].mxu0
      %v1432 = vadd.f32 0.0, %v1431
      %v1433 = vpop.f32.mrb[0].mxu0
      %v1434 = vpop.f32.mrb[0].mxu0
      %v1435 = vadd.f32 0.0, %v1434
      %v1436 = vpop.f32.mrb[0].mxu0
      %1437 = vmatprep.mubr.bf16.mxu0 0
      %1438 = vmatmul.mubr.bf16.gmra.mrb[0].mxu0 %v1389
      %v1439 = vpop.f32.mrb[0].mxu0
      %v1440 = vadd.f32 0.0, %v1439
      %v1441 = vpop.f32.mrb[0].mxu0
      %v1442 = vpop.f32.mrb[0].mxu0
      %v1443 = vadd.f32 0.0, %v1442
      %v1444 = vpop.f32.mrb[0].mxu0
      %1445 = vdwg.mxu0
      %v1446 = vmul.f32 %v1432, 0.25
      %v1447 = vmul.f32 %v1435, 0.25
      %v1448 = vmul.f32 %v1440, 0.25
      %v1449 = vmul.f32 %v1443, 0.25
      %v1450 = vadd.f32 %v1446, %v1264
      %v1451 = vadd.f32 %v1447, %v1264
      %v1452 = vadd.f32 %v1448, %v1264
      %v1453 = vadd.f32 %v1449, %v1264
      %v1454 = vsel %vm1130, %v1450, -inf
      %1455 = vmax.xlane.f32.xlu0 %v1454
      %v1456 = vpop.xlane.xlu0 %1455
      %v1457 = vsel %vm1130, %v1451, -inf
      %1458 = vmax.xlane.f32.xlu0 %v1457
      %v1459 = vpop.xlane.xlu0 %1458
      %v1460 = vsel %vm1130, %v1452, -inf
      %1461 = vmax.xlane.f32.xlu0 %v1460
      %v1462 = vpop.xlane.xlu0 %1461
      %v1463 = vsel %vm1130, %v1453, -inf
      %1464 = vmax.xlane.f32.xlu0 %v1463
      %v1465 = vpop.xlane.xlu0 %1464
      %v1466 = vsub.f32 %v1450, %v1456
      %v1467 = vsub.f32 %v1451, %v1459
      %v1468 = vsub.f32 %v1452, %v1462
      %v1469 = vsub.f32 %v1453, %v1465
      %v1470 = vmul.f32 %v1466, 1.442695
      %v1471 = vpow.pop %v1470
      %v1472 = vmul.f32 %v1467, 1.442695
      %v1473 = vpow.pop %v1472
      %v1474 = vmul.f32 %v1468, 1.442695
      %v1475 = vpow.pop %v1474
      %v1476 = vmul.f32 %v1469, 1.442695
      %v1477 = vpow.pop %v1476
      %v1478 = vsel %vm1130, %v1471, 0.0
      %1479 = vadd.xlane.f32.xlu0 %v1478
      %v1480 = vpop.xlane.xlu0 %1479
      %v1481 = vsel %vm1130, %v1473, 0.0
      %1482 = vadd.xlane.f32.xlu0 %v1481
      %v1483 = vpop.xlane.xlu0 %1482
      %v1484 = vsel %vm1130, %v1475, 0.0
      %1485 = vadd.xlane.f32.xlu0 %v1484
      %v1486 = vpop.xlane.xlu0 %1485
      %v1487 = vsel %vm1130, %v1477, 0.0
      %1488 = vadd.xlane.f32.xlu0 %v1487
      %v1489 = vpop.xlane.xlu0 %1488
      %v1490 = vrcp.pop %v1480
      %v1491 = vrcp.pop %v1483
      %v1492 = vrcp.pop %v1486
      %v1493 = vrcp.pop %v1489
      %v1494 = vmul.f32 %v1471, %v1490
      %v1495 = vmul.f32 %v1473, %v1491
      %v1496 = vmul.f32 %v1475, %v1492
      %v1497 = vmul.f32 %v1477, %v1493
      %v1498 = vpack.c.bf16 %v1495, %v1494
      %v1499 = vpack.c.bf16 %v1497, %v1496
      %1500 = vrot.lane.b32.xlu0 %v1186, 48
      %v1501 = vpop.permute.xlu0 %1500
      %1502 = vrot.lane.b32.xlu0 %v1187, 48
      %v1503 = vpop.permute.xlu0 %1502
      %v1507 = vsel %vm1130, %v1498, 0
      %v1510 = vsel %vm1130, %v1499, 0
      %1512 = vmatprep.subr.bf16.mxu0 0
      %1513 = vmatpush1.bf16.msra.mxu0 %v1501
      %1514 = vmatprep.subr.bf16.mxu0 0
      %1515 = vmatpush1.bf16.msra.mxu0 %v1503
      %1516 = vmatprep.subr.bf16.mxu0 0
      %1517 = vmatpush1.bf16.msra.mxu0 0
      %1518 = vmatprep.subr.bf16.mxu0 0
      %1519 = vmatpush1.bf16.msra.mxu0 0
      %1520 = vmatprep.subr.bf16.mxu0 0
      %1521 = vmatpush1.bf16.msra.mxu0 0
      %1522 = vmatprep.subr.bf16.mxu0 0
      %1523 = vmatpush1.bf16.msra.mxu0 0
      %1524 = vmatprep.subr.bf16.mxu0 0
      %1525 = vmatpush1.bf16.msra.mxu0 0
      %1526 = vmatprep.subr.bf16.mxu0 0
      %1527 = vmatpush1.bf16.msra.mxu0 0
      %1528 = vmatprep.subr.bf16.mxu0 0
      %1529 = vmatpush1.bf16.msra.mxu0 0
      %1530 = vmatprep.subr.bf16.mxu0 0
      %1531 = vmatpush1.bf16.msra.mxu0 0
      %1532 = vmatprep.subr.bf16.mxu0 0
      %1533 = vmatpush1.bf16.msra.mxu0 0
      %1534 = vmatprep.subr.bf16.mxu0 0
      %1535 = vmatpush1.bf16.msra.mxu0 0
      %1536 = vmatprep.subr.bf16.mxu0 0
      %1537 = vmatpush1.bf16.msra.mxu0 0
      %1538 = vmatprep.subr.bf16.mxu0 0
      %1539 = vmatpush1.bf16.msra.mxu0 0
      %1540 = vmatprep.subr.bf16.mxu0 0
      %1541 = vmatpush1.bf16.msra.mxu0 0
      %1542 = vmatprep.subr.bf16.mxu0 0
      %1543 = vmatpush1.bf16.msra.mxu0 0
      %1544 = vmatprep.mubr.bf16.mxu0 0
      %1545 = vmatmul.mubr.bf16.gmra.mrb[0].mxu0 %v1507
      %v1546 = vpop.f32.mrb[0].mxu0
      %v1547 = vadd.f32 0.0, %v1546
      %v1548 = vpop.f32.mrb[0].mxu0
      %v1549 = vpop.f32.mrb[0].mxu0
      %v1550 = vadd.f32 0.0, %v1549
      %v1551 = vpop.f32.mrb[0].mxu0
      %1552 = vmatprep.mubr.bf16.mxu0 0
      %1553 = vmatmul.mubr.bf16.gmra.mrb[0].mxu0 %v1510
      %v1554 = vpop.f32.mrb[0].mxu0
      %v1555 = vadd.f32 0.0, %v1554
      %v1556 = vpop.f32.mrb[0].mxu0
      %v1557 = vpop.f32.mrb[0].mxu0
      %v1558 = vadd.f32 0.0, %v1557
      %v1559 = vpop.f32.mrb[0].mxu0
      %1560 = vdwg.mxu0
      %1565 = vrot.lane.b32.xlu0 %v1547, 16
      %v1566 = vpop.permute.xlu0 %1565
      %1567 = vrot.lane.b32.xlu0 %v1550, 16
      %v1568 = vpop.permute.xlu0 %1567
      %1569 = vrot.lane.b32.xlu0 %v1555, 16
      %v1570 = vpop.permute.xlu0 %1569
      %1571 = vrot.lane.b32.xlu0 %v1558, 16
      %v1572 = vpop.permute.xlu0 %1571
      %v1577 = vsel %vm1194, %v1363, %v1566
      %v1578 = vsel %vm1194, %v1366, %v1568
      %v1579 = vsel %vm1194, %v1371, %v1570
      %v1580 = vsel %vm1194, %v1374, %v1572
      %v1581 = vpack.c.bf16 %v1578, %v1577
      %v1582 = vpack.c.bf16 %v1580, %v1579
      %v1584 = vlaneseq
      %v1585 = vshrl.u32 %v1584, 7
      %v1586 = vsub.s32 0, %v1585
      %v1587 = vrot.slane %v1067, %v1586
      %v1593 = vunpack.c.l.b16 %v1063
      %v1594 = vunpack.c.l.b16 %v1064
      %v1595 = vunpack.c.l.b16 %v1065
      %v1596 = vunpack.c.l.b16 %v1066
      %v1597 = vpack.c.b16 %v1594, %v1593
      %v1598 = vpack.c.b16 %v1596, %v1595
      %v1602 = vsel %vm1130, %v1581, 0
      %v1605 = vsel %vm1130, %v1582, 0
      %1607 = vmatprep.subr.bf16.mxu0 0
      %1608 = vmatpush1.bf16.msra.mxu0 %v1597
      %1609 = vmatprep.subr.bf16.mxu0 0
      %1610 = vmatpush1.bf16.msra.mxu0 %v1598
      %1611 = vmatprep.subr.bf16.mxu0 0
      %1612 = vmatpush1.bf16.msra.mxu0 0
      %1613 = vmatprep.subr.bf16.mxu0 0
      %1614 = vmatpush1.bf16.msra.mxu0 0
      %1615 = vmatprep.subr.bf16.mxu0 0
      %1616 = vmatpush1.bf16.msra.mxu0 0
      %1617 = vmatprep.subr.bf16.mxu0 0
      %1618 = vmatpush1.bf16.msra.mxu0 0
      %1619 = vmatprep.subr.bf16.mxu0 0
      %1620 = vmatpush1.bf16.msra.mxu0 0
      %1621 = vmatprep.subr.bf16.mxu0 0
      %1622 = vmatpush1.bf16.msra.mxu0 0
      %1623 = vmatprep.subr.bf16.mxu0 0
      %1624 = vmatpush1.bf16.msra.mxu0 0
      %1625 = vmatprep.subr.bf16.mxu0 0
      %1626 = vmatpush1.bf16.msra.mxu0 0
      %1627 = vmatprep.subr.bf16.mxu0 0
      %1628 = vmatpush1.bf16.msra.mxu0 0
      %1629 = vmatprep.subr.bf16.mxu0 0
      %1630 = vmatpush1.bf16.msra.mxu0 0
      %1631 = vmatprep.subr.bf16.mxu0 0
      %1632 = vmatpush1.bf16.msra.mxu0 0
      %1633 = vmatprep.subr.bf16.mxu0 0
      %1634 = vmatpush1.bf16.msra.mxu0 0
      %1635 = vmatprep.subr.bf16.mxu0 0
      %1636 = vmatpush1.bf16.msra.mxu0 0
      %1637 = vmatprep.subr.bf16.mxu0 0
      %1638 = vmatpush1.bf16.msra.mxu0 0
      %1639 = vmatprep.mubr.bf16.mxu0 0
      %1640 = vmatmul.mubr.bf16.gmra.mrb[0].mxu0 %v1602
      %v1641 = vpop.f32.mrb[0].mxu0
      %v1642 = vadd.f32 %v1587, %v1641
      %v1643 = vpop.f32.mrb[0].mxu0
      %v1644 = vpop.f32.mrb[0].mxu0
      %v1645 = vadd.f32 %v1587, %v1644
      %v1646 = vpop.f32.mrb[0].mxu0
      %1647 = vmatprep.mubr.bf16.mxu0 0
      %1648 = vmatmul.mubr.bf16.gmra.mrb[0].mxu0 %v1605
      %v1649 = vpop.f32.mrb[0].mxu0
      %v1650 = vadd.f32 %v1587, %v1649
      %v1651 = vpop.f32.mrb[0].mxu0
      %v1652 = vpop.f32.mrb[0].mxu0
      %v1653 = vadd.f32 %v1587, %v1652
      %v1654 = vpop.f32.mrb[0].mxu0
      %1655 = vdwg.mxu0
      %v1656 = vadd.f32 %v1642, %v1038
      %v1657 = vadd.f32 %v1645, %v1039
      %v1658 = vadd.f32 %v1650, %v1040
      %v1659 = vadd.f32 %v1653, %v1041
      %v1660 = vsel %vm1130, %v1656, 0.0
      %1661 = vadd.xlane.f32.xlu0 %v1660
      %v1662 = vpop.xlane.xlu0 %1661
      %v1663 = vsel %vm1130, %v1657, 0.0
      %1664 = vadd.xlane.f32.xlu0 %v1663
      %v1665 = vpop.xlane.xlu0 %1664
      %v1666 = vsel %vm1130, %v1658, 0.0
      %1667 = vadd.xlane.f32.xlu0 %v1666
      %v1668 = vpop.xlane.xlu0 %1667
      %v1669 = vsel %vm1130, %v1659, 0.0
      %1670 = vadd.xlane.f32.xlu0 %v1669
      %v1671 = vpop.xlane.xlu0 %1670
      %v1672 = vrcp.pop 32.0
      %v1673 = vmul.f32 %v1662, %v1672
      %v1674 = vmul.f32 %v1665, %v1672
      %v1675 = vmul.f32 %v1668, %v1672
      %v1676 = vmul.f32 %v1671, %v1672
      %v1677 = vsub.f32 %v1656, %v1673
      %v1678 = vsub.f32 %v1657, %v1674
      %v1679 = vsub.f32 %v1658, %v1675
      %v1680 = vsub.f32 %v1659, %v1676
      %v1681 = vmul.f32 %v1677, %v1677
      %v1682 = vmul.f32 %v1678, %v1678
      %v1683 = vmul.f32 %v1679, %v1679
      %v1684 = vmul.f32 %v1680, %v1680
      %v1685 = vsel %vm1130, %v1681, 0.0
      %1686 = vadd.xlane.f32.xlu0 %v1685
      %v1687 = vpop.xlane.xlu0 %1686
      %v1688 = vsel %vm1130, %v1682, 0.0
      %1689 = vadd.xlane.f32.xlu0 %v1688
      %v1690 = vpop.xlane.xlu0 %1689
      %v1691 = vsel %vm1130, %v1683, 0.0
      %1692 = vadd.xlane.f32.xlu0 %v1691
      %v1693 = vpop.xlane.xlu0 %1692
      %v1694 = vsel %vm1130, %v1684, 0.0
      %1695 = vadd.xlane.f32.xlu0 %v1694
      %v1696 = vpop.xlane.xlu0 %1695
      %v1697 = vmul.f32 %v1687, %v1672
      %v1698 = vmul.f32 %v1690, %v1672
      %v1699 = vmul.f32 %v1693, %v1672
      %v1700 = vmul.f32 %v1696, %v1672
      %v1701 = vadd.f32 %v1697, 1e-05
      %v1702 = vadd.f32 %v1698, 1e-05
      %v1703 = vadd.f32 %v1699, 1e-05
      %v1704 = vadd.f32 %v1700, 1e-05
      %v1705 = vrsqrt.pop %v1701
      %v1706 = vrsqrt.pop %v1702
      %v1707 = vrsqrt.pop %v1703
      %v1708 = vrsqrt.pop %v1704
      %v1709 = vmul.f32 %v1677, %v1705
      %v1710 = vmul.f32 %v1678, %v1706
      %v1711 = vmul.f32 %v1679, %v1707
      %v1712 = vmul.f32 %v1680, %v1708
      %v1714 = vlaneseq
      %v1715 = vshrl.u32 %v1714, 7
      %v1716 = vsub.s32 0, %v1715
      %v1717 = vrot.slane %v1068, %v1716
      %v1719 = vmul.f32 %v1709, %v1717
      %v1720 = vmul.f32 %v1710, %v1717
      %v1721 = vmul.f32 %v1711, %v1717
      %v1722 = vmul.f32 %v1712, %v1717
      %v1724 = vlaneseq
      %v1725 = vshrl.u32 %v1724, 7
      %v1726 = vsub.s32 0, %v1725
      %v1727 = vrot.slane %v1069, %v1726
      %v1729 = vadd.f32 %v1719, %v1727
      %v1730 = vadd.f32 %v1720, %v1727
      %v1731 = vadd.f32 %v1721, %v1727
      %v1732 = vadd.f32 %v1722, %v1727
      %1734 = vset.pattern.permute.xlu0 0
      %1735 = vperm.xlu0 %1734, %v1042
      %v1736 = vpop.permute.xlu0 %1735
      %1739 = vset.pattern.permute.xlu0 0
      %1740 = vperm.xlu0 %1739, %v1043
      %v1741 = vpop.permute.xlu0 %1740
      %1744 = vset.pattern.permute.xlu0 0
      %1745 = vperm.xlu0 %1744, %v1044
      %v1746 = vpop.permute.xlu0 %1745
      %1749 = vset.pattern.permute.xlu0 0
      %1750 = vperm.xlu0 %1749, %v1045
      %v1751 = vpop.permute.xlu0 %1750
      %v1753 = vmul.f32 %v1729, %v1736
      %v1754 = vmul.f32 %v1730, %v1741
      %v1755 = vmul.f32 %v1731, %v1746
      %v1756 = vmul.f32 %v1732, %v1751
      %v1757 = vrot.slane %v1753, 7
      %v1758 = vrot.slane %v1754, 7
      %v1759 = vrot.slane %v1755, 7
      %v1760 = vrot.slane %v1756, 7
      %vm1761 = vcmp.lt.s32.totalorder %v1050, 1
      %v1762 = vsel %vm1761, %v1759, %v1760
      %v1763 = vsel %vm1761, %v1758, %v1759
      %v1764 = vsel %vm1761, %v1757, %v1758
      %v1765 = vsel %vm1761, %v1760, %v1757
      %v1766 = vadd.s32 %v1054, 4294967295
      %v1767 = vadd.s32 %v1055, 4294967295
      %v1768 = vadd.s32 %v1056, 4294967295
      %v1769 = vadd.s32 %v1057, 4294967295
      %vm1770 = vcmp.ge.s32.totalorder %v1766, 0
      %vm1771 = vcmp.ge.s32.totalorder %v1767, 0
      %vm1772 = vcmp.ge.s32.totalorder %v1768, 0
      %vm1773 = vcmp.ge.s32.totalorder %v1769, 0
      %vm1774 = vcmp.lt.s32.totalorder %v1766, 32
      %vm1775 = vcmp.lt.s32.totalorder %v1767, 32
      %vm1776 = vcmp.lt.s32.totalorder %v1768, 32
      %vm1777 = vcmp.lt.s32.totalorder %v1769, 32
      %vm1778 = vmand %vm1770, %vm1774
      %vm1779 = vmand %vm1771, %vm1775
      %vm1780 = vmand %vm1772, %vm1776
      %vm1781 = vmand %vm1773, %vm1777
      %v1782 = vsel %vm1778, 1, 0
      %v1783 = vsel %vm1779, 1, 0
      %v1784 = vsel %vm1780, 1, 0
      %v1785 = vsel %vm1781, 1, 0
      %v1786 = vcvt.s32.f32 %v1782
      %v1787 = vcvt.s32.f32 %v1783
      %v1788 = vcvt.s32.f32 %v1784
      %v1789 = vcvt.s32.f32 %v1785
      %v1790 = vmul.f32 %v1765, %v1786
      %v1791 = vmul.f32 %v1764, %v1787
      %v1792 = vmul.f32 %v1763, %v1788
      %v1793 = vmul.f32 %v1762, %v1789
      %v1794 = vrot.slane %v1753, 1
      %v1795 = vrot.slane %v1754, 1
      %v1796 = vrot.slane %v1755, 1
      %v1797 = vrot.slane %v1756, 1
      %vm1798 = vcmp.lt.s32.totalorder %v1050, 7
      %v1799 = vsel %vm1798, %v1796, %v1797
      %v1800 = vsel %vm1798, %v1795, %v1796
      %v1801 = vsel %vm1798, %v1794, %v1795
      %v1802 = vsel %vm1798, %v1797, %v1794
      %v1803 = vadd.s32 %v1054, 1
      %v1804 = vadd.s32 %v1055, 1
      %v1805 = vadd.s32 %v1056, 1
      %v1806 = vadd.s32 %v1057, 1
      %vm1807 = vcmp.ge.s32.totalorder %v1803, 0
      %vm1808 = vcmp.ge.s32.totalorder %v1804, 0
      %vm1809 = vcmp.ge.s32.totalorder %v1805, 0
      %vm1810 = vcmp.ge.s32.totalorder %v1806, 0
      %vm1811 = vcmp.lt.s32.totalorder %v1803, 32
      %vm1812 = vcmp.lt.s32.totalorder %v1804, 32
      %vm1813 = vcmp.lt.s32.totalorder %v1805, 32
      %vm1814 = vcmp.lt.s32.totalorder %v1806, 32
      %vm1815 = vmand %vm1807, %vm1811
      %vm1816 = vmand %vm1808, %vm1812
      %vm1817 = vmand %vm1809, %vm1813
      %vm1818 = vmand %vm1810, %vm1814
      %v1819 = vsel %vm1815, 1, 0
      %v1820 = vsel %vm1816, 1, 0
      %v1821 = vsel %vm1817, 1, 0
      %v1822 = vsel %vm1818, 1, 0
      %v1823 = vcvt.s32.f32 %v1819
      %v1824 = vcvt.s32.f32 %v1820
      %v1825 = vcvt.s32.f32 %v1821
      %v1826 = vcvt.s32.f32 %v1822
      %v1827 = vmul.f32 %v1801, %v1823
      %v1828 = vmul.f32 %v1800, %v1824
      %v1829 = vmul.f32 %v1799, %v1825
      %v1830 = vmul.f32 %v1802, %v1826
      %1835 = vrot.lane.b32.xlu0 %v1753, 32
      %v1836 = vpop.permute.xlu0 %1835
      %1837 = vrot.lane.b32.xlu0 %v1754, 32
      %v1838 = vpop.permute.xlu0 %1837
      %1839 = vrot.lane.b32.xlu0 %v1755, 32
      %v1840 = vpop.permute.xlu0 %1839
      %1841 = vrot.lane.b32.xlu0 %v1756, 32
      %v1842 = vpop.permute.xlu0 %1841
      %1851 = vrot.lane.b32.xlu0 %v1827, 64
      %v1852 = vpop.permute.xlu0 %1851
      %1853 = vrot.lane.b32.xlu0 %v1828, 64
      %v1854 = vpop.permute.xlu0 %1853
      %1855 = vrot.lane.b32.xlu0 %v1829, 64
      %v1856 = vpop.permute.xlu0 %1855
      %1857 = vrot.lane.b32.xlu0 %v1830, 64
      %v1858 = vpop.permute.xlu0 %1857
      %v1863 = vsel %vm1130, %v1790, %v1836
      %v1864 = vsel %vm1130, %v1791, %v1838
      %v1865 = vsel %vm1130, %v1792, %v1840
      %v1866 = vsel %vm1130, %v1793, %v1842
      %vm1867 = vcmask 523264
      %v1868 = vsel %vm1867, %v1863, %v1852
      %v1869 = vsel %vm1867, %v1864, %v1854
      %v1870 = vsel %vm1867, %v1865, %v1856
      %v1871 = vsel %vm1867, %v1866, %v1858
      %v1872 = vpack.c.bf16 %v1869, %v1868
      %v1873 = vpack.c.bf16 %v1871, %v1870
      %v1875 = vlaneseq
      %v1876 = vshrl.u32 %v1875, 7
      %v1877 = vsub.s32 0, %v1876
      %v1878 = vrot.slane %v1082, %v1877
      %v1892 = vunpack.c.l.b16 %v1070
      %v1893 = vunpack.c.l.b16 %v1071
      %v1894 = vunpack.c.l.b16 %v1072
      %v1895 = vunpack.c.l.b16 %v1073
      %v1896 = vunpack.c.l.b16 %v1074
      %v1897 = vunpack.c.l.b16 %v1075
      %v1898 = vunpack.c.l.b16 %v1076
      %v1899 = vunpack.c.l.b16 %v1077
      %v1900 = vunpack.c.l.b16 %v1078
      %v1901 = vunpack.c.l.b16 %v1079
      %v1902 = vunpack.c.l.b16 %v1080
      %v1903 = vunpack.c.l.b16 %v1081
      %v1904 = vpack.c.b16 %v1893, %v1892
      %v1905 = vpack.c.b16 %v1895, %v1894
      %v1906 = vpack.c.b16 %v1897, %v1896
      %v1907 = vpack.c.b16 %v1899, %v1898
      %v1908 = vpack.c.b16 %v1901, %v1900
      %v1909 = vpack.c.b16 %v1903, %v1902
      %vm1916 = vcmask 785408
      %v1918 = vsel %vm1916, %v1872, 0
      %v1921 = vsel %vm1916, %v1873, 0
      %1923 = vmatprep.subr.bf16.mxu0 0
      %1924 = vmatpush1.bf16.msra.mxu0 %v1904
      %1925 = vmatprep.subr.bf16.mxu0 0
      %1926 = vmatpush1.bf16.msra.mxu0 %v1905
      %1927 = vmatprep.subr.bf16.mxu0 0
      %1928 = vmatpush1.bf16.msra.mxu0 %v1906
      %1929 = vmatprep.subr.bf16.mxu0 0
      %1930 = vmatpush1.bf16.msra.mxu0 %v1907
      %1931 = vmatprep.subr.bf16.mxu0 0
      %1932 = vmatpush1.bf16.msra.mxu0 %v1908
      %1933 = vmatprep.subr.bf16.mxu0 0
      %1934 = vmatpush1.bf16.msra.mxu0 %v1909
      %1935 = vmatprep.subr.bf16.mxu0 0
      %1936 = vmatpush1.bf16.msra.mxu0 0
      %1937 = vmatprep.subr.bf16.mxu0 0
      %1938 = vmatpush1.bf16.msra.mxu0 0
      %1939 = vmatprep.subr.bf16.mxu0 0
      %1940 = vmatpush1.bf16.msra.mxu0 0
      %1941 = vmatprep.subr.bf16.mxu0 0
      %1942 = vmatpush1.bf16.msra.mxu0 0
      %1943 = vmatprep.subr.bf16.mxu0 0
      %1944 = vmatpush1.bf16.msra.mxu0 0
      %1945 = vmatprep.subr.bf16.mxu0 0
      %1946 = vmatpush1.bf16.msra.mxu0 0
      %1947 = vmatprep.subr.bf16.mxu0 0
      %1948 = vmatpush1.bf16.msra.mxu0 0
      %1949 = vmatprep.subr.bf16.mxu0 0
      %1950 = vmatpush1.bf16.msra.mxu0 0
      %1951 = vmatprep.subr.bf16.mxu0 0
      %1952 = vmatpush1.bf16.msra.mxu0 0
      %1953 = vmatprep.subr.bf16.mxu0 0
      %1954 = vmatpush1.bf16.msra.mxu0 0
      %1955 = vmatprep.mubr.bf16.mxu0 0
      %1956 = vmatmul.mubr.bf16.gmra.mrb[0].mxu0 %v1918
      %v1957 = vpop.f32.mrb[0].mxu0
      %v1958 = vadd.f32 %v1878, %v1957
      %v1959 = vpop.f32.mrb[0].mxu0
      %v1960 = vpop.f32.mrb[0].mxu0
      %v1961 = vadd.f32 %v1878, %v1960
      %v1962 = vpop.f32.mrb[0].mxu0
      %1963 = vmatprep.mubr.bf16.mxu0 0
      %1964 = vmatmul.mubr.bf16.gmra.mrb[0].mxu0 %v1921
      %v1965 = vpop.f32.mrb[0].mxu0
      %v1966 = vadd.f32 %v1878, %v1965
      %v1967 = vpop.f32.mrb[0].mxu0
      %v1968 = vpop.f32.mrb[0].mxu0
      %v1969 = vadd.f32 %v1878, %v1968
      %v1970 = vpop.f32.mrb[0].mxu0
      %1971 = vdwg.mxu0
      %v1972 = vmax.f32 %v1958, 0.0
      %v1973 = vmax.f32 %v1961, 0.0
      %v1974 = vmax.f32 %v1966, 0.0
      %v1975 = vmax.f32 %v1969, 0.0
      %v1976 = vrot.slane %v1972, 7
      %v1977 = vrot.slane %v1973, 7
      %v1978 = vrot.slane %v1974, 7
      %v1979 = vrot.slane %v1975, 7
      %v1980 = vsel %vm1761, %v1978, %v1979
      %v1981 = vsel %vm1761, %v1977, %v1978
      %v1982 = vsel %vm1761, %v1976, %v1977
      %v1983 = vsel %vm1761, %v1979, %v1976
      %v1984 = vmul.f32 %v1983, %v1786
      %v1985 = vmul.f32 %v1982, %v1787
      %v1986 = vmul.f32 %v1981, %v1788
      %v1987 = vmul.f32 %v1980, %v1789
      %v1988 = vrot.slane %v1972, 1
      %v1989 = vrot.slane %v1973, 1
      %v1990 = vrot.slane %v1974, 1
      %v1991 = vrot.slane %v1975, 1
      %v1992 = vsel %vm1798, %v1990, %v1991
      %v1993 = vsel %vm1798, %v1989, %v1990
      %v1994 = vsel %vm1798, %v1988, %v1989
      %v1995 = vsel %vm1798, %v1991, %v1988
      %v1996 = vmul.f32 %v1994, %v1823
      %v1997 = vmul.f32 %v1993, %v1824
      %v1998 = vmul.f32 %v1992, %v1825
      %v1999 = vmul.f32 %v1995, %v1826
      %2004 = vrot.lane.b32.xlu0 %v1972, 64
      %v2005 = vpop.permute.xlu0 %2004
      %2006 = vrot.lane.b32.xlu0 %v1973, 64
      %v2007 = vpop.permute.xlu0 %2006
      %2008 = vrot.lane.b32.xlu0 %v1974, 64
      %v2009 = vpop.permute.xlu0 %2008
      %2010 = vrot.lane.b32.xlu0 %v1975, 64
      %v2011 = vpop.permute.xlu0 %2010
      %v2016 = vsel %vm1867, %v1984, %v2005
      %v2017 = vsel %vm1867, %v1985, %v2007
      %v2018 = vsel %vm1867, %v1986, %v2009
      %v2019 = vsel %vm1867, %v1987, %v2011
      %v2020 = vpack.c.bf16 %v2017, %v2016
      %v2021 = vpack.c.bf16 %v1997, %v1996
      %v2022 = vpack.c.bf16 %v2019, %v2018
      %v2023 = vpack.c.bf16 %v1999, %v1998
      %v2025 = vlaneseq
      %v2026 = vshrl.u32 %v2025, 7
      %v2027 = vsub.s32 0, %v2026
      %v2028 = vrot.slane %v1107, %v2027
      %v2054 = vunpack.c.l.b16 %v1083
      %v2055 = vunpack.c.l.b16 %v1084
      %v2056 = vunpack.c.l.b16 %v1085
      %v2057 = vunpack.c.l.b16 %v1086
      %v2058 = vunpack.c.l.b16 %v1087
      %v2059 = vunpack.c.l.b16 %v1088
      %v2060 = vunpack.c.l.b16 %v1089
      %v2061 = vunpack.c.l.b16 %v1090
      %v2062 = vunpack.c.l.b16 %v1091
      %v2063 = vunpack.c.l.b16 %v1092
      %v2064 = vunpack.c.l.b16 %v1093
      %v2065 = vunpack.c.l.b16 %v1094
      %v2066 = vunpack.c.l.b16 %v1095
      %v2067 = vunpack.c.l.b16 %v1096
      %v2068 = vunpack.c.l.b16 %v1097
      %v2069 = vunpack.c.l.b16 %v1098
      %v2070 = vunpack.c.l.b16 %v1099
      %v2071 = vunpack.c.l.b16 %v1100
      %v2072 = vunpack.c.l.b16 %v1101
      %v2073 = vunpack.c.l.b16 %v1102
      %v2074 = vunpack.c.l.b16 %v1103
      %v2075 = vunpack.c.l.b16 %v1104
      %v2076 = vunpack.c.l.b16 %v1105
      %v2077 = vunpack.c.l.b16 %v1106
      %v2078 = vpack.c.b16 %v2055, %v2054
      %v2079 = vpack.c.b16 %v2057, %v2056
      %v2080 = vpack.c.b16 %v2059, %v2058
      %v2081 = vpack.c.b16 %v2061, %v2060
      %v2082 = vpack.c.b16 %v2063, %v2062
      %v2083 = vpack.c.b16 %v2065, %v2064
      %v2084 = vpack.c.b16 %v2067, %v2066
      %v2085 = vpack.c.b16 %v2069, %v2068
      %v2086 = vpack.c.b16 %v2071, %v2070
      %v2087 = vpack.c.b16 %v2073, %v2072
      %v2088 = vpack.c.b16 %v2075, %v2074
      %v2089 = vpack.c.b16 %v2077, %v2076
      %v2103 = vsel %vm1867, %v2021, 0
      %v2106 = vsel %vm1867, %v2023, 0
      %2108 = vmatprep.subr.bf16.mxu0 0
      %2109 = vmatpush1.bf16.msra.mxu0 %v2078
      %2110 = vmatprep.subr.bf16.mxu0 0
      %2111 = vmatpush1.bf16.msra.mxu0 %v2079
      %2112 = vmatprep.subr.bf16.mxu0 0
      %2113 = vmatpush1.bf16.msra.mxu0 %v2080
      %2114 = vmatprep.subr.bf16.mxu0 0
      %2115 = vmatpush1.bf16.msra.mxu0 %v2081
      %2116 = vmatprep.subr.bf16.mxu0 0
      %2117 = vmatpush1.bf16.msra.mxu0 %v2082
      %2118 = vmatprep.subr.bf16.mxu0 0
      %2119 = vmatpush1.bf16.msra.mxu0 %v2083
      %2120 = vmatprep.subr.bf16.mxu0 0
      %2121 = vmatpush1.bf16.msra.mxu0 %v2084
      %2122 = vmatprep.subr.bf16.mxu0 0
      %2123 = vmatpush1.bf16.msra.mxu0 %v2085
      %2124 = vmatprep.subr.bf16.mxu0 0
      %2125 = vmatpush1.bf16.msra.mxu0 %v2086
      %2126 = vmatprep.subr.bf16.mxu0 0
      %2127 = vmatpush1.bf16.msra.mxu0 %v2087
      %2128 = vmatprep.subr.bf16.mxu0 0
      %2129 = vmatpush1.bf16.msra.mxu0 %v2088
      %2130 = vmatprep.subr.bf16.mxu0 0
      %2131 = vmatpush1.bf16.msra.mxu0 %v2089
      %2132 = vmatprep.subr.bf16.mxu0 0
      %2133 = vmatpush1.bf16.msra.mxu0 0
      %2134 = vmatprep.subr.bf16.mxu0 0
      %2135 = vmatpush1.bf16.msra.mxu0 0
      %2136 = vmatprep.subr.bf16.mxu0 0
      %2137 = vmatpush1.bf16.msra.mxu0 0
      %2138 = vmatprep.subr.bf16.mxu0 0
      %2139 = vmatpush1.bf16.msra.mxu0 0
      %2140 = vmatprep.mubr.bf16.mxu0 %v2103
      %2141 = vmatmul.mubr.bf16.gmra.mrb[0].mxu0 %v2020
      %v2142 = vpop.f32.mrb[0].mxu0
      %v2143 = vadd.f32 %v2028, %v2142
      %v2144 = vpop.f32.mrb[0].mxu0
      %v2145 = vpop.f32.mrb[0].mxu0
      %v2146 = vadd.f32 %v2028, %v2145
      %v2147 = vpop.f32.mrb[0].mxu0
      %2148 = vmatprep.mubr.bf16.mxu0 %v2106
      %2149 = vmatmul.mubr.bf16.gmra.mrb[0].mxu0 %v2022
      %v2150 = vpop.f32.mrb[0].mxu0
      %v2151 = vadd.f32 %v2028, %v2150
      %v2152 = vpop.f32.mrb[0].mxu0
      %v2153 = vpop.f32.mrb[0].mxu0
      %v2154 = vadd.f32 %v2028, %v2153
      %v2155 = vpop.f32.mrb[0].mxu0
      %2156 = vdwg.mxu0
      %v2157 = vadd.f32 %v2143, %v1753
      %v2158 = vadd.f32 %v2146, %v1754
      %v2159 = vadd.f32 %v2151, %v1755
      %v2160 = vadd.f32 %v2154, %v1756
      %v2161 = vsel %vm1130, %v2157, 0.0
      %2162 = vadd.xlane.f32.xlu0 %v2161
      %v2163 = vpop.xlane.xlu0 %2162
      %v2164 = vsel %vm1130, %v2158, 0.0
      %2165 = vadd.xlane.f32.xlu0 %v2164
      %v2166 = vpop.xlane.xlu0 %2165
      %v2167 = vsel %vm1130, %v2159, 0.0
      %2168 = vadd.xlane.f32.xlu0 %v2167
      %v2169 = vpop.xlane.xlu0 %2168
      %v2170 = vsel %vm1130, %v2160, 0.0
      %2171 = vadd.xlane.f32.xlu0 %v2170
      %v2172 = vpop.xlane.xlu0 %2171
      %v2173 = vmul.f32 %v2163, %v1672
      %v2174 = vmul.f32 %v2166, %v1672
      %v2175 = vmul.f32 %v2169, %v1672
      %v2176 = vmul.f32 %v2172, %v1672
      %v2177 = vsub.f32 %v2157, %v2173
      %v2178 = vsub.f32 %v2158, %v2174
      %v2179 = vsub.f32 %v2159, %v2175
      %v2180 = vsub.f32 %v2160, %v2176
      %v2181 = vmul.f32 %v2177, %v2177
      %v2182 = vmul.f32 %v2178, %v2178
      %v2183 = vmul.f32 %v2179, %v2179
      %v2184 = vmul.f32 %v2180, %v2180
      %v2185 = vsel %vm1130, %v2181, 0.0
      %2186 = vadd.xlane.f32.xlu0 %v2185
      %v2187 = vpop.xlane.xlu0 %2186
      %v2188 = vsel %vm1130, %v2182, 0.0
      %2189 = vadd.xlane.f32.xlu0 %v2188
      %v2190 = vpop.xlane.xlu0 %2189
      %v2191 = vsel %vm1130, %v2183, 0.0
      %2192 = vadd.xlane.f32.xlu0 %v2191
      %v2193 = vpop.xlane.xlu0 %2192
      %v2194 = vsel %vm1130, %v2184, 0.0
      %2195 = vadd.xlane.f32.xlu0 %v2194
      %v2196 = vpop.xlane.xlu0 %2195
      %v2197 = vmul.f32 %v2187, %v1672
      %v2198 = vmul.f32 %v2190, %v1672
      %v2199 = vmul.f32 %v2193, %v1672
      %v2200 = vmul.f32 %v2196, %v1672
      %v2201 = vadd.f32 %v2197, 1e-05
      %v2202 = vadd.f32 %v2198, 1e-05
      %v2203 = vadd.f32 %v2199, 1e-05
      %v2204 = vadd.f32 %v2200, 1e-05
      %v2205 = vrsqrt.pop %v2201
      %v2206 = vrsqrt.pop %v2202
      %v2207 = vrsqrt.pop %v2203
      %v2208 = vrsqrt.pop %v2204
      %v2209 = vmul.f32 %v2177, %v2205
      %v2210 = vmul.f32 %v2178, %v2206
      %v2211 = vmul.f32 %v2179, %v2207
      %v2212 = vmul.f32 %v2180, %v2208
      %v2214 = vlaneseq
      %v2215 = vshrl.u32 %v2214, 7
      %v2216 = vsub.s32 0, %v2215
      %v2217 = vrot.slane %v1108, %v2216
      %v2219 = vmul.f32 %v2209, %v2217
      %v2220 = vmul.f32 %v2210, %v2217
      %v2221 = vmul.f32 %v2211, %v2217
      %v2222 = vmul.f32 %v2212, %v2217
      %v2224 = vlaneseq
      %v2225 = vshrl.u32 %v2224, 7
      %v2226 = vsub.s32 0, %v2225
      %v2227 = vrot.slane %v1109, %v2226
      %v2229 = vadd.f32 %v2219, %v2227
      %v2230 = vadd.f32 %v2220, %v2227
      %v2231 = vadd.f32 %v2221, %v2227
      %v2232 = vadd.f32 %v2222, %v2227
      %v2233 = vmul.f32 %v2229, %v1736
      %v2234 = vmul.f32 %v2230, %v1741
      %v2235 = vmul.f32 %v2231, %v1746
      %v2236 = vmul.f32 %v2232, %v1751
      %2237 = vst.msk [vmem:[#allocation2] sm:$0xff] %vm1130, %v2233
      %2238 = vst.msk [vmem:[#allocation2 + $0x8] sm:$0xff] %vm1130, %v2234
      %2239 = vst.msk [vmem:[#allocation2 + $0x10] sm:$0xff] %vm1130, %v2235
      %2240 = vst.msk [vmem:[#allocation2 + $0x18] sm:$0xff] %vm1130, %v2236
      // Predicated region
      $region93: #{fastspeech2_forward.5} parent=87 // pred_check
        %p2241 = pneg %p1025
      $region94: #{fastspeech2_forward.5} parent=87 // pred_check_branch
        %2243 = sbr.rel (%p2241) target = $region96
      $region95: #{fastspeech2_forward.5} parent=87 // pred_region
        %v2244 = vpack.c.bf16 %v2234, %v2233
        %v2245 = vpack.c.bf16 %v2236, %v2235
        %v2246 = vld [vmem:[%s1011] sm:$0xf]
        %v2247 = vld [vmem:[%s1011 + $0x4] sm:$0xf]
        %v2248 = vld [vmem:[%s1011 + $0x8] sm:$0xf]
        %v2249 = vld [vmem:[%s1011 + $0xc] sm:$0xf]
        %v2250 = vld [vmem:[%s1014] sm:$0x1]
        %v2252 = vlaneseq
        %v2253 = vshrl.u32 %v2252, 7
        %v2254 = vsub.s32 0, %v2253
        %v2255 = vrot.slane %v2250, %v2254
        %v2261 = vunpack.c.l.b16 %v2246
        %v2262 = vunpack.c.l.b16 %v2247
        %v2263 = vunpack.c.l.b16 %v2248
        %v2264 = vunpack.c.l.b16 %v2249
        %v2265 = vpack.c.b16 %v2262, %v2261
        %v2266 = vpack.c.b16 %v2264, %v2263
        %v2270 = vsel %vm1130, %v2244, 0
        %v2273 = vsel %vm1130, %v2245, 0
        %2275 = vmatprep.subr.bf16.mxu0 0
        %2276 = vmatpush1.bf16.msra.mxu0 %v2265
        %2277 = vmatprep.subr.bf16.mxu0 0
        %2278 = vmatpush1.bf16.msra.mxu0 %v2266
        %2279 = vmatprep.subr.bf16.mxu0 0
        %2280 = vmatpush1.bf16.msra.mxu0 0
        %2281 = vmatprep.subr.bf16.mxu0 0
        %2282 = vmatpush1.bf16.msra.mxu0 0
        %2283 = vmatprep.subr.bf16.mxu0 0
        %2284 = vmatpush1.bf16.msra.mxu0 0
        %2285 = vmatprep.subr.bf16.mxu0 0
        %2286 = vmatpush1.bf16.msra.mxu0 0
        %2287 = vmatprep.subr.bf16.mxu0 0
        %2288 = vmatpush1.bf16.msra.mxu0 0
        %2289 = vmatprep.subr.bf16.mxu0 0
        %2290 = vmatpush1.bf16.msra.mxu0 0
        %2291 = vmatprep.subr.bf16.mxu0 0
        %2292 = vmatpush1.bf16.msra.mxu0 0
        %2293 = vmatprep.subr.bf16.mxu0 0
        %2294 = vmatpush1.bf16.msra.mxu0 0
        %2295 = vmatprep.subr.bf16.mxu0 0
        %2296 = vmatpush1.bf16.msra.mxu0 0
        %2297 = vmatprep.subr.bf16.mxu0 0
        %2298 = vmatpush1.bf16.msra.mxu0 0
        %2299 = vmatprep.subr.bf16.mxu0 0
        %2300 = vmatpush1.bf16.msra.mxu0 0
        %2301 = vmatprep.subr.bf16.mxu0 0
        %2302 = vmatpush1.bf16.msra.mxu0 0
        %2303 = vmatprep.subr.bf16.mxu0 0
        %2304 = vmatpush1.bf16.msra.mxu0 0
        %2305 = vmatprep.subr.bf16.mxu0 0
        %2306 = vmatpush1.bf16.msra.mxu0 0
        %2307 = vmatprep.mubr.bf16.mxu0 0
        %2308 = vmatmul.mubr.bf16.gmra.mrb[0].mxu0 %v2270
        %v2309 = vpop.f32.mrb[0].mxu0
        %v2310 = vadd.f32 %v2255, %v2309
        %v2311 = vpop.f32.mrb[0].mxu0
        %v2312 = vpop.f32.mrb[0].mxu0
        %v2313 = vadd.f32 %v2255, %v2312
        %v2314 = vpop.f32.mrb[0].mxu0
        %2315 = vmatprep.mubr.bf16.mxu0 0
        %2316 = vmatmul.mubr.bf16.gmra.mrb[0].mxu0 %v2273
        %v2317 = vpop.f32.mrb[0].mxu0
        %v2318 = vadd.f32 %v2255, %v2317
        %v2319 = vpop.f32.mrb[0].mxu0
        %v2320 = vpop.f32.mrb[0].mxu0
        %v2321 = vadd.f32 %v2255, %v2320
        %v2322 = vpop.f32.mrb[0].mxu0
        %2323 = vdwg.mxu0
        %2324 = vst.msk [vmem:[%s1023] sm:$0xff] %vm1194, %v2310
        %2325 = vst.msk [vmem:[%s1023 + $0x8] sm:$0xff] %vm1194, %v2313
        %2326 = vst.msk [vmem:[%s1023 + $0x10] sm:$0xff] %vm1194, %v2318
        %2327 = vst.msk [vmem:[%s1023 + $0x18] sm:$0xff] %vm1194, %v2321
      $region96: #{fastspeech2_forward.5} parent=87 // pred_fallthru
        _
      %p2328 = scmp.lt.s32.totalorder %s33, 1
      %s2329 = scalar_select %p2328, %s33, 1
      %p2330 = scmp.lt.s32.totalorder %s34, 1
      %s2331 = scalar_select %p2330, %s34, 1
      %s2332 = smul.addr %s2331, 4
      %s2333 = smul.addr %s2329, 8
      %s2334 = sadd.s32 %s2332, %s2333
      %s2335 = smul.addr %s2334, 8
      %s2336 = scalar_lea.vmem %s17, %s2335
      // Predicated region
      $region97: #{fastspeech2_forward.5} parent=87 // pred_check
        %p2337 = pneg %p539
      $region98: #{fastspeech2_forward.5} parent=87 // pred_check_branch
        %2339 = sbr.rel (%p2337) target = $region100
      $region99: #{fastspeech2_forward.5} parent=87 // pred_region
        _
      $region100: #{fastspeech2_forward.5} parent=87 // pred_fallthru
        _
    $region88: #{fastspeech2_forward.5} parent=5 // pred_fallthru
      _
    %p2340 = scmp.le.s32.totalorder 2, %s23
    // Predicated region
    $region101: #{fastspeech2_forward.5} parent=5 // pred_check
      %p2341 = pneg %p2340
    $region102: #{fastspeech2_forward.5} parent=5 // pred_check_branch
      %2343 = sbr.rel (%p2341) target = $region104
    $region103: #{fastspeech2_forward.5} parent=5 // pred_region
      %s2344 = ssub.s32 %s23, 2
      // Predicated region
      $region105: #{fastspeech2_forward.5} parent=103 // pred_check
        %p2345 = pneg %p545
      $region106: #{fastspeech2_forward.5} parent=103 // pred_check_branch
        %2347 = sbr.rel (%p2345) target = $region108
      $region107: #{fastspeech2_forward.5} parent=103 // pred_region
        %p2348 = scmp.lt.s32.totalorder %s36, 1
        %s2349 = scalar_select %p2348, %s36, 1
        %p2350 = scmp.lt.s32.totalorder %s37, 1
        %s2351 = scalar_select %p2350, %s37, 1
        %s2352 = smul.addr %s2351, 4
        %s2353 = smul.addr %s2349, 8
        %s2354 = sadd.s32 %s2352, %s2353
        %s2355 = smul.addr %s2354, 8
        %s2356 = scalar_lea.vmem %s17, %s2355
      $region108: #{fastspeech2_forward.5} parent=103 // pred_fallthru
        _
    $region104: #{fastspeech2_forward.5} parent=5 // pred_fallthru
      _
  $region6: #{fastspeech2_forward.5} parent=0 // loop_footer
    %s27 = sadd.s32 1, %s23
  $region7: #{fastspeech2_forward.5} parent=0 // loop_footer_branch
    %22 = sbr.rel target = $region3
  $region8: #{fastspeech2_forward.5} parent=0 // loop_exit
    _

</llo_original>
